<compile_context>
chip_gen: v7x
topology: tpu7x:2x2x1
jax: 0.10.0
libtpu: 0.0.40
codegen_flags: <defaults>
</compile_context>

<pallas_src>
import jax
import jax.numpy as jnp
from jax.experimental import pallas as pl
from jax.experimental.pallas import tpu as pltpu

DIM = 32
NUM_FEATURES_XD = 78
NUM_FEATURES_XT = 25
EMBED_DIM = 128
OUTPUT_DIM = 128
SEQ_LEN = 1000
VOCAB = NUM_FEATURES_XT + 1          # 26
VOCAB_PAD = 32                       # pad vocab so K_PAD is a multiple of 128
K_PAD = SEQ_LEN * VOCAB_PAD          # 32000
HIDDEN1 = 1024
HIDDEN2 = 256
BN_EPS = 1e-5


# ----------------------------- Pallas kernel --------------------------------

def fused_kernel(oh_ref, c_ref, bxt_ref,
                 x_ref, adj_ref, pool_ref, gw_ref, gv_ref, fxdw_ref, fxdb_ref,
                 w1d_ref, w1t_ref, b1_ref, w2_ref, b2_ref, w3_ref, b3_ref,
                 o_ref, xg_ref, acc_ref):
    """Entire GINProtEmb forward in one K-tiled pallas_call.

    k == 0      : graph branch (gin1->gin2->gin3 -> add-pool -> fc1_xd -> ReLU)
                  into xg scratch; init xt accumulator with fc1_xt bias.
    every k     : acc += onehot_tile @ C_tile   (== fc1_xt on gathered embeddings)
    k == last   : concat-free head: fc1 (split) -> ReLU -> fc2 -> ReLU -> out.
    """
    k = pl.program_id(0)

    @pl.when(k == 0)
    def _():
        adj = adj_ref[...]
        gw = gw_ref[...]       # packed GIN weights  (240, 32)
        gv = gv_ref[...]       # packed GIN vectors  (16, 32): b1,b2,scale,shift x3
        h = x_ref[...]

        def gin(h, w1, b1, w2, b2, scale, shift):
            # GINConv(eps=0): nn(x + A@x), nn = Linear -> ReLU -> Linear;
            # then outer F.relu and eval-mode BatchNorm1d (scale/shift).
            pre = h + jnp.dot(adj, h, preferred_element_type=jnp.float32)
            t = jnp.dot(pre, w1, preferred_element_type=jnp.float32) + b1
            t = jnp.maximum(t, 0.0)
            t = jnp.dot(t, w2, preferred_element_type=jnp.float32) + b2
            t = jnp.maximum(t, 0.0)
            return t * scale + shift

        h = gin(h, gw[0:NUM_FEATURES_XD, :], gv[0:1, :],
                gw[80:112, :], gv[1:2, :], gv[2:3, :], gv[3:4, :])
        h = gin(h, gw[112:144, :], gv[4:5, :],
                gw[144:176, :], gv[5:6, :], gv[6:7, :], gv[7:8, :])
        h = gin(h, gw[176:208, :], gv[8:9, :],
                gw[208:240, :], gv[9:10, :], gv[10:11, :], gv[11:12, :])

        pooled = jnp.dot(pool_ref[...], h, preferred_element_type=jnp.float32)
        xg = jnp.dot(pooled, fxdw_ref[...],
                     preferred_element_type=jnp.float32) + fxdb_ref[...]
        xg_ref[...] = jnp.maximum(xg, 0.0)          # dropout = identity (inference)

        acc_ref[...] = jnp.zeros_like(acc_ref) + bxt_ref[...]

    # fc1_xt via the precomputed table: onehot(target) @ C  (bf16 x bf16 -> f32 acc)
    acc_ref[...] += jnp.dot(oh_ref[...], c_ref[...],
                            preferred_element_type=jnp.float32)

    @pl.when(k == pl.num_programs(0) - 1)
    def _():
        xt = acc_ref[...]
        # concat([xg, xt]) @ fc1.w == xg @ fc1.w[:128] + xt @ fc1.w[128:]
        h = (jnp.dot(xg_ref[...], w1d_ref[...], preferred_element_type=jnp.float32)
             + jnp.dot(xt, w1t_ref[...], preferred_element_type=jnp.float32)
             + b1_ref[...])
        h = jnp.maximum(h, 0.0)
        h = jnp.dot(h, w2_ref[...], preferred_element_type=jnp.float32) + b2_ref[...]
        h = jnp.maximum(h, 0.0)
        o_ref[...] = (jnp.dot(h, w3_ref[...], preferred_element_type=jnp.float32)
                      + b3_ref[...])


# ------------------------------ wrapper --------------------------------------

def fused_forward(x, adj, pool, onehot, p, tk=6400):
    """Single pallas_call for the whole model.  5 grid steps of tk=6400; per-step
    C tile is 1.56 MiB bf16 (double-buffered ~3.1 MiB); resident head weights
    ~2 MiB f32 (double-buffered ~4 MiB) -> total ~8 MiB, comfortably inside the
    32 MiB cap on every generation (v7x physical VMEM is 64 MiB)."""
    bsz, kpad = onehot.shape
    assert kpad % tk == 0 and tk % 128 == 0
    c = p["xt_table"]                                  # (K_PAD, 128) bf16
    gw, gv = p["gin_w_packed"], p["gin_v_packed"]
    w1 = p["fc1"]["w"]
    w1d, w1t = w1[:OUTPUT_DIM], w1[OUTPUT_DIM:]        # split -> no concat
    n_out = p["out"]["w"].shape[1]

    const = lambda shape: pl.BlockSpec(shape, lambda k: (0, 0))

    return pl.pallas_call(
        fused_kernel,
        out_shape=jax.ShapeDtypeStruct((bsz, n_out), jnp.float32),
        grid_spec=pltpu.PrefetchScalarGridSpec(
            num_scalar_prefetch=0,
            grid=(kpad // tk,),
            in_specs=[
                pl.BlockSpec((bsz, tk), lambda k: (0, k)),         # onehot (bf16)
                pl.BlockSpec((tk, OUTPUT_DIM), lambda k: (k, 0)),  # C table (bf16)
                const((1, OUTPUT_DIM)),                            # fc1_xt.b
                const(x.shape),                                    # x
                const(adj.shape),                                  # adj
                const(pool.shape),                                 # pool
                const(gw.shape),                                   # packed GIN weights
                const(gv.shape),                                   # packed GIN vectors
                const((DIM, OUTPUT_DIM)),                          # fc1_xd.w
                const((1, OUTPUT_DIM)),                            # fc1_xd.b
                const((OUTPUT_DIM, HIDDEN1)),                      # fc1.w[:128]
                const((OUTPUT_DIM, HIDDEN1)),                      # fc1.w[128:]
                const((1, HIDDEN1)),                               # fc1.b
                const((HIDDEN1, HIDDEN2)),                         # fc2.w
                const((1, HIDDEN2)),                               # fc2.b
                const((HIDDEN2, n_out)),                           # out.w
                const((1, n_out)),                                 # out.b
            ],
            out_specs=pl.BlockSpec((bsz, n_out), lambda k: (0, 0)),
            scratch_shapes=[pltpu.VMEM((bsz, OUTPUT_DIM), jnp.float32),   # xg
                            pltpu.VMEM((bsz, OUTPUT_DIM), jnp.float32)],  # xt acc
        ),
        compiler_params=pltpu.CompilerParams(
            dimension_semantics=("arbitrary",),       # reduction axis: keep arbitrary
            vmem_limit_bytes=32 * 1024 * 1024),
    )(onehot, c, p["fc1_xt"]["b"], x, adj, pool, gw, gv,
      p["fc1_xd"]["w"], p["fc1_xd"]["b"],
      w1d, w1t, p["fc1"]["b"], p["fc2"]["w"], p["fc2"]["b"],
      p["out"]["w"], p["out"]["b"])


# --------------------------- parameter setup ---------------------------------

def init_params(key):
    keys = jax.random.split(key, 16)
    p = {}

    def lin(k, fan_in, fan_out, scale=0.05):
        kw, kb = jax.random.split(k)
        return {"w": jax.random.normal(kw, (fan_in, fan_out), jnp.float32) * scale,
                "b": jax.random.normal(kb, (1, fan_out), jnp.float32) * scale}

    # GIN MLPs + eval-mode BatchNorm (default running stats) folded to scale/shift.
    # Real checkpoints must fold their actual running stats here.
    bn_scale = jnp.full((1, DIM), 1.0 / jnp.sqrt(1.0 + BN_EPS), jnp.float32)
    bn_shift = jnp.zeros((1, DIM), jnp.float32)
    for i, fin in zip((1, 2, 3), (NUM_FEATURES_XD, DIM, DIM)):
        l1 = lin(keys[2 * i - 2], fin, DIM)
        l2 = lin(keys[2 * i - 1], DIM, DIM)
        p[f"gin{i}"] = {"w1": l1["w"], "b1": l1["b"],
                        "w2": l2["w"], "b2": l2["b"],
                        "bn_scale": bn_scale, "bn_shift": bn_shift}

    p["fc1_xd"] = lin(keys[6], DIM, OUTPUT_DIM)
    p["embedding_xt"] = jax.random.normal(
        keys[7], (VOCAB, EMBED_DIM), jnp.float32) * 0.1
    p["fc1_xt"] = lin(keys[8], SEQ_LEN * EMBED_DIM, OUTPUT_DIM, scale=0.01)
    p["fc1"] = lin(keys[9], 2 * OUTPUT_DIM, HIDDEN1)
    p["fc2"] = lin(keys[10], HIDDEN1, HIDDEN2)
    p["out"] = lin(keys[11], HIDDEN2, 1)
    return p


def add_inference_tables(p):
    """Inference-only precomputes (done once, offline)."""
    # (a) Fold embedding_xt + fc1_xt.w into C[s, v, :] = emb[v] @ W[s*128:(s+1)*128, :].
    #     Vocab padded 26 -> 32 so the flattened K axis (32000) is lane-aligned.
    emb_pad = jnp.zeros((VOCAB_PAD, EMBED_DIM), jnp.float32).at[:VOCAB].set(
        p["embedding_xt"])
    w = p["fc1_xt"]["w"].reshape(SEQ_LEN, EMBED_DIM, OUTPUT_DIM)
    c = jnp.einsum("vd,sdo->svo", emb_pad, w)               # (1000, 32, 128) f32
    p["xt_table"] = c.reshape(K_PAD, OUTPUT_DIM).astype(jnp.bfloat16)

    # (b) Pack the 20 tiny GIN parameter tensors into two slabs (fewer DMA
    #     descriptors / kernel args); rows padded to multiples of 8 for clean
    #     static slicing inside the kernel.
    pad80 = jnp.pad(p["gin1"]["w1"], ((0, 80 - NUM_FEATURES_XD), (0, 0)))
    p["gin_w_packed"] = jnp.concatenate(
        [pad80, p["gin1"]["w2"],
         p["gin2"]["w1"], p["gin2"]["w2"],
         p["gin3"]["w1"], p["gin3"]["w2"]], axis=0)          # (240, 32)
    p["gin_v_packed"] = jnp.concatenate(
        [p[f"gin{i}"][k] for i in (1, 2, 3)
         for k in ("b1", "b2", "bn_scale", "bn_shift")]
        + [jnp.zeros((4, DIM), jnp.float32)], axis=0)        # (16, 32)
    return p


# ------------------------------ forward pass ---------------------------------

def ginprotemb_forward(params, x, edge_index, batch, target, num_graphs):
    n = x.shape[0]
    # Dense adjacency A[i, j] = #edges j -> i (PyG: edge_index[0]=src, [1]=dst).
    # TODO(synk): for large graphs (N >~ 1500) store adj/pool in bf16 and tile the
    # A@h matmul with a BlockSpec grid; dense A is O(N^2) in VMEM.
    adj = jnp.zeros((n, n), jnp.float32).at[edge_index[1], edge_index[0]].add(1.0)
    # Pooling matrix for global_add_pool.
    pool = (batch[None, :] == jnp.arange(num_graphs)[:, None]).astype(jnp.float32)
    # One-hot of the protein token sequence (cheap XLA glue, ~64 KB at B=2);
    # onehot @ C == sum_s C[s, target[b,s], :] == fc1_xt(flatten(emb[target])).
    onehot = jax.nn.one_hot(target, VOCAB_PAD, dtype=jnp.bfloat16).reshape(
        num_graphs, K_PAD)
    return fused_forward(x, adj, pool, onehot, params)


def reference_forward(params, x, edge_index, batch, target, num_graphs):
    """Pure-XLA f32 reference following the original module math."""
    n = x.shape[0]
    adj = jnp.zeros((n, n), jnp.float32).at[edge_index[1], edge_index[0]].add(1.0)
    pool = (batch[None, :] == jnp.arange(num_graphs)[:, None]).astype(jnp.float32)
    h = x
    for i in (1, 2, 3):
        g = params[f"gin{i}"]
        pre = h + adj @ h
        t = jnp.maximum(pre @ g["w1"] + g["b1"], 0.0)
        t = jnp.maximum(t @ g["w2"] + g["b2"], 0.0)
        h = t * g["bn_scale"] + g["bn_shift"]
    xg = jnp.maximum((pool @ h) @ params["fc1_xd"]["w"] + params["fc1_xd"]["b"], 0.0)
    emb = params["embedding_xt"][target].reshape(target.shape[0], -1)
    xt = emb @ params["fc1_xt"]["w"] + params["fc1_xt"]["b"]
    xc = jnp.concatenate([xg, xt], axis=1)
    h1 = jnp.maximum(xc @ params["fc1"]["w"] + params["fc1"]["b"], 0.0)
    h2 = jnp.maximum(h1 @ params["fc2"]["w"] + params["fc2"]["b"], 0.0)
    return h2 @ params["out"]["w"] + params["out"]["b"]


# ---------------------------------- main --------------------------------------

if __name__ == "__main__":
    key = jax.random.PRNGKey(0)
    k_par, k_x, k_tgt = jax.random.split(key, 3)

    params = add_inference_tables(init_params(k_par))

    # Two small molecular graphs of 8 nodes each (bidirectional ring edges).
    num_graphs = 2
    nodes_per_graph = 8
    n_nodes = num_graphs * nodes_per_graph

    x = jax.random.normal(k_x, (n_nodes, NUM_FEATURES_XD), jnp.float32)

    srcs, dsts = [], []
    for g in range(num_graphs):
        base = g * nodes_per_graph
        s = jnp.arange(base, base + nodes_per_graph)
        d = jnp.roll(s, -1)
        srcs += [s, d]
        dsts += [d, s]
    edge_index = jnp.stack([jnp.concatenate(srcs),
                            jnp.concatenate(dsts)]).astype(jnp.int32)

    batch = jnp.repeat(jnp.arange(num_graphs, dtype=jnp.int32), nodes_per_graph)
    target = jax.random.randint(k_tgt, (num_graphs, SEQ_LEN), 0, VOCAB,
                                dtype=jnp.int32)

    out = ginprotemb_forward(params, x, edge_index, batch, target, num_graphs)
    out = jax.block_until_ready(out)

    ref = reference_forward(params, x, edge_index, batch, target, num_graphs)
    assert out.shape == (num_graphs, 1), out.shape
    assert jnp.allclose(out, ref, rtol=1e-2, atol=1e-2), (out, ref)

    print("KERNEL_OK")
</pallas_src>

<mosaic_0001>
module attributes {stable_mosaic.version = 11 : i64} {
  func.func @fused_kernel(%arg0: i32, %arg1: memref<2x6400xbf16, #tpu.memory_space<vmem>>, %arg2: memref<6400x128xbf16, #tpu.memory_space<vmem>>, %arg3: memref<1x128xf32, #tpu.memory_space<vmem>>, %arg4: memref<16x78xf32, #tpu.memory_space<vmem>>, %arg5: memref<16x16xf32, #tpu.memory_space<vmem>>, %arg6: memref<2x16xf32, #tpu.memory_space<vmem>>, %arg7: memref<240x32xf32, #tpu.memory_space<vmem>>, %arg8: memref<16x32xf32, #tpu.memory_space<vmem>>, %arg9: memref<32x128xf32, #tpu.memory_space<vmem>>, %arg10: memref<1x128xf32, #tpu.memory_space<vmem>>, %arg11: memref<128x1024xf32, #tpu.memory_space<vmem>>, %arg12: memref<128x1024xf32, #tpu.memory_space<vmem>>, %arg13: memref<1x1024xf32, #tpu.memory_space<vmem>>, %arg14: memref<1024x256xf32, #tpu.memory_space<vmem>>, %arg15: memref<1x256xf32, #tpu.memory_space<vmem>>, %arg16: memref<256x1xf32, #tpu.memory_space<vmem>>, %arg17: memref<1x1xf32, #tpu.memory_space<vmem>>, %arg18: memref<2x1xf32, #tpu.memory_space<vmem>>, %arg19: memref<2x128xf32, #tpu.memory_space<vmem>>, %arg20: memref<2x128xf32, #tpu.memory_space<vmem>>) attributes {dimension_semantics = [#tpu.dimension_semantics<arbitrary>], iteration_bounds = array<i64: 5>, scalar_prefetch = 0 : i64, scratch_operands = 2 : i64, tpu.core_type = #tpu.core_type<tc>, window_params = [{transform_indices = @transform_0, window_bounds = array<i64: 2, 6400>}, {transform_indices = @transform_1, window_bounds = array<i64: 6400, 128>}, {pipeline_mode = #tpu.pipeline_mode<synchronous>, transform_indices = @transform_2, window_bounds = array<i64: 1, 128>}, {pipeline_mode = #tpu.pipeline_mode<synchronous>, transform_indices = @transform_3, window_bounds = array<i64: 16, 78>}, {pipeline_mode = #tpu.pipeline_mode<synchronous>, transform_indices = @transform_4, window_bounds = array<i64: 16, 16>}, {pipeline_mode = #tpu.pipeline_mode<synchronous>, transform_indices = @transform_5, window_bounds = array<i64: 2, 16>}, {pipeline_mode = #tpu.pipeline_mode<synchronous>, transform_indices = @transform_6, window_bounds = array<i64: 240, 32>}, {pipeline_mode = #tpu.pipeline_mode<synchronous>, transform_indices = @transform_7, window_bounds = array<i64: 16, 32>}, {pipeline_mode = #tpu.pipeline_mode<synchronous>, transform_indices = @transform_8, window_bounds = array<i64: 32, 128>}, {pipeline_mode = #tpu.pipeline_mode<synchronous>, transform_indices = @transform_9, window_bounds = array<i64: 1, 128>}, {pipeline_mode = #tpu.pipeline_mode<synchronous>, transform_indices = @transform_10, window_bounds = array<i64: 128, 1024>}, {pipeline_mode = #tpu.pipeline_mode<synchronous>, transform_indices = @transform_11, window_bounds = array<i64: 128, 1024>}, {pipeline_mode = #tpu.pipeline_mode<synchronous>, transform_indices = @transform_12, window_bounds = array<i64: 1, 1024>}, {pipeline_mode = #tpu.pipeline_mode<synchronous>, transform_indices = @transform_13, window_bounds = array<i64: 1024, 256>}, {pipeline_mode = #tpu.pipeline_mode<synchronous>, transform_indices = @transform_14, window_bounds = array<i64: 1, 256>}, {pipeline_mode = #tpu.pipeline_mode<synchronous>, transform_indices = @transform_15, window_bounds = array<i64: 256, 1>}, {pipeline_mode = #tpu.pipeline_mode<synchronous>, transform_indices = @transform_16, window_bounds = array<i64: 1, 1>}, {pipeline_mode = #tpu.pipeline_mode<synchronous>, transform_indices = @transform_17, window_bounds = array<i64: 2, 1>}]} {
    %c0_i32 = arith.constant 0 : i32
    %0 = arith.cmpi eq, %arg0, %c0_i32 : i32
    %1 = arith.extui %0 : i1 to i32
    %c0_i32_0 = arith.constant 0 : i32
    %2 = arith.cmpi ne, %1, %c0_i32_0 : i32
    scf.if %2 {
      %c0_9 = arith.constant 0 : index
      %c0_10 = arith.constant 0 : index
      %12 = vector.load %arg5[%c0_9, %c0_10] : memref<16x16xf32, #tpu.memory_space<vmem>>, vector<16x16xf32>
      %c0_11 = arith.constant 0 : index
      %c0_12 = arith.constant 0 : index
      %13 = vector.load %arg7[%c0_11, %c0_12] : memref<240x32xf32, #tpu.memory_space<vmem>>, vector<240x32xf32>
      %c0_13 = arith.constant 0 : index
      %c0_14 = arith.constant 0 : index
      %14 = vector.load %arg8[%c0_13, %c0_14] : memref<16x32xf32, #tpu.memory_space<vmem>>, vector<16x32xf32>
      %c0_15 = arith.constant 0 : index
      %c0_16 = arith.constant 0 : index
      %15 = vector.load %arg4[%c0_15, %c0_16] : memref<16x78xf32, #tpu.memory_space<vmem>>, vector<16x78xf32>
      %16 = vector.extract_strided_slice %13 {offsets = [0, 0], sizes = [78, 32], strides = [1, 1]} : vector<240x32xf32> to vector<78x32xf32>
      %17 = vector.extract_strided_slice %14 {offsets = [0, 0], sizes = [1, 32], strides = [1, 1]} : vector<16x32xf32> to vector<1x32xf32>
      %18 = vector.extract_strided_slice %13 {offsets = [80, 0], sizes = [32, 32], strides = [1, 1]} : vector<240x32xf32> to vector<32x32xf32>
      %19 = vector.extract_strided_slice %14 {offsets = [1, 0], sizes = [1, 32], strides = [1, 1]} : vector<16x32xf32> to vector<1x32xf32>
      %20 = vector.extract_strided_slice %14 {offsets = [2, 0], sizes = [1, 32], strides = [1, 1]} : vector<16x32xf32> to vector<1x32xf32>
      %21 = vector.extract_strided_slice %14 {offsets = [3, 0], sizes = [1, 32], strides = [1, 1]} : vector<16x32xf32> to vector<1x32xf32>
      %cst_17 = arith.constant dense<0.000000e+00> : vector<16x78xf32>
      %22 = tpu.matmul %12, %15, %cst_17 {dimension_numbers = #tpu.dot_dimension_numbers<[1], [0], [0], [1], [0, 0, 1, 1], [], []>} : vector<16x16xf32>, vector<16x78xf32>, vector<16x78xf32> -> vector<16x78xf32>
      %23 = arith.addf %15, %22 : vector<16x78xf32>
      %cst_18 = arith.constant dense<0.000000e+00> : vector<16x32xf32>
      %24 = tpu.matmul %23, %16, %cst_18 {dimension_numbers = #tpu.dot_dimension_numbers<[1], [0], [0], [1], [0, 0, 1, 1], [], []>} : vector<16x78xf32>, vector<78x32xf32>, vector<16x32xf32> -> vector<16x32xf32>
      %25 = vector.broadcast %17 : vector<1x32xf32> to vector<16x32xf32>
      %26 = arith.addf %24, %25 : vector<16x32xf32>
      %cst_19 = arith.constant 0.000000e+00 : f32
      %27 = vector.broadcast %cst_19 : f32 to vector<16x32xf32>
      %28 = arith.maximumf %26, %27 : vector<16x32xf32>
      %cst_20 = arith.constant dense<0.000000e+00> : vector<16x32xf32>
      %29 = tpu.matmul %28, %18, %cst_20 {dimension_numbers = #tpu.dot_dimension_numbers<[1], [0], [0], [1], [0, 0, 1, 1], [], []>} : vector<16x32xf32>, vector<32x32xf32>, vector<16x32xf32> -> vector<16x32xf32>
      %30 = vector.broadcast %19 : vector<1x32xf32> to vector<16x32xf32>
      %31 = arith.addf %29, %30 : vector<16x32xf32>
      %cst_21 = arith.constant 0.000000e+00 : f32
      %32 = vector.broadcast %cst_21 : f32 to vector<16x32xf32>
      %33 = arith.maximumf %31, %32 : vector<16x32xf32>
      %34 = vector.broadcast %20 : vector<1x32xf32> to vector<16x32xf32>
      %35 = arith.mulf %33, %34 : vector<16x32xf32>
      %36 = vector.broadcast %21 : vector<1x32xf32> to vector<16x32xf32>
      %37 = arith.addf %35, %36 : vector<16x32xf32>
      %38 = vector.extract_strided_slice %13 {offsets = [112, 0], sizes = [32, 32], strides = [1, 1]} : vector<240x32xf32> to vector<32x32xf32>
      %39 = vector.extract_strided_slice %14 {offsets = [4, 0], sizes = [1, 32], strides = [1, 1]} : vector<16x32xf32> to vector<1x32xf32>
      %40 = vector.extract_strided_slice %13 {offsets = [144, 0], sizes = [32, 32], strides = [1, 1]} : vector<240x32xf32> to vector<32x32xf32>
      %41 = vector.extract_strided_slice %14 {offsets = [5, 0], sizes = [1, 32], strides = [1, 1]} : vector<16x32xf32> to vector<1x32xf32>
      %42 = vector.extract_strided_slice %14 {offsets = [6, 0], sizes = [1, 32], strides = [1, 1]} : vector<16x32xf32> to vector<1x32xf32>
      %43 = vector.extract_strided_slice %14 {offsets = [7, 0], sizes = [1, 32], strides = [1, 1]} : vector<16x32xf32> to vector<1x32xf32>
      %cst_22 = arith.constant dense<0.000000e+00> : vector<16x32xf32>
      %44 = tpu.matmul %12, %37, %cst_22 {dimension_numbers = #tpu.dot_dimension_numbers<[1], [0], [0], [1], [0, 0, 1, 1], [], []>} : vector<16x16xf32>, vector<16x32xf32>, vector<16x32xf32> -> vector<16x32xf32>
      %45 = arith.addf %37, %44 : vector<16x32xf32>
      %cst_23 = arith.constant dense<0.000000e+00> : vector<16x32xf32>
      %46 = tpu.matmul %45, %38, %cst_23 {dimension_numbers = #tpu.dot_dimension_numbers<[1], [0], [0], [1], [0, 0, 1, 1], [], []>} : vector<16x32xf32>, vector<32x32xf32>, vector<16x32xf32> -> vector<16x32xf32>
      %47 = vector.broadcast %39 : vector<1x32xf32> to vector<16x32xf32>
      %48 = arith.addf %46, %47 : vector<16x32xf32>
      %cst_24 = arith.constant 0.000000e+00 : f32
      %49 = vector.broadcast %cst_24 : f32 to vector<16x32xf32>
      %50 = arith.maximumf %48, %49 : vector<16x32xf32>
      %cst_25 = arith.constant dense<0.000000e+00> : vector<16x32xf32>
      %51 = tpu.matmul %50, %40, %cst_25 {dimension_numbers = #tpu.dot_dimension_numbers<[1], [0], [0], [1], [0, 0, 1, 1], [], []>} : vector<16x32xf32>, vector<32x32xf32>, vector<16x32xf32> -> vector<16x32xf32>
      %52 = vector.broadcast %41 : vector<1x32xf32> to vector<16x32xf32>
      %53 = arith.addf %51, %52 : vector<16x32xf32>
      %cst_26 = arith.constant 0.000000e+00 : f32
      %54 = vector.broadcast %cst_26 : f32 to vector<16x32xf32>
      %55 = arith.maximumf %53, %54 : vector<16x32xf32>
      %56 = vector.broadcast %42 : vector<1x32xf32> to vector<16x32xf32>
      %57 = arith.mulf %55, %56 : vector<16x32xf32>
      %58 = vector.broadcast %43 : vector<1x32xf32> to vector<16x32xf32>
      %59 = arith.addf %57, %58 : vector<16x32xf32>
      %60 = vector.extract_strided_slice %13 {offsets = [176, 0], sizes = [32, 32], strides = [1, 1]} : vector<240x32xf32> to vector<32x32xf32>
      %61 = vector.extract_strided_slice %14 {offsets = [8, 0], sizes = [1, 32], strides = [1, 1]} : vector<16x32xf32> to vector<1x32xf32>
      %62 = vector.extract_strided_slice %13 {offsets = [208, 0], sizes = [32, 32], strides = [1, 1]} : vector<240x32xf32> to vector<32x32xf32>
      %63 = vector.extract_strided_slice %14 {offsets = [9, 0], sizes = [1, 32], strides = [1, 1]} : vector<16x32xf32> to vector<1x32xf32>
      %64 = vector.extract_strided_slice %14 {offsets = [10, 0], sizes = [1, 32], strides = [1, 1]} : vector<16x32xf32> to vector<1x32xf32>
      %65 = vector.extract_strided_slice %14 {offsets = [11, 0], sizes = [1, 32], strides = [1, 1]} : vector<16x32xf32> to vector<1x32xf32>
      %cst_27 = arith.constant dense<0.000000e+00> : vector<16x32xf32>
      %66 = tpu.matmul %12, %59, %cst_27 {dimension_numbers = #tpu.dot_dimension_numbers<[1], [0], [0], [1], [0, 0, 1, 1], [], []>} : vector<16x16xf32>, vector<16x32xf32>, vector<16x32xf32> -> vector<16x32xf32>
      %67 = arith.addf %59, %66 : vector<16x32xf32>
      %cst_28 = arith.constant dense<0.000000e+00> : vector<16x32xf32>
      %68 = tpu.matmul %67, %60, %cst_28 {dimension_numbers = #tpu.dot_dimension_numbers<[1], [0], [0], [1], [0, 0, 1, 1], [], []>} : vector<16x32xf32>, vector<32x32xf32>, vector<16x32xf32> -> vector<16x32xf32>
      %69 = vector.broadcast %61 : vector<1x32xf32> to vector<16x32xf32>
      %70 = arith.addf %68, %69 : vector<16x32xf32>
      %cst_29 = arith.constant 0.000000e+00 : f32
      %71 = vector.broadcast %cst_29 : f32 to vector<16x32xf32>
      %72 = arith.maximumf %70, %71 : vector<16x32xf32>
      %cst_30 = arith.constant dense<0.000000e+00> : vector<16x32xf32>
      %73 = tpu.matmul %72, %62, %cst_30 {dimension_numbers = #tpu.dot_dimension_numbers<[1], [0], [0], [1], [0, 0, 1, 1], [], []>} : vector<16x32xf32>, vector<32x32xf32>, vector<16x32xf32> -> vector<16x32xf32>
      %74 = vector.broadcast %63 : vector<1x32xf32> to vector<16x32xf32>
      %75 = arith.addf %73, %74 : vector<16x32xf32>
      %cst_31 = arith.constant 0.000000e+00 : f32
      %76 = vector.broadcast %cst_31 : f32 to vector<16x32xf32>
      %77 = arith.maximumf %75, %76 : vector<16x32xf32>
      %78 = vector.broadcast %64 : vector<1x32xf32> to vector<16x32xf32>
      %79 = arith.mulf %77, %78 : vector<16x32xf32>
      %80 = vector.broadcast %65 : vector<1x32xf32> to vector<16x32xf32>
      %81 = arith.addf %79, %80 : vector<16x32xf32>
      %c0_32 = arith.constant 0 : index
      %c0_33 = arith.constant 0 : index
      %82 = vector.load %arg6[%c0_32, %c0_33] : memref<2x16xf32, #tpu.memory_space<vmem>>, vector<2x16xf32>
      %cst_34 = arith.constant dense<0.000000e+00> : vector<2x32xf32>
      %83 = tpu.matmul %82, %81, %cst_34 {dimension_numbers = #tpu.dot_dimension_numbers<[1], [0], [0], [1], [0, 0, 1, 1], [], []>} : vector<2x16xf32>, vector<16x32xf32>, vector<2x32xf32> -> vector<2x32xf32>
      %c0_35 = arith.constant 0 : index
      %c0_36 = arith.constant 0 : index
      %84 = vector.load %arg9[%c0_35, %c0_36] : memref<32x128xf32, #tpu.memory_space<vmem>>, vector<32x128xf32>
      %cst_37 = arith.constant dense<0.000000e+00> : vector<2x128xf32>
      %85 = tpu.matmul %83, %84, %cst_37 {dimension_numbers = #tpu.dot_dimension_numbers<[1], [0], [0], [1], [0, 0, 1, 1], [], []>} : vector<2x32xf32>, vector<32x128xf32>, vector<2x128xf32> -> vector<2x128xf32>
      %c0_38 = arith.constant 0 : index
      %c0_39 = arith.constant 0 : index
      %86 = vector.load %arg10[%c0_38, %c0_39] : memref<1x128xf32, #tpu.memory_space<vmem>>, vector<1x128xf32>
      %87 = vector.broadcast %86 : vector<1x128xf32> to vector<2x128xf32>
      %88 = arith.addf %85, %87 : vector<2x128xf32>
      %cst_40 = arith.constant 0.000000e+00 : f32
      %89 = vector.broadcast %cst_40 : f32 to vector<2x128xf32>
      %90 = arith.maximumf %88, %89 : vector<2x128xf32>
      %c0_41 = arith.constant 0 : index
      %c0_42 = arith.constant 0 : index
      %91 = vector.load %arg19[%c0_41, %c0_42] : memref<2x128xf32, #tpu.memory_space<vmem>>, vector<2x128xf32>
      tpu.vector_store %arg19[%c0_41, %c0_42], %90 {strides = array<i32>} : memref<2x128xf32, #tpu.memory_space<vmem>>, vector<2x128xf32>,
      %cst_43 = arith.constant 0.000000e+00 : f32
      %92 = vector.broadcast %cst_43 : f32 to vector<2x128xf32>
      %c0_44 = arith.constant 0 : index
      %c0_45 = arith.constant 0 : index
      %93 = vector.load %arg3[%c0_44, %c0_45] : memref<1x128xf32, #tpu.memory_space<vmem>>, vector<1x128xf32>
      %94 = vector.broadcast %93 : vector<1x128xf32> to vector<2x128xf32>
      %95 = arith.addf %92, %94 : vector<2x128xf32>
      %c0_46 = arith.constant 0 : index
      %c0_47 = arith.constant 0 : index
      %96 = vector.load %arg20[%c0_46, %c0_47] : memref<2x128xf32, #tpu.memory_space<vmem>>, vector<2x128xf32>
      tpu.vector_store %arg20[%c0_46, %c0_47], %95 {strides = array<i32>} : memref<2x128xf32, #tpu.memory_space<vmem>>, vector<2x128xf32>,
    } else {
    }
    %c0 = arith.constant 0 : index
    %c0_1 = arith.constant 0 : index
    %3 = vector.load %arg20[%c0, %c0_1] : memref<2x128xf32, #tpu.memory_space<vmem>>, vector<2x128xf32>
    %c0_2 = arith.constant 0 : index
    %c0_3 = arith.constant 0 : index
    %4 = vector.load %arg1[%c0_2, %c0_3] : memref<2x6400xbf16, #tpu.memory_space<vmem>>, vector<2x6400xbf16>
    %c0_4 = arith.constant 0 : index
    %c0_5 = arith.constant 0 : index
    %5 = vector.load %arg2[%c0_4, %c0_5] : memref<6400x128xbf16, #tpu.memory_space<vmem>>, vector<6400x128xbf16>
    %cst = arith.constant dense<0.000000e+00> : vector<2x128xf32>
    %6 = tpu.matmul %4, %5, %cst {dimension_numbers = #tpu.dot_dimension_numbers<[1], [0], [0], [1], [0, 0, 1, 1], [], []>} : vector<2x6400xbf16>, vector<6400x128xbf16>, vector<2x128xf32> -> vector<2x128xf32>
    %7 = arith.addf %3, %6 : vector<2x128xf32>
    %c0_6 = arith.constant 0 : index
    %c0_7 = arith.constant 0 : index
    %8 = vector.load %arg20[%c0_6, %c0_7] : memref<2x128xf32, #tpu.memory_space<vmem>>, vector<2x128xf32>
    tpu.vector_store %arg20[%c0_6, %c0_7], %7 {strides = array<i32>} : memref<2x128xf32, #tpu.memory_space<vmem>>, vector<2x128xf32>,
    %c4_i32 = arith.constant 4 : i32
    %9 = arith.cmpi eq, %arg0, %c4_i32 : i32
    %10 = arith.extui %9 : i1 to i32
    %c0_i32_8 = arith.constant 0 : i32
    %11 = arith.cmpi ne, %10, %c0_i32_8 : i32
    scf.if %11 {
      %c0_9 = arith.constant 0 : index
      %c0_10 = arith.constant 0 : index
      %12 = vector.load %arg20[%c0_9, %c0_10] : memref<2x128xf32, #tpu.memory_space<vmem>>, vector<2x128xf32>
      %c0_11 = arith.constant 0 : index
      %c0_12 = arith.constant 0 : index
      %13 = vector.load %arg19[%c0_11, %c0_12] : memref<2x128xf32, #tpu.memory_space<vmem>>, vector<2x128xf32>
      %c0_13 = arith.constant 0 : index
      %c0_14 = arith.constant 0 : index
      %14 = vector.load %arg11[%c0_13, %c0_14] : memref<128x1024xf32, #tpu.memory_space<vmem>>, vector<128x1024xf32>
      %cst_15 = arith.constant dense<0.000000e+00> : vector<2x1024xf32>
      %15 = tpu.matmul %13, %14, %cst_15 {dimension_numbers = #tpu.dot_dimension_numbers<[1], [0], [0], [1], [0, 0, 1, 1], [], []>} : vector<2x128xf32>, vector<128x1024xf32>, vector<2x1024xf32> -> vector<2x1024xf32>
      %c0_16 = arith.constant 0 : index
      %c0_17 = arith.constant 0 : index
      %16 = vector.load %arg12[%c0_16, %c0_17] : memref<128x1024xf32, #tpu.memory_space<vmem>>, vector<128x1024xf32>
      %cst_18 = arith.constant dense<0.000000e+00> : vector<2x1024xf32>
      %17 = tpu.matmul %12, %16, %cst_18 {dimension_numbers = #tpu.dot_dimension_numbers<[1], [0], [0], [1], [0, 0, 1, 1], [], []>} : vector<2x128xf32>, vector<128x1024xf32>, vector<2x1024xf32> -> vector<2x1024xf32>
      %18 = arith.addf %15, %17 : vector<2x1024xf32>
      %c0_19 = arith.constant 0 : index
      %c0_20 = arith.constant 0 : index
      %19 = vector.load %arg13[%c0_19, %c0_20] : memref<1x1024xf32, #tpu.memory_space<vmem>>, vector<1x1024xf32>
      %20 = vector.broadcast %19 : vector<1x1024xf32> to vector<2x1024xf32>
      %21 = arith.addf %18, %20 : vector<2x1024xf32>
      %cst_21 = arith.constant 0.000000e+00 : f32
      %22 = vector.broadcast %cst_21 : f32 to vector<2x1024xf32>
      %23 = arith.maximumf %21, %22 : vector<2x1024xf32>
      %c0_22 = arith.constant 0 : index
      %c0_23 = arith.constant 0 : index
      %24 = vector.load %arg14[%c0_22, %c0_23] : memref<1024x256xf32, #tpu.memory_space<vmem>>, vector<1024x256xf32>
      %cst_24 = arith.constant dense<0.000000e+00> : vector<2x256xf32>
      %25 = tpu.matmul %23, %24, %cst_24 {dimension_numbers = #tpu.dot_dimension_numbers<[1], [0], [0], [1], [0, 0, 1, 1], [], []>} : vector<2x1024xf32>, vector<1024x256xf32>, vector<2x256xf32> -> vector<2x256xf32>
      %c0_25 = arith.constant 0 : index
      %c0_26 = arith.constant 0 : index
      %26 = vector.load %arg15[%c0_25, %c0_26] : memref<1x256xf32, #tpu.memory_space<vmem>>, vector<1x256xf32>
      %27 = vector.broadcast %26 : vector<1x256xf32> to vector<2x256xf32>
      %28 = arith.addf %25, %27 : vector<2x256xf32>
      %cst_27 = arith.constant 0.000000e+00 : f32
      %29 = vector.broadcast %cst_27 : f32 to vector<2x256xf32>
      %30 = arith.maximumf %28, %29 : vector<2x256xf32>
      %c0_28 = arith.constant 0 : index
      %c0_29 = arith.constant 0 : index
      %31 = vector.load %arg16[%c0_28, %c0_29] : memref<256x1xf32, #tpu.memory_space<vmem>>, vector<256x1xf32>
      %cst_30 = arith.constant dense<0.000000e+00> : vector<2x1xf32>
      %32 = tpu.matmul %30, %31, %cst_30 {dimension_numbers = #tpu.dot_dimension_numbers<[1], [0], [0], [1], [0, 0, 1, 1], [], []>} : vector<2x256xf32>, vector<256x1xf32>, vector<2x1xf32> -> vector<2x1xf32>
      %c0_31 = arith.constant 0 : index
      %c0_32 = arith.constant 0 : index
      %33 = vector.load %arg17[%c0_31, %c0_32] : memref<1x1xf32, #tpu.memory_space<vmem>>, vector<1x1xf32>
      %34 = vector.broadcast %33 : vector<1x1xf32> to vector<2x1xf32>
      %35 = arith.addf %32, %34 : vector<2x1xf32>
      %c0_33 = arith.constant 0 : index
      %c0_34 = arith.constant 0 : index
      %36 = vector.load %arg18[%c0_33, %c0_34] : memref<2x1xf32, #tpu.memory_space<vmem>>, vector<2x1xf32>
      tpu.vector_store %arg18[%c0_33, %c0_34], %35 {strides = array<i32>} : memref<2x1xf32, #tpu.memory_space<vmem>>, vector<2x1xf32>,
    } else {
    }
    return
  }
  func.func @transform_0(%arg0: i32) -> (i32, i32) {
    %c0_i32 = arith.constant 0 : i32
    %c0_i32_0 = arith.constant 0 : i32
    return %c0_i32, %arg0 : i32, i32
  }
  func.func @transform_1(%arg0: i32) -> (i32, i32) {
    %c0_i32 = arith.constant 0 : i32
    %c0_i32_0 = arith.constant 0 : i32
    return %arg0, %c0_i32 : i32, i32
  }
  func.func @transform_2(%arg0: i32) -> (i32, i32) {
    %c0_i32 = arith.constant 0 : i32
    %c0_i32_0 = arith.constant 0 : i32
    %c0_i32_1 = arith.constant 0 : i32
    return %c0_i32, %c0_i32_0 : i32, i32
  }
  func.func @transform_3(%arg0: i32) -> (i32, i32) {
    %c0_i32 = arith.constant 0 : i32
    %c0_i32_0 = arith.constant 0 : i32
    %c0_i32_1 = arith.constant 0 : i32
    return %c0_i32, %c0_i32_0 : i32, i32
  }
  func.func @transform_4(%arg0: i32) -> (i32, i32) {
    %c0_i32 = arith.constant 0 : i32
    %c0_i32_0 = arith.constant 0 : i32
    %c0_i32_1 = arith.constant 0 : i32
    return %c0_i32, %c0_i32_0 : i32, i32
  }
  func.func @transform_5(%arg0: i32) -> (i32, i32) {
    %c0_i32 = arith.constant 0 : i32
    %c0_i32_0 = arith.constant 0 : i32
    %c0_i32_1 = arith.constant 0 : i32
    return %c0_i32, %c0_i32_0 : i32, i32
  }
  func.func @transform_6(%arg0: i32) -> (i32, i32) {
    %c0_i32 = arith.constant 0 : i32
    %c0_i32_0 = arith.constant 0 : i32
    %c0_i32_1 = arith.constant 0 : i32
    return %c0_i32, %c0_i32_0 : i32, i32
  }
  func.func @transform_7(%arg0: i32) -> (i32, i32) {
    %c0_i32 = arith.constant 0 : i32
    %c0_i32_0 = arith.constant 0 : i32
    %c0_i32_1 = arith.constant 0 : i32
    return %c0_i32, %c0_i32_0 : i32, i32
  }
  func.func @transform_8(%arg0: i32) -> (i32, i32) {
    %c0_i32 = arith.constant 0 : i32
    %c0_i32_0 = arith.constant 0 : i32
    %c0_i32_1 = arith.constant 0 : i32
    return %c0_i32, %c0_i32_0 : i32, i32
  }
  func.func @transform_9(%arg0: i32) -> (i32, i32) {
    %c0_i32 = arith.constant 0 : i32
    %c0_i32_0 = arith.constant 0 : i32
    %c0_i32_1 = arith.constant 0 : i32
    return %c0_i32, %c0_i32_0 : i32, i32
  }
  func.func @transform_10(%arg0: i32) -> (i32, i32) {
    %c0_i32 = arith.constant 0 : i32
    %c0_i32_0 = arith.constant 0 : i32
    %c0_i32_1 = arith.constant 0 : i32
    return %c0_i32, %c0_i32_0 : i32, i32
  }
  func.func @transform_11(%arg0: i32) -> (i32, i32) {
    %c0_i32 = arith.constant 0 : i32
    %c0_i32_0 = arith.constant 0 : i32
    %c0_i32_1 = arith.constant 0 : i32
    return %c0_i32, %c0_i32_0 : i32, i32
  }
  func.func @transform_12(%arg0: i32) -> (i32, i32) {
    %c0_i32 = arith.constant 0 : i32
    %c0_i32_0 = arith.constant 0 : i32
    %c0_i32_1 = arith.constant 0 : i32
    return %c0_i32, %c0_i32_0 : i32, i32
  }
  func.func @transform_13(%arg0: i32) -> (i32, i32) {
    %c0_i32 = arith.constant 0 : i32
    %c0_i32_0 = arith.constant 0 : i32
    %c0_i32_1 = arith.constant 0 : i32
    return %c0_i32, %c0_i32_0 : i32, i32
  }
  func.func @transform_14(%arg0: i32) -> (i32, i32) {
    %c0_i32 = arith.constant 0 : i32
    %c0_i32_0 = arith.constant 0 : i32
    %c0_i32_1 = arith.constant 0 : i32
    return %c0_i32, %c0_i32_0 : i32, i32
  }
  func.func @transform_15(%arg0: i32) -> (i32, i32) {
    %c0_i32 = arith.constant 0 : i32
    %c0_i32_0 = arith.constant 0 : i32
    %c0_i32_1 = arith.constant 0 : i32
    return %c0_i32, %c0_i32_0 : i32, i32
  }
  func.func @transform_16(%arg0: i32) -> (i32, i32) {
    %c0_i32 = arith.constant 0 : i32
    %c0_i32_0 = arith.constant 0 : i32
    %c0_i32_1 = arith.constant 0 : i32
    return %c0_i32, %c0_i32_0 : i32, i32
  }
  func.func @transform_17(%arg0: i32) -> (i32, i32) {
    %c0_i32 = arith.constant 0 : i32
    %c0_i32_0 = arith.constant 0 : i32
    %c0_i32_1 = arith.constant 0 : i32
    return %c0_i32, %c0_i32_0 : i32, i32
  }
}

</mosaic_0001>

<llo_original>
// kernel: tpu_custom_call.1
$region0: #{tpu_custom_call.1}
  #allocation0 [shape = 'u32[]', space=smem, size = 0x4, offset = 0x4, fixed_abs, tag = 'smem constant byte address 0x4 - core index']
  #allocation1 [shape = 'u32[144,128]{1,0:T(1,128)}', space=vmem, size = 0x12000, scoped, tag = 'internal scratch']
  #allocation2 [shape = 'f32[2,128]{1,0:T(2,128)}', space=vmem, size = 0x400, scoped, tag = 'scratch operand']
  #allocation3 [shape = 'f32[2,128]{1,0:T(2,128)}', space=vmem, size = 0x400, scoped, tag = 'scratch operand']
  #allocation4 [shape = 'f32[1,1]{1,0:T(1,128)S(1)}', space=vmem, size = 0x200, scoped, tag = 'scoped memory for tpu_custom_call.1']
  %s0 = inlined_call_operand.hbm [shape: bf16[2,32000], index: 0, kind: input, shape index: {}]
  %s1 = inlined_call_operand.hbm [shape: bf16[32000,128], index: 1, kind: input, shape index: {}]
  %s2 = inlined_call_operand.hbm [shape: f32[1,128], index: 2, kind: input, shape index: {}]
  %s3 = inlined_call_operand.hbm [shape: f32[16,78], index: 3, kind: input, shape index: {}]
  %s4 = inlined_call_operand.hbm [shape: f32[16,16], index: 4, kind: input, shape index: {}]
  %s5 = inlined_call_operand.hbm [shape: f32[2,16], index: 5, kind: input, shape index: {}]
  %s6 = inlined_call_operand.vmem [shape: f32[240,32], index: 6, kind: input, shape index: {}]
  %s7 = inlined_call_operand.hbm [shape: f32[16,32], index: 7, kind: input, shape index: {}]
  %s8 = inlined_call_operand.hbm [shape: f32[32,128], index: 8, kind: input, shape index: {}]
  %s9 = inlined_call_operand.hbm [shape: f32[1,128], index: 9, kind: input, shape index: {}]
  %s10 = inlined_call_operand.hbm [shape: f32[128,1024], index: 10, kind: input, shape index: {}]
  %s11 = inlined_call_operand.hbm [shape: f32[128,1024], index: 11, kind: input, shape index: {}]
  %s12 = inlined_call_operand.hbm [shape: f32[1,1024], index: 12, kind: input, shape index: {}]
  %s13 = inlined_call_operand.hbm [shape: f32[1024,256], index: 13, kind: input, shape index: {}]
  %s14 = inlined_call_operand.hbm [shape: f32[1,256], index: 14, kind: input, shape index: {}]
  %s15 = inlined_call_operand.vmem [shape: f32[256,1], index: 15, kind: input, shape index: {}]
  %s16 = inlined_call_operand.<no memory space> [shape: f32[1,1], index: 16, kind: input, shape index: {}]
  %s17 = inlined_call_operand.vmem [shape: f32[2,1], index: 17, kind: output, shape index: {}]
  %s18 = sld [smem:[#allocation0]]
  $region165: #{tpu_custom_call.1} parent=0
    _
  %s20 = ssub.s32 1, %s18
  %s21 = scalar_select 0, %s20, %s18
  %v22 = vstv %s16
  %23 = vst [vmem:[#allocation4] sm:$0x1] %v22
  $region1: #{tpu_custom_call.1} parent=0
    #allocation5 [shape = 'u8[51200]{0}', space=vmem, size = 0xc800, scoped, tag = 'input window, operand 0']
    #allocation6 [shape = 's32[2]{0}', space=sflag, size = 0x8, scoped, tag = 'scoped memory for tpu_custom_call.1']
    #allocation7 [shape = 'u8[3276800]{0}', space=vmem, size = 0x320000, scoped, tag = 'input window, operand 1']
    #allocation8 [shape = 's32[2]{0}', space=sflag, size = 0x8, scoped, tag = 'scoped memory for tpu_custom_call.1']
    #allocation9 [shape = 'u8[512]{0}', space=vmem, size = 0x400, scoped, tag = 'input window, operand 2, single buffered']
    #allocation10 [shape = 'u8[8192]{0}', space=vmem, size = 0x2000, scoped, tag = 'input window, operand 3, single buffered']
    #allocation11 [shape = 's32[1]{0}', space=sflag, size = 0x4, scoped, tag = 'scoped memory for tpu_custom_call.1']
    #allocation12 [shape = 'u8[8192]{0}', space=vmem, size = 0x2000, scoped, tag = 'input window, operand 4, single buffered']
    #allocation13 [shape = 'u8[1024]{0}', space=vmem, size = 0x400, scoped, tag = 'input window, operand 5, single buffered']
    #allocation14 [shape = 's32[1]{0}', space=sflag, size = 0x4, scoped, tag = 'scoped memory for tpu_custom_call.1']
    #allocation15 [shape = 'u8[8192]{0}', space=vmem, size = 0x2000, scoped, tag = 'input window, operand 7, single buffered']
    #allocation16 [shape = 'u8[16384]{0}', space=vmem, size = 0x4000, scoped, tag = 'input window, operand 8, single buffered']
    #allocation17 [shape = 's32[1]{0}', space=sflag, size = 0x4, scoped, tag = 'scoped memory for tpu_custom_call.1']
    #allocation18 [shape = 'u8[512]{0}', space=vmem, size = 0x400, scoped, tag = 'input window, operand 9, single buffered']
    #allocation19 [shape = 'u8[524288]{0}', space=vmem, size = 0x80000, scoped, tag = 'input window, operand 10, single buffered']
    #allocation20 [shape = 's32[1]{0}', space=sflag, size = 0x4, scoped, tag = 'scoped memory for tpu_custom_call.1']
    #allocation21 [shape = 'u8[524288]{0}', space=vmem, size = 0x80000, scoped, tag = 'input window, operand 11, single buffered']
    #allocation22 [shape = 'u8[4096]{0}', space=vmem, size = 0x1000, scoped, tag = 'input window, operand 12, single buffered']
    #allocation23 [shape = 's32[1]{0}', space=sflag, size = 0x4, scoped, tag = 'scoped memory for tpu_custom_call.1']
    #allocation24 [shape = 'u8[1048576]{0}', space=vmem, size = 0x100000, scoped, tag = 'input window, operand 13, single buffered']
    #allocation25 [shape = 'u8[1024]{0}', space=vmem, size = 0x400, scoped, tag = 'input window, operand 14, single buffered']
    #allocation26 [shape = 's32[1]{0}', space=sflag, size = 0x4, scoped, tag = 'scoped memory for tpu_custom_call.1']
    %24 = vsyncpa [#allocation6], 0
    %s25 = scalar_lea.sflag [#allocation6], 1
    %26 = vsyncpa %s25, 0
    %27 = vsyncpa [#allocation8], 0
    %s28 = scalar_lea.sflag [#allocation8], 1
    %29 = vsyncpa %s28, 0
    %30 = vsyncpa [#allocation11], 0
    %31 = vsyncpa [#allocation14], 0
    %32 = vsyncpa [#allocation17], 0
    %33 = vsyncpa [#allocation20], 0
    %34 = vsyncpa [#allocation23], 0
    %35 = vsyncpa [#allocation26], 0
    loop: start=0, step=1, limit=7
    $region2: #{tpu_custom_call.1} parent=1 // loop_pre_header
      _
    $region3: #{tpu_custom_call.1} parent=1 // loop_header
      %s37 = sphi 0, %s41
      %p38 = scmp.ge.s32.totalorder %s37, 7
      %s47 = sphi 0, %s49
      %s50 = sphi 0, %s47
      %s51 = sphi 0, %s50
      %s67 = sphi 0, %s51
      %s73 = sphi 0, %s75
      %s76 = sphi 0, %s73
      %s77 = sphi 0, %s76
      %s93 = sphi 0, %s77
      %s97 = sphi 0, %s97
      %s99 = sphi 0, %s97
      %s100 = sphi 0, %s99
      %s114 = sphi 0, %s100
      %s118 = sphi 0, %s118
      %s120 = sphi 0, %s118
      %s121 = sphi 0, %s120
      %s135 = sphi 0, %s121
      %s139 = sphi 0, %s139
      %s141 = sphi 0, %s139
      %s142 = sphi 0, %s141
      %s156 = sphi 0, %s142
      %s160 = sphi 0, %s160
      %s162 = sphi 0, %s160
      %s163 = sphi 0, %s162
      %s177 = sphi 0, %s163
      %s181 = sphi 0, %s181
      %s183 = sphi 0, %s181
      %s184 = sphi 0, %s183
      %s198 = sphi 0, %s184
      %s202 = sphi 0, %s202
      %s204 = sphi 0, %s202
      %s205 = sphi 0, %s204
      %s219 = sphi 0, %s205
      %s223 = sphi 0, %s223
      %s225 = sphi 0, %s223
      %s226 = sphi 0, %s225
      %s240 = sphi 0, %s226
      %s244 = sphi 0, %s244
      %s246 = sphi 0, %s244
      %s247 = sphi 0, %s246
      %s261 = sphi 0, %s247
      %s265 = sphi 0, %s265
      %s267 = sphi 0, %s265
      %s268 = sphi 0, %s267
      %s282 = sphi 0, %s268
      %s286 = sphi 0, %s286
      %s288 = sphi 0, %s286
      %s289 = sphi 0, %s288
      %s303 = sphi 0, %s289
      %s307 = sphi 0, %s307
      %s309 = sphi 0, %s307
      %s310 = sphi 0, %s309
      %s324 = sphi 0, %s310
      %s328 = sphi 0, %s328
      %s330 = sphi 0, %s328
      %s331 = sphi 0, %s330
      %s345 = sphi 0, %s331
      %s349 = sphi 0, %s349
      %s351 = sphi 0, %s349
      %s352 = sphi 0, %s351
      %s366 = sphi 0, %s352
      %s370 = sphi 0, %s370
      %s372 = sphi 0, %s370
      %s373 = sphi 0, %s372
      %s387 = sphi 0, %s373
      %s391 = sphi 0, %s391
      %s393 = sphi 0, %s391
      %s394 = sphi 0, %s393
      %s408 = sphi 0, %s394
      %s412 = sphi 0, %s412
      %s414 = sphi 0, %s412
      %s415 = sphi 0, %s414
      %s429 = sphi 0, %s415
    $region4: #{tpu_custom_call.1} parent=1 // loop_header_branch
      %40 = sbr.rel (%p38) target = $region8
    $region5: #{tpu_custom_call.1} parent=1 // loop_body
      %s42 = ssub.s32 %s37, 1
      %s43 = ssub.s32 %s37, 2
      %s44 = sadd.s32 %s37, 1
      %s45 = ssub.s32 %s37, %s44
      %p46 = scmp.eq.s32.totalorder %s45, 0
      %s48 = sadd.s32 %s47, 1
      %s49 = scalar_select %p46, %s47, %s48
      %p52 = pneg %p46
      %p53 = scmp.eq.s32.totalorder %s37, 4
      %p54 = por %p52, %p53
      %p55 = scmp.ne.s32.totalorder %s47, %s50
      %p56 = scmp.eq.s32.totalorder %s37, 0
      %p57 = por %p55, %p56
      %p58 = scmp.ne.s32.totalorder %s47, %s50
      %p59 = scmp.eq.s32.totalorder %s42, 4
      %p60 = por %p58, %p59
      %p61 = scmp.ne.s32.totalorder %s50, %s51
      %p62 = scmp.eq.s32.totalorder %s42, 0
      %p63 = por %p61, %p62
      %p64 = scmp.ne.s32.totalorder %s50, %s51
      %p65 = scmp.eq.s32.totalorder %s43, 4
      %p66 = por %p64, %p65
      %p68 = scmp.ne.s32.totalorder %s51, %s67
      %p69 = scmp.eq.s32.totalorder %s43, 0
      %p70 = por %p68, %p69
      %s71 = ssub.s32 %s37, %s44
      %p72 = scmp.eq.s32.totalorder %s71, 0
      %s74 = sadd.s32 %s73, 1
      %s75 = scalar_select %p72, %s73, %s74
      %p78 = pneg %p72
      %p79 = scmp.eq.s32.totalorder %s37, 4
      %p80 = por %p78, %p79
      %p81 = scmp.ne.s32.totalorder %s73, %s76
      %p82 = scmp.eq.s32.totalorder %s37, 0
      %p83 = por %p81, %p82
      %p84 = scmp.ne.s32.totalorder %s73, %s76
      %p85 = scmp.eq.s32.totalorder %s42, 4
      %p86 = por %p84, %p85
      %p87 = scmp.ne.s32.totalorder %s76, %s77
      %p88 = scmp.eq.s32.totalorder %s42, 0
      %p89 = por %p87, %p88
      %p90 = scmp.ne.s32.totalorder %s76, %s77
      %p91 = scmp.eq.s32.totalorder %s43, 4
      %p92 = por %p90, %p91
      %p94 = scmp.ne.s32.totalorder %s77, %s93
      %p95 = scmp.eq.s32.totalorder %s43, 0
      %p96 = por %p94, %p95
      %s98 = sadd.s32 %s97, 1
      %p101 = scmp.eq.s32.totalorder %s37, 4
      %p102 = scmp.ne.s32.totalorder %s97, %s99
      %p103 = scmp.eq.s32.totalorder %s37, 0
      %p104 = por %p102, %p103
      %p105 = scmp.ne.s32.totalorder %s97, %s99
      %p106 = scmp.eq.s32.totalorder %s42, 4
      %p107 = por %p105, %p106
      %p108 = scmp.ne.s32.totalorder %s99, %s100
      %p109 = scmp.eq.s32.totalorder %s42, 0
      %p110 = por %p108, %p109
      %p111 = scmp.ne.s32.totalorder %s99, %s100
      %p112 = scmp.eq.s32.totalorder %s43, 4
      %p113 = por %p111, %p112
      %p115 = scmp.ne.s32.totalorder %s100, %s114
      %p116 = scmp.eq.s32.totalorder %s43, 0
      %p117 = por %p115, %p116
      %s119 = sadd.s32 %s118, 1
      %p122 = scmp.eq.s32.totalorder %s37, 4
      %p123 = scmp.ne.s32.totalorder %s118, %s120
      %p124 = scmp.eq.s32.totalorder %s37, 0
      %p125 = por %p123, %p124
      %p126 = scmp.ne.s32.totalorder %s118, %s120
      %p127 = scmp.eq.s32.totalorder %s42, 4
      %p128 = por %p126, %p127
      %p129 = scmp.ne.s32.totalorder %s120, %s121
      %p130 = scmp.eq.s32.totalorder %s42, 0
      %p131 = por %p129, %p130
      %p132 = scmp.ne.s32.totalorder %s120, %s121
      %p133 = scmp.eq.s32.totalorder %s43, 4
      %p134 = por %p132, %p133
      %p136 = scmp.ne.s32.totalorder %s121, %s135
      %p137 = scmp.eq.s32.totalorder %s43, 0
      %p138 = por %p136, %p137
      %s140 = sadd.s32 %s139, 1
      %p143 = scmp.eq.s32.totalorder %s37, 4
      %p144 = scmp.ne.s32.totalorder %s139, %s141
      %p145 = scmp.eq.s32.totalorder %s37, 0
      %p146 = por %p144, %p145
      %p147 = scmp.ne.s32.totalorder %s139, %s141
      %p148 = scmp.eq.s32.totalorder %s42, 4
      %p149 = por %p147, %p148
      %p150 = scmp.ne.s32.totalorder %s141, %s142
      %p151 = scmp.eq.s32.totalorder %s42, 0
      %p152 = por %p150, %p151
      %p153 = scmp.ne.s32.totalorder %s141, %s142
      %p154 = scmp.eq.s32.totalorder %s43, 4
      %p155 = por %p153, %p154
      %p157 = scmp.ne.s32.totalorder %s142, %s156
      %p158 = scmp.eq.s32.totalorder %s43, 0
      %p159 = por %p157, %p158
      %s161 = sadd.s32 %s160, 1
      %p164 = scmp.eq.s32.totalorder %s37, 4
      %p165 = scmp.ne.s32.totalorder %s160, %s162
      %p166 = scmp.eq.s32.totalorder %s37, 0
      %p167 = por %p165, %p166
      %p168 = scmp.ne.s32.totalorder %s160, %s162
      %p169 = scmp.eq.s32.totalorder %s42, 4
      %p170 = por %p168, %p169
      %p171 = scmp.ne.s32.totalorder %s162, %s163
      %p172 = scmp.eq.s32.totalorder %s42, 0
      %p173 = por %p171, %p172
      %p174 = scmp.ne.s32.totalorder %s162, %s163
      %p175 = scmp.eq.s32.totalorder %s43, 4
      %p176 = por %p174, %p175
      %p178 = scmp.ne.s32.totalorder %s163, %s177
      %p179 = scmp.eq.s32.totalorder %s43, 0
      %p180 = por %p178, %p179
      %s182 = sadd.s32 %s181, 1
      %p185 = scmp.eq.s32.totalorder %s37, 4
      %p186 = scmp.ne.s32.totalorder %s181, %s183
      %p187 = scmp.eq.s32.totalorder %s37, 0
      %p188 = por %p186, %p187
      %p189 = scmp.ne.s32.totalorder %s181, %s183
      %p190 = scmp.eq.s32.totalorder %s42, 4
      %p191 = por %p189, %p190
      %p192 = scmp.ne.s32.totalorder %s183, %s184
      %p193 = scmp.eq.s32.totalorder %s42, 0
      %p194 = por %p192, %p193
      %p195 = scmp.ne.s32.totalorder %s183, %s184
      %p196 = scmp.eq.s32.totalorder %s43, 4
      %p197 = por %p195, %p196
      %p199 = scmp.ne.s32.totalorder %s184, %s198
      %p200 = scmp.eq.s32.totalorder %s43, 0
      %p201 = por %p199, %p200
      %s203 = sadd.s32 %s202, 1
      %p206 = scmp.eq.s32.totalorder %s37, 4
      %p207 = scmp.ne.s32.totalorder %s202, %s204
      %p208 = scmp.eq.s32.totalorder %s37, 0
      %p209 = por %p207, %p208
      %p210 = scmp.ne.s32.totalorder %s202, %s204
      %p211 = scmp.eq.s32.totalorder %s42, 4
      %p212 = por %p210, %p211
      %p213 = scmp.ne.s32.totalorder %s204, %s205
      %p214 = scmp.eq.s32.totalorder %s42, 0
      %p215 = por %p213, %p214
      %p216 = scmp.ne.s32.totalorder %s204, %s205
      %p217 = scmp.eq.s32.totalorder %s43, 4
      %p218 = por %p216, %p217
      %p220 = scmp.ne.s32.totalorder %s205, %s219
      %p221 = scmp.eq.s32.totalorder %s43, 0
      %p222 = por %p220, %p221
      %s224 = sadd.s32 %s223, 1
      %p227 = scmp.eq.s32.totalorder %s37, 4
      %p228 = scmp.ne.s32.totalorder %s223, %s225
      %p229 = scmp.eq.s32.totalorder %s37, 0
      %p230 = por %p228, %p229
      %p231 = scmp.ne.s32.totalorder %s223, %s225
      %p232 = scmp.eq.s32.totalorder %s42, 4
      %p233 = por %p231, %p232
      %p234 = scmp.ne.s32.totalorder %s225, %s226
      %p235 = scmp.eq.s32.totalorder %s42, 0
      %p236 = por %p234, %p235
      %p237 = scmp.ne.s32.totalorder %s225, %s226
      %p238 = scmp.eq.s32.totalorder %s43, 4
      %p239 = por %p237, %p238
      %p241 = scmp.ne.s32.totalorder %s226, %s240
      %p242 = scmp.eq.s32.totalorder %s43, 0
      %p243 = por %p241, %p242
      %s245 = sadd.s32 %s244, 1
      %p248 = scmp.eq.s32.totalorder %s37, 4
      %p249 = scmp.ne.s32.totalorder %s244, %s246
      %p250 = scmp.eq.s32.totalorder %s37, 0
      %p251 = por %p249, %p250
      %p252 = scmp.ne.s32.totalorder %s244, %s246
      %p253 = scmp.eq.s32.totalorder %s42, 4
      %p254 = por %p252, %p253
      %p255 = scmp.ne.s32.totalorder %s246, %s247
      %p256 = scmp.eq.s32.totalorder %s42, 0
      %p257 = por %p255, %p256
      %p258 = scmp.ne.s32.totalorder %s246, %s247
      %p259 = scmp.eq.s32.totalorder %s43, 4
      %p260 = por %p258, %p259
      %p262 = scmp.ne.s32.totalorder %s247, %s261
      %p263 = scmp.eq.s32.totalorder %s43, 0
      %p264 = por %p262, %p263
      %s266 = sadd.s32 %s265, 1
      %p269 = scmp.eq.s32.totalorder %s37, 4
      %p270 = scmp.ne.s32.totalorder %s265, %s267
      %p271 = scmp.eq.s32.totalorder %s37, 0
      %p272 = por %p270, %p271
      %p273 = scmp.ne.s32.totalorder %s265, %s267
      %p274 = scmp.eq.s32.totalorder %s42, 4
      %p275 = por %p273, %p274
      %p276 = scmp.ne.s32.totalorder %s267, %s268
      %p277 = scmp.eq.s32.totalorder %s42, 0
      %p278 = por %p276, %p277
      %p279 = scmp.ne.s32.totalorder %s267, %s268
      %p280 = scmp.eq.s32.totalorder %s43, 4
      %p281 = por %p279, %p280
      %p283 = scmp.ne.s32.totalorder %s268, %s282
      %p284 = scmp.eq.s32.totalorder %s43, 0
      %p285 = por %p283, %p284
      %s287 = sadd.s32 %s286, 1
      %p290 = scmp.eq.s32.totalorder %s37, 4
      %p291 = scmp.ne.s32.totalorder %s286, %s288
      %p292 = scmp.eq.s32.totalorder %s37, 0
      %p293 = por %p291, %p292
      %p294 = scmp.ne.s32.totalorder %s286, %s288
      %p295 = scmp.eq.s32.totalorder %s42, 4
      %p296 = por %p294, %p295
      %p297 = scmp.ne.s32.totalorder %s288, %s289
      %p298 = scmp.eq.s32.totalorder %s42, 0
      %p299 = por %p297, %p298
      %p300 = scmp.ne.s32.totalorder %s288, %s289
      %p301 = scmp.eq.s32.totalorder %s43, 4
      %p302 = por %p300, %p301
      %p304 = scmp.ne.s32.totalorder %s289, %s303
      %p305 = scmp.eq.s32.totalorder %s43, 0
      %p306 = por %p304, %p305
      %s308 = sadd.s32 %s307, 1
      %p311 = scmp.eq.s32.totalorder %s37, 4
      %p312 = scmp.ne.s32.totalorder %s307, %s309
      %p313 = scmp.eq.s32.totalorder %s37, 0
      %p314 = por %p312, %p313
      %p315 = scmp.ne.s32.totalorder %s307, %s309
      %p316 = scmp.eq.s32.totalorder %s42, 4
      %p317 = por %p315, %p316
      %p318 = scmp.ne.s32.totalorder %s309, %s310
      %p319 = scmp.eq.s32.totalorder %s42, 0
      %p320 = por %p318, %p319
      %p321 = scmp.ne.s32.totalorder %s309, %s310
      %p322 = scmp.eq.s32.totalorder %s43, 4
      %p323 = por %p321, %p322
      %p325 = scmp.ne.s32.totalorder %s310, %s324
      %p326 = scmp.eq.s32.totalorder %s43, 0
      %p327 = por %p325, %p326
      %s329 = sadd.s32 %s328, 1
      %p332 = scmp.eq.s32.totalorder %s37, 4
      %p333 = scmp.ne.s32.totalorder %s328, %s330
      %p334 = scmp.eq.s32.totalorder %s37, 0
      %p335 = por %p333, %p334
      %p336 = scmp.ne.s32.totalorder %s328, %s330
      %p337 = scmp.eq.s32.totalorder %s42, 4
      %p338 = por %p336, %p337
      %p339 = scmp.ne.s32.totalorder %s330, %s331
      %p340 = scmp.eq.s32.totalorder %s42, 0
      %p341 = por %p339, %p340
      %p342 = scmp.ne.s32.totalorder %s330, %s331
      %p343 = scmp.eq.s32.totalorder %s43, 4
      %p344 = por %p342, %p343
      %p346 = scmp.ne.s32.totalorder %s331, %s345
      %p347 = scmp.eq.s32.totalorder %s43, 0
      %p348 = por %p346, %p347
      %s350 = sadd.s32 %s349, 1
      %p353 = scmp.eq.s32.totalorder %s37, 4
      %p354 = scmp.ne.s32.totalorder %s349, %s351
      %p355 = scmp.eq.s32.totalorder %s37, 0
      %p356 = por %p354, %p355
      %p357 = scmp.ne.s32.totalorder %s349, %s351
      %p358 = scmp.eq.s32.totalorder %s42, 4
      %p359 = por %p357, %p358
      %p360 = scmp.ne.s32.totalorder %s351, %s352
      %p361 = scmp.eq.s32.totalorder %s42, 0
      %p362 = por %p360, %p361
      %p363 = scmp.ne.s32.totalorder %s351, %s352
      %p364 = scmp.eq.s32.totalorder %s43, 4
      %p365 = por %p363, %p364
      %p367 = scmp.ne.s32.totalorder %s352, %s366
      %p368 = scmp.eq.s32.totalorder %s43, 0
      %p369 = por %p367, %p368
      %s371 = sadd.s32 %s370, 1
      %p374 = scmp.eq.s32.totalorder %s37, 4
      %p375 = scmp.ne.s32.totalorder %s370, %s372
      %p376 = scmp.eq.s32.totalorder %s37, 0
      %p377 = por %p375, %p376
      %p378 = scmp.ne.s32.totalorder %s370, %s372
      %p379 = scmp.eq.s32.totalorder %s42, 4
      %p380 = por %p378, %p379
      %p381 = scmp.ne.s32.totalorder %s372, %s373
      %p382 = scmp.eq.s32.totalorder %s42, 0
      %p383 = por %p381, %p382
      %p384 = scmp.ne.s32.totalorder %s372, %s373
      %p385 = scmp.eq.s32.totalorder %s43, 4
      %p386 = por %p384, %p385
      %p388 = scmp.ne.s32.totalorder %s373, %s387
      %p389 = scmp.eq.s32.totalorder %s43, 0
      %p390 = por %p388, %p389
      %s392 = sadd.s32 %s391, 1
      %p395 = scmp.eq.s32.totalorder %s37, 4
      %p396 = scmp.ne.s32.totalorder %s391, %s393
      %p397 = scmp.eq.s32.totalorder %s37, 0
      %p398 = por %p396, %p397
      %p399 = scmp.ne.s32.totalorder %s391, %s393
      %p400 = scmp.eq.s32.totalorder %s42, 4
      %p401 = por %p399, %p400
      %p402 = scmp.ne.s32.totalorder %s393, %s394
      %p403 = scmp.eq.s32.totalorder %s42, 0
      %p404 = por %p402, %p403
      %p405 = scmp.ne.s32.totalorder %s393, %s394
      %p406 = scmp.eq.s32.totalorder %s43, 4
      %p407 = por %p405, %p406
      %p409 = scmp.ne.s32.totalorder %s394, %s408
      %p410 = scmp.eq.s32.totalorder %s43, 0
      %p411 = por %p409, %p410
      %s413 = sadd.s32 %s412, 1
      %p416 = scmp.eq.s32.totalorder %s37, 4
      %p417 = scmp.ne.s32.totalorder %s412, %s414
      %p418 = scmp.eq.s32.totalorder %s37, 0
      %p419 = por %p417, %p418
      %p420 = scmp.ne.s32.totalorder %s412, %s414
      %p421 = scmp.eq.s32.totalorder %s42, 4
      %p422 = por %p420, %p421
      %p423 = scmp.ne.s32.totalorder %s414, %s415
      %p424 = scmp.eq.s32.totalorder %s42, 0
      %p425 = por %p423, %p424
      %p426 = scmp.ne.s32.totalorder %s414, %s415
      %p427 = scmp.eq.s32.totalorder %s43, 4
      %p428 = por %p426, %p427
      %p430 = scmp.ne.s32.totalorder %s415, %s429
      %p431 = scmp.eq.s32.totalorder %s43, 0
      %p432 = por %p430, %p431
      %p433 = scmp.le.s32.totalorder 1, %s37
      %p434 = scmp.lt.s32.totalorder %s37, 6
      %p435 = pnand %p433, %p434
      %p436 = pneg %p435
      // Predicated region
      $region9: #{tpu_custom_call.1} parent=5 // pred_check
        _
      $region10: #{tpu_custom_call.1} parent=5 // pred_check_branch
        %438 = sbr.rel (%p435) target = $region12
      $region11: #{tpu_custom_call.1} parent=5 // pred_region
        %s439 = ssub.s32 %s37, 1
        // Predicated region
        $region13: #{tpu_custom_call.1} parent=11 // pred_check
          %p440 = pneg %p110
        $region14: #{tpu_custom_call.1} parent=11 // pred_check_branch
          %442 = sbr.rel (%p440) target = $region16
        $region15: #{tpu_custom_call.1} parent=11 // pred_region
          %s444 = ssub.s32 16, 16
          %445 = vsyncadd [#allocation8], %s444
          %s447 = sshll.u32 [#allocation9], 4
          %s448 = int_to_ptr.vmem [resolvable:$true] %s447
          %450 = dma.hbm_to_vmem [thread:$0]  %s2, 16, %s448, [#allocation8]
        $region16: #{tpu_custom_call.1} parent=11 // pred_fallthru
          _
        // Predicated region
        $region17: #{tpu_custom_call.1} parent=11 // pred_check
          %p451 = pneg %p131
        $region18: #{tpu_custom_call.1} parent=11 // pred_check_branch
          %453 = sbr.rel (%p451) target = $region20
        $region19: #{tpu_custom_call.1} parent=11 // pred_region
          %s455 = ssub.s32 256, 256
          %456 = vsyncadd [#allocation11], %s455
          %s457 = sshll.u32 [#allocation10], 4
          %s458 = int_to_ptr.vmem [resolvable:$true] %s457
          %463 = dma.hbm_to_vmem [thread:$0]  %s3, 256, %s458, [#allocation11], 128, 128, 8
        $region20: #{tpu_custom_call.1} parent=11 // pred_fallthru
          _
        // Predicated region
        $region21: #{tpu_custom_call.1} parent=11 // pred_check
          %p464 = pneg %p152
        $region22: #{tpu_custom_call.1} parent=11 // pred_check_branch
          %466 = sbr.rel (%p464) target = $region24
        $region23: #{tpu_custom_call.1} parent=11 // pred_region
          %s468 = ssub.s32 256, 256
          %469 = vsyncadd [#allocation11], %s468
          %s470 = sshll.u32 [#allocation12], 4
          %s471 = int_to_ptr.vmem [resolvable:$true] %s470
          %476 = dma.hbm_to_vmem [thread:$0]  %s4, 256, %s471, [#allocation11], 128, 128, 8
        $region24: #{tpu_custom_call.1} parent=11 // pred_fallthru
          _
        // Predicated region
        $region25: #{tpu_custom_call.1} parent=11 // pred_check
          %p477 = pneg %p173
        $region26: #{tpu_custom_call.1} parent=11 // pred_check_branch
          %479 = sbr.rel (%p477) target = $region28
        $region27: #{tpu_custom_call.1} parent=11 // pred_region
          %s481 = ssub.s32 32, 32
          %482 = vsyncadd [#allocation14], %s481
          %s484 = sshll.u32 [#allocation13], 4
          %s485 = int_to_ptr.vmem [resolvable:$true] %s484
          %487 = dma.hbm_to_vmem [thread:$0]  %s5, 32, %s485, [#allocation14]
        $region28: #{tpu_custom_call.1} parent=11 // pred_fallthru
          _
        // Predicated region
        $region29: #{tpu_custom_call.1} parent=11 // pred_check
          %p488 = pneg %p194
        $region30: #{tpu_custom_call.1} parent=11 // pred_check_branch
          %490 = sbr.rel (%p488) target = $region32
        $region31: #{tpu_custom_call.1} parent=11 // pred_region
          _
        $region32: #{tpu_custom_call.1} parent=11 // pred_fallthru
          _
        // Predicated region
        $region33: #{tpu_custom_call.1} parent=11 // pred_check
          %p491 = pneg %p215
        $region34: #{tpu_custom_call.1} parent=11 // pred_check_branch
          %493 = sbr.rel (%p491) target = $region36
        $region35: #{tpu_custom_call.1} parent=11 // pred_region
          %s495 = ssub.s32 256, 256
          %496 = vsyncadd [#allocation14], %s495
          %s497 = sshll.u32 [#allocation15], 4
          %s498 = int_to_ptr.vmem [resolvable:$true] %s497
          %503 = dma.hbm_to_vmem [thread:$0]  %s7, 256, %s498, [#allocation14], 128, 128, 8
        $region36: #{tpu_custom_call.1} parent=11 // pred_fallthru
          _
        // Predicated region
        $region37: #{tpu_custom_call.1} parent=11 // pred_check
          %p504 = pneg %p236
        $region38: #{tpu_custom_call.1} parent=11 // pred_check_branch
          %506 = sbr.rel (%p504) target = $region40
        $region39: #{tpu_custom_call.1} parent=11 // pred_region
          %s508 = ssub.s32 512, 512
          %509 = vsyncadd [#allocation17], %s508
          %s510 = sshll.u32 [#allocation16], 4
          %s511 = int_to_ptr.vmem [resolvable:$true] %s510
          %516 = dma.hbm_to_vmem [thread:$0]  %s8, 512, %s511, [#allocation17], 128, 128, 8
        $region40: #{tpu_custom_call.1} parent=11 // pred_fallthru
          _
        // Predicated region
        $region41: #{tpu_custom_call.1} parent=11 // pred_check
          %p517 = pneg %p257
        $region42: #{tpu_custom_call.1} parent=11 // pred_check_branch
          %519 = sbr.rel (%p517) target = $region44
        $region43: #{tpu_custom_call.1} parent=11 // pred_region
          %s521 = ssub.s32 16, 16
          %522 = vsyncadd [#allocation17], %s521
          %s524 = sshll.u32 [#allocation18], 4
          %s525 = int_to_ptr.vmem [resolvable:$true] %s524
          %527 = dma.hbm_to_vmem [thread:$0]  %s9, 16, %s525, [#allocation17]
        $region44: #{tpu_custom_call.1} parent=11 // pred_fallthru
          _
        // Predicated region
        $region45: #{tpu_custom_call.1} parent=11 // pred_check
          %p528 = pneg %p278
        $region46: #{tpu_custom_call.1} parent=11 // pred_check_branch
          %530 = sbr.rel (%p528) target = $region48
        $region47: #{tpu_custom_call.1} parent=11 // pred_region
          %s532 = ssub.s32 16384, 16384
          %533 = vsyncadd [#allocation20], %s532
          %s534 = sshll.u32 [#allocation19], 4
          %s535 = int_to_ptr.vmem [resolvable:$true] %s534
          %540 = dma.hbm_to_vmem [thread:$0]  %s10, 16384, %s535, [#allocation20], 1024, 1024, 64
        $region48: #{tpu_custom_call.1} parent=11 // pred_fallthru
          _
        // Predicated region
        $region49: #{tpu_custom_call.1} parent=11 // pred_check
          %p541 = pneg %p299
        $region50: #{tpu_custom_call.1} parent=11 // pred_check_branch
          %543 = sbr.rel (%p541) target = $region52
        $region51: #{tpu_custom_call.1} parent=11 // pred_region
          %s545 = ssub.s32 16384, 16384
          %546 = vsyncadd [#allocation20], %s545
          %s547 = sshll.u32 [#allocation21], 4
          %s548 = int_to_ptr.vmem [resolvable:$true] %s547
          %553 = dma.hbm_to_vmem [thread:$0]  %s11, 16384, %s548, [#allocation20], 1024, 1024, 64
        $region52: #{tpu_custom_call.1} parent=11 // pred_fallthru
          _
        // Predicated region
        $region53: #{tpu_custom_call.1} parent=11 // pred_check
          %p554 = pneg %p320
        $region54: #{tpu_custom_call.1} parent=11 // pred_check_branch
          %556 = sbr.rel (%p554) target = $region56
        $region55: #{tpu_custom_call.1} parent=11 // pred_region
          %s558 = ssub.s32 128, 128
          %559 = vsyncadd [#allocation23], %s558
          %s561 = sshll.u32 [#allocation22], 4
          %s562 = int_to_ptr.vmem [resolvable:$true] %s561
          %564 = dma.hbm_to_vmem [thread:$0]  %s12, 128, %s562, [#allocation23]
        $region56: #{tpu_custom_call.1} parent=11 // pred_fallthru
          _
        // Predicated region
        $region57: #{tpu_custom_call.1} parent=11 // pred_check
          %p565 = pneg %p341
        $region58: #{tpu_custom_call.1} parent=11 // pred_check_branch
          %567 = sbr.rel (%p565) target = $region60
        $region59: #{tpu_custom_call.1} parent=11 // pred_region
          %s569 = ssub.s32 32768, 32768
          %570 = vsyncadd [#allocation23], %s569
          %s571 = sshll.u32 [#allocation24], 4
          %s572 = int_to_ptr.vmem [resolvable:$true] %s571
          %577 = dma.hbm_to_vmem [thread:$0]  %s13, 32768, %s572, [#allocation23], 256, 256, 16
        $region60: #{tpu_custom_call.1} parent=11 // pred_fallthru
          _
        // Predicated region
        $region61: #{tpu_custom_call.1} parent=11 // pred_check
          %p578 = pneg %p362
        $region62: #{tpu_custom_call.1} parent=11 // pred_check_branch
          %580 = sbr.rel (%p578) target = $region64
        $region63: #{tpu_custom_call.1} parent=11 // pred_region
          %s582 = ssub.s32 32, 32
          %583 = vsyncadd [#allocation26], %s582
          %s585 = sshll.u32 [#allocation25], 4
          %s586 = int_to_ptr.vmem [resolvable:$true] %s585
          %588 = dma.hbm_to_vmem [thread:$0]  %s14, 32, %s586, [#allocation26]
        $region64: #{tpu_custom_call.1} parent=11 // pred_fallthru
          _
        // Predicated region
        $region65: #{tpu_custom_call.1} parent=11 // pred_check
          %p589 = pneg %p383
        $region66: #{tpu_custom_call.1} parent=11 // pred_check_branch
          %591 = sbr.rel (%p589) target = $region68
        $region67: #{tpu_custom_call.1} parent=11 // pred_region
          _
        $region68: #{tpu_custom_call.1} parent=11 // pred_fallthru
          _
        // Predicated region
        $region69: #{tpu_custom_call.1} parent=11 // pred_check
          %p592 = pneg %p404
        $region70: #{tpu_custom_call.1} parent=11 // pred_check_branch
          %594 = sbr.rel (%p592) target = $region72
        $region71: #{tpu_custom_call.1} parent=11 // pred_region
          _
        $region72: #{tpu_custom_call.1} parent=11 // pred_fallthru
          _
      $region12: #{tpu_custom_call.1} parent=5 // pred_fallthru
        _
      %p595 = scmp.lt.s32.totalorder %s37, 5
      // Predicated region
      $region73: #{tpu_custom_call.1} parent=5 // pred_check
        %p596 = pneg %p595
      $region74: #{tpu_custom_call.1} parent=5 // pred_check_branch
        %598 = sbr.rel (%p596) target = $region76
      $region75: #{tpu_custom_call.1} parent=5 // pred_region
        // Predicated region
        $region77: #{tpu_custom_call.1} parent=75 // pred_check
          %p599 = pneg %p57
        $region78: #{tpu_custom_call.1} parent=75 // pred_check_branch
          %601 = sbr.rel (%p599) target = $region80
        $region79: #{tpu_custom_call.1} parent=75 // pred_region
          %s602 = sand.u32 %s47, 1
          %s603 = scalar_lea.sflag [#allocation6], %s602
          %s604 = sand.u32 %s47, 1
          %s605 = smul.addr %s604, 50
          %s606 = scalar_lea.vmem [#allocation5], %s605
          %s607 = smul.u32 50, %s37
          %s609 = ssub.s32 800, 800
          %610 = vsyncadd %s603, %s609
          %s611 = smul.addr %s607, 16
          %s612 = scalar_lea.hbm %s0, %s611
          %s614 = sshll.u32 %s606, 4
          %s615 = int_to_ptr.vmem [resolvable:$true] %s614
          %617 = dma.hbm_to_vmem [thread:$0]  %s612, 800, %s615, %s603
        $region80: #{tpu_custom_call.1} parent=75 // pred_fallthru
          _
        // Predicated region
        $region81: #{tpu_custom_call.1} parent=75 // pred_check
          %p618 = pneg %p83
        $region82: #{tpu_custom_call.1} parent=75 // pred_check_branch
          %620 = sbr.rel (%p618) target = $region84
        $region83: #{tpu_custom_call.1} parent=75 // pred_region
          %s621 = sand.u32 %s37, 1
          %s622 = scalar_lea.sflag [#allocation8], %s621
          %s623 = sand.u32 %s73, 1
          %s624 = smul.addr %s623, 3200
          %s625 = scalar_lea.vmem [#allocation7], %s624
          %s626 = smul.u32 800, %s37
          %s628 = ssub.s32 51200, 51200
          %629 = vsyncadd %s622, %s628
          %s630 = smul.addr %s626, 64
          %s631 = scalar_lea.hbm %s1, %s630
          %s632 = sshll.u32 %s625, 4
          %s633 = int_to_ptr.vmem [resolvable:$true] %s632
          %638 = dma.hbm_to_vmem [thread:$0]  %s631, 51200, %s633, %s622, 64, 64, 4
        $region84: #{tpu_custom_call.1} parent=75 // pred_fallthru
          _
      $region76: #{tpu_custom_call.1} parent=5 // pred_fallthru
        _
      %p639 = scmp.le.s32.totalorder 1, %s37
      %p640 = scmp.lt.s32.totalorder %s37, 6
      %p641 = pnand %p639, %p640
      %p642 = pneg %p641
      // Predicated region
      $region85: #{tpu_custom_call.1} parent=5 // pred_check
        _
      $region86: #{tpu_custom_call.1} parent=5 // pred_check_branch
        %644 = sbr.rel (%p641) target = $region88
      $region87: #{tpu_custom_call.1} parent=5 // pred_region
        %s645 = ssub.s32 %s37, 1
        %s646 = sand.u32 %s50, 1
        %s647 = scalar_lea.sflag [#allocation6], %s646
        %s648 = sand.u32 %s50, 1
        %s649 = smul.addr %s648, 50
        %s650 = scalar_lea.vmem [#allocation5], %s649
        // Predicated region
        $region89: #{tpu_custom_call.1} parent=87 // pred_check
          %p651 = pneg %p63
        $region90: #{tpu_custom_call.1} parent=87 // pred_check_branch
          %653 = sbr.rel (%p651) target = $region92
        $region91: #{tpu_custom_call.1} parent=87 // pred_region
          %654 = dma.done %s647, 800
        $region92: #{tpu_custom_call.1} parent=87 // pred_fallthru
          _
        %s655 = sand.u32 %s42, 1
        %s656 = scalar_lea.sflag [#allocation8], %s655
        %s657 = sand.u32 %s76, 1
        %s658 = smul.addr %s657, 3200
        %s659 = scalar_lea.vmem [#allocation7], %s658
        // Predicated region
        $region93: #{tpu_custom_call.1} parent=87 // pred_check
          %p660 = pneg %p89
        $region94: #{tpu_custom_call.1} parent=87 // pred_check_branch
          %662 = sbr.rel (%p660) target = $region96
        $region95: #{tpu_custom_call.1} parent=87 // pred_region
          %663 = dma.done %s656, 51200
        $region96: #{tpu_custom_call.1} parent=87 // pred_fallthru
          _
        // Predicated region
        $region97: #{tpu_custom_call.1} parent=87 // pred_check
          %p664 = pneg %p110
        $region98: #{tpu_custom_call.1} parent=87 // pred_check_branch
          %666 = sbr.rel (%p664) target = $region100
        $region99: #{tpu_custom_call.1} parent=87 // pred_region
          %667 = dma.done [#allocation8], 16
        $region100: #{tpu_custom_call.1} parent=87 // pred_fallthru
          _
        // Predicated region
        $region101: #{tpu_custom_call.1} parent=87 // pred_check
          %p668 = pneg %p131
        $region102: #{tpu_custom_call.1} parent=87 // pred_check_branch
          %670 = sbr.rel (%p668) target = $region104
        $region103: #{tpu_custom_call.1} parent=87 // pred_region
          %671 = dma.done [#allocation11], 256
        $region104: #{tpu_custom_call.1} parent=87 // pred_fallthru
          _
        // Predicated region
        $region105: #{tpu_custom_call.1} parent=87 // pred_check
          %p672 = pneg %p152
        $region106: #{tpu_custom_call.1} parent=87 // pred_check_branch
          %674 = sbr.rel (%p672) target = $region108
        $region107: #{tpu_custom_call.1} parent=87 // pred_region
          %675 = dma.done [#allocation11], 256
        $region108: #{tpu_custom_call.1} parent=87 // pred_fallthru
          _
        // Predicated region
        $region109: #{tpu_custom_call.1} parent=87 // pred_check
          %p676 = pneg %p173
        $region110: #{tpu_custom_call.1} parent=87 // pred_check_branch
          %678 = sbr.rel (%p676) target = $region112
        $region111: #{tpu_custom_call.1} parent=87 // pred_region
          %679 = dma.done [#allocation14], 32
        $region112: #{tpu_custom_call.1} parent=87 // pred_fallthru
          _
        // Predicated region
        $region113: #{tpu_custom_call.1} parent=87 // pred_check
          %p680 = pneg %p215
        $region114: #{tpu_custom_call.1} parent=87 // pred_check_branch
          %682 = sbr.rel (%p680) target = $region116
        $region115: #{tpu_custom_call.1} parent=87 // pred_region
          %683 = dma.done [#allocation14], 256
        $region116: #{tpu_custom_call.1} parent=87 // pred_fallthru
          _
        // Predicated region
        $region117: #{tpu_custom_call.1} parent=87 // pred_check
          %p684 = pneg %p236
        $region118: #{tpu_custom_call.1} parent=87 // pred_check_branch
          %686 = sbr.rel (%p684) target = $region120
        $region119: #{tpu_custom_call.1} parent=87 // pred_region
          %687 = dma.done [#allocation17], 512
        $region120: #{tpu_custom_call.1} parent=87 // pred_fallthru
          _
        // Predicated region
        $region121: #{tpu_custom_call.1} parent=87 // pred_check
          %p688 = pneg %p257
        $region122: #{tpu_custom_call.1} parent=87 // pred_check_branch
          %690 = sbr.rel (%p688) target = $region124
        $region123: #{tpu_custom_call.1} parent=87 // pred_region
          %691 = dma.done [#allocation17], 16
        $region124: #{tpu_custom_call.1} parent=87 // pred_fallthru
          _
        // Predicated region
        $region125: #{tpu_custom_call.1} parent=87 // pred_check
          %p692 = pneg %p278
        $region126: #{tpu_custom_call.1} parent=87 // pred_check_branch
          %694 = sbr.rel (%p692) target = $region128
        $region127: #{tpu_custom_call.1} parent=87 // pred_region
          %695 = dma.done [#allocation20], 16384
        $region128: #{tpu_custom_call.1} parent=87 // pred_fallthru
          _
        // Predicated region
        $region129: #{tpu_custom_call.1} parent=87 // pred_check
          %p696 = pneg %p299
        $region130: #{tpu_custom_call.1} parent=87 // pred_check_branch
          %698 = sbr.rel (%p696) target = $region132
        $region131: #{tpu_custom_call.1} parent=87 // pred_region
          %699 = dma.done [#allocation20], 16384
        $region132: #{tpu_custom_call.1} parent=87 // pred_fallthru
          _
        // Predicated region
        $region133: #{tpu_custom_call.1} parent=87 // pred_check
          %p700 = pneg %p320
        $region134: #{tpu_custom_call.1} parent=87 // pred_check_branch
          %702 = sbr.rel (%p700) target = $region136
        $region135: #{tpu_custom_call.1} parent=87 // pred_region
          %703 = dma.done [#allocation23], 128
        $region136: #{tpu_custom_call.1} parent=87 // pred_fallthru
          _
        // Predicated region
        $region137: #{tpu_custom_call.1} parent=87 // pred_check
          %p704 = pneg %p341
        $region138: #{tpu_custom_call.1} parent=87 // pred_check_branch
          %706 = sbr.rel (%p704) target = $region140
        $region139: #{tpu_custom_call.1} parent=87 // pred_region
          %707 = dma.done [#allocation23], 32768
        $region140: #{tpu_custom_call.1} parent=87 // pred_fallthru
          _
        // Predicated region
        $region141: #{tpu_custom_call.1} parent=87 // pred_check
          %p708 = pneg %p362
        $region142: #{tpu_custom_call.1} parent=87 // pred_check_branch
          %710 = sbr.rel (%p708) target = $region144
        $region143: #{tpu_custom_call.1} parent=87 // pred_region
          %711 = dma.done [#allocation26], 32
        $region144: #{tpu_custom_call.1} parent=87 // pred_fallthru
          _
        %s712 = sand.u32 %s50, 1
        %s713 = scalar_lea.sflag [#allocation6], %s712
        %s714 = sand.u32 %s50, 1
        %s715 = smul.addr %s714, 50
        %s716 = scalar_lea.vmem [#allocation5], %s715
        %p717 = pneg %p63
        %p718 = pneg %p60
        %s719 = sand.u32 %s42, 1
        %s720 = scalar_lea.sflag [#allocation8], %s719
        %s721 = sand.u32 %s76, 1
        %s722 = smul.addr %s721, 3200
        %s723 = scalar_lea.vmem [#allocation7], %s722
        %p724 = pneg %p89
        %p725 = pneg %p86
        %p726 = pneg %p110
        %p727 = pneg %p107
        %p728 = pneg %p131
        %p729 = pneg %p128
        %p730 = pneg %p152
        %p731 = pneg %p149
        %p732 = pneg %p173
        %p733 = pneg %p170
        %p734 = pneg %p194
        %p735 = pneg %p191
        %p736 = pneg %p215
        %p737 = pneg %p212
        %p738 = pneg %p236
        %p739 = pneg %p233
        %p740 = pneg %p257
        %p741 = pneg %p254
        %p742 = pneg %p278
        %p743 = pneg %p275
        %p744 = pneg %p299
        %p745 = pneg %p296
        %p746 = pneg %p320
        %p747 = pneg %p317
        %p748 = pneg %p341
        %p749 = pneg %p338
        %p750 = pneg %p362
        %p751 = pneg %p359
        %p752 = pneg %p383
        %p753 = pneg %p380
        %p754 = pneg %p404
        %p755 = pneg %p401
        %p756 = pneg %p425
        %p757 = pneg %p422
        %s758 = smul.u32 50, %s42
        %s759 = smul.u32 800, %s42
        %p761 = scmp.eq.s32.totalorder %s42, 0
        // Predicated region
        $region145: #{tpu_custom_call.1} parent=87 // pred_check
          %p762 = pneg %p761
        $region146: #{tpu_custom_call.1} parent=87 // pred_check_branch
          %764 = sbr.rel (%p762) target = $region148
        $region147: #{tpu_custom_call.1} parent=87 // pred_region
          %v765 = vld [vmem:[#allocation12] sm:$0xff]
          %v766 = vld [vmem:[#allocation12 + $0x8] sm:$0xff]
          %v767 = vld [vmem:[%s6] sm:$0xff]
          %v768 = vld [vmem:[%s6 + $0x8] sm:$0xff]
          %v769 = vld [vmem:[%s6 + $0x10] sm:$0xff]
          %v770 = vld [vmem:[%s6 + $0x18] sm:$0xff]
          %v771 = vld [vmem:[%s6 + $0x20] sm:$0xff]
          %v772 = vld [vmem:[%s6 + $0x28] sm:$0xff]
          %v773 = vld [vmem:[%s6 + $0x30] sm:$0xff]
          %v774 = vld [vmem:[%s6 + $0x38] sm:$0xff]
          %v775 = vld [vmem:[%s6 + $0x40] sm:$0xff]
          %v776 = vld [vmem:[%s6 + $0x48] sm:$0xff]
          %v777 = vld [vmem:[%s6 + $0x50] sm:$0xff]
          %v778 = vld [vmem:[%s6 + $0x58] sm:$0xff]
          %v779 = vld [vmem:[%s6 + $0x60] sm:$0xff]
          %v780 = vld [vmem:[%s6 + $0x68] sm:$0xff]
          %v781 = vld [vmem:[%s6 + $0x70] sm:$0xff]
          %v782 = vld [vmem:[%s6 + $0x78] sm:$0xff]
          %v783 = vld [vmem:[%s6 + $0x80] sm:$0xff]
          %v784 = vld [vmem:[%s6 + $0x88] sm:$0xff]
          %v785 = vld [vmem:[%s6 + $0x90] sm:$0xff]
          %v786 = vld [vmem:[%s6 + $0x98] sm:$0xff]
          %v787 = vld [vmem:[%s6 + $0xa0] sm:$0xff]
          %v788 = vld [vmem:[%s6 + $0xa8] sm:$0xff]
          %v789 = vld [vmem:[%s6 + $0xb0] sm:$0xff]
          %v790 = vld [vmem:[%s6 + $0xb8] sm:$0xff]
          %v791 = vld [vmem:[%s6 + $0xc0] sm:$0xff]
          %v792 = vld [vmem:[%s6 + $0xc8] sm:$0xff]
          %v793 = vld [vmem:[%s6 + $0xd0] sm:$0xff]
          %v794 = vld [vmem:[%s6 + $0xd8] sm:$0xff]
          %v795 = vld [vmem:[%s6 + $0xe0] sm:$0xff]
          %v796 = vld [vmem:[%s6 + $0xe8] sm:$0xff]
          %v797 = vld [vmem:[#allocation15] sm:$0xff]
          %v798 = vld [vmem:[#allocation15 + $0x8] sm:$0xff]
          %v799 = vld [vmem:[#allocation10] sm:$0xff]
          %v800 = vld [vmem:[#allocation10 + $0x8] sm:$0xff]
          %vm801 = vcmask 130048
          %v803 = vsel %vm801, %v765, 0
          %v806 = vsel %vm801, %v766, 0
          %808 = vmatprep.subr.mxu0 0.0
          %809 = vmatpush1.msra.mxu0 %v799
          %810 = vmatprep.subr.mxu0 0.0
          %811 = vmatpush1.msra.mxu0 %v800
          %812 = vmatprep.subr.mxu0 0.0
          %813 = vmatpush1.msra.mxu0 0.0
          %814 = vmatprep.subr.mxu0 0.0
          %815 = vmatpush1.msra.mxu0 0.0
          %816 = vmatprep.subr.mxu0 0.0
          %817 = vmatpush1.msra.mxu0 0.0
          %818 = vmatprep.subr.mxu0 0.0
          %819 = vmatpush1.msra.mxu0 0.0
          %820 = vmatprep.subr.mxu0 0.0
          %821 = vmatpush1.msra.mxu0 0.0
          %822 = vmatprep.subr.mxu0 0.0
          %823 = vmatpush1.msra.mxu0 0.0
          %824 = vmatprep.subr.mxu0 0.0
          %825 = vmatpush1.msra.mxu0 0.0
          %826 = vmatprep.subr.mxu0 0.0
          %827 = vmatpush1.msra.mxu0 0.0
          %828 = vmatprep.subr.mxu0 0.0
          %829 = vmatpush1.msra.mxu0 0.0
          %830 = vmatprep.subr.mxu0 0.0
          %831 = vmatpush1.msra.mxu0 0.0
          %832 = vmatprep.subr.mxu0 0.0
          %833 = vmatpush1.msra.mxu0 0.0
          %834 = vmatprep.subr.mxu0 0.0
          %835 = vmatpush1.msra.mxu0 0.0
          %836 = vmatprep.subr.mxu0 0.0
          %837 = vmatpush1.msra.mxu0 0.0
          %838 = vmatprep.subr.mxu0 0.0
          %839 = vmatpush1.msra.mxu0 0.0
          %840 = vmatprep.subr.mxu0 0.0
          %841 = vmatpush1.msra.mxu0 0.0
          %842 = vmatprep.subr.mxu0 0.0
          %843 = vmatpush1.msra.mxu0 0.0
          %844 = vmatprep.subr.mxu0 0.0
          %845 = vmatpush1.msra.mxu0 0.0
          %846 = vmatprep.subr.mxu0 0.0
          %847 = vmatpush1.msra.mxu0 0.0
          %848 = vmatprep.subr.mxu0 0.0
          %849 = vmatpush1.msra.mxu0 0.0
          %850 = vmatprep.subr.mxu0 0.0
          %851 = vmatpush1.msra.mxu0 0.0
          %852 = vmatprep.subr.mxu0 0.0
          %853 = vmatpush1.msra.mxu0 0.0
          %854 = vmatprep.subr.mxu0 0.0
          %855 = vmatpush1.msra.mxu0 0.0
          %856 = vmatprep.subr.mxu0 0.0
          %857 = vmatpush1.msra.mxu0 0.0
          %858 = vmatprep.subr.mxu0 0.0
          %859 = vmatpush1.msra.mxu0 0.0
          %860 = vmatprep.subr.mxu0 0.0
          %861 = vmatpush1.msra.mxu0 0.0
          %862 = vmatprep.subr.mxu0 0.0
          %863 = vmatpush1.msra.mxu0 0.0
          %864 = vmatprep.subr.mxu0 0.0
          %865 = vmatpush1.msra.mxu0 0.0
          %866 = vmatprep.subr.mxu0 0.0
          %867 = vmatpush1.msra.mxu0 0.0
          %868 = vmatprep.subr.mxu0 0.0
          %869 = vmatpush1.msra.mxu0 0.0
          %870 = vmatprep.subr.mxu0 0.0
          %871 = vmatpush1.msra.mxu0 0.0
          %872 = vmatprep.mubr.f32.mxu0 0.0
          %873 = vmatmul.mubr.f32.gmra.mrb[0].mxu0 %v803
          %v874 = vpop.f32.mrb[0].mxu0
          %v875 = vadd.f32 0.0, %v874
          %v876 = vpop.f32.mrb[0].mxu0
          %877 = vmatprep.mubr.f32.mxu0 0.0
          %878 = vmatmul.mubr.f32.gmra.mrb[0].mxu0 %v806
          %v879 = vpop.f32.mrb[0].mxu0
          %v880 = vadd.f32 0.0, %v879
          %v881 = vpop.f32.mrb[0].mxu0
          %882 = vdwg.mxu0
          %v883 = vadd.f32 %v799, %v875
          %v884 = vadd.f32 %v800, %v880
          %v885 = vlaneseq
          %v886 = vshrl.u32 %v885, 7
          %v887 = vsub.s32 0, %v886
          %v888 = vrot.slane %v797, %v887
          %vm889 = vcmask 637952
          %v891 = vsel %vm889, %v883, 0
          %v894 = vsel %vm889, %v884, 0
          %vm896 = vcmask 1045504
          %v898 = vsel %vm896, %v776, 0
          %900 = vmatprep.subr.mxu0 0.0
          %901 = vmatpush1.msra.mxu0 %v767
          %902 = vmatprep.subr.mxu0 0.0
          %903 = vmatpush1.msra.mxu0 %v768
          %904 = vmatprep.subr.mxu0 0.0
          %905 = vmatpush1.msra.mxu0 %v769
          %906 = vmatprep.subr.mxu0 0.0
          %907 = vmatpush1.msra.mxu0 %v770
          %908 = vmatprep.subr.mxu0 0.0
          %909 = vmatpush1.msra.mxu0 %v771
          %910 = vmatprep.subr.mxu0 0.0
          %911 = vmatpush1.msra.mxu0 %v772
          %912 = vmatprep.subr.mxu0 0.0
          %913 = vmatpush1.msra.mxu0 %v773
          %914 = vmatprep.subr.mxu0 0.0
          %915 = vmatpush1.msra.mxu0 %v774
          %916 = vmatprep.subr.mxu0 0.0
          %917 = vmatpush1.msra.mxu0 %v775
          %918 = vmatprep.subr.mxu0 0.0
          %919 = vmatpush1.msra.mxu0 %v898
          %920 = vmatprep.subr.mxu0 0.0
          %921 = vmatpush1.msra.mxu0 0.0
          %922 = vmatprep.subr.mxu0 0.0
          %923 = vmatpush1.msra.mxu0 0.0
          %924 = vmatprep.subr.mxu0 0.0
          %925 = vmatpush1.msra.mxu0 0.0
          %926 = vmatprep.subr.mxu0 0.0
          %927 = vmatpush1.msra.mxu0 0.0
          %928 = vmatprep.subr.mxu0 0.0
          %929 = vmatpush1.msra.mxu0 0.0
          %930 = vmatprep.subr.mxu0 0.0
          %931 = vmatpush1.msra.mxu0 0.0
          %932 = vmatprep.subr.mxu0 0.0
          %933 = vmatpush1.msra.mxu0 0.0
          %934 = vmatprep.subr.mxu0 0.0
          %935 = vmatpush1.msra.mxu0 0.0
          %936 = vmatprep.subr.mxu0 0.0
          %937 = vmatpush1.msra.mxu0 0.0
          %938 = vmatprep.subr.mxu0 0.0
          %939 = vmatpush1.msra.mxu0 0.0
          %940 = vmatprep.subr.mxu0 0.0
          %941 = vmatpush1.msra.mxu0 0.0
          %942 = vmatprep.subr.mxu0 0.0
          %943 = vmatpush1.msra.mxu0 0.0
          %944 = vmatprep.subr.mxu0 0.0
          %945 = vmatpush1.msra.mxu0 0.0
          %946 = vmatprep.subr.mxu0 0.0
          %947 = vmatpush1.msra.mxu0 0.0
          %948 = vmatprep.subr.mxu0 0.0
          %949 = vmatpush1.msra.mxu0 0.0
          %950 = vmatprep.subr.mxu0 0.0
          %951 = vmatpush1.msra.mxu0 0.0
          %952 = vmatprep.subr.mxu0 0.0
          %953 = vmatpush1.msra.mxu0 0.0
          %954 = vmatprep.subr.mxu0 0.0
          %955 = vmatpush1.msra.mxu0 0.0
          %956 = vmatprep.subr.mxu0 0.0
          %957 = vmatpush1.msra.mxu0 0.0
          %958 = vmatprep.subr.mxu0 0.0
          %959 = vmatpush1.msra.mxu0 0.0
          %960 = vmatprep.subr.mxu0 0.0
          %961 = vmatpush1.msra.mxu0 0.0
          %962 = vmatprep.subr.mxu0 0.0
          %963 = vmatpush1.msra.mxu0 0.0
          %964 = vmatprep.mubr.f32.mxu0 0.0
          %965 = vmatmul.mubr.f32.gmra.mrb[0].mxu0 %v891
          %v966 = vpop.f32.mrb[0].mxu0
          %v967 = vadd.f32 %v888, %v966
          %v968 = vpop.f32.mrb[0].mxu0
          %969 = vmatprep.mubr.f32.mxu0 0.0
          %970 = vmatmul.mubr.f32.gmra.mrb[0].mxu0 %v894
          %v971 = vpop.f32.mrb[0].mxu0
          %v972 = vadd.f32 %v888, %v971
          %v973 = vpop.f32.mrb[0].mxu0
          %974 = vdwg.mxu0
          %v975 = vmax.f32 %v967, 0.0
          %v976 = vmax.f32 %v972, 0.0
          %v977 = vlaneseq
          %v978 = vshrl.u32 %v977, 7
          %v979 = vsub.s32 1, %v978
          %v980 = vrot.slane %v797, %v979
          %vm981 = vcmask 261120
          %v983 = vsel %vm981, %v975, 0
          %v986 = vsel %vm981, %v976, 0
          %988 = vmatprep.subr.mxu0 0.0
          %989 = vmatpush1.msra.mxu0 %v777
          %990 = vmatprep.subr.mxu0 0.0
          %991 = vmatpush1.msra.mxu0 %v778
          %992 = vmatprep.subr.mxu0 0.0
          %993 = vmatpush1.msra.mxu0 %v779
          %994 = vmatprep.subr.mxu0 0.0
          %995 = vmatpush1.msra.mxu0 %v780
          %996 = vmatprep.subr.mxu0 0.0
          %997 = vmatpush1.msra.mxu0 0.0
          %998 = vmatprep.subr.mxu0 0.0
          %999 = vmatpush1.msra.mxu0 0.0
          %1000 = vmatprep.subr.mxu0 0.0
          %1001 = vmatpush1.msra.mxu0 0.0
          %1002 = vmatprep.subr.mxu0 0.0
          %1003 = vmatpush1.msra.mxu0 0.0
          %1004 = vmatprep.subr.mxu0 0.0
          %1005 = vmatpush1.msra.mxu0 0.0
          %1006 = vmatprep.subr.mxu0 0.0
          %1007 = vmatpush1.msra.mxu0 0.0
          %1008 = vmatprep.subr.mxu0 0.0
          %1009 = vmatpush1.msra.mxu0 0.0
          %1010 = vmatprep.subr.mxu0 0.0
          %1011 = vmatpush1.msra.mxu0 0.0
          %1012 = vmatprep.subr.mxu0 0.0
          %1013 = vmatpush1.msra.mxu0 0.0
          %1014 = vmatprep.subr.mxu0 0.0
          %1015 = vmatpush1.msra.mxu0 0.0
          %1016 = vmatprep.subr.mxu0 0.0
          %1017 = vmatpush1.msra.mxu0 0.0
          %1018 = vmatprep.subr.mxu0 0.0
          %1019 = vmatpush1.msra.mxu0 0.0
          %1020 = vmatprep.subr.mxu0 0.0
          %1021 = vmatpush1.msra.mxu0 0.0
          %1022 = vmatprep.subr.mxu0 0.0
          %1023 = vmatpush1.msra.mxu0 0.0
          %1024 = vmatprep.subr.mxu0 0.0
          %1025 = vmatpush1.msra.mxu0 0.0
          %1026 = vmatprep.subr.mxu0 0.0
          %1027 = vmatpush1.msra.mxu0 0.0
          %1028 = vmatprep.subr.mxu0 0.0
          %1029 = vmatpush1.msra.mxu0 0.0
          %1030 = vmatprep.subr.mxu0 0.0
          %1031 = vmatpush1.msra.mxu0 0.0
          %1032 = vmatprep.subr.mxu0 0.0
          %1033 = vmatpush1.msra.mxu0 0.0
          %1034 = vmatprep.subr.mxu0 0.0
          %1035 = vmatpush1.msra.mxu0 0.0
          %1036 = vmatprep.subr.mxu0 0.0
          %1037 = vmatpush1.msra.mxu0 0.0
          %1038 = vmatprep.subr.mxu0 0.0
          %1039 = vmatpush1.msra.mxu0 0.0
          %1040 = vmatprep.subr.mxu0 0.0
          %1041 = vmatpush1.msra.mxu0 0.0
          %1042 = vmatprep.subr.mxu0 0.0
          %1043 = vmatpush1.msra.mxu0 0.0
          %1044 = vmatprep.subr.mxu0 0.0
          %1045 = vmatpush1.msra.mxu0 0.0
          %1046 = vmatprep.subr.mxu0 0.0
          %1047 = vmatpush1.msra.mxu0 0.0
          %1048 = vmatprep.subr.mxu0 0.0
          %1049 = vmatpush1.msra.mxu0 0.0
          %1050 = vmatprep.subr.mxu0 0.0
          %1051 = vmatpush1.msra.mxu0 0.0
          %1052 = vmatprep.mubr.f32.mxu0 0.0
          %1053 = vmatmul.mubr.f32.gmra.mrb[0].mxu0 %v983
          %v1054 = vpop.f32.mrb[0].mxu0
          %v1055 = vadd.f32 %v980, %v1054
          %v1056 = vpop.f32.mrb[0].mxu0
          %1057 = vmatprep.mubr.f32.mxu0 0.0
          %1058 = vmatmul.mubr.f32.gmra.mrb[0].mxu0 %v986
          %v1059 = vpop.f32.mrb[0].mxu0
          %v1060 = vadd.f32 %v980, %v1059
          %v1061 = vpop.f32.mrb[0].mxu0
          %1062 = vdwg.mxu0
          %v1063 = vmax.f32 %v1055, 0.0
          %v1064 = vmax.f32 %v1060, 0.0
          %v1065 = vlaneseq
          %v1066 = vshrl.u32 %v1065, 7
          %v1067 = vsub.s32 2, %v1066
          %v1068 = vrot.slane %v797, %v1067
          %v1069 = vmul.f32 %v1063, %v1068
          %v1070 = vmul.f32 %v1064, %v1068
          %v1071 = vlaneseq
          %v1072 = vshrl.u32 %v1071, 7
          %v1073 = vsub.s32 3, %v1072
          %v1074 = vrot.slane %v797, %v1073
          %v1075 = vadd.f32 %v1069, %v1074
          %v1076 = vadd.f32 %v1070, %v1074
          %1077 = vmatprep.subr.mxu0 0.0
          %1078 = vmatpush1.msra.mxu0 %v1075
          %1079 = vmatprep.subr.mxu0 0.0
          %1080 = vmatpush1.msra.mxu0 %v1076
          %1081 = vmatprep.subr.mxu0 0.0
          %1082 = vmatpush1.msra.mxu0 0.0
          %1083 = vmatprep.subr.mxu0 0.0
          %1084 = vmatpush1.msra.mxu0 0.0
          %1085 = vmatprep.subr.mxu0 0.0
          %1086 = vmatpush1.msra.mxu0 0.0
          %1087 = vmatprep.subr.mxu0 0.0
          %1088 = vmatpush1.msra.mxu0 0.0
          %1089 = vmatprep.subr.mxu0 0.0
          %1090 = vmatpush1.msra.mxu0 0.0
          %1091 = vmatprep.subr.mxu0 0.0
          %1092 = vmatpush1.msra.mxu0 0.0
          %1093 = vmatprep.subr.mxu0 0.0
          %1094 = vmatpush1.msra.mxu0 0.0
          %1095 = vmatprep.subr.mxu0 0.0
          %1096 = vmatpush1.msra.mxu0 0.0
          %1097 = vmatprep.subr.mxu0 0.0
          %1098 = vmatpush1.msra.mxu0 0.0
          %1099 = vmatprep.subr.mxu0 0.0
          %1100 = vmatpush1.msra.mxu0 0.0
          %1101 = vmatprep.subr.mxu0 0.0
          %1102 = vmatpush1.msra.mxu0 0.0
          %1103 = vmatprep.subr.mxu0 0.0
          %1104 = vmatpush1.msra.mxu0 0.0
          %1105 = vmatprep.subr.mxu0 0.0
          %1106 = vmatpush1.msra.mxu0 0.0
          %1107 = vmatprep.subr.mxu0 0.0
          %1108 = vmatpush1.msra.mxu0 0.0
          %1109 = vmatprep.subr.mxu0 0.0
          %1110 = vmatpush1.msra.mxu0 0.0
          %1111 = vmatprep.subr.mxu0 0.0
          %1112 = vmatpush1.msra.mxu0 0.0
          %1113 = vmatprep.subr.mxu0 0.0
          %1114 = vmatpush1.msra.mxu0 0.0
          %1115 = vmatprep.subr.mxu0 0.0
          %1116 = vmatpush1.msra.mxu0 0.0
          %1117 = vmatprep.subr.mxu0 0.0
          %1118 = vmatpush1.msra.mxu0 0.0
          %1119 = vmatprep.subr.mxu0 0.0
          %1120 = vmatpush1.msra.mxu0 0.0
          %1121 = vmatprep.subr.mxu0 0.0
          %1122 = vmatpush1.msra.mxu0 0.0
          %1123 = vmatprep.subr.mxu0 0.0
          %1124 = vmatpush1.msra.mxu0 0.0
          %1125 = vmatprep.subr.mxu0 0.0
          %1126 = vmatpush1.msra.mxu0 0.0
          %1127 = vmatprep.subr.mxu0 0.0
          %1128 = vmatpush1.msra.mxu0 0.0
          %1129 = vmatprep.subr.mxu0 0.0
          %1130 = vmatpush1.msra.mxu0 0.0
          %1131 = vmatprep.subr.mxu0 0.0
          %1132 = vmatpush1.msra.mxu0 0.0
          %1133 = vmatprep.subr.mxu0 0.0
          %1134 = vmatpush1.msra.mxu0 0.0
          %1135 = vmatprep.subr.mxu0 0.0
          %1136 = vmatpush1.msra.mxu0 0.0
          %1137 = vmatprep.subr.mxu0 0.0
          %1138 = vmatpush1.msra.mxu0 0.0
          %1139 = vmatprep.subr.mxu0 0.0
          %1140 = vmatpush1.msra.mxu0 0.0
          %1141 = vmatprep.mubr.f32.mxu0 0.0
          %1142 = vmatmul.mubr.f32.gmra.mrb[0].mxu0 %v803
          %v1143 = vpop.f32.mrb[0].mxu0
          %v1144 = vadd.f32 0.0, %v1143
          %v1145 = vpop.f32.mrb[0].mxu0
          %1146 = vmatprep.mubr.f32.mxu0 0.0
          %1147 = vmatmul.mubr.f32.gmra.mrb[0].mxu0 %v806
          %v1148 = vpop.f32.mrb[0].mxu0
          %v1149 = vadd.f32 0.0, %v1148
          %v1150 = vpop.f32.mrb[0].mxu0
          %1151 = vdwg.mxu0
          %v1152 = vadd.f32 %v1075, %v1144
          %v1153 = vadd.f32 %v1076, %v1149
          %v1154 = vlaneseq
          %v1155 = vshrl.u32 %v1154, 7
          %v1156 = vsub.s32 4, %v1155
          %v1157 = vrot.slane %v797, %v1156
          %v1159 = vsel %vm981, %v1152, 0
          %v1162 = vsel %vm981, %v1153, 0
          %1164 = vmatprep.subr.mxu0 0.0
          %1165 = vmatpush1.msra.mxu0 %v781
          %1166 = vmatprep.subr.mxu0 0.0
          %1167 = vmatpush1.msra.mxu0 %v782
          %1168 = vmatprep.subr.mxu0 0.0
          %1169 = vmatpush1.msra.mxu0 %v783
          %1170 = vmatprep.subr.mxu0 0.0
          %1171 = vmatpush1.msra.mxu0 %v784
          %1172 = vmatprep.subr.mxu0 0.0
          %1173 = vmatpush1.msra.mxu0 0.0
          %1174 = vmatprep.subr.mxu0 0.0
          %1175 = vmatpush1.msra.mxu0 0.0
          %1176 = vmatprep.subr.mxu0 0.0
          %1177 = vmatpush1.msra.mxu0 0.0
          %1178 = vmatprep.subr.mxu0 0.0
          %1179 = vmatpush1.msra.mxu0 0.0
          %1180 = vmatprep.subr.mxu0 0.0
          %1181 = vmatpush1.msra.mxu0 0.0
          %1182 = vmatprep.subr.mxu0 0.0
          %1183 = vmatpush1.msra.mxu0 0.0
          %1184 = vmatprep.subr.mxu0 0.0
          %1185 = vmatpush1.msra.mxu0 0.0
          %1186 = vmatprep.subr.mxu0 0.0
          %1187 = vmatpush1.msra.mxu0 0.0
          %1188 = vmatprep.subr.mxu0 0.0
          %1189 = vmatpush1.msra.mxu0 0.0
          %1190 = vmatprep.subr.mxu0 0.0
          %1191 = vmatpush1.msra.mxu0 0.0
          %1192 = vmatprep.subr.mxu0 0.0
          %1193 = vmatpush1.msra.mxu0 0.0
          %1194 = vmatprep.subr.mxu0 0.0
          %1195 = vmatpush1.msra.mxu0 0.0
          %1196 = vmatprep.subr.mxu0 0.0
          %1197 = vmatpush1.msra.mxu0 0.0
          %1198 = vmatprep.subr.mxu0 0.0
          %1199 = vmatpush1.msra.mxu0 0.0
          %1200 = vmatprep.subr.mxu0 0.0
          %1201 = vmatpush1.msra.mxu0 0.0
          %1202 = vmatprep.subr.mxu0 0.0
          %1203 = vmatpush1.msra.mxu0 0.0
          %1204 = vmatprep.subr.mxu0 0.0
          %1205 = vmatpush1.msra.mxu0 0.0
          %1206 = vmatprep.subr.mxu0 0.0
          %1207 = vmatpush1.msra.mxu0 0.0
          %1208 = vmatprep.subr.mxu0 0.0
          %1209 = vmatpush1.msra.mxu0 0.0
          %1210 = vmatprep.subr.mxu0 0.0
          %1211 = vmatpush1.msra.mxu0 0.0
          %1212 = vmatprep.subr.mxu0 0.0
          %1213 = vmatpush1.msra.mxu0 0.0
          %1214 = vmatprep.subr.mxu0 0.0
          %1215 = vmatpush1.msra.mxu0 0.0
          %1216 = vmatprep.subr.mxu0 0.0
          %1217 = vmatpush1.msra.mxu0 0.0
          %1218 = vmatprep.subr.mxu0 0.0
          %1219 = vmatpush1.msra.mxu0 0.0
          %1220 = vmatprep.subr.mxu0 0.0
          %1221 = vmatpush1.msra.mxu0 0.0
          %1222 = vmatprep.subr.mxu0 0.0
          %1223 = vmatpush1.msra.mxu0 0.0
          %1224 = vmatprep.subr.mxu0 0.0
          %1225 = vmatpush1.msra.mxu0 0.0
          %1226 = vmatprep.subr.mxu0 0.0
          %1227 = vmatpush1.msra.mxu0 0.0
          %1228 = vmatprep.mubr.f32.mxu0 0.0
          %1229 = vmatmul.mubr.f32.gmra.mrb[0].mxu0 %v1159
          %v1230 = vpop.f32.mrb[0].mxu0
          %v1231 = vadd.f32 %v1157, %v1230
          %v1232 = vpop.f32.mrb[0].mxu0
          %1233 = vmatprep.mubr.f32.mxu0 0.0
          %1234 = vmatmul.mubr.f32.gmra.mrb[0].mxu0 %v1162
          %v1235 = vpop.f32.mrb[0].mxu0
          %v1236 = vadd.f32 %v1157, %v1235
          %v1237 = vpop.f32.mrb[0].mxu0
          %1238 = vdwg.mxu0
          %v1239 = vmax.f32 %v1231, 0.0
          %v1240 = vmax.f32 %v1236, 0.0
          %v1241 = vlaneseq
          %v1242 = vshrl.u32 %v1241, 7
          %v1243 = vsub.s32 5, %v1242
          %v1244 = vrot.slane %v797, %v1243
          %v1246 = vsel %vm981, %v1239, 0
          %v1249 = vsel %vm981, %v1240, 0
          %1251 = vmatprep.subr.mxu0 0.0
          %1252 = vmatpush1.msra.mxu0 %v785
          %1253 = vmatprep.subr.mxu0 0.0
          %1254 = vmatpush1.msra.mxu0 %v786
          %1255 = vmatprep.subr.mxu0 0.0
          %1256 = vmatpush1.msra.mxu0 %v787
          %1257 = vmatprep.subr.mxu0 0.0
          %1258 = vmatpush1.msra.mxu0 %v788
          %1259 = vmatprep.subr.mxu0 0.0
          %1260 = vmatpush1.msra.mxu0 0.0
          %1261 = vmatprep.subr.mxu0 0.0
          %1262 = vmatpush1.msra.mxu0 0.0
          %1263 = vmatprep.subr.mxu0 0.0
          %1264 = vmatpush1.msra.mxu0 0.0
          %1265 = vmatprep.subr.mxu0 0.0
          %1266 = vmatpush1.msra.mxu0 0.0
          %1267 = vmatprep.subr.mxu0 0.0
          %1268 = vmatpush1.msra.mxu0 0.0
          %1269 = vmatprep.subr.mxu0 0.0
          %1270 = vmatpush1.msra.mxu0 0.0
          %1271 = vmatprep.subr.mxu0 0.0
          %1272 = vmatpush1.msra.mxu0 0.0
          %1273 = vmatprep.subr.mxu0 0.0
          %1274 = vmatpush1.msra.mxu0 0.0
          %1275 = vmatprep.subr.mxu0 0.0
          %1276 = vmatpush1.msra.mxu0 0.0
          %1277 = vmatprep.subr.mxu0 0.0
          %1278 = vmatpush1.msra.mxu0 0.0
          %1279 = vmatprep.subr.mxu0 0.0
          %1280 = vmatpush1.msra.mxu0 0.0
          %1281 = vmatprep.subr.mxu0 0.0
          %1282 = vmatpush1.msra.mxu0 0.0
          %1283 = vmatprep.subr.mxu0 0.0
          %1284 = vmatpush1.msra.mxu0 0.0
          %1285 = vmatprep.subr.mxu0 0.0
          %1286 = vmatpush1.msra.mxu0 0.0
          %1287 = vmatprep.subr.mxu0 0.0
          %1288 = vmatpush1.msra.mxu0 0.0
          %1289 = vmatprep.subr.mxu0 0.0
          %1290 = vmatpush1.msra.mxu0 0.0
          %1291 = vmatprep.subr.mxu0 0.0
          %1292 = vmatpush1.msra.mxu0 0.0
          %1293 = vmatprep.subr.mxu0 0.0
          %1294 = vmatpush1.msra.mxu0 0.0
          %1295 = vmatprep.subr.mxu0 0.0
          %1296 = vmatpush1.msra.mxu0 0.0
          %1297 = vmatprep.subr.mxu0 0.0
          %1298 = vmatpush1.msra.mxu0 0.0
          %1299 = vmatprep.subr.mxu0 0.0
          %1300 = vmatpush1.msra.mxu0 0.0
          %1301 = vmatprep.subr.mxu0 0.0
          %1302 = vmatpush1.msra.mxu0 0.0
          %1303 = vmatprep.subr.mxu0 0.0
          %1304 = vmatpush1.msra.mxu0 0.0
          %1305 = vmatprep.subr.mxu0 0.0
          %1306 = vmatpush1.msra.mxu0 0.0
          %1307 = vmatprep.subr.mxu0 0.0
          %1308 = vmatpush1.msra.mxu0 0.0
          %1309 = vmatprep.subr.mxu0 0.0
          %1310 = vmatpush1.msra.mxu0 0.0
          %1311 = vmatprep.subr.mxu0 0.0
          %1312 = vmatpush1.msra.mxu0 0.0
          %1313 = vmatprep.subr.mxu0 0.0
          %1314 = vmatpush1.msra.mxu0 0.0
          %1315 = vmatprep.mubr.f32.mxu0 0.0
          %1316 = vmatmul.mubr.f32.gmra.mrb[0].mxu0 %v1246
          %v1317 = vpop.f32.mrb[0].mxu0
          %v1318 = vadd.f32 %v1244, %v1317
          %v1319 = vpop.f32.mrb[0].mxu0
          %1320 = vmatprep.mubr.f32.mxu0 0.0
          %1321 = vmatmul.mubr.f32.gmra.mrb[0].mxu0 %v1249
          %v1322 = vpop.f32.mrb[0].mxu0
          %v1323 = vadd.f32 %v1244, %v1322
          %v1324 = vpop.f32.mrb[0].mxu0
          %1325 = vdwg.mxu0
          %v1326 = vmax.f32 %v1318, 0.0
          %v1327 = vmax.f32 %v1323, 0.0
          %v1328 = vlaneseq
          %v1329 = vshrl.u32 %v1328, 7
          %v1330 = vsub.s32 6, %v1329
          %v1331 = vrot.slane %v797, %v1330
          %v1332 = vmul.f32 %v1326, %v1331
          %v1333 = vmul.f32 %v1327, %v1331
          %v1334 = vlaneseq
          %v1335 = vshrl.u32 %v1334, 7
          %v1336 = vsub.s32 7, %v1335
          %v1337 = vrot.slane %v797, %v1336
          %v1338 = vadd.f32 %v1332, %v1337
          %v1339 = vadd.f32 %v1333, %v1337
          %1340 = vmatprep.subr.mxu0 0.0
          %1341 = vmatpush1.msra.mxu0 %v1338
          %1342 = vmatprep.subr.mxu0 0.0
          %1343 = vmatpush1.msra.mxu0 %v1339
          %1344 = vmatprep.subr.mxu0 0.0
          %1345 = vmatpush1.msra.mxu0 0.0
          %1346 = vmatprep.subr.mxu0 0.0
          %1347 = vmatpush1.msra.mxu0 0.0
          %1348 = vmatprep.subr.mxu0 0.0
          %1349 = vmatpush1.msra.mxu0 0.0
          %1350 = vmatprep.subr.mxu0 0.0
          %1351 = vmatpush1.msra.mxu0 0.0
          %1352 = vmatprep.subr.mxu0 0.0
          %1353 = vmatpush1.msra.mxu0 0.0
          %1354 = vmatprep.subr.mxu0 0.0
          %1355 = vmatpush1.msra.mxu0 0.0
          %1356 = vmatprep.subr.mxu0 0.0
          %1357 = vmatpush1.msra.mxu0 0.0
          %1358 = vmatprep.subr.mxu0 0.0
          %1359 = vmatpush1.msra.mxu0 0.0
          %1360 = vmatprep.subr.mxu0 0.0
          %1361 = vmatpush1.msra.mxu0 0.0
          %1362 = vmatprep.subr.mxu0 0.0
          %1363 = vmatpush1.msra.mxu0 0.0
          %1364 = vmatprep.subr.mxu0 0.0
          %1365 = vmatpush1.msra.mxu0 0.0
          %1366 = vmatprep.subr.mxu0 0.0
          %1367 = vmatpush1.msra.mxu0 0.0
          %1368 = vmatprep.subr.mxu0 0.0
          %1369 = vmatpush1.msra.mxu0 0.0
          %1370 = vmatprep.subr.mxu0 0.0
          %1371 = vmatpush1.msra.mxu0 0.0
          %1372 = vmatprep.subr.mxu0 0.0
          %1373 = vmatpush1.msra.mxu0 0.0
          %1374 = vmatprep.subr.mxu0 0.0
          %1375 = vmatpush1.msra.mxu0 0.0
          %1376 = vmatprep.subr.mxu0 0.0
          %1377 = vmatpush1.msra.mxu0 0.0
          %1378 = vmatprep.subr.mxu0 0.0
          %1379 = vmatpush1.msra.mxu0 0.0
          %1380 = vmatprep.subr.mxu0 0.0
          %1381 = vmatpush1.msra.mxu0 0.0
          %1382 = vmatprep.subr.mxu0 0.0
          %1383 = vmatpush1.msra.mxu0 0.0
          %1384 = vmatprep.subr.mxu0 0.0
          %1385 = vmatpush1.msra.mxu0 0.0
          %1386 = vmatprep.subr.mxu0 0.0
          %1387 = vmatpush1.msra.mxu0 0.0
          %1388 = vmatprep.subr.mxu0 0.0
          %1389 = vmatpush1.msra.mxu0 0.0
          %1390 = vmatprep.subr.mxu0 0.0
          %1391 = vmatpush1.msra.mxu0 0.0
          %1392 = vmatprep.subr.mxu0 0.0
          %1393 = vmatpush1.msra.mxu0 0.0
          %1394 = vmatprep.subr.mxu0 0.0
          %1395 = vmatpush1.msra.mxu0 0.0
          %1396 = vmatprep.subr.mxu0 0.0
          %1397 = vmatpush1.msra.mxu0 0.0
          %1398 = vmatprep.subr.mxu0 0.0
          %1399 = vmatpush1.msra.mxu0 0.0
          %1400 = vmatprep.subr.mxu0 0.0
          %1401 = vmatpush1.msra.mxu0 0.0
          %1402 = vmatprep.subr.mxu0 0.0
          %1403 = vmatpush1.msra.mxu0 0.0
          %1404 = vmatprep.mubr.f32.mxu0 0.0
          %1405 = vmatmul.mubr.f32.gmra.mrb[0].mxu0 %v803
          %v1406 = vpop.f32.mrb[0].mxu0
          %v1407 = vadd.f32 0.0, %v1406
          %v1408 = vpop.f32.mrb[0].mxu0
          %1409 = vmatprep.mubr.f32.mxu0 0.0
          %1410 = vmatmul.mubr.f32.gmra.mrb[0].mxu0 %v806
          %v1411 = vpop.f32.mrb[0].mxu0
          %v1412 = vadd.f32 0.0, %v1411
          %v1413 = vpop.f32.mrb[0].mxu0
          %1414 = vdwg.mxu0
          %v1415 = vadd.f32 %v1338, %v1407
          %v1416 = vadd.f32 %v1339, %v1412
          %v1417 = vlaneseq
          %v1418 = vshrl.u32 %v1417, 7
          %v1419 = vsub.s32 0, %v1418
          %v1420 = vrot.slane %v798, %v1419
          %v1422 = vsel %vm981, %v1415, 0
          %v1425 = vsel %vm981, %v1416, 0
          %1427 = vmatprep.subr.mxu0 0.0
          %1428 = vmatpush1.msra.mxu0 %v789
          %1429 = vmatprep.subr.mxu0 0.0
          %1430 = vmatpush1.msra.mxu0 %v790
          %1431 = vmatprep.subr.mxu0 0.0
          %1432 = vmatpush1.msra.mxu0 %v791
          %1433 = vmatprep.subr.mxu0 0.0
          %1434 = vmatpush1.msra.mxu0 %v792
          %1435 = vmatprep.subr.mxu0 0.0
          %1436 = vmatpush1.msra.mxu0 0.0
          %1437 = vmatprep.subr.mxu0 0.0
          %1438 = vmatpush1.msra.mxu0 0.0
          %1439 = vmatprep.subr.mxu0 0.0
          %1440 = vmatpush1.msra.mxu0 0.0
          %1441 = vmatprep.subr.mxu0 0.0
          %1442 = vmatpush1.msra.mxu0 0.0
          %1443 = vmatprep.subr.mxu0 0.0
          %1444 = vmatpush1.msra.mxu0 0.0
          %1445 = vmatprep.subr.mxu0 0.0
          %1446 = vmatpush1.msra.mxu0 0.0
          %1447 = vmatprep.subr.mxu0 0.0
          %1448 = vmatpush1.msra.mxu0 0.0
          %1449 = vmatprep.subr.mxu0 0.0
          %1450 = vmatpush1.msra.mxu0 0.0
          %1451 = vmatprep.subr.mxu0 0.0
          %1452 = vmatpush1.msra.mxu0 0.0
          %1453 = vmatprep.subr.mxu0 0.0
          %1454 = vmatpush1.msra.mxu0 0.0
          %1455 = vmatprep.subr.mxu0 0.0
          %1456 = vmatpush1.msra.mxu0 0.0
          %1457 = vmatprep.subr.mxu0 0.0
          %1458 = vmatpush1.msra.mxu0 0.0
          %1459 = vmatprep.subr.mxu0 0.0
          %1460 = vmatpush1.msra.mxu0 0.0
          %1461 = vmatprep.subr.mxu0 0.0
          %1462 = vmatpush1.msra.mxu0 0.0
          %1463 = vmatprep.subr.mxu0 0.0
          %1464 = vmatpush1.msra.mxu0 0.0
          %1465 = vmatprep.subr.mxu0 0.0
          %1466 = vmatpush1.msra.mxu0 0.0
          %1467 = vmatprep.subr.mxu0 0.0
          %1468 = vmatpush1.msra.mxu0 0.0
          %1469 = vmatprep.subr.mxu0 0.0
          %1470 = vmatpush1.msra.mxu0 0.0
          %1471 = vmatprep.subr.mxu0 0.0
          %1472 = vmatpush1.msra.mxu0 0.0
          %1473 = vmatprep.subr.mxu0 0.0
          %1474 = vmatpush1.msra.mxu0 0.0
          %1475 = vmatprep.subr.mxu0 0.0
          %1476 = vmatpush1.msra.mxu0 0.0
          %1477 = vmatprep.subr.mxu0 0.0
          %1478 = vmatpush1.msra.mxu0 0.0
          %1479 = vmatprep.subr.mxu0 0.0
          %1480 = vmatpush1.msra.mxu0 0.0
          %1481 = vmatprep.subr.mxu0 0.0
          %1482 = vmatpush1.msra.mxu0 0.0
          %1483 = vmatprep.subr.mxu0 0.0
          %1484 = vmatpush1.msra.mxu0 0.0
          %1485 = vmatprep.subr.mxu0 0.0
          %1486 = vmatpush1.msra.mxu0 0.0
          %1487 = vmatprep.subr.mxu0 0.0
          %1488 = vmatpush1.msra.mxu0 0.0
          %1489 = vmatprep.subr.mxu0 0.0
          %1490 = vmatpush1.msra.mxu0 0.0
          %1491 = vmatprep.mubr.f32.mxu0 0.0
          %1492 = vmatmul.mubr.f32.gmra.mrb[0].mxu0 %v1422
          %v1493 = vpop.f32.mrb[0].mxu0
          %v1494 = vadd.f32 %v1420, %v1493
          %v1495 = vpop.f32.mrb[0].mxu0
          %1496 = vmatprep.mubr.f32.mxu0 0.0
          %1497 = vmatmul.mubr.f32.gmra.mrb[0].mxu0 %v1425
          %v1498 = vpop.f32.mrb[0].mxu0
          %v1499 = vadd.f32 %v1420, %v1498
          %v1500 = vpop.f32.mrb[0].mxu0
          %1501 = vdwg.mxu0
          %v1502 = vmax.f32 %v1494, 0.0
          %v1503 = vmax.f32 %v1499, 0.0
          %v1504 = vlaneseq
          %v1505 = vshrl.u32 %v1504, 7
          %v1506 = vsub.s32 1, %v1505
          %v1507 = vrot.slane %v798, %v1506
          %v1509 = vsel %vm981, %v1502, 0
          %v1512 = vsel %vm981, %v1503, 0
          %1514 = vmatprep.subr.mxu0 0.0
          %1515 = vmatpush1.msra.mxu0 %v793
          %1516 = vmatprep.subr.mxu0 0.0
          %1517 = vmatpush1.msra.mxu0 %v794
          %1518 = vmatprep.subr.mxu0 0.0
          %1519 = vmatpush1.msra.mxu0 %v795
          %1520 = vmatprep.subr.mxu0 0.0
          %1521 = vmatpush1.msra.mxu0 %v796
          %1522 = vmatprep.subr.mxu0 0.0
          %1523 = vmatpush1.msra.mxu0 0.0
          %1524 = vmatprep.subr.mxu0 0.0
          %1525 = vmatpush1.msra.mxu0 0.0
          %1526 = vmatprep.subr.mxu0 0.0
          %1527 = vmatpush1.msra.mxu0 0.0
          %1528 = vmatprep.subr.mxu0 0.0
          %1529 = vmatpush1.msra.mxu0 0.0
          %1530 = vmatprep.subr.mxu0 0.0
          %1531 = vmatpush1.msra.mxu0 0.0
          %1532 = vmatprep.subr.mxu0 0.0
          %1533 = vmatpush1.msra.mxu0 0.0
          %1534 = vmatprep.subr.mxu0 0.0
          %1535 = vmatpush1.msra.mxu0 0.0
          %1536 = vmatprep.subr.mxu0 0.0
          %1537 = vmatpush1.msra.mxu0 0.0
          %1538 = vmatprep.subr.mxu0 0.0
          %1539 = vmatpush1.msra.mxu0 0.0
          %1540 = vmatprep.subr.mxu0 0.0
          %1541 = vmatpush1.msra.mxu0 0.0
          %1542 = vmatprep.subr.mxu0 0.0
          %1543 = vmatpush1.msra.mxu0 0.0
          %1544 = vmatprep.subr.mxu0 0.0
          %1545 = vmatpush1.msra.mxu0 0.0
          %1546 = vmatprep.subr.mxu0 0.0
          %1547 = vmatpush1.msra.mxu0 0.0
          %1548 = vmatprep.subr.mxu0 0.0
          %1549 = vmatpush1.msra.mxu0 0.0
          %1550 = vmatprep.subr.mxu0 0.0
          %1551 = vmatpush1.msra.mxu0 0.0
          %1552 = vmatprep.subr.mxu0 0.0
          %1553 = vmatpush1.msra.mxu0 0.0
          %1554 = vmatprep.subr.mxu0 0.0
          %1555 = vmatpush1.msra.mxu0 0.0
          %1556 = vmatprep.subr.mxu0 0.0
          %1557 = vmatpush1.msra.mxu0 0.0
          %1558 = vmatprep.subr.mxu0 0.0
          %1559 = vmatpush1.msra.mxu0 0.0
          %1560 = vmatprep.subr.mxu0 0.0
          %1561 = vmatpush1.msra.mxu0 0.0
          %1562 = vmatprep.subr.mxu0 0.0
          %1563 = vmatpush1.msra.mxu0 0.0
          %1564 = vmatprep.subr.mxu0 0.0
          %1565 = vmatpush1.msra.mxu0 0.0
          %1566 = vmatprep.subr.mxu0 0.0
          %1567 = vmatpush1.msra.mxu0 0.0
          %1568 = vmatprep.subr.mxu0 0.0
          %1569 = vmatpush1.msra.mxu0 0.0
          %1570 = vmatprep.subr.mxu0 0.0
          %1571 = vmatpush1.msra.mxu0 0.0
          %1572 = vmatprep.subr.mxu0 0.0
          %1573 = vmatpush1.msra.mxu0 0.0
          %1574 = vmatprep.subr.mxu0 0.0
          %1575 = vmatpush1.msra.mxu0 0.0
          %1576 = vmatprep.subr.mxu0 0.0
          %1577 = vmatpush1.msra.mxu0 0.0
          %1578 = vmatprep.mubr.f32.mxu0 0.0
          %1579 = vmatmul.mubr.f32.gmra.mrb[0].mxu0 %v1509
          %v1580 = vpop.f32.mrb[0].mxu0
          %v1581 = vadd.f32 %v1507, %v1580
          %v1582 = vpop.f32.mrb[0].mxu0
          %1583 = vmatprep.mubr.f32.mxu0 0.0
          %1584 = vmatmul.mubr.f32.gmra.mrb[0].mxu0 %v1512
          %v1585 = vpop.f32.mrb[0].mxu0
          %v1586 = vadd.f32 %v1507, %v1585
          %v1587 = vpop.f32.mrb[0].mxu0
          %1588 = vdwg.mxu0
          %v1589 = vmax.f32 %v1581, 0.0
          %v1590 = vmax.f32 %v1586, 0.0
          %v1591 = vlaneseq
          %v1592 = vshrl.u32 %v1591, 7
          %v1593 = vsub.s32 2, %v1592
          %v1594 = vrot.slane %v798, %v1593
          %v1595 = vmul.f32 %v1589, %v1594
          %v1596 = vmul.f32 %v1590, %v1594
          %v1597 = vlaneseq
          %v1598 = vshrl.u32 %v1597, 7
          %v1599 = vsub.s32 3, %v1598
          %v1600 = vrot.slane %v798, %v1599
          %v1601 = vadd.f32 %v1595, %v1600
          %v1602 = vadd.f32 %v1596, %v1600
          %v1603 = vld [vmem:[#allocation13] sm:$0x3]
          %v1605 = vsel %vm801, %v1603, 0
          %1607 = vmatprep.subr.mxu0 0.0
          %1608 = vmatpush1.msra.mxu0 %v1601
          %1609 = vmatprep.subr.mxu0 0.0
          %1610 = vmatpush1.msra.mxu0 %v1602
          %1611 = vmatprep.subr.mxu0 0.0
          %1612 = vmatpush1.msra.mxu0 0.0
          %1613 = vmatprep.subr.mxu0 0.0
          %1614 = vmatpush1.msra.mxu0 0.0
          %1615 = vmatprep.subr.mxu0 0.0
          %1616 = vmatpush1.msra.mxu0 0.0
          %1617 = vmatprep.subr.mxu0 0.0
          %1618 = vmatpush1.msra.mxu0 0.0
          %1619 = vmatprep.subr.mxu0 0.0
          %1620 = vmatpush1.msra.mxu0 0.0
          %1621 = vmatprep.subr.mxu0 0.0
          %1622 = vmatpush1.msra.mxu0 0.0
          %1623 = vmatprep.subr.mxu0 0.0
          %1624 = vmatpush1.msra.mxu0 0.0
          %1625 = vmatprep.subr.mxu0 0.0
          %1626 = vmatpush1.msra.mxu0 0.0
          %1627 = vmatprep.subr.mxu0 0.0
          %1628 = vmatpush1.msra.mxu0 0.0
          %1629 = vmatprep.subr.mxu0 0.0
          %1630 = vmatpush1.msra.mxu0 0.0
          %1631 = vmatprep.subr.mxu0 0.0
          %1632 = vmatpush1.msra.mxu0 0.0
          %1633 = vmatprep.subr.mxu0 0.0
          %1634 = vmatpush1.msra.mxu0 0.0
          %1635 = vmatprep.subr.mxu0 0.0
          %1636 = vmatpush1.msra.mxu0 0.0
          %1637 = vmatprep.subr.mxu0 0.0
          %1638 = vmatpush1.msra.mxu0 0.0
          %1639 = vmatprep.subr.mxu0 0.0
          %1640 = vmatpush1.msra.mxu0 0.0
          %1641 = vmatprep.subr.mxu0 0.0
          %1642 = vmatpush1.msra.mxu0 0.0
          %1643 = vmatprep.subr.mxu0 0.0
          %1644 = vmatpush1.msra.mxu0 0.0
          %1645 = vmatprep.subr.mxu0 0.0
          %1646 = vmatpush1.msra.mxu0 0.0
          %1647 = vmatprep.subr.mxu0 0.0
          %1648 = vmatpush1.msra.mxu0 0.0
          %1649 = vmatprep.subr.mxu0 0.0
          %1650 = vmatpush1.msra.mxu0 0.0
          %1651 = vmatprep.subr.mxu0 0.0
          %1652 = vmatpush1.msra.mxu0 0.0
          %1653 = vmatprep.subr.mxu0 0.0
          %1654 = vmatpush1.msra.mxu0 0.0
          %1655 = vmatprep.subr.mxu0 0.0
          %1656 = vmatpush1.msra.mxu0 0.0
          %1657 = vmatprep.subr.mxu0 0.0
          %1658 = vmatpush1.msra.mxu0 0.0
          %1659 = vmatprep.subr.mxu0 0.0
          %1660 = vmatpush1.msra.mxu0 0.0
          %1661 = vmatprep.subr.mxu0 0.0
          %1662 = vmatpush1.msra.mxu0 0.0
          %1663 = vmatprep.subr.mxu0 0.0
          %1664 = vmatpush1.msra.mxu0 0.0
          %1665 = vmatprep.subr.mxu0 0.0
          %1666 = vmatpush1.msra.mxu0 0.0
          %1667 = vmatprep.subr.mxu0 0.0
          %1668 = vmatpush1.msra.mxu0 0.0
          %1669 = vmatprep.subr.mxu0 0.0
          %1670 = vmatpush1.msra.mxu0 0.0
          %1671 = vmatprep.mubr.f32.mxu0 0.0
          %1672 = vmatmul.mubr.f32.gmra.mrb[0].mxu0 %v1605
          %v1673 = vpop.f32.mrb[0].mxu0
          %v1674 = vadd.f32 0.0, %v1673
          %v1675 = vpop.f32.mrb[0].mxu0
          %1676 = vdwg.mxu0
          %v1677 = vld [vmem:[#allocation16] sm:$0xff]
          %v1678 = vld [vmem:[#allocation16 + $0x8] sm:$0xff]
          %v1679 = vld [vmem:[#allocation16 + $0x10] sm:$0xff]
          %v1680 = vld [vmem:[#allocation16 + $0x18] sm:$0xff]
          %v1681 = vld [vmem:[#allocation18] sm:$0x1]
          %v1683 = vlaneseq
          %v1684 = vshrl.u32 %v1683, 7
          %v1685 = vsub.s32 0, %v1684
          %v1686 = vrot.slane %v1681, %v1685
          %v1689 = vsel %vm981, %v1674, 0
          %1691 = vmatprep.subr.mxu0 0.0
          %1692 = vmatpush1.msra.mxu0 %v1677
          %1693 = vmatprep.subr.mxu0 0.0
          %1694 = vmatpush1.msra.mxu0 %v1678
          %1695 = vmatprep.subr.mxu0 0.0
          %1696 = vmatpush1.msra.mxu0 %v1679
          %1697 = vmatprep.subr.mxu0 0.0
          %1698 = vmatpush1.msra.mxu0 %v1680
          %1699 = vmatprep.subr.mxu0 0.0
          %1700 = vmatpush1.msra.mxu0 0.0
          %1701 = vmatprep.subr.mxu0 0.0
          %1702 = vmatpush1.msra.mxu0 0.0
          %1703 = vmatprep.subr.mxu0 0.0
          %1704 = vmatpush1.msra.mxu0 0.0
          %1705 = vmatprep.subr.mxu0 0.0
          %1706 = vmatpush1.msra.mxu0 0.0
          %1707 = vmatprep.subr.mxu0 0.0
          %1708 = vmatpush1.msra.mxu0 0.0
          %1709 = vmatprep.subr.mxu0 0.0
          %1710 = vmatpush1.msra.mxu0 0.0
          %1711 = vmatprep.subr.mxu0 0.0
          %1712 = vmatpush1.msra.mxu0 0.0
          %1713 = vmatprep.subr.mxu0 0.0
          %1714 = vmatpush1.msra.mxu0 0.0
          %1715 = vmatprep.subr.mxu0 0.0
          %1716 = vmatpush1.msra.mxu0 0.0
          %1717 = vmatprep.subr.mxu0 0.0
          %1718 = vmatpush1.msra.mxu0 0.0
          %1719 = vmatprep.subr.mxu0 0.0
          %1720 = vmatpush1.msra.mxu0 0.0
          %1721 = vmatprep.subr.mxu0 0.0
          %1722 = vmatpush1.msra.mxu0 0.0
          %1723 = vmatprep.subr.mxu0 0.0
          %1724 = vmatpush1.msra.mxu0 0.0
          %1725 = vmatprep.subr.mxu0 0.0
          %1726 = vmatpush1.msra.mxu0 0.0
          %1727 = vmatprep.subr.mxu0 0.0
          %1728 = vmatpush1.msra.mxu0 0.0
          %1729 = vmatprep.subr.mxu0 0.0
          %1730 = vmatpush1.msra.mxu0 0.0
          %1731 = vmatprep.subr.mxu0 0.0
          %1732 = vmatpush1.msra.mxu0 0.0
          %1733 = vmatprep.subr.mxu0 0.0
          %1734 = vmatpush1.msra.mxu0 0.0
          %1735 = vmatprep.subr.mxu0 0.0
          %1736 = vmatpush1.msra.mxu0 0.0
          %1737 = vmatprep.subr.mxu0 0.0
          %1738 = vmatpush1.msra.mxu0 0.0
          %1739 = vmatprep.subr.mxu0 0.0
          %1740 = vmatpush1.msra.mxu0 0.0
          %1741 = vmatprep.subr.mxu0 0.0
          %1742 = vmatpush1.msra.mxu0 0.0
          %1743 = vmatprep.subr.mxu0 0.0
          %1744 = vmatpush1.msra.mxu0 0.0
          %1745 = vmatprep.subr.mxu0 0.0
          %1746 = vmatpush1.msra.mxu0 0.0
          %1747 = vmatprep.subr.mxu0 0.0
          %1748 = vmatpush1.msra.mxu0 0.0
          %1749 = vmatprep.subr.mxu0 0.0
          %1750 = vmatpush1.msra.mxu0 0.0
          %1751 = vmatprep.subr.mxu0 0.0
          %1752 = vmatpush1.msra.mxu0 0.0
          %1753 = vmatprep.subr.mxu0 0.0
          %1754 = vmatpush1.msra.mxu0 0.0
          %1755 = vmatprep.mubr.f32.mxu0 0.0
          %1756 = vmatmul.mubr.f32.gmra.mrb[0].mxu0 %v1689
          %v1757 = vpop.f32.mrb[0].mxu0
          %v1758 = vadd.f32 %v1686, %v1757
          %v1759 = vpop.f32.mrb[0].mxu0
          %1760 = vdwg.mxu0
          %v1761 = vmax.f32 %v1758, 0.0
          %1762 = vst [vmem:[#allocation2] sm:$0x3] %v1761
          %v1763 = vld [vmem:[#allocation9] sm:$0x1]
          %v1765 = vlaneseq
          %v1766 = vshrl.u32 %v1765, 7
          %v1767 = vsub.s32 0, %v1766
          %v1768 = vrot.slane %v1763, %v1767
          %v1770 = vadd.f32 %v1768, 0.0
          %1771 = vst [vmem:[#allocation3] sm:$0x3] %v1770
        $region148: #{tpu_custom_call.1} parent=87 // pred_fallthru
          _
        %v1772 = vld [vmem:[#allocation3] sm:$0x3]
        %v1773 = vld [vmem:[%s650] sm:$0xff]
        %v1774 = vld [vmem:[%s650 + $0x8] sm:$0xff]
        %v1775 = vld [vmem:[%s650 + $0x10] sm:$0xff]
        %v1776 = vld [vmem:[%s650 + $0x18] sm:$0xff]
        %v1777 = vld [vmem:[%s650 + $0x20] sm:$0xff]
        %v1778 = vld [vmem:[%s650 + $0x28] sm:$0xff]
        %v1779 = vld [vmem:[%s650 + $0x30] sm:$0x3]
        %v1780 = vld [vmem:[%s659] sm:$0xf]
        %v1781 = vld [vmem:[%s659 + $0x4] sm:$0xf]
        %v1782 = vld [vmem:[%s659 + $0x8] sm:$0xf]
        %v1783 = vld [vmem:[%s659 + $0xc] sm:$0xf]
        %v1784 = vld [vmem:[%s659 + $0x10] sm:$0xf]
        %v1785 = vld [vmem:[%s659 + $0x14] sm:$0xf]
        %v1786 = vld [vmem:[%s659 + $0x18] sm:$0xf]
        %v1787 = vld [vmem:[%s659 + $0x1c] sm:$0xf]
        %v1788 = vld [vmem:[%s659 + $0x20] sm:$0xf]
        %v1789 = vld [vmem:[%s659 + $0x24] sm:$0xf]
        %v1790 = vld [vmem:[%s659 + $0x28] sm:$0xf]
        %v1791 = vld [vmem:[%s659 + $0x2c] sm:$0xf]
        %v1792 = vld [vmem:[%s659 + $0x30] sm:$0xf]
        %v1793 = vld [vmem:[%s659 + $0x34] sm:$0xf]
        %v1794 = vld [vmem:[%s659 + $0x38] sm:$0xf]
        %v1795 = vld [vmem:[%s659 + $0x3c] sm:$0xf]
        %v1796 = vld [vmem:[%s659 + $0x40] sm:$0xf]
        %v1797 = vld [vmem:[%s659 + $0x44] sm:$0xf]
        %v1798 = vld [vmem:[%s659 + $0x48] sm:$0xf]
        %v1799 = vld [vmem:[%s659 + $0x4c] sm:$0xf]
        %v1800 = vld [vmem:[%s659 + $0x50] sm:$0xf]
        %v1801 = vld [vmem:[%s659 + $0x54] sm:$0xf]
        %v1802 = vld [vmem:[%s659 + $0x58] sm:$0xf]
        %v1803 = vld [vmem:[%s659 + $0x5c] sm:$0xf]
        %v1804 = vld [vmem:[%s659 + $0x60] sm:$0xf]
        %v1805 = vld [vmem:[%s659 + $0x64] sm:$0xf]
        %v1806 = vld [vmem:[%s659 + $0x68] sm:$0xf]
        %v1807 = vld [vmem:[%s659 + $0x6c] sm:$0xf]
        %v1808 = vld [vmem:[%s659 + $0x70] sm:$0xf]
        %v1809 = vld [vmem:[%s659 + $0x74] sm:$0xf]
        %v1810 = vld [vmem:[%s659 + $0x78] sm:$0xf]
        %v1811 = vld [vmem:[%s659 + $0x7c] sm:$0xf]
        %v1812 = vld [vmem:[%s659 + $0x80] sm:$0xf]
        %v1813 = vld [vmem:[%s659 + $0x84] sm:$0xf]
        %v1814 = vld [vmem:[%s659 + $0x88] sm:$0xf]
        %v1815 = vld [vmem:[%s659 + $0x8c] sm:$0xf]
        %v1816 = vld [vmem:[%s659 + $0x90] sm:$0xf]
        %v1817 = vld [vmem:[%s659 + $0x94] sm:$0xf]
        %v1818 = vld [vmem:[%s659 + $0x98] sm:$0xf]
        %v1819 = vld [vmem:[%s659 + $0x9c] sm:$0xf]
        %v1820 = vld [vmem:[%s659 + $0xa0] sm:$0xf]
        %v1821 = vld [vmem:[%s659 + $0xa4] sm:$0xf]
        %v1822 = vld [vmem:[%s659 + $0xa8] sm:$0xf]
        %v1823 = vld [vmem:[%s659 + $0xac] sm:$0xf]
        %v1824 = vld [vmem:[%s659 + $0xb0] sm:$0xf]
        %v1825 = vld [vmem:[%s659 + $0xb4] sm:$0xf]
        %v1826 = vld [vmem:[%s659 + $0xb8] sm:$0xf]
        %v1827 = vld [vmem:[%s659 + $0xbc] sm:$0xf]
        %v1828 = vld [vmem:[%s659 + $0xc0] sm:$0xf]
        %v1829 = vld [vmem:[%s659 + $0xc4] sm:$0xf]
        %v1830 = vld [vmem:[%s659 + $0xc8] sm:$0xf]
        %v1831 = vld [vmem:[%s659 + $0xcc] sm:$0xf]
        %v1832 = vld [vmem:[%s659 + $0xd0] sm:$0xf]
        %v1833 = vld [vmem:[%s659 + $0xd4] sm:$0xf]
        %v1834 = vld [vmem:[%s659 + $0xd8] sm:$0xf]
        %v1835 = vld [vmem:[%s659 + $0xdc] sm:$0xf]
        %v1836 = vld [vmem:[%s659 + $0xe0] sm:$0xf]
        %v1837 = vld [vmem:[%s659 + $0xe4] sm:$0xf]
        %v1838 = vld [vmem:[%s659 + $0xe8] sm:$0xf]
        %v1839 = vld [vmem:[%s659 + $0xec] sm:$0xf]
        %v1840 = vld [vmem:[%s659 + $0xf0] sm:$0xf]
        %v1841 = vld [vmem:[%s659 + $0xf4] sm:$0xf]
        %v1842 = vld [vmem:[%s659 + $0xf8] sm:$0xf]
        %v1843 = vld [vmem:[%s659 + $0xfc] sm:$0xf]
        %v1844 = vld [vmem:[%s659 + $0x100] sm:$0xf]
        %v1845 = vld [vmem:[%s659 + $0x104] sm:$0xf]
        %v1846 = vld [vmem:[%s659 + $0x108] sm:$0xf]
        %v1847 = vld [vmem:[%s659 + $0x10c] sm:$0xf]
        %v1848 = vld [vmem:[%s659 + $0x110] sm:$0xf]
        %v1849 = vld [vmem:[%s659 + $0x114] sm:$0xf]
        %v1850 = vld [vmem:[%s659 + $0x118] sm:$0xf]
        %v1851 = vld [vmem:[%s659 + $0x11c] sm:$0xf]
        %v1852 = vld [vmem:[%s659 + $0x120] sm:$0xf]
        %v1853 = vld [vmem:[%s659 + $0x124] sm:$0xf]
        %v1854 = vld [vmem:[%s659 + $0x128] sm:$0xf]
        %v1855 = vld [vmem:[%s659 + $0x12c] sm:$0xf]
        %v1856 = vld [vmem:[%s659 + $0x130] sm:$0xf]
        %v1857 = vld [vmem:[%s659 + $0x134] sm:$0xf]
        %v1858 = vld [vmem:[%s659 + $0x138] sm:$0xf]
        %v1859 = vld [vmem:[%s659 + $0x13c] sm:$0xf]
        %v1860 = vld [vmem:[%s659 + $0x140] sm:$0xf]
        %v1861 = vld [vmem:[%s659 + $0x144] sm:$0xf]
        %v1862 = vld [vmem:[%s659 + $0x148] sm:$0xf]
        %v1863 = vld [vmem:[%s659 + $0x14c] sm:$0xf]
        %v1864 = vld [vmem:[%s659 + $0x150] sm:$0xf]
        %v1865 = vld [vmem:[%s659 + $0x154] sm:$0xf]
        %v1866 = vld [vmem:[%s659 + $0x158] sm:$0xf]
        %v1867 = vld [vmem:[%s659 + $0x15c] sm:$0xf]
        %v1868 = vld [vmem:[%s659 + $0x160] sm:$0xf]
        %v1869 = vld [vmem:[%s659 + $0x164] sm:$0xf]
        %v1870 = vld [vmem:[%s659 + $0x168] sm:$0xf]
        %v1871 = vld [vmem:[%s659 + $0x16c] sm:$0xf]
        %v1872 = vld [vmem:[%s659 + $0x170] sm:$0xf]
        %v1873 = vld [vmem:[%s659 + $0x174] sm:$0xf]
        %v1874 = vld [vmem:[%s659 + $0x178] sm:$0xf]
        %v1875 = vld [vmem:[%s659 + $0x17c] sm:$0xf]
        %v1876 = vld [vmem:[%s659 + $0x180] sm:$0xf]
        %v1877 = vld [vmem:[%s659 + $0x184] sm:$0xf]
        %v1878 = vld [vmem:[%s659 + $0x188] sm:$0xf]
        %v1879 = vld [vmem:[%s659 + $0x18c] sm:$0xf]
        %v1880 = vld [vmem:[%s659 + $0x190] sm:$0xf]
        %v1881 = vld [vmem:[%s659 + $0x194] sm:$0xf]
        %v1882 = vld [vmem:[%s659 + $0x198] sm:$0xf]
        %v1883 = vld [vmem:[%s659 + $0x19c] sm:$0xf]
        %v1884 = vld [vmem:[%s659 + $0x1a0] sm:$0xf]
        %v1885 = vld [vmem:[%s659 + $0x1a4] sm:$0xf]
        %v1886 = vld [vmem:[%s659 + $0x1a8] sm:$0xf]
        %v1887 = vld [vmem:[%s659 + $0x1ac] sm:$0xf]
        %v1888 = vld [vmem:[%s659 + $0x1b0] sm:$0xf]
        %v1889 = vld [vmem:[%s659 + $0x1b4] sm:$0xf]
        %v1890 = vld [vmem:[%s659 + $0x1b8] sm:$0xf]
        %v1891 = vld [vmem:[%s659 + $0x1bc] sm:$0xf]
        %v1892 = vld [vmem:[%s659 + $0x1c0] sm:$0xf]
        %v1893 = vld [vmem:[%s659 + $0x1c4] sm:$0xf]
        %v1894 = vld [vmem:[%s659 + $0x1c8] sm:$0xf]
        %v1895 = vld [vmem:[%s659 + $0x1cc] sm:$0xf]
        %v1896 = vld [vmem:[%s659 + $0x1d0] sm:$0xf]
        %v1897 = vld [vmem:[%s659 + $0x1d4] sm:$0xf]
        %v1898 = vld [vmem:[%s659 + $0x1d8] sm:$0xf]
        %v1899 = vld [vmem:[%s659 + $0x1dc] sm:$0xf]
        %v1900 = vld [vmem:[%s659 + $0x1e0] sm:$0xf]
        %v1901 = vld [vmem:[%s659 + $0x1e4] sm:$0xf]
        %v1902 = vld [vmem:[%s659 + $0x1e8] sm:$0xf]
        %v1903 = vld [vmem:[%s659 + $0x1ec] sm:$0xf]
        %v1904 = vld [vmem:[%s659 + $0x1f0] sm:$0xf]
        %v1905 = vld [vmem:[%s659 + $0x1f4] sm:$0xf]
        %v1906 = vld [vmem:[%s659 + $0x1f8] sm:$0xf]
        %v1907 = vld [vmem:[%s659 + $0x1fc] sm:$0xf]
        %v1908 = vld [vmem:[%s659 + $0x200] sm:$0xf]
        %v1909 = vld [vmem:[%s659 + $0x204] sm:$0xf]
        %v1910 = vld [vmem:[%s659 + $0x208] sm:$0xf]
        %v1911 = vld [vmem:[%s659 + $0x20c] sm:$0xf]
        %v1912 = vld [vmem:[%s659 + $0x210] sm:$0xf]
        %v1913 = vld [vmem:[%s659 + $0x214] sm:$0xf]
        %v1914 = vld [vmem:[%s659 + $0x218] sm:$0xf]
        %v1915 = vld [vmem:[%s659 + $0x21c] sm:$0xf]
        %v1916 = vld [vmem:[%s659 + $0x220] sm:$0xf]
        %v1917 = vld [vmem:[%s659 + $0x224] sm:$0xf]
        %v1918 = vld [vmem:[%s659 + $0x228] sm:$0xf]
        %v1919 = vld [vmem:[%s659 + $0x22c] sm:$0xf]
        %v1920 = vld [vmem:[%s659 + $0x230] sm:$0xf]
        %v1921 = vld [vmem:[%s659 + $0x234] sm:$0xf]
        %v1922 = vld [vmem:[%s659 + $0x238] sm:$0xf]
        %v1923 = vld [vmem:[%s659 + $0x23c] sm:$0xf]
        %v1924 = vld [vmem:[%s659 + $0x240] sm:$0xf]
        %v1925 = vld [vmem:[%s659 + $0x244] sm:$0xf]
        %v1926 = vld [vmem:[%s659 + $0x248] sm:$0xf]
        %v1927 = vld [vmem:[%s659 + $0x24c] sm:$0xf]
        %v1928 = vld [vmem:[%s659 + $0x250] sm:$0xf]
        %v1929 = vld [vmem:[%s659 + $0x254] sm:$0xf]
        %v1930 = vld [vmem:[%s659 + $0x258] sm:$0xf]
        %v1931 = vld [vmem:[%s659 + $0x25c] sm:$0xf]
        %v1932 = vld [vmem:[%s659 + $0x260] sm:$0xf]
        %v1933 = vld [vmem:[%s659 + $0x264] sm:$0xf]
        %v1934 = vld [vmem:[%s659 + $0x268] sm:$0xf]
        %v1935 = vld [vmem:[%s659 + $0x26c] sm:$0xf]
        %v1936 = vld [vmem:[%s659 + $0x270] sm:$0xf]
        %v1937 = vld [vmem:[%s659 + $0x274] sm:$0xf]
        %v1938 = vld [vmem:[%s659 + $0x278] sm:$0xf]
        %v1939 = vld [vmem:[%s659 + $0x27c] sm:$0xf]
        %v1940 = vld [vmem:[%s659 + $0x280] sm:$0xf]
        %v1941 = vld [vmem:[%s659 + $0x284] sm:$0xf]
        %v1942 = vld [vmem:[%s659 + $0x288] sm:$0xf]
        %v1943 = vld [vmem:[%s659 + $0x28c] sm:$0xf]
        %v1944 = vld [vmem:[%s659 + $0x290] sm:$0xf]
        %v1945 = vld [vmem:[%s659 + $0x294] sm:$0xf]
        %v1946 = vld [vmem:[%s659 + $0x298] sm:$0xf]
        %v1947 = vld [vmem:[%s659 + $0x29c] sm:$0xf]
        %v1948 = vld [vmem:[%s659 + $0x2a0] sm:$0xf]
        %v1949 = vld [vmem:[%s659 + $0x2a4] sm:$0xf]
        %v1950 = vld [vmem:[%s659 + $0x2a8] sm:$0xf]
        %v1951 = vld [vmem:[%s659 + $0x2ac] sm:$0xf]
        %v1952 = vld [vmem:[%s659 + $0x2b0] sm:$0xf]
        %v1953 = vld [vmem:[%s659 + $0x2b4] sm:$0xf]
        %v1954 = vld [vmem:[%s659 + $0x2b8] sm:$0xf]
        %v1955 = vld [vmem:[%s659 + $0x2bc] sm:$0xf]
        %v1956 = vld [vmem:[%s659 + $0x2c0] sm:$0xf]
        %v1957 = vld [vmem:[%s659 + $0x2c4] sm:$0xf]
        %v1958 = vld [vmem:[%s659 + $0x2c8] sm:$0xf]
        %v1959 = vld [vmem:[%s659 + $0x2cc] sm:$0xf]
        %v1960 = vld [vmem:[%s659 + $0x2d0] sm:$0xf]
        %v1961 = vld [vmem:[%s659 + $0x2d4] sm:$0xf]
        %v1962 = vld [vmem:[%s659 + $0x2d8] sm:$0xf]
        %v1963 = vld [vmem:[%s659 + $0x2dc] sm:$0xf]
        %v1964 = vld [vmem:[%s659 + $0x2e0] sm:$0xf]
        %v1965 = vld [vmem:[%s659 + $0x2e4] sm:$0xf]
        %v1966 = vld [vmem:[%s659 + $0x2e8] sm:$0xf]
        %v1967 = vld [vmem:[%s659 + $0x2ec] sm:$0xf]
        %v1968 = vld [vmem:[%s659 + $0x2f0] sm:$0xf]
        %v1969 = vld [vmem:[%s659 + $0x2f4] sm:$0xf]
        %v1970 = vld [vmem:[%s659 + $0x2f8] sm:$0xf]
        %v1971 = vld [vmem:[%s659 + $0x2fc] sm:$0xf]
        %v1972 = vld [vmem:[%s659 + $0x300] sm:$0xf]
        %v1973 = vld [vmem:[%s659 + $0x304] sm:$0xf]
        %v1974 = vld [vmem:[%s659 + $0x308] sm:$0xf]
        %v1975 = vld [vmem:[%s659 + $0x30c] sm:$0xf]
        %v1976 = vld [vmem:[%s659 + $0x310] sm:$0xf]
        %v1977 = vld [vmem:[%s659 + $0x314] sm:$0xf]
        %v1978 = vld [vmem:[%s659 + $0x318] sm:$0xf]
        %v1979 = vld [vmem:[%s659 + $0x31c] sm:$0xf]
        %v1980 = vld [vmem:[%s659 + $0x320] sm:$0xf]
        %v1981 = vld [vmem:[%s659 + $0x324] sm:$0xf]
        %v1982 = vld [vmem:[%s659 + $0x328] sm:$0xf]
        %v1983 = vld [vmem:[%s659 + $0x32c] sm:$0xf]
        %v1984 = vld [vmem:[%s659 + $0x330] sm:$0xf]
        %v1985 = vld [vmem:[%s659 + $0x334] sm:$0xf]
        %v1986 = vld [vmem:[%s659 + $0x338] sm:$0xf]
        %v1987 = vld [vmem:[%s659 + $0x33c] sm:$0xf]
        %v1988 = vld [vmem:[%s659 + $0x340] sm:$0xf]
        %v1989 = vld [vmem:[%s659 + $0x344] sm:$0xf]
        %v1990 = vld [vmem:[%s659 + $0x348] sm:$0xf]
        %v1991 = vld [vmem:[%s659 + $0x34c] sm:$0xf]
        %v1992 = vld [vmem:[%s659 + $0x350] sm:$0xf]
        %v1993 = vld [vmem:[%s659 + $0x354] sm:$0xf]
        %v1994 = vld [vmem:[%s659 + $0x358] sm:$0xf]
        %v1995 = vld [vmem:[%s659 + $0x35c] sm:$0xf]
        %v1996 = vld [vmem:[%s659 + $0x360] sm:$0xf]
        %v1997 = vld [vmem:[%s659 + $0x364] sm:$0xf]
        %v1998 = vld [vmem:[%s659 + $0x368] sm:$0xf]
        %v1999 = vld [vmem:[%s659 + $0x36c] sm:$0xf]
        %v2000 = vld [vmem:[%s659 + $0x370] sm:$0xf]
        %v2001 = vld [vmem:[%s659 + $0x374] sm:$0xf]
        %v2002 = vld [vmem:[%s659 + $0x378] sm:$0xf]
        %v2003 = vld [vmem:[%s659 + $0x37c] sm:$0xf]
        %v2004 = vld [vmem:[%s659 + $0x380] sm:$0xf]
        %v2005 = vld [vmem:[%s659 + $0x384] sm:$0xf]
        %v2006 = vld [vmem:[%s659 + $0x388] sm:$0xf]
        %v2007 = vld [vmem:[%s659 + $0x38c] sm:$0xf]
        %v2008 = vld [vmem:[%s659 + $0x390] sm:$0xf]
        %v2009 = vld [vmem:[%s659 + $0x394] sm:$0xf]
        %v2010 = vld [vmem:[%s659 + $0x398] sm:$0xf]
        %v2011 = vld [vmem:[%s659 + $0x39c] sm:$0xf]
        %v2012 = vld [vmem:[%s659 + $0x3a0] sm:$0xf]
        %v2013 = vld [vmem:[%s659 + $0x3a4] sm:$0xf]
        %v2014 = vld [vmem:[%s659 + $0x3a8] sm:$0xf]
        %v2015 = vld [vmem:[%s659 + $0x3ac] sm:$0xf]
        %v2016 = vld [vmem:[%s659 + $0x3b0] sm:$0xf]
        %v2017 = vld [vmem:[%s659 + $0x3b4] sm:$0xf]
        %v2018 = vld [vmem:[%s659 + $0x3b8] sm:$0xf]
        %v2019 = vld [vmem:[%s659 + $0x3bc] sm:$0xf]
        %v2020 = vld [vmem:[%s659 + $0x3c0] sm:$0xf]
        %v2021 = vld [vmem:[%s659 + $0x3c4] sm:$0xf]
        %v2022 = vld [vmem:[%s659 + $0x3c8] sm:$0xf]
        %v2023 = vld [vmem:[%s659 + $0x3cc] sm:$0xf]
        %v2024 = vld [vmem:[%s659 + $0x3d0] sm:$0xf]
        %v2025 = vld [vmem:[%s659 + $0x3d4] sm:$0xf]
        %v2026 = vld [vmem:[%s659 + $0x3d8] sm:$0xf]
        %v2027 = vld [vmem:[%s659 + $0x3dc] sm:$0xf]
        %v2028 = vld [vmem:[%s659 + $0x3e0] sm:$0xf]
        %v2029 = vld [vmem:[%s659 + $0x3e4] sm:$0xf]
        %v2030 = vld [vmem:[%s659 + $0x3e8] sm:$0xf]
        %v2031 = vld [vmem:[%s659 + $0x3ec] sm:$0xf]
        %v2032 = vld [vmem:[%s659 + $0x3f0] sm:$0xf]
        %v2033 = vld [vmem:[%s659 + $0x3f4] sm:$0xf]
        %v2034 = vld [vmem:[%s659 + $0x3f8] sm:$0xf]
        %v2035 = vld [vmem:[%s659 + $0x3fc] sm:$0xf]
        %v2036 = vld [vmem:[%s659 + $0x400] sm:$0xf]
        %v2037 = vld [vmem:[%s659 + $0x404] sm:$0xf]
        %v2038 = vld [vmem:[%s659 + $0x408] sm:$0xf]
        %v2039 = vld [vmem:[%s659 + $0x40c] sm:$0xf]
        %v2040 = vld [vmem:[%s659 + $0x410] sm:$0xf]
        %v2041 = vld [vmem:[%s659 + $0x414] sm:$0xf]
        %v2042 = vld [vmem:[%s659 + $0x418] sm:$0xf]
        %v2043 = vld [vmem:[%s659 + $0x41c] sm:$0xf]
        %v2044 = vld [vmem:[%s659 + $0x420] sm:$0xf]
        %v2045 = vld [vmem:[%s659 + $0x424] sm:$0xf]
        %v2046 = vld [vmem:[%s659 + $0x428] sm:$0xf]
        %v2047 = vld [vmem:[%s659 + $0x42c] sm:$0xf]
        %v2048 = vld [vmem:[%s659 + $0x430] sm:$0xf]
        %v2049 = vld [vmem:[%s659 + $0x434] sm:$0xf]
        %v2050 = vld [vmem:[%s659 + $0x438] sm:$0xf]
        %v2051 = vld [vmem:[%s659 + $0x43c] sm:$0xf]
        %v2052 = vld [vmem:[%s659 + $0x440] sm:$0xf]
        %v2053 = vld [vmem:[%s659 + $0x444] sm:$0xf]
        %v2054 = vld [vmem:[%s659 + $0x448] sm:$0xf]
        %v2055 = vld [vmem:[%s659 + $0x44c] sm:$0xf]
        %v2056 = vld [vmem:[%s659 + $0x450] sm:$0xf]
        %v2057 = vld [vmem:[%s659 + $0x454] sm:$0xf]
        %v2058 = vld [vmem:[%s659 + $0x458] sm:$0xf]
        %v2059 = vld [vmem:[%s659 + $0x45c] sm:$0xf]
        %v2060 = vld [vmem:[%s659 + $0x460] sm:$0xf]
        %v2061 = vld [vmem:[%s659 + $0x464] sm:$0xf]
        %v2062 = vld [vmem:[%s659 + $0x468] sm:$0xf]
        %v2063 = vld [vmem:[%s659 + $0x46c] sm:$0xf]
        %v2064 = vld [vmem:[%s659 + $0x470] sm:$0xf]
        %v2065 = vld [vmem:[%s659 + $0x474] sm:$0xf]
        %v2066 = vld [vmem:[%s659 + $0x478] sm:$0xf]
        %v2067 = vld [vmem:[%s659 + $0x47c] sm:$0xf]
        %v2068 = vld [vmem:[%s659 + $0x480] sm:$0xf]
        %v2069 = vld [vmem:[%s659 + $0x484] sm:$0xf]
        %v2070 = vld [vmem:[%s659 + $0x488] sm:$0xf]
        %v2071 = vld [vmem:[%s659 + $0x48c] sm:$0xf]
        %v2072 = vld [vmem:[%s659 + $0x490] sm:$0xf]
        %v2073 = vld [vmem:[%s659 + $0x494] sm:$0xf]
        %v2074 = vld [vmem:[%s659 + $0x498] sm:$0xf]
        %v2075 = vld [vmem:[%s659 + $0x49c] sm:$0xf]
        %v2076 = vld [vmem:[%s659 + $0x4a0] sm:$0xf]
        %v2077 = vld [vmem:[%s659 + $0x4a4] sm:$0xf]
        %v2078 = vld [vmem:[%s659 + $0x4a8] sm:$0xf]
        %v2079 = vld [vmem:[%s659 + $0x4ac] sm:$0xf]
        %v2080 = vld [vmem:[%s659 + $0x4b0] sm:$0xf]
        %v2081 = vld [vmem:[%s659 + $0x4b4] sm:$0xf]
        %v2082 = vld [vmem:[%s659 + $0x4b8] sm:$0xf]
        %v2083 = vld [vmem:[%s659 + $0x4bc] sm:$0xf]
        %v2084 = vld [vmem:[%s659 + $0x4c0] sm:$0xf]
        %v2085 = vld [vmem:[%s659 + $0x4c4] sm:$0xf]
        %v2086 = vld [vmem:[%s659 + $0x4c8] sm:$0xf]
        %v2087 = vld [vmem:[%s659 + $0x4cc] sm:$0xf]
        %v2088 = vld [vmem:[%s659 + $0x4d0] sm:$0xf]
        %v2089 = vld [vmem:[%s659 + $0x4d4] sm:$0xf]
        %v2090 = vld [vmem:[%s659 + $0x4d8] sm:$0xf]
        %v2091 = vld [vmem:[%s659 + $0x4dc] sm:$0xf]
        %v2092 = vld [vmem:[%s659 + $0x4e0] sm:$0xf]
        %v2093 = vld [vmem:[%s659 + $0x4e4] sm:$0xf]
        %v2094 = vld [vmem:[%s659 + $0x4e8] sm:$0xf]
        %v2095 = vld [vmem:[%s659 + $0x4ec] sm:$0xf]
        %v2096 = vld [vmem:[%s659 + $0x4f0] sm:$0xf]
        %v2097 = vld [vmem:[%s659 + $0x4f4] sm:$0xf]
        %v2098 = vld [vmem:[%s659 + $0x4f8] sm:$0xf]
        %v2099 = vld [vmem:[%s659 + $0x4fc] sm:$0xf]
        %v2100 = vld [vmem:[%s659 + $0x500] sm:$0xf]
        %v2101 = vld [vmem:[%s659 + $0x504] sm:$0xf]
        %v2102 = vld [vmem:[%s659 + $0x508] sm:$0xf]
        %v2103 = vld [vmem:[%s659 + $0x50c] sm:$0xf]
        %v2104 = vld [vmem:[%s659 + $0x510] sm:$0xf]
        %v2105 = vld [vmem:[%s659 + $0x514] sm:$0xf]
        %v2106 = vld [vmem:[%s659 + $0x518] sm:$0xf]
        %v2107 = vld [vmem:[%s659 + $0x51c] sm:$0xf]
        %v2108 = vld [vmem:[%s659 + $0x520] sm:$0xf]
        %v2109 = vld [vmem:[%s659 + $0x524] sm:$0xf]
        %v2110 = vld [vmem:[%s659 + $0x528] sm:$0xf]
        %v2111 = vld [vmem:[%s659 + $0x52c] sm:$0xf]
        %v2112 = vld [vmem:[%s659 + $0x530] sm:$0xf]
        %v2113 = vld [vmem:[%s659 + $0x534] sm:$0xf]
        %v2114 = vld [vmem:[%s659 + $0x538] sm:$0xf]
        %v2115 = vld [vmem:[%s659 + $0x53c] sm:$0xf]
        %v2116 = vld [vmem:[%s659 + $0x540] sm:$0xf]
        %v2117 = vld [vmem:[%s659 + $0x544] sm:$0xf]
        %v2118 = vld [vmem:[%s659 + $0x548] sm:$0xf]
        %v2119 = vld [vmem:[%s659 + $0x54c] sm:$0xf]
        %v2120 = vld [vmem:[%s659 + $0x550] sm:$0xf]
        %v2121 = vld [vmem:[%s659 + $0x554] sm:$0xf]
        %v2122 = vld [vmem:[%s659 + $0x558] sm:$0xf]
        %v2123 = vld [vmem:[%s659 + $0x55c] sm:$0xf]
        %v2124 = vld [vmem:[%s659 + $0x560] sm:$0xf]
        %v2125 = vld [vmem:[%s659 + $0x564] sm:$0xf]
        %v2126 = vld [vmem:[%s659 + $0x568] sm:$0xf]
        %v2127 = vld [vmem:[%s659 + $0x56c] sm:$0xf]
        %v2128 = vld [vmem:[%s659 + $0x570] sm:$0xf]
        %v2129 = vld [vmem:[%s659 + $0x574] sm:$0xf]
        %v2130 = vld [vmem:[%s659 + $0x578] sm:$0xf]
        %v2131 = vld [vmem:[%s659 + $0x57c] sm:$0xf]
        %v2132 = vld [vmem:[%s659 + $0x580] sm:$0xf]
        %v2133 = vld [vmem:[%s659 + $0x584] sm:$0xf]
        %v2134 = vld [vmem:[%s659 + $0x588] sm:$0xf]
        %v2135 = vld [vmem:[%s659 + $0x58c] sm:$0xf]
        %v2136 = vld [vmem:[%s659 + $0x590] sm:$0xf]
        %v2137 = vld [vmem:[%s659 + $0x594] sm:$0xf]
        %v2138 = vld [vmem:[%s659 + $0x598] sm:$0xf]
        %v2139 = vld [vmem:[%s659 + $0x59c] sm:$0xf]
        %v2140 = vld [vmem:[%s659 + $0x5a0] sm:$0xf]
        %v2141 = vld [vmem:[%s659 + $0x5a4] sm:$0xf]
        %v2142 = vld [vmem:[%s659 + $0x5a8] sm:$0xf]
        %v2143 = vld [vmem:[%s659 + $0x5ac] sm:$0xf]
        %v2144 = vld [vmem:[%s659 + $0x5b0] sm:$0xf]
        %v2145 = vld [vmem:[%s659 + $0x5b4] sm:$0xf]
        %v2146 = vld [vmem:[%s659 + $0x5b8] sm:$0xf]
        %v2147 = vld [vmem:[%s659 + $0x5bc] sm:$0xf]
        %v2148 = vld [vmem:[%s659 + $0x5c0] sm:$0xf]
        %v2149 = vld [vmem:[%s659 + $0x5c4] sm:$0xf]
        %v2150 = vld [vmem:[%s659 + $0x5c8] sm:$0xf]
        %v2151 = vld [vmem:[%s659 + $0x5cc] sm:$0xf]
        %v2152 = vld [vmem:[%s659 + $0x5d0] sm:$0xf]
        %v2153 = vld [vmem:[%s659 + $0x5d4] sm:$0xf]
        %v2154 = vld [vmem:[%s659 + $0x5d8] sm:$0xf]
        %v2155 = vld [vmem:[%s659 + $0x5dc] sm:$0xf]
        %v2156 = vld [vmem:[%s659 + $0x5e0] sm:$0xf]
        %v2157 = vld [vmem:[%s659 + $0x5e4] sm:$0xf]
        %v2158 = vld [vmem:[%s659 + $0x5e8] sm:$0xf]
        %v2159 = vld [vmem:[%s659 + $0x5ec] sm:$0xf]
        %v2160 = vld [vmem:[%s659 + $0x5f0] sm:$0xf]
        %v2161 = vld [vmem:[%s659 + $0x5f4] sm:$0xf]
        %v2162 = vld [vmem:[%s659 + $0x5f8] sm:$0xf]
        %v2163 = vld [vmem:[%s659 + $0x5fc] sm:$0xf]
        %v2164 = vld [vmem:[%s659 + $0x600] sm:$0xf]
        %v2165 = vld [vmem:[%s659 + $0x604] sm:$0xf]
        %v2166 = vld [vmem:[%s659 + $0x608] sm:$0xf]
        %v2167 = vld [vmem:[%s659 + $0x60c] sm:$0xf]
        %v2168 = vld [vmem:[%s659 + $0x610] sm:$0xf]
        %v2169 = vld [vmem:[%s659 + $0x614] sm:$0xf]
        %v2170 = vld [vmem:[%s659 + $0x618] sm:$0xf]
        %v2171 = vld [vmem:[%s659 + $0x61c] sm:$0xf]
        %v2172 = vld [vmem:[%s659 + $0x620] sm:$0xf]
        %v2173 = vld [vmem:[%s659 + $0x624] sm:$0xf]
        %v2174 = vld [vmem:[%s659 + $0x628] sm:$0xf]
        %v2175 = vld [vmem:[%s659 + $0x62c] sm:$0xf]
        %v2176 = vld [vmem:[%s659 + $0x630] sm:$0xf]
        %v2177 = vld [vmem:[%s659 + $0x634] sm:$0xf]
        %v2178 = vld [vmem:[%s659 + $0x638] sm:$0xf]
        %v2179 = vld [vmem:[%s659 + $0x63c] sm:$0xf]
        %v2180 = vld [vmem:[%s659 + $0x640] sm:$0xf]
        %v2181 = vld [vmem:[%s659 + $0x644] sm:$0xf]
        %v2182 = vld [vmem:[%s659 + $0x648] sm:$0xf]
        %v2183 = vld [vmem:[%s659 + $0x64c] sm:$0xf]
        %v2184 = vld [vmem:[%s659 + $0x650] sm:$0xf]
        %v2185 = vld [vmem:[%s659 + $0x654] sm:$0xf]
        %v2186 = vld [vmem:[%s659 + $0x658] sm:$0xf]
        %v2187 = vld [vmem:[%s659 + $0x65c] sm:$0xf]
        %v2188 = vld [vmem:[%s659 + $0x660] sm:$0xf]
        %v2189 = vld [vmem:[%s659 + $0x664] sm:$0xf]
        %v2190 = vld [vmem:[%s659 + $0x668] sm:$0xf]
        %v2191 = vld [vmem:[%s659 + $0x66c] sm:$0xf]
        %v2192 = vld [vmem:[%s659 + $0x670] sm:$0xf]
        %v2193 = vld [vmem:[%s659 + $0x674] sm:$0xf]
        %v2194 = vld [vmem:[%s659 + $0x678] sm:$0xf]
        %v2195 = vld [vmem:[%s659 + $0x67c] sm:$0xf]
        %v2196 = vld [vmem:[%s659 + $0x680] sm:$0xf]
        %v2197 = vld [vmem:[%s659 + $0x684] sm:$0xf]
        %v2198 = vld [vmem:[%s659 + $0x688] sm:$0xf]
        %v2199 = vld [vmem:[%s659 + $0x68c] sm:$0xf]
        %v2200 = vld [vmem:[%s659 + $0x690] sm:$0xf]
        %v2201 = vld [vmem:[%s659 + $0x694] sm:$0xf]
        %v2202 = vld [vmem:[%s659 + $0x698] sm:$0xf]
        %v2203 = vld [vmem:[%s659 + $0x69c] sm:$0xf]
        %v2204 = vld [vmem:[%s659 + $0x6a0] sm:$0xf]
        %v2205 = vld [vmem:[%s659 + $0x6a4] sm:$0xf]
        %v2206 = vld [vmem:[%s659 + $0x6a8] sm:$0xf]
        %v2207 = vld [vmem:[%s659 + $0x6ac] sm:$0xf]
        %v2208 = vld [vmem:[%s659 + $0x6b0] sm:$0xf]
        %v2209 = vld [vmem:[%s659 + $0x6b4] sm:$0xf]
        %v2210 = vld [vmem:[%s659 + $0x6b8] sm:$0xf]
        %v2211 = vld [vmem:[%s659 + $0x6bc] sm:$0xf]
        %v2212 = vld [vmem:[%s659 + $0x6c0] sm:$0xf]
        %v2213 = vld [vmem:[%s659 + $0x6c4] sm:$0xf]
        %v2214 = vld [vmem:[%s659 + $0x6c8] sm:$0xf]
        %v2215 = vld [vmem:[%s659 + $0x6cc] sm:$0xf]
        %v2216 = vld [vmem:[%s659 + $0x6d0] sm:$0xf]
        %v2217 = vld [vmem:[%s659 + $0x6d4] sm:$0xf]
        %v2218 = vld [vmem:[%s659 + $0x6d8] sm:$0xf]
        %v2219 = vld [vmem:[%s659 + $0x6dc] sm:$0xf]
        %v2220 = vld [vmem:[%s659 + $0x6e0] sm:$0xf]
        %v2221 = vld [vmem:[%s659 + $0x6e4] sm:$0xf]
        %v2222 = vld [vmem:[%s659 + $0x6e8] sm:$0xf]
        %v2223 = vld [vmem:[%s659 + $0x6ec] sm:$0xf]
        %v2224 = vld [vmem:[%s659 + $0x6f0] sm:$0xf]
        %v2225 = vld [vmem:[%s659 + $0x6f4] sm:$0xf]
        %v2226 = vld [vmem:[%s659 + $0x6f8] sm:$0xf]
        %v2227 = vld [vmem:[%s659 + $0x6fc] sm:$0xf]
        %v2228 = vld [vmem:[%s659 + $0x700] sm:$0xf]
        %v2229 = vld [vmem:[%s659 + $0x704] sm:$0xf]
        %v2230 = vld [vmem:[%s659 + $0x708] sm:$0xf]
        %v2231 = vld [vmem:[%s659 + $0x70c] sm:$0xf]
        %v2232 = vld [vmem:[%s659 + $0x710] sm:$0xf]
        %v2233 = vld [vmem:[%s659 + $0x714] sm:$0xf]
        %v2234 = vld [vmem:[%s659 + $0x718] sm:$0xf]
        %v2235 = vld [vmem:[%s659 + $0x71c] sm:$0xf]
        %v2236 = vld [vmem:[%s659 + $0x720] sm:$0xf]
        %v2237 = vld [vmem:[%s659 + $0x724] sm:$0xf]
        %v2238 = vld [vmem:[%s659 + $0x728] sm:$0xf]
        %v2239 = vld [vmem:[%s659 + $0x72c] sm:$0xf]
        %v2240 = vld [vmem:[%s659 + $0x730] sm:$0xf]
        %v2241 = vld [vmem:[%s659 + $0x734] sm:$0xf]
        %v2242 = vld [vmem:[%s659 + $0x738] sm:$0xf]
        %v2243 = vld [vmem:[%s659 + $0x73c] sm:$0xf]
        %v2244 = vld [vmem:[%s659 + $0x740] sm:$0xf]
        %v2245 = vld [vmem:[%s659 + $0x744] sm:$0xf]
        %v2246 = vld [vmem:[%s659 + $0x748] sm:$0xf]
        %v2247 = vld [vmem:[%s659 + $0x74c] sm:$0xf]
        %v2248 = vld [vmem:[%s659 + $0x750] sm:$0xf]
        %v2249 = vld [vmem:[%s659 + $0x754] sm:$0xf]
        %v2250 = vld [vmem:[%s659 + $0x758] sm:$0xf]
        %v2251 = vld [vmem:[%s659 + $0x75c] sm:$0xf]
        %v2252 = vld [vmem:[%s659 + $0x760] sm:$0xf]
        %v2253 = vld [vmem:[%s659 + $0x764] sm:$0xf]
        %v2254 = vld [vmem:[%s659 + $0x768] sm:$0xf]
        %v2255 = vld [vmem:[%s659 + $0x76c] sm:$0xf]
        %v2256 = vld [vmem:[%s659 + $0x770] sm:$0xf]
        %v2257 = vld [vmem:[%s659 + $0x774] sm:$0xf]
        %v2258 = vld [vmem:[%s659 + $0x778] sm:$0xf]
        %v2259 = vld [vmem:[%s659 + $0x77c] sm:$0xf]
        %v2260 = vld [vmem:[%s659 + $0x780] sm:$0xf]
        %v2261 = vld [vmem:[%s659 + $0x784] sm:$0xf]
        %v2262 = vld [vmem:[%s659 + $0x788] sm:$0xf]
        %v2263 = vld [vmem:[%s659 + $0x78c] sm:$0xf]
        %v2264 = vld [vmem:[%s659 + $0x790] sm:$0xf]
        %v2265 = vld [vmem:[%s659 + $0x794] sm:$0xf]
        %v2266 = vld [vmem:[%s659 + $0x798] sm:$0xf]
        %v2267 = vld [vmem:[%s659 + $0x79c] sm:$0xf]
        %v2268 = vld [vmem:[%s659 + $0x7a0] sm:$0xf]
        %v2269 = vld [vmem:[%s659 + $0x7a4] sm:$0xf]
        %v2270 = vld [vmem:[%s659 + $0x7a8] sm:$0xf]
        %v2271 = vld [vmem:[%s659 + $0x7ac] sm:$0xf]
        %v2272 = vld [vmem:[%s659 + $0x7b0] sm:$0xf]
        %v2273 = vld [vmem:[%s659 + $0x7b4] sm:$0xf]
        %v2274 = vld [vmem:[%s659 + $0x7b8] sm:$0xf]
        %v2275 = vld [vmem:[%s659 + $0x7bc] sm:$0xf]
        %v2276 = vld [vmem:[%s659 + $0x7c0] sm:$0xf]
        %v2277 = vld [vmem:[%s659 + $0x7c4] sm:$0xf]
        %v2278 = vld [vmem:[%s659 + $0x7c8] sm:$0xf]
        %v2279 = vld [vmem:[%s659 + $0x7cc] sm:$0xf]
        %v2280 = vld [vmem:[%s659 + $0x7d0] sm:$0xf]
        %v2281 = vld [vmem:[%s659 + $0x7d4] sm:$0xf]
        %v2282 = vld [vmem:[%s659 + $0x7d8] sm:$0xf]
        %v2283 = vld [vmem:[%s659 + $0x7dc] sm:$0xf]
        %v2284 = vld [vmem:[%s659 + $0x7e0] sm:$0xf]
        %v2285 = vld [vmem:[%s659 + $0x7e4] sm:$0xf]
        %v2286 = vld [vmem:[%s659 + $0x7e8] sm:$0xf]
        %v2287 = vld [vmem:[%s659 + $0x7ec] sm:$0xf]
        %v2288 = vld [vmem:[%s659 + $0x7f0] sm:$0xf]
        %v2289 = vld [vmem:[%s659 + $0x7f4] sm:$0xf]
        %v2290 = vld [vmem:[%s659 + $0x7f8] sm:$0xf]
        %v2291 = vld [vmem:[%s659 + $0x7fc] sm:$0xf]
        %v2292 = vld [vmem:[%s659 + $0x800] sm:$0xf]
        %v2293 = vld [vmem:[%s659 + $0x804] sm:$0xf]
        %v2294 = vld [vmem:[%s659 + $0x808] sm:$0xf]
        %v2295 = vld [vmem:[%s659 + $0x80c] sm:$0xf]
        %v2296 = vld [vmem:[%s659 + $0x810] sm:$0xf]
        %v2297 = vld [vmem:[%s659 + $0x814] sm:$0xf]
        %v2298 = vld [vmem:[%s659 + $0x818] sm:$0xf]
        %v2299 = vld [vmem:[%s659 + $0x81c] sm:$0xf]
        %v2300 = vld [vmem:[%s659 + $0x820] sm:$0xf]
        %v2301 = vld [vmem:[%s659 + $0x824] sm:$0xf]
        %v2302 = vld [vmem:[%s659 + $0x828] sm:$0xf]
        %v2303 = vld [vmem:[%s659 + $0x82c] sm:$0xf]
        %v2304 = vld [vmem:[%s659 + $0x830] sm:$0xf]
        %v2305 = vld [vmem:[%s659 + $0x834] sm:$0xf]
        %v2306 = vld [vmem:[%s659 + $0x838] sm:$0xf]
        %v2307 = vld [vmem:[%s659 + $0x83c] sm:$0xf]
        %v2308 = vld [vmem:[%s659 + $0x840] sm:$0xf]
        %v2309 = vld [vmem:[%s659 + $0x844] sm:$0xf]
        %v2310 = vld [vmem:[%s659 + $0x848] sm:$0xf]
        %v2311 = vld [vmem:[%s659 + $0x84c] sm:$0xf]
        %v2312 = vld [vmem:[%s659 + $0x850] sm:$0xf]
        %v2313 = vld [vmem:[%s659 + $0x854] sm:$0xf]
        %v2314 = vld [vmem:[%s659 + $0x858] sm:$0xf]
        %v2315 = vld [vmem:[%s659 + $0x85c] sm:$0xf]
        %v2316 = vld [vmem:[%s659 + $0x860] sm:$0xf]
        %v2317 = vld [vmem:[%s659 + $0x864] sm:$0xf]
        %v2318 = vld [vmem:[%s659 + $0x868] sm:$0xf]
        %v2319 = vld [vmem:[%s659 + $0x86c] sm:$0xf]
        %v2320 = vld [vmem:[%s659 + $0x870] sm:$0xf]
        %v2321 = vld [vmem:[%s659 + $0x874] sm:$0xf]
        %v2322 = vld [vmem:[%s659 + $0x878] sm:$0xf]
        %v2323 = vld [vmem:[%s659 + $0x87c] sm:$0xf]
        %v2324 = vld [vmem:[%s659 + $0x880] sm:$0xf]
        %v2325 = vld [vmem:[%s659 + $0x884] sm:$0xf]
        %v2326 = vld [vmem:[%s659 + $0x888] sm:$0xf]
        %v2327 = vld [vmem:[%s659 + $0x88c] sm:$0xf]
        %v2328 = vld [vmem:[%s659 + $0x890] sm:$0xf]
        %v2329 = vld [vmem:[%s659 + $0x894] sm:$0xf]
        %v2330 = vld [vmem:[%s659 + $0x898] sm:$0xf]
        %v2331 = vld [vmem:[%s659 + $0x89c] sm:$0xf]
        %v2332 = vld [vmem:[%s659 + $0x8a0] sm:$0xf]
        %v2333 = vld [vmem:[%s659 + $0x8a4] sm:$0xf]
        %v2334 = vld [vmem:[%s659 + $0x8a8] sm:$0xf]
        %v2335 = vld [vmem:[%s659 + $0x8ac] sm:$0xf]
        %v2336 = vld [vmem:[%s659 + $0x8b0] sm:$0xf]
        %v2337 = vld [vmem:[%s659 + $0x8b4] sm:$0xf]
        %v2338 = vld [vmem:[%s659 + $0x8b8] sm:$0xf]
        %v2339 = vld [vmem:[%s659 + $0x8bc] sm:$0xf]
        %v2340 = vld [vmem:[%s659 + $0x8c0] sm:$0xf]
        %v2341 = vld [vmem:[%s659 + $0x8c4] sm:$0xf]
        %v2342 = vld [vmem:[%s659 + $0x8c8] sm:$0xf]
        %v2343 = vld [vmem:[%s659 + $0x8cc] sm:$0xf]
        %v2344 = vld [vmem:[%s659 + $0x8d0] sm:$0xf]
        %v2345 = vld [vmem:[%s659 + $0x8d4] sm:$0xf]
        %v2346 = vld [vmem:[%s659 + $0x8d8] sm:$0xf]
        %v2347 = vld [vmem:[%s659 + $0x8dc] sm:$0xf]
        %v2348 = vld [vmem:[%s659 + $0x8e0] sm:$0xf]
        %v2349 = vld [vmem:[%s659 + $0x8e4] sm:$0xf]
        %v2350 = vld [vmem:[%s659 + $0x8e8] sm:$0xf]
        %v2351 = vld [vmem:[%s659 + $0x8ec] sm:$0xf]
        %v2352 = vld [vmem:[%s659 + $0x8f0] sm:$0xf]
        %v2353 = vld [vmem:[%s659 + $0x8f4] sm:$0xf]
        %v2354 = vld [vmem:[%s659 + $0x8f8] sm:$0xf]
        %v2355 = vld [vmem:[%s659 + $0x8fc] sm:$0xf]
        %v2356 = vld [vmem:[%s659 + $0x900] sm:$0xf]
        %v2357 = vld [vmem:[%s659 + $0x904] sm:$0xf]
        %v2358 = vld [vmem:[%s659 + $0x908] sm:$0xf]
        %v2359 = vld [vmem:[%s659 + $0x90c] sm:$0xf]
        %v2360 = vld [vmem:[%s659 + $0x910] sm:$0xf]
        %v2361 = vld [vmem:[%s659 + $0x914] sm:$0xf]
        %v2362 = vld [vmem:[%s659 + $0x918] sm:$0xf]
        %v2363 = vld [vmem:[%s659 + $0x91c] sm:$0xf]
        %v2364 = vld [vmem:[%s659 + $0x920] sm:$0xf]
        %v2365 = vld [vmem:[%s659 + $0x924] sm:$0xf]
        %v2366 = vld [vmem:[%s659 + $0x928] sm:$0xf]
        %v2367 = vld [vmem:[%s659 + $0x92c] sm:$0xf]
        %v2368 = vld [vmem:[%s659 + $0x930] sm:$0xf]
        %v2369 = vld [vmem:[%s659 + $0x934] sm:$0xf]
        %v2370 = vld [vmem:[%s659 + $0x938] sm:$0xf]
        %v2371 = vld [vmem:[%s659 + $0x93c] sm:$0xf]
        %v2372 = vld [vmem:[%s659 + $0x940] sm:$0xf]
        %v2373 = vld [vmem:[%s659 + $0x944] sm:$0xf]
        %v2374 = vld [vmem:[%s659 + $0x948] sm:$0xf]
        %v2375 = vld [vmem:[%s659 + $0x94c] sm:$0xf]
        %v2376 = vld [vmem:[%s659 + $0x950] sm:$0xf]
        %v2377 = vld [vmem:[%s659 + $0x954] sm:$0xf]
        %v2378 = vld [vmem:[%s659 + $0x958] sm:$0xf]
        %v2379 = vld [vmem:[%s659 + $0x95c] sm:$0xf]
        %v2380 = vld [vmem:[%s659 + $0x960] sm:$0xf]
        %v2381 = vld [vmem:[%s659 + $0x964] sm:$0xf]
        %v2382 = vld [vmem:[%s659 + $0x968] sm:$0xf]
        %v2383 = vld [vmem:[%s659 + $0x96c] sm:$0xf]
        %v2384 = vld [vmem:[%s659 + $0x970] sm:$0xf]
        %v2385 = vld [vmem:[%s659 + $0x974] sm:$0xf]
        %v2386 = vld [vmem:[%s659 + $0x978] sm:$0xf]
        %v2387 = vld [vmem:[%s659 + $0x97c] sm:$0xf]
        %v2388 = vld [vmem:[%s659 + $0x980] sm:$0xf]
        %v2389 = vld [vmem:[%s659 + $0x984] sm:$0xf]
        %v2390 = vld [vmem:[%s659 + $0x988] sm:$0xf]
        %v2391 = vld [vmem:[%s659 + $0x98c] sm:$0xf]
        %v2392 = vld [vmem:[%s659 + $0x990] sm:$0xf]
        %v2393 = vld [vmem:[%s659 + $0x994] sm:$0xf]
        %v2394 = vld [vmem:[%s659 + $0x998] sm:$0xf]
        %v2395 = vld [vmem:[%s659 + $0x99c] sm:$0xf]
        %v2396 = vld [vmem:[%s659 + $0x9a0] sm:$0xf]
        %v2397 = vld [vmem:[%s659 + $0x9a4] sm:$0xf]
        %v2398 = vld [vmem:[%s659 + $0x9a8] sm:$0xf]
        %v2399 = vld [vmem:[%s659 + $0x9ac] sm:$0xf]
        %v2400 = vld [vmem:[%s659 + $0x9b0] sm:$0xf]
        %v2401 = vld [vmem:[%s659 + $0x9b4] sm:$0xf]
        %v2402 = vld [vmem:[%s659 + $0x9b8] sm:$0xf]
        %v2403 = vld [vmem:[%s659 + $0x9bc] sm:$0xf]
        %v2404 = vld [vmem:[%s659 + $0x9c0] sm:$0xf]
        %v2405 = vld [vmem:[%s659 + $0x9c4] sm:$0xf]
        %v2406 = vld [vmem:[%s659 + $0x9c8] sm:$0xf]
        %v2407 = vld [vmem:[%s659 + $0x9cc] sm:$0xf]
        %v2408 = vld [vmem:[%s659 + $0x9d0] sm:$0xf]
        %v2409 = vld [vmem:[%s659 + $0x9d4] sm:$0xf]
        %v2410 = vld [vmem:[%s659 + $0x9d8] sm:$0xf]
        %v2411 = vld [vmem:[%s659 + $0x9dc] sm:$0xf]
        %v2412 = vld [vmem:[%s659 + $0x9e0] sm:$0xf]
        %v2413 = vld [vmem:[%s659 + $0x9e4] sm:$0xf]
        %v2414 = vld [vmem:[%s659 + $0x9e8] sm:$0xf]
        %v2415 = vld [vmem:[%s659 + $0x9ec] sm:$0xf]
        %v2416 = vld [vmem:[%s659 + $0x9f0] sm:$0xf]
        %v2417 = vld [vmem:[%s659 + $0x9f4] sm:$0xf]
        %v2418 = vld [vmem:[%s659 + $0x9f8] sm:$0xf]
        %v2419 = vld [vmem:[%s659 + $0x9fc] sm:$0xf]
        %v2420 = vld [vmem:[%s659 + $0xa00] sm:$0xf]
        %v2421 = vld [vmem:[%s659 + $0xa04] sm:$0xf]
        %v2422 = vld [vmem:[%s659 + $0xa08] sm:$0xf]
        %v2423 = vld [vmem:[%s659 + $0xa0c] sm:$0xf]
        %v2424 = vld [vmem:[%s659 + $0xa10] sm:$0xf]
        %v2425 = vld [vmem:[%s659 + $0xa14] sm:$0xf]
        %v2426 = vld [vmem:[%s659 + $0xa18] sm:$0xf]
        %v2427 = vld [vmem:[%s659 + $0xa1c] sm:$0xf]
        %v2428 = vld [vmem:[%s659 + $0xa20] sm:$0xf]
        %v2429 = vld [vmem:[%s659 + $0xa24] sm:$0xf]
        %v2430 = vld [vmem:[%s659 + $0xa28] sm:$0xf]
        %v2431 = vld [vmem:[%s659 + $0xa2c] sm:$0xf]
        %v2432 = vld [vmem:[%s659 + $0xa30] sm:$0xf]
        %v2433 = vld [vmem:[%s659 + $0xa34] sm:$0xf]
        %v2434 = vld [vmem:[%s659 + $0xa38] sm:$0xf]
        %v2435 = vld [vmem:[%s659 + $0xa3c] sm:$0xf]
        %v2436 = vld [vmem:[%s659 + $0xa40] sm:$0xf]
        %v2437 = vld [vmem:[%s659 + $0xa44] sm:$0xf]
        %v2438 = vld [vmem:[%s659 + $0xa48] sm:$0xf]
        %v2439 = vld [vmem:[%s659 + $0xa4c] sm:$0xf]
        %v2440 = vld [vmem:[%s659 + $0xa50] sm:$0xf]
        %v2441 = vld [vmem:[%s659 + $0xa54] sm:$0xf]
        %v2442 = vld [vmem:[%s659 + $0xa58] sm:$0xf]
        %v2443 = vld [vmem:[%s659 + $0xa5c] sm:$0xf]
        %v2444 = vld [vmem:[%s659 + $0xa60] sm:$0xf]
        %v2445 = vld [vmem:[%s659 + $0xa64] sm:$0xf]
        %v2446 = vld [vmem:[%s659 + $0xa68] sm:$0xf]
        %v2447 = vld [vmem:[%s659 + $0xa6c] sm:$0xf]
        %v2448 = vld [vmem:[%s659 + $0xa70] sm:$0xf]
        %v2449 = vld [vmem:[%s659 + $0xa74] sm:$0xf]
        %v2450 = vld [vmem:[%s659 + $0xa78] sm:$0xf]
        %v2451 = vld [vmem:[%s659 + $0xa7c] sm:$0xf]
        %v2452 = vld [vmem:[%s659 + $0xa80] sm:$0xf]
        %v2453 = vld [vmem:[%s659 + $0xa84] sm:$0xf]
        %v2454 = vld [vmem:[%s659 + $0xa88] sm:$0xf]
        %v2455 = vld [vmem:[%s659 + $0xa8c] sm:$0xf]
        %v2456 = vld [vmem:[%s659 + $0xa90] sm:$0xf]
        %v2457 = vld [vmem:[%s659 + $0xa94] sm:$0xf]
        %v2458 = vld [vmem:[%s659 + $0xa98] sm:$0xf]
        %v2459 = vld [vmem:[%s659 + $0xa9c] sm:$0xf]
        %v2460 = vld [vmem:[%s659 + $0xaa0] sm:$0xf]
        %v2461 = vld [vmem:[%s659 + $0xaa4] sm:$0xf]
        %v2462 = vld [vmem:[%s659 + $0xaa8] sm:$0xf]
        %v2463 = vld [vmem:[%s659 + $0xaac] sm:$0xf]
        %v2464 = vld [vmem:[%s659 + $0xab0] sm:$0xf]
        %v2465 = vld [vmem:[%s659 + $0xab4] sm:$0xf]
        %v2466 = vld [vmem:[%s659 + $0xab8] sm:$0xf]
        %v2467 = vld [vmem:[%s659 + $0xabc] sm:$0xf]
        %v2468 = vld [vmem:[%s659 + $0xac0] sm:$0xf]
        %v2469 = vld [vmem:[%s659 + $0xac4] sm:$0xf]
        %v2470 = vld [vmem:[%s659 + $0xac8] sm:$0xf]
        %v2471 = vld [vmem:[%s659 + $0xacc] sm:$0xf]
        %v2472 = vld [vmem:[%s659 + $0xad0] sm:$0xf]
        %v2473 = vld [vmem:[%s659 + $0xad4] sm:$0xf]
        %v2474 = vld [vmem:[%s659 + $0xad8] sm:$0xf]
        %v2475 = vld [vmem:[%s659 + $0xadc] sm:$0xf]
        %v2476 = vld [vmem:[%s659 + $0xae0] sm:$0xf]
        %v2477 = vld [vmem:[%s659 + $0xae4] sm:$0xf]
        %v2478 = vld [vmem:[%s659 + $0xae8] sm:$0xf]
        %v2479 = vld [vmem:[%s659 + $0xaec] sm:$0xf]
        %v2480 = vld [vmem:[%s659 + $0xaf0] sm:$0xf]
        %v2481 = vld [vmem:[%s659 + $0xaf4] sm:$0xf]
        %v2482 = vld [vmem:[%s659 + $0xaf8] sm:$0xf]
        %v2483 = vld [vmem:[%s659 + $0xafc] sm:$0xf]
        %v2484 = vld [vmem:[%s659 + $0xb00] sm:$0xf]
        %v2485 = vld [vmem:[%s659 + $0xb04] sm:$0xf]
        %v2486 = vld [vmem:[%s659 + $0xb08] sm:$0xf]
        %v2487 = vld [vmem:[%s659 + $0xb0c] sm:$0xf]
        %v2488 = vld [vmem:[%s659 + $0xb10] sm:$0xf]
        %v2489 = vld [vmem:[%s659 + $0xb14] sm:$0xf]
        %v2490 = vld [vmem:[%s659 + $0xb18] sm:$0xf]
        %v2491 = vld [vmem:[%s659 + $0xb1c] sm:$0xf]
        %v2492 = vld [vmem:[%s659 + $0xb20] sm:$0xf]
        %v2493 = vld [vmem:[%s659 + $0xb24] sm:$0xf]
        %v2494 = vld [vmem:[%s659 + $0xb28] sm:$0xf]
        %v2495 = vld [vmem:[%s659 + $0xb2c] sm:$0xf]
        %v2496 = vld [vmem:[%s659 + $0xb30] sm:$0xf]
        %v2497 = vld [vmem:[%s659 + $0xb34] sm:$0xf]
        %v2498 = vld [vmem:[%s659 + $0xb38] sm:$0xf]
        %v2499 = vld [vmem:[%s659 + $0xb3c] sm:$0xf]
        %v2500 = vld [vmem:[%s659 + $0xb40] sm:$0xf]
        %v2501 = vld [vmem:[%s659 + $0xb44] sm:$0xf]
        %v2502 = vld [vmem:[%s659 + $0xb48] sm:$0xf]
        %v2503 = vld [vmem:[%s659 + $0xb4c] sm:$0xf]
        %v2504 = vld [vmem:[%s659 + $0xb50] sm:$0xf]
        %v2505 = vld [vmem:[%s659 + $0xb54] sm:$0xf]
        %v2506 = vld [vmem:[%s659 + $0xb58] sm:$0xf]
        %v2507 = vld [vmem:[%s659 + $0xb5c] sm:$0xf]
        %v2508 = vld [vmem:[%s659 + $0xb60] sm:$0xf]
        %v2509 = vld [vmem:[%s659 + $0xb64] sm:$0xf]
        %v2510 = vld [vmem:[%s659 + $0xb68] sm:$0xf]
        %v2511 = vld [vmem:[%s659 + $0xb6c] sm:$0xf]
        %v2512 = vld [vmem:[%s659 + $0xb70] sm:$0xf]
        %v2513 = vld [vmem:[%s659 + $0xb74] sm:$0xf]
        %v2514 = vld [vmem:[%s659 + $0xb78] sm:$0xf]
        %v2515 = vld [vmem:[%s659 + $0xb7c] sm:$0xf]
        %v2516 = vld [vmem:[%s659 + $0xb80] sm:$0xf]
        %v2517 = vld [vmem:[%s659 + $0xb84] sm:$0xf]
        %v2518 = vld [vmem:[%s659 + $0xb88] sm:$0xf]
        %v2519 = vld [vmem:[%s659 + $0xb8c] sm:$0xf]
        %v2520 = vld [vmem:[%s659 + $0xb90] sm:$0xf]
        %v2521 = vld [vmem:[%s659 + $0xb94] sm:$0xf]
        %v2522 = vld [vmem:[%s659 + $0xb98] sm:$0xf]
        %v2523 = vld [vmem:[%s659 + $0xb9c] sm:$0xf]
        %v2524 = vld [vmem:[%s659 + $0xba0] sm:$0xf]
        %v2525 = vld [vmem:[%s659 + $0xba4] sm:$0xf]
        %v2526 = vld [vmem:[%s659 + $0xba8] sm:$0xf]
        %v2527 = vld [vmem:[%s659 + $0xbac] sm:$0xf]
        %v2528 = vld [vmem:[%s659 + $0xbb0] sm:$0xf]
        %v2529 = vld [vmem:[%s659 + $0xbb4] sm:$0xf]
        %v2530 = vld [vmem:[%s659 + $0xbb8] sm:$0xf]
        %v2531 = vld [vmem:[%s659 + $0xbbc] sm:$0xf]
        %v2532 = vld [vmem:[%s659 + $0xbc0] sm:$0xf]
        %v2533 = vld [vmem:[%s659 + $0xbc4] sm:$0xf]
        %v2534 = vld [vmem:[%s659 + $0xbc8] sm:$0xf]
        %v2535 = vld [vmem:[%s659 + $0xbcc] sm:$0xf]
        %v2536 = vld [vmem:[%s659 + $0xbd0] sm:$0xf]
        %v2537 = vld [vmem:[%s659 + $0xbd4] sm:$0xf]
        %v2538 = vld [vmem:[%s659 + $0xbd8] sm:$0xf]
        %v2539 = vld [vmem:[%s659 + $0xbdc] sm:$0xf]
        %v2540 = vld [vmem:[%s659 + $0xbe0] sm:$0xf]
        %v2541 = vld [vmem:[%s659 + $0xbe4] sm:$0xf]
        %v2542 = vld [vmem:[%s659 + $0xbe8] sm:$0xf]
        %v2543 = vld [vmem:[%s659 + $0xbec] sm:$0xf]
        %v2544 = vld [vmem:[%s659 + $0xbf0] sm:$0xf]
        %v2545 = vld [vmem:[%s659 + $0xbf4] sm:$0xf]
        %v2546 = vld [vmem:[%s659 + $0xbf8] sm:$0xf]
        %v2547 = vld [vmem:[%s659 + $0xbfc] sm:$0xf]
        %v2548 = vld [vmem:[%s659 + $0xc00] sm:$0xf]
        %v2549 = vld [vmem:[%s659 + $0xc04] sm:$0xf]
        %v2550 = vld [vmem:[%s659 + $0xc08] sm:$0xf]
        %v2551 = vld [vmem:[%s659 + $0xc0c] sm:$0xf]
        %v2552 = vld [vmem:[%s659 + $0xc10] sm:$0xf]
        %v2553 = vld [vmem:[%s659 + $0xc14] sm:$0xf]
        %v2554 = vld [vmem:[%s659 + $0xc18] sm:$0xf]
        %v2555 = vld [vmem:[%s659 + $0xc1c] sm:$0xf]
        %v2556 = vld [vmem:[%s659 + $0xc20] sm:$0xf]
        %v2557 = vld [vmem:[%s659 + $0xc24] sm:$0xf]
        %v2558 = vld [vmem:[%s659 + $0xc28] sm:$0xf]
        %v2559 = vld [vmem:[%s659 + $0xc2c] sm:$0xf]
        %v2560 = vld [vmem:[%s659 + $0xc30] sm:$0xf]
        %v2561 = vld [vmem:[%s659 + $0xc34] sm:$0xf]
        %v2562 = vld [vmem:[%s659 + $0xc38] sm:$0xf]
        %v2563 = vld [vmem:[%s659 + $0xc3c] sm:$0xf]
        %v2564 = vld [vmem:[%s659 + $0xc40] sm:$0xf]
        %v2565 = vld [vmem:[%s659 + $0xc44] sm:$0xf]
        %v2566 = vld [vmem:[%s659 + $0xc48] sm:$0xf]
        %v2567 = vld [vmem:[%s659 + $0xc4c] sm:$0xf]
        %v2568 = vld [vmem:[%s659 + $0xc50] sm:$0xf]
        %v2569 = vld [vmem:[%s659 + $0xc54] sm:$0xf]
        %v2570 = vld [vmem:[%s659 + $0xc58] sm:$0xf]
        %v2571 = vld [vmem:[%s659 + $0xc5c] sm:$0xf]
        %v2572 = vld [vmem:[%s659 + $0xc60] sm:$0xf]
        %v2573 = vld [vmem:[%s659 + $0xc64] sm:$0xf]
        %v2574 = vld [vmem:[%s659 + $0xc68] sm:$0xf]
        %v2575 = vld [vmem:[%s659 + $0xc6c] sm:$0xf]
        %v2576 = vld [vmem:[%s659 + $0xc70] sm:$0xf]
        %v2577 = vld [vmem:[%s659 + $0xc74] sm:$0xf]
        %v2578 = vld [vmem:[%s659 + $0xc78] sm:$0xf]
        %v2579 = vld [vmem:[%s659 + $0xc7c] sm:$0xf]
        %v2587 = vcombine.high %v1773, %v1773
        %v2589 = vunpack.c.l.s4 1966171168
        %v2590 = vunpack.c.0.s8 %v2589
        %v2591 = vlaneseq
        %v2592 = vshrl.u32 %v2591, 7
        %v2593 = vsub.s32 %v2590, %v2592
        %v2594 = vrot.slane %v1773, %v2593
        %v2596 = vunpack.c.l.s4 1966171168
        %v2597 = vunpack.c.0.s8 %v2596
        %v2598 = vlaneseq
        %v2599 = vshrl.u32 %v2598, 7
        %v2600 = vsub.s32 %v2597, %v2599
        %v2601 = vrot.slane %v2587, %v2600
        %v2602 = vcombine.high %v2594, %v2594
        %v2603 = vcombine.high %v2601, %v2601
        %v2605 = vunpack.c.l.s4 1966171168
        %v2606 = vunpack.c.0.s8 %v2605
        %v2607 = vlaneseq
        %v2608 = vshrl.u32 %v2607, 7
        %v2609 = vsub.s32 %v2606, %v2608
        %v2610 = vrot.slane %v2594, %v2609
        %v2612 = vunpack.c.l.s4 1966171168
        %v2613 = vunpack.c.0.s8 %v2612
        %v2614 = vlaneseq
        %v2615 = vshrl.u32 %v2614, 7
        %v2616 = vsub.s32 %v2613, %v2615
        %v2617 = vrot.slane %v2601, %v2616
        %v2619 = vunpack.c.l.s4 1966171168
        %v2620 = vunpack.c.0.s8 %v2619
        %v2621 = vlaneseq
        %v2622 = vshrl.u32 %v2621, 7
        %v2623 = vsub.s32 %v2620, %v2622
        %v2624 = vrot.slane %v2602, %v2623
        %v2626 = vunpack.c.l.s4 1966171168
        %v2627 = vunpack.c.0.s8 %v2626
        %v2628 = vlaneseq
        %v2629 = vshrl.u32 %v2628, 7
        %v2630 = vsub.s32 %v2627, %v2629
        %v2631 = vrot.slane %v2603, %v2630
        %v2632 = vcombine.high %v2610, %v2610
        %v2633 = vcombine.high %v2617, %v2617
        %v2634 = vcombine.high %v2624, %v2624
        %v2635 = vcombine.high %v2631, %v2631
        %v2636 = vcombine.high %v1774, %v1774
        %v2638 = vunpack.c.l.s4 1966171168
        %v2639 = vunpack.c.0.s8 %v2638
        %v2640 = vlaneseq
        %v2641 = vshrl.u32 %v2640, 7
        %v2642 = vsub.s32 %v2639, %v2641
        %v2643 = vrot.slane %v1774, %v2642
        %v2645 = vunpack.c.l.s4 1966171168
        %v2646 = vunpack.c.0.s8 %v2645
        %v2647 = vlaneseq
        %v2648 = vshrl.u32 %v2647, 7
        %v2649 = vsub.s32 %v2646, %v2648
        %v2650 = vrot.slane %v2636, %v2649
        %v2651 = vcombine.high %v2643, %v2643
        %v2652 = vcombine.high %v2650, %v2650
        %v2654 = vunpack.c.l.s4 1966171168
        %v2655 = vunpack.c.0.s8 %v2654
        %v2656 = vlaneseq
        %v2657 = vshrl.u32 %v2656, 7
        %v2658 = vsub.s32 %v2655, %v2657
        %v2659 = vrot.slane %v2643, %v2658
        %v2661 = vunpack.c.l.s4 1966171168
        %v2662 = vunpack.c.0.s8 %v2661
        %v2663 = vlaneseq
        %v2664 = vshrl.u32 %v2663, 7
        %v2665 = vsub.s32 %v2662, %v2664
        %v2666 = vrot.slane %v2650, %v2665
        %v2668 = vunpack.c.l.s4 1966171168
        %v2669 = vunpack.c.0.s8 %v2668
        %v2670 = vlaneseq
        %v2671 = vshrl.u32 %v2670, 7
        %v2672 = vsub.s32 %v2669, %v2671
        %v2673 = vrot.slane %v2651, %v2672
        %v2675 = vunpack.c.l.s4 1966171168
        %v2676 = vunpack.c.0.s8 %v2675
        %v2677 = vlaneseq
        %v2678 = vshrl.u32 %v2677, 7
        %v2679 = vsub.s32 %v2676, %v2678
        %v2680 = vrot.slane %v2652, %v2679
        %v2681 = vcombine.high %v2659, %v2659
        %v2682 = vcombine.high %v2666, %v2666
        %v2683 = vcombine.high %v2673, %v2673
        %v2684 = vcombine.high %v2680, %v2680
        %v2685 = vcombine.high %v1775, %v1775
        %v2687 = vunpack.c.l.s4 1966171168
        %v2688 = vunpack.c.0.s8 %v2687
        %v2689 = vlaneseq
        %v2690 = vshrl.u32 %v2689, 7
        %v2691 = vsub.s32 %v2688, %v2690
        %v2692 = vrot.slane %v1775, %v2691
        %v2694 = vunpack.c.l.s4 1966171168
        %v2695 = vunpack.c.0.s8 %v2694
        %v2696 = vlaneseq
        %v2697 = vshrl.u32 %v2696, 7
        %v2698 = vsub.s32 %v2695, %v2697
        %v2699 = vrot.slane %v2685, %v2698
        %v2700 = vcombine.high %v2692, %v2692
        %v2701 = vcombine.high %v2699, %v2699
        %v2703 = vunpack.c.l.s4 1966171168
        %v2704 = vunpack.c.0.s8 %v2703
        %v2705 = vlaneseq
        %v2706 = vshrl.u32 %v2705, 7
        %v2707 = vsub.s32 %v2704, %v2706
        %v2708 = vrot.slane %v2692, %v2707
        %v2710 = vunpack.c.l.s4 1966171168
        %v2711 = vunpack.c.0.s8 %v2710
        %v2712 = vlaneseq
        %v2713 = vshrl.u32 %v2712, 7
        %v2714 = vsub.s32 %v2711, %v2713
        %v2715 = vrot.slane %v2699, %v2714
        %v2717 = vunpack.c.l.s4 1966171168
        %v2718 = vunpack.c.0.s8 %v2717
        %v2719 = vlaneseq
        %v2720 = vshrl.u32 %v2719, 7
        %v2721 = vsub.s32 %v2718, %v2720
        %v2722 = vrot.slane %v2700, %v2721
        %v2724 = vunpack.c.l.s4 1966171168
        %v2725 = vunpack.c.0.s8 %v2724
        %v2726 = vlaneseq
        %v2727 = vshrl.u32 %v2726, 7
        %v2728 = vsub.s32 %v2725, %v2727
        %v2729 = vrot.slane %v2701, %v2728
        %v2730 = vcombine.high %v2708, %v2708
        %v2731 = vcombine.high %v2715, %v2715
        %v2732 = vcombine.high %v2722, %v2722
        %v2733 = vcombine.high %v2729, %v2729
        %v2734 = vcombine.high %v1776, %v1776
        %v2736 = vunpack.c.l.s4 1966171168
        %v2737 = vunpack.c.0.s8 %v2736
        %v2738 = vlaneseq
        %v2739 = vshrl.u32 %v2738, 7
        %v2740 = vsub.s32 %v2737, %v2739
        %v2741 = vrot.slane %v1776, %v2740
        %v2743 = vunpack.c.l.s4 1966171168
        %v2744 = vunpack.c.0.s8 %v2743
        %v2745 = vlaneseq
        %v2746 = vshrl.u32 %v2745, 7
        %v2747 = vsub.s32 %v2744, %v2746
        %v2748 = vrot.slane %v2734, %v2747
        %v2749 = vcombine.high %v2741, %v2741
        %v2750 = vcombine.high %v2748, %v2748
        %v2752 = vunpack.c.l.s4 1966171168
        %v2753 = vunpack.c.0.s8 %v2752
        %v2754 = vlaneseq
        %v2755 = vshrl.u32 %v2754, 7
        %v2756 = vsub.s32 %v2753, %v2755
        %v2757 = vrot.slane %v2741, %v2756
        %v2759 = vunpack.c.l.s4 1966171168
        %v2760 = vunpack.c.0.s8 %v2759
        %v2761 = vlaneseq
        %v2762 = vshrl.u32 %v2761, 7
        %v2763 = vsub.s32 %v2760, %v2762
        %v2764 = vrot.slane %v2748, %v2763
        %v2766 = vunpack.c.l.s4 1966171168
        %v2767 = vunpack.c.0.s8 %v2766
        %v2768 = vlaneseq
        %v2769 = vshrl.u32 %v2768, 7
        %v2770 = vsub.s32 %v2767, %v2769
        %v2771 = vrot.slane %v2749, %v2770
        %v2773 = vunpack.c.l.s4 1966171168
        %v2774 = vunpack.c.0.s8 %v2773
        %v2775 = vlaneseq
        %v2776 = vshrl.u32 %v2775, 7
        %v2777 = vsub.s32 %v2774, %v2776
        %v2778 = vrot.slane %v2750, %v2777
        %v2779 = vcombine.high %v2757, %v2757
        %v2780 = vcombine.high %v2764, %v2764
        %v2781 = vcombine.high %v2771, %v2771
        %v2782 = vcombine.high %v2778, %v2778
        %v2783 = vcombine.high %v1777, %v1777
        %v2785 = vunpack.c.l.s4 1966171168
        %v2786 = vunpack.c.0.s8 %v2785
        %v2787 = vlaneseq
        %v2788 = vshrl.u32 %v2787, 7
        %v2789 = vsub.s32 %v2786, %v2788
        %v2790 = vrot.slane %v1777, %v2789
        %v2792 = vunpack.c.l.s4 1966171168
        %v2793 = vunpack.c.0.s8 %v2792
        %v2794 = vlaneseq
        %v2795 = vshrl.u32 %v2794, 7
        %v2796 = vsub.s32 %v2793, %v2795
        %v2797 = vrot.slane %v2783, %v2796
        %v2798 = vcombine.high %v2790, %v2790
        %v2799 = vcombine.high %v2797, %v2797
        %v2801 = vunpack.c.l.s4 1966171168
        %v2802 = vunpack.c.0.s8 %v2801
        %v2803 = vlaneseq
        %v2804 = vshrl.u32 %v2803, 7
        %v2805 = vsub.s32 %v2802, %v2804
        %v2806 = vrot.slane %v2790, %v2805
        %v2808 = vunpack.c.l.s4 1966171168
        %v2809 = vunpack.c.0.s8 %v2808
        %v2810 = vlaneseq
        %v2811 = vshrl.u32 %v2810, 7
        %v2812 = vsub.s32 %v2809, %v2811
        %v2813 = vrot.slane %v2797, %v2812
        %v2815 = vunpack.c.l.s4 1966171168
        %v2816 = vunpack.c.0.s8 %v2815
        %v2817 = vlaneseq
        %v2818 = vshrl.u32 %v2817, 7
        %v2819 = vsub.s32 %v2816, %v2818
        %v2820 = vrot.slane %v2798, %v2819
        %v2822 = vunpack.c.l.s4 1966171168
        %v2823 = vunpack.c.0.s8 %v2822
        %v2824 = vlaneseq
        %v2825 = vshrl.u32 %v2824, 7
        %v2826 = vsub.s32 %v2823, %v2825
        %v2827 = vrot.slane %v2799, %v2826
        %v2828 = vcombine.high %v2806, %v2806
        %v2829 = vcombine.high %v2813, %v2813
        %v2830 = vcombine.high %v2820, %v2820
        %v2831 = vcombine.high %v2827, %v2827
        %v2832 = vcombine.high %v1778, %v1778
        %v2834 = vunpack.c.l.s4 1966171168
        %v2835 = vunpack.c.0.s8 %v2834
        %v2836 = vlaneseq
        %v2837 = vshrl.u32 %v2836, 7
        %v2838 = vsub.s32 %v2835, %v2837
        %v2839 = vrot.slane %v1778, %v2838
        %v2841 = vunpack.c.l.s4 1966171168
        %v2842 = vunpack.c.0.s8 %v2841
        %v2843 = vlaneseq
        %v2844 = vshrl.u32 %v2843, 7
        %v2845 = vsub.s32 %v2842, %v2844
        %v2846 = vrot.slane %v2832, %v2845
        %v2847 = vcombine.high %v2839, %v2839
        %v2848 = vcombine.high %v2846, %v2846
        %v2850 = vunpack.c.l.s4 1966171168
        %v2851 = vunpack.c.0.s8 %v2850
        %v2852 = vlaneseq
        %v2853 = vshrl.u32 %v2852, 7
        %v2854 = vsub.s32 %v2851, %v2853
        %v2855 = vrot.slane %v2839, %v2854
        %v2857 = vunpack.c.l.s4 1966171168
        %v2858 = vunpack.c.0.s8 %v2857
        %v2859 = vlaneseq
        %v2860 = vshrl.u32 %v2859, 7
        %v2861 = vsub.s32 %v2858, %v2860
        %v2862 = vrot.slane %v2846, %v2861
        %v2864 = vunpack.c.l.s4 1966171168
        %v2865 = vunpack.c.0.s8 %v2864
        %v2866 = vlaneseq
        %v2867 = vshrl.u32 %v2866, 7
        %v2868 = vsub.s32 %v2865, %v2867
        %v2869 = vrot.slane %v2847, %v2868
        %v2871 = vunpack.c.l.s4 1966171168
        %v2872 = vunpack.c.0.s8 %v2871
        %v2873 = vlaneseq
        %v2874 = vshrl.u32 %v2873, 7
        %v2875 = vsub.s32 %v2872, %v2874
        %v2876 = vrot.slane %v2848, %v2875
        %v2877 = vcombine.high %v2855, %v2855
        %v2878 = vcombine.high %v2862, %v2862
        %v2879 = vcombine.high %v2869, %v2869
        %v2880 = vcombine.high %v2876, %v2876
        %v2882 = vunpack.c.l.s4 1966171168
        %v2883 = vunpack.c.0.s8 %v2882
        %v2884 = vlaneseq
        %v2885 = vshrl.u32 %v2884, 7
        %v2886 = vsub.s32 %v2883, %v2885
        %v2887 = vrot.slane %v1779, %v2886
        %v2888 = vcombine.high %v2887, %v2887
        %v2890 = vunpack.c.l.s4 1966171168
        %v2891 = vunpack.c.0.s8 %v2890
        %v2892 = vlaneseq
        %v2893 = vshrl.u32 %v2892, 7
        %v2894 = vsub.s32 %v2891, %v2893
        %v2895 = vrot.slane %v2887, %v2894
        %v2897 = vunpack.c.l.s4 1966171168
        %v2898 = vunpack.c.0.s8 %v2897
        %v2899 = vlaneseq
        %v2900 = vshrl.u32 %v2899, 7
        %v2901 = vsub.s32 %v2898, %v2900
        %v2902 = vrot.slane %v2888, %v2901
        %v3753 = vunpack.c.l.b16 %v1780
        %v3754 = vunpack.c.l.b16 %v1781
        %v3755 = vunpack.c.l.b16 %v1782
        %v3756 = vunpack.c.l.b16 %v1783
        %v3757 = vunpack.c.l.b16 %v1784
        %v3758 = vunpack.c.l.b16 %v1785
        %v3759 = vunpack.c.l.b16 %v1786
        %v3760 = vunpack.c.l.b16 %v1787
        %v3761 = vunpack.c.l.b16 %v1788
        %v3762 = vunpack.c.l.b16 %v1789
        %v3763 = vunpack.c.l.b16 %v1790
        %v3764 = vunpack.c.l.b16 %v1791
        %v3765 = vunpack.c.l.b16 %v1792
        %v3766 = vunpack.c.l.b16 %v1793
        %v3767 = vunpack.c.l.b16 %v1794
        %v3768 = vunpack.c.l.b16 %v1795
        %v3769 = vunpack.c.l.b16 %v1796
        %v3770 = vunpack.c.l.b16 %v1797
        %v3771 = vunpack.c.l.b16 %v1798
        %v3772 = vunpack.c.l.b16 %v1799
        %v3773 = vunpack.c.l.b16 %v1800
        %v3774 = vunpack.c.l.b16 %v1801
        %v3775 = vunpack.c.l.b16 %v1802
        %v3776 = vunpack.c.l.b16 %v1803
        %v3777 = vunpack.c.l.b16 %v1804
        %v3778 = vunpack.c.l.b16 %v1805
        %v3779 = vunpack.c.l.b16 %v1806
        %v3780 = vunpack.c.l.b16 %v1807
        %v3781 = vunpack.c.l.b16 %v1808
        %v3782 = vunpack.c.l.b16 %v1809
        %v3783 = vunpack.c.l.b16 %v1810
        %v3784 = vunpack.c.l.b16 %v1811
        %v3785 = vunpack.c.l.b16 %v1812
        %v3786 = vunpack.c.l.b16 %v1813
        %v3787 = vunpack.c.l.b16 %v1814
        %v3788 = vunpack.c.l.b16 %v1815
        %v3789 = vunpack.c.l.b16 %v1816
        %v3790 = vunpack.c.l.b16 %v1817
        %v3791 = vunpack.c.l.b16 %v1818
        %v3792 = vunpack.c.l.b16 %v1819
        %v3793 = vunpack.c.l.b16 %v1820
        %v3794 = vunpack.c.l.b16 %v1821
        %v3795 = vunpack.c.l.b16 %v1822
        %v3796 = vunpack.c.l.b16 %v1823
        %v3797 = vunpack.c.l.b16 %v1824
        %v3798 = vunpack.c.l.b16 %v1825
        %v3799 = vunpack.c.l.b16 %v1826
        %v3800 = vunpack.c.l.b16 %v1827
        %v3801 = vunpack.c.l.b16 %v1828
        %v3802 = vunpack.c.l.b16 %v1829
        %v3803 = vunpack.c.l.b16 %v1830
        %v3804 = vunpack.c.l.b16 %v1831
        %v3805 = vunpack.c.l.b16 %v1832
        %v3806 = vunpack.c.l.b16 %v1833
        %v3807 = vunpack.c.l.b16 %v1834
        %v3808 = vunpack.c.l.b16 %v1835
        %v3809 = vunpack.c.l.b16 %v1836
        %v3810 = vunpack.c.l.b16 %v1837
        %v3811 = vunpack.c.l.b16 %v1838
        %v3812 = vunpack.c.l.b16 %v1839
        %v3813 = vunpack.c.l.b16 %v1840
        %v3814 = vunpack.c.l.b16 %v1841
        %v3815 = vunpack.c.l.b16 %v1842
        %v3816 = vunpack.c.l.b16 %v1843
        %v3817 = vunpack.c.l.b16 %v1844
        %v3818 = vunpack.c.l.b16 %v1845
        %v3819 = vunpack.c.l.b16 %v1846
        %v3820 = vunpack.c.l.b16 %v1847
        %v3821 = vunpack.c.l.b16 %v1848
        %v3822 = vunpack.c.l.b16 %v1849
        %v3823 = vunpack.c.l.b16 %v1850
        %v3824 = vunpack.c.l.b16 %v1851
        %v3825 = vunpack.c.l.b16 %v1852
        %v3826 = vunpack.c.l.b16 %v1853
        %v3827 = vunpack.c.l.b16 %v1854
        %v3828 = vunpack.c.l.b16 %v1855
        %v3829 = vunpack.c.l.b16 %v1856
        %v3830 = vunpack.c.l.b16 %v1857
        %v3831 = vunpack.c.l.b16 %v1858
        %v3832 = vunpack.c.l.b16 %v1859
        %v3833 = vunpack.c.l.b16 %v1860
        %v3834 = vunpack.c.l.b16 %v1861
        %v3835 = vunpack.c.l.b16 %v1862
        %v3836 = vunpack.c.l.b16 %v1863
        %v3837 = vunpack.c.l.b16 %v1864
        %v3838 = vunpack.c.l.b16 %v1865
        %v3839 = vunpack.c.l.b16 %v1866
        %v3840 = vunpack.c.l.b16 %v1867
        %v3841 = vunpack.c.l.b16 %v1868
        %v3842 = vunpack.c.l.b16 %v1869
        %v3843 = vunpack.c.l.b16 %v1870
        %v3844 = vunpack.c.l.b16 %v1871
        %v3845 = vunpack.c.l.b16 %v1872
        %v3846 = vunpack.c.l.b16 %v1873
        %v3847 = vunpack.c.l.b16 %v1874
        %v3848 = vunpack.c.l.b16 %v1875
        %v3849 = vunpack.c.l.b16 %v1876
        %v3850 = vunpack.c.l.b16 %v1877
        %v3851 = vunpack.c.l.b16 %v1878
        %v3852 = vunpack.c.l.b16 %v1879
        %v3853 = vunpack.c.l.b16 %v1880
        %v3854 = vunpack.c.l.b16 %v1881
        %v3855 = vunpack.c.l.b16 %v1882
        %v3856 = vunpack.c.l.b16 %v1883
        %v3857 = vunpack.c.l.b16 %v1884
        %v3858 = vunpack.c.l.b16 %v1885
        %v3859 = vunpack.c.l.b16 %v1886
        %v3860 = vunpack.c.l.b16 %v1887
        %v3861 = vunpack.c.l.b16 %v1888
        %v3862 = vunpack.c.l.b16 %v1889
        %v3863 = vunpack.c.l.b16 %v1890
        %v3864 = vunpack.c.l.b16 %v1891
        %v3865 = vunpack.c.l.b16 %v1892
        %v3866 = vunpack.c.l.b16 %v1893
        %v3867 = vunpack.c.l.b16 %v1894
        %v3868 = vunpack.c.l.b16 %v1895
        %v3869 = vunpack.c.l.b16 %v1896
        %v3870 = vunpack.c.l.b16 %v1897
        %v3871 = vunpack.c.l.b16 %v1898
        %v3872 = vunpack.c.l.b16 %v1899
        %v3873 = vunpack.c.l.b16 %v1900
        %v3874 = vunpack.c.l.b16 %v1901
        %v3875 = vunpack.c.l.b16 %v1902
        %v3876 = vunpack.c.l.b16 %v1903
        %v3877 = vunpack.c.l.b16 %v1904
        %v3878 = vunpack.c.l.b16 %v1905
        %v3879 = vunpack.c.l.b16 %v1906
        %v3880 = vunpack.c.l.b16 %v1907
        %v3881 = vunpack.c.l.b16 %v1908
        %v3882 = vunpack.c.l.b16 %v1909
        %v3883 = vunpack.c.l.b16 %v1910
        %v3884 = vunpack.c.l.b16 %v1911
        %v3885 = vunpack.c.l.b16 %v1912
        %v3886 = vunpack.c.l.b16 %v1913
        %v3887 = vunpack.c.l.b16 %v1914
        %v3888 = vunpack.c.l.b16 %v1915
        %v3889 = vunpack.c.l.b16 %v1916
        %v3890 = vunpack.c.l.b16 %v1917
        %v3891 = vunpack.c.l.b16 %v1918
        %v3892 = vunpack.c.l.b16 %v1919
        %v3893 = vunpack.c.l.b16 %v1920
        %v3894 = vunpack.c.l.b16 %v1921
        %v3895 = vunpack.c.l.b16 %v1922
        %v3896 = vunpack.c.l.b16 %v1923
        %v3897 = vunpack.c.l.b16 %v1924
        %v3898 = vunpack.c.l.b16 %v1925
        %v3899 = vunpack.c.l.b16 %v1926
        %v3900 = vunpack.c.l.b16 %v1927
        %v3901 = vunpack.c.l.b16 %v1928
        %v3902 = vunpack.c.l.b16 %v1929
        %v3903 = vunpack.c.l.b16 %v1930
        %v3904 = vunpack.c.l.b16 %v1931
        %v3905 = vunpack.c.l.b16 %v1932
        %v3906 = vunpack.c.l.b16 %v1933
        %v3907 = vunpack.c.l.b16 %v1934
        %v3908 = vunpack.c.l.b16 %v1935
        %v3909 = vunpack.c.l.b16 %v1936
        %v3910 = vunpack.c.l.b16 %v1937
        %v3911 = vunpack.c.l.b16 %v1938
        %v3912 = vunpack.c.l.b16 %v1939
        %v3913 = vunpack.c.l.b16 %v1940
        %v3914 = vunpack.c.l.b16 %v1941
        %v3915 = vunpack.c.l.b16 %v1942
        %v3916 = vunpack.c.l.b16 %v1943
        %v3917 = vunpack.c.l.b16 %v1944
        %v3918 = vunpack.c.l.b16 %v1945
        %v3919 = vunpack.c.l.b16 %v1946
        %v3920 = vunpack.c.l.b16 %v1947
        %v3921 = vunpack.c.l.b16 %v1948
        %v3922 = vunpack.c.l.b16 %v1949
        %v3923 = vunpack.c.l.b16 %v1950
        %v3924 = vunpack.c.l.b16 %v1951
        %v3925 = vunpack.c.l.b16 %v1952
        %v3926 = vunpack.c.l.b16 %v1953
        %v3927 = vunpack.c.l.b16 %v1954
        %v3928 = vunpack.c.l.b16 %v1955
        %v3929 = vunpack.c.l.b16 %v1956
        %v3930 = vunpack.c.l.b16 %v1957
        %v3931 = vunpack.c.l.b16 %v1958
        %v3932 = vunpack.c.l.b16 %v1959
        %v3933 = vunpack.c.l.b16 %v1960
        %v3934 = vunpack.c.l.b16 %v1961
        %v3935 = vunpack.c.l.b16 %v1962
        %v3936 = vunpack.c.l.b16 %v1963
        %v3937 = vunpack.c.l.b16 %v1964
        %v3938 = vunpack.c.l.b16 %v1965
        %v3939 = vunpack.c.l.b16 %v1966
        %v3940 = vunpack.c.l.b16 %v1967
        %v3941 = vunpack.c.l.b16 %v1968
        %v3942 = vunpack.c.l.b16 %v1969
        %v3943 = vunpack.c.l.b16 %v1970
        %v3944 = vunpack.c.l.b16 %v1971
        %v3945 = vunpack.c.l.b16 %v1972
        %v3946 = vunpack.c.l.b16 %v1973
        %v3947 = vunpack.c.l.b16 %v1974
        %v3948 = vunpack.c.l.b16 %v1975
        %v3949 = vunpack.c.l.b16 %v1976
        %v3950 = vunpack.c.l.b16 %v1977
        %v3951 = vunpack.c.l.b16 %v1978
        %v3952 = vunpack.c.l.b16 %v1979
        %v3953 = vunpack.c.l.b16 %v1980
        %v3954 = vunpack.c.l.b16 %v1981
        %v3955 = vunpack.c.l.b16 %v1982
        %v3956 = vunpack.c.l.b16 %v1983
        %v3957 = vunpack.c.l.b16 %v1984
        %v3958 = vunpack.c.l.b16 %v1985
        %v3959 = vunpack.c.l.b16 %v1986
        %v3960 = vunpack.c.l.b16 %v1987
        %v3961 = vunpack.c.l.b16 %v1988
        %v3962 = vunpack.c.l.b16 %v1989
        %v3963 = vunpack.c.l.b16 %v1990
        %v3964 = vunpack.c.l.b16 %v1991
        %v3965 = vunpack.c.l.b16 %v1992
        %v3966 = vunpack.c.l.b16 %v1993
        %v3967 = vunpack.c.l.b16 %v1994
        %v3968 = vunpack.c.l.b16 %v1995
        %v3969 = vunpack.c.l.b16 %v1996
        %v3970 = vunpack.c.l.b16 %v1997
        %v3971 = vunpack.c.l.b16 %v1998
        %v3972 = vunpack.c.l.b16 %v1999
        %v3973 = vunpack.c.l.b16 %v2000
        %v3974 = vunpack.c.l.b16 %v2001
        %v3975 = vunpack.c.l.b16 %v2002
        %v3976 = vunpack.c.l.b16 %v2003
        %v3977 = vunpack.c.l.b16 %v2004
        %v3978 = vunpack.c.l.b16 %v2005
        %v3979 = vunpack.c.l.b16 %v2006
        %v3980 = vunpack.c.l.b16 %v2007
        %v3981 = vunpack.c.l.b16 %v2008
        %v3982 = vunpack.c.l.b16 %v2009
        %v3983 = vunpack.c.l.b16 %v2010
        %v3984 = vunpack.c.l.b16 %v2011
        %v3985 = vunpack.c.l.b16 %v2012
        %v3986 = vunpack.c.l.b16 %v2013
        %v3987 = vunpack.c.l.b16 %v2014
        %v3988 = vunpack.c.l.b16 %v2015
        %v3989 = vunpack.c.l.b16 %v2016
        %v3990 = vunpack.c.l.b16 %v2017
        %v3991 = vunpack.c.l.b16 %v2018
        %v3992 = vunpack.c.l.b16 %v2019
        %v3993 = vunpack.c.l.b16 %v2020
        %v3994 = vunpack.c.l.b16 %v2021
        %v3995 = vunpack.c.l.b16 %v2022
        %v3996 = vunpack.c.l.b16 %v2023
        %v3997 = vunpack.c.l.b16 %v2024
        %v3998 = vunpack.c.l.b16 %v2025
        %v3999 = vunpack.c.l.b16 %v2026
        %v4000 = vunpack.c.l.b16 %v2027
        %v4001 = vunpack.c.l.b16 %v2028
        %v4002 = vunpack.c.l.b16 %v2029
        %v4003 = vunpack.c.l.b16 %v2030
        %v4004 = vunpack.c.l.b16 %v2031
        %v4005 = vunpack.c.l.b16 %v2032
        %v4006 = vunpack.c.l.b16 %v2033
        %v4007 = vunpack.c.l.b16 %v2034
        %v4008 = vunpack.c.l.b16 %v2035
        %v4009 = vunpack.c.l.b16 %v2036
        %v4010 = vunpack.c.l.b16 %v2037
        %v4011 = vunpack.c.l.b16 %v2038
        %v4012 = vunpack.c.l.b16 %v2039
        %v4013 = vunpack.c.l.b16 %v2040
        %v4014 = vunpack.c.l.b16 %v2041
        %v4015 = vunpack.c.l.b16 %v2042
        %v4016 = vunpack.c.l.b16 %v2043
        %v4017 = vunpack.c.l.b16 %v2044
        %v4018 = vunpack.c.l.b16 %v2045
        %v4019 = vunpack.c.l.b16 %v2046
        %v4020 = vunpack.c.l.b16 %v2047
        %v4021 = vunpack.c.l.b16 %v2048
        %v4022 = vunpack.c.l.b16 %v2049
        %v4023 = vunpack.c.l.b16 %v2050
        %v4024 = vunpack.c.l.b16 %v2051
        %v4025 = vunpack.c.l.b16 %v2052
        %v4026 = vunpack.c.l.b16 %v2053
        %v4027 = vunpack.c.l.b16 %v2054
        %v4028 = vunpack.c.l.b16 %v2055
        %v4029 = vunpack.c.l.b16 %v2056
        %v4030 = vunpack.c.l.b16 %v2057
        %v4031 = vunpack.c.l.b16 %v2058
        %v4032 = vunpack.c.l.b16 %v2059
        %v4033 = vunpack.c.l.b16 %v2060
        %v4034 = vunpack.c.l.b16 %v2061
        %v4035 = vunpack.c.l.b16 %v2062
        %v4036 = vunpack.c.l.b16 %v2063
        %v4037 = vunpack.c.l.b16 %v2064
        %v4038 = vunpack.c.l.b16 %v2065
        %v4039 = vunpack.c.l.b16 %v2066
        %v4040 = vunpack.c.l.b16 %v2067
        %v4041 = vunpack.c.l.b16 %v2068
        %v4042 = vunpack.c.l.b16 %v2069
        %v4043 = vunpack.c.l.b16 %v2070
        %v4044 = vunpack.c.l.b16 %v2071
        %v4045 = vunpack.c.l.b16 %v2072
        %v4046 = vunpack.c.l.b16 %v2073
        %v4047 = vunpack.c.l.b16 %v2074
        %v4048 = vunpack.c.l.b16 %v2075
        %v4049 = vunpack.c.l.b16 %v2076
        %v4050 = vunpack.c.l.b16 %v2077
        %v4051 = vunpack.c.l.b16 %v2078
        %v4052 = vunpack.c.l.b16 %v2079
        %v4053 = vunpack.c.l.b16 %v2080
        %v4054 = vunpack.c.l.b16 %v2081
        %v4055 = vunpack.c.l.b16 %v2082
        %v4056 = vunpack.c.l.b16 %v2083
        %v4057 = vunpack.c.l.b16 %v2084
        %v4058 = vunpack.c.l.b16 %v2085
        %v4059 = vunpack.c.l.b16 %v2086
        %v4060 = vunpack.c.l.b16 %v2087
        %v4061 = vunpack.c.l.b16 %v2088
        %v4062 = vunpack.c.l.b16 %v2089
        %v4063 = vunpack.c.l.b16 %v2090
        %v4064 = vunpack.c.l.b16 %v2091
        %v4065 = vunpack.c.l.b16 %v2092
        %v4066 = vunpack.c.l.b16 %v2093
        %v4067 = vunpack.c.l.b16 %v2094
        %v4068 = vunpack.c.l.b16 %v2095
        %v4069 = vunpack.c.l.b16 %v2096
        %v4070 = vunpack.c.l.b16 %v2097
        %v4071 = vunpack.c.l.b16 %v2098
        %v4072 = vunpack.c.l.b16 %v2099
        %v4073 = vunpack.c.l.b16 %v2100
        %v4074 = vunpack.c.l.b16 %v2101
        %v4075 = vunpack.c.l.b16 %v2102
        %v4076 = vunpack.c.l.b16 %v2103
        %v4077 = vunpack.c.l.b16 %v2104
        %v4078 = vunpack.c.l.b16 %v2105
        %v4079 = vunpack.c.l.b16 %v2106
        %v4080 = vunpack.c.l.b16 %v2107
        %v4081 = vunpack.c.l.b16 %v2108
        %v4082 = vunpack.c.l.b16 %v2109
        %v4083 = vunpack.c.l.b16 %v2110
        %v4084 = vunpack.c.l.b16 %v2111
        %v4085 = vunpack.c.l.b16 %v2112
        %v4086 = vunpack.c.l.b16 %v2113
        %v4087 = vunpack.c.l.b16 %v2114
        %v4088 = vunpack.c.l.b16 %v2115
        %v4089 = vunpack.c.l.b16 %v2116
        %v4090 = vunpack.c.l.b16 %v2117
        %v4091 = vunpack.c.l.b16 %v2118
        %v4092 = vunpack.c.l.b16 %v2119
        %v4093 = vunpack.c.l.b16 %v2120
        %v4094 = vunpack.c.l.b16 %v2121
        %v4095 = vunpack.c.l.b16 %v2122
        %v4096 = vunpack.c.l.b16 %v2123
        %v4097 = vunpack.c.l.b16 %v2124
        %v4098 = vunpack.c.l.b16 %v2125
        %v4099 = vunpack.c.l.b16 %v2126
        %v4100 = vunpack.c.l.b16 %v2127
        %v4101 = vunpack.c.l.b16 %v2128
        %v4102 = vunpack.c.l.b16 %v2129
        %v4103 = vunpack.c.l.b16 %v2130
        %v4104 = vunpack.c.l.b16 %v2131
        %v4105 = vunpack.c.l.b16 %v2132
        %v4106 = vunpack.c.l.b16 %v2133
        %v4107 = vunpack.c.l.b16 %v2134
        %v4108 = vunpack.c.l.b16 %v2135
        %v4109 = vunpack.c.l.b16 %v2136
        %v4110 = vunpack.c.l.b16 %v2137
        %v4111 = vunpack.c.l.b16 %v2138
        %v4112 = vunpack.c.l.b16 %v2139
        %v4113 = vunpack.c.l.b16 %v2140
        %v4114 = vunpack.c.l.b16 %v2141
        %v4115 = vunpack.c.l.b16 %v2142
        %v4116 = vunpack.c.l.b16 %v2143
        %v4117 = vunpack.c.l.b16 %v2144
        %v4118 = vunpack.c.l.b16 %v2145
        %v4119 = vunpack.c.l.b16 %v2146
        %v4120 = vunpack.c.l.b16 %v2147
        %v4121 = vunpack.c.l.b16 %v2148
        %v4122 = vunpack.c.l.b16 %v2149
        %v4123 = vunpack.c.l.b16 %v2150
        %v4124 = vunpack.c.l.b16 %v2151
        %v4125 = vunpack.c.l.b16 %v2152
        %v4126 = vunpack.c.l.b16 %v2153
        %v4127 = vunpack.c.l.b16 %v2154
        %v4128 = vunpack.c.l.b16 %v2155
        %v4129 = vunpack.c.l.b16 %v2156
        %v4130 = vunpack.c.l.b16 %v2157
        %v4131 = vunpack.c.l.b16 %v2158
        %v4132 = vunpack.c.l.b16 %v2159
        %v4133 = vunpack.c.l.b16 %v2160
        %v4134 = vunpack.c.l.b16 %v2161
        %v4135 = vunpack.c.l.b16 %v2162
        %v4136 = vunpack.c.l.b16 %v2163
        %v4137 = vunpack.c.l.b16 %v2164
        %v4138 = vunpack.c.l.b16 %v2165
        %v4139 = vunpack.c.l.b16 %v2166
        %v4140 = vunpack.c.l.b16 %v2167
        %v4141 = vunpack.c.l.b16 %v2168
        %v4142 = vunpack.c.l.b16 %v2169
        %v4143 = vunpack.c.l.b16 %v2170
        %v4144 = vunpack.c.l.b16 %v2171
        %v4145 = vunpack.c.l.b16 %v2172
        %v4146 = vunpack.c.l.b16 %v2173
        %v4147 = vunpack.c.l.b16 %v2174
        %v4148 = vunpack.c.l.b16 %v2175
        %v4149 = vunpack.c.l.b16 %v2176
        %v4150 = vunpack.c.l.b16 %v2177
        %v4151 = vunpack.c.l.b16 %v2178
        %v4152 = vunpack.c.l.b16 %v2179
        %v4153 = vunpack.c.l.b16 %v2180
        %v4154 = vunpack.c.l.b16 %v2181
        %v4155 = vunpack.c.l.b16 %v2182
        %v4156 = vunpack.c.l.b16 %v2183
        %v4157 = vunpack.c.l.b16 %v2184
        %v4158 = vunpack.c.l.b16 %v2185
        %v4159 = vunpack.c.l.b16 %v2186
        %v4160 = vunpack.c.l.b16 %v2187
        %v4161 = vunpack.c.l.b16 %v2188
        %v4162 = vunpack.c.l.b16 %v2189
        %v4163 = vunpack.c.l.b16 %v2190
        %v4164 = vunpack.c.l.b16 %v2191
        %v4165 = vunpack.c.l.b16 %v2192
        %v4166 = vunpack.c.l.b16 %v2193
        %v4167 = vunpack.c.l.b16 %v2194
        %v4168 = vunpack.c.l.b16 %v2195
        %v4169 = vunpack.c.l.b16 %v2196
        %v4170 = vunpack.c.l.b16 %v2197
        %v4171 = vunpack.c.l.b16 %v2198
        %v4172 = vunpack.c.l.b16 %v2199
        %v4173 = vunpack.c.l.b16 %v2200
        %v4174 = vunpack.c.l.b16 %v2201
        %v4175 = vunpack.c.l.b16 %v2202
        %v4176 = vunpack.c.l.b16 %v2203
        %v4177 = vunpack.c.l.b16 %v2204
        %v4178 = vunpack.c.l.b16 %v2205
        %v4179 = vunpack.c.l.b16 %v2206
        %v4180 = vunpack.c.l.b16 %v2207
        %v4181 = vunpack.c.l.b16 %v2208
        %v4182 = vunpack.c.l.b16 %v2209
        %v4183 = vunpack.c.l.b16 %v2210
        %v4184 = vunpack.c.l.b16 %v2211
        %v4185 = vunpack.c.l.b16 %v2212
        %v4186 = vunpack.c.l.b16 %v2213
        %v4187 = vunpack.c.l.b16 %v2214
        %v4188 = vunpack.c.l.b16 %v2215
        %v4189 = vunpack.c.l.b16 %v2216
        %v4190 = vunpack.c.l.b16 %v2217
        %v4191 = vunpack.c.l.b16 %v2218
        %v4192 = vunpack.c.l.b16 %v2219
        %v4193 = vunpack.c.l.b16 %v2220
        %v4194 = vunpack.c.l.b16 %v2221
        %v4195 = vunpack.c.l.b16 %v2222
        %v4196 = vunpack.c.l.b16 %v2223
        %v4197 = vunpack.c.l.b16 %v2224
        %v4198 = vunpack.c.l.b16 %v2225
        %v4199 = vunpack.c.l.b16 %v2226
        %v4200 = vunpack.c.l.b16 %v2227
        %v4201 = vunpack.c.l.b16 %v2228
        %v4202 = vunpack.c.l.b16 %v2229
        %v4203 = vunpack.c.l.b16 %v2230
        %v4204 = vunpack.c.l.b16 %v2231
        %v4205 = vunpack.c.l.b16 %v2232
        %v4206 = vunpack.c.l.b16 %v2233
        %v4207 = vunpack.c.l.b16 %v2234
        %v4208 = vunpack.c.l.b16 %v2235
        %v4209 = vunpack.c.l.b16 %v2236
        %v4210 = vunpack.c.l.b16 %v2237
        %v4211 = vunpack.c.l.b16 %v2238
        %v4212 = vunpack.c.l.b16 %v2239
        %v4213 = vunpack.c.l.b16 %v2240
        %v4214 = vunpack.c.l.b16 %v2241
        %v4215 = vunpack.c.l.b16 %v2242
        %v4216 = vunpack.c.l.b16 %v2243
        %v4217 = vunpack.c.l.b16 %v2244
        %v4218 = vunpack.c.l.b16 %v2245
        %v4219 = vunpack.c.l.b16 %v2246
        %v4220 = vunpack.c.l.b16 %v2247
        %v4221 = vunpack.c.l.b16 %v2248
        %v4222 = vunpack.c.l.b16 %v2249
        %v4223 = vunpack.c.l.b16 %v2250
        %v4224 = vunpack.c.l.b16 %v2251
        %v4225 = vunpack.c.l.b16 %v2252
        %v4226 = vunpack.c.l.b16 %v2253
        %v4227 = vunpack.c.l.b16 %v2254
        %v4228 = vunpack.c.l.b16 %v2255
        %v4229 = vunpack.c.l.b16 %v2256
        %v4230 = vunpack.c.l.b16 %v2257
        %v4231 = vunpack.c.l.b16 %v2258
        %v4232 = vunpack.c.l.b16 %v2259
        %v4233 = vunpack.c.l.b16 %v2260
        %v4234 = vunpack.c.l.b16 %v2261
        %v4235 = vunpack.c.l.b16 %v2262
        %v4236 = vunpack.c.l.b16 %v2263
        %v4237 = vunpack.c.l.b16 %v2264
        %v4238 = vunpack.c.l.b16 %v2265
        %v4239 = vunpack.c.l.b16 %v2266
        %v4240 = vunpack.c.l.b16 %v2267
        %v4241 = vunpack.c.l.b16 %v2268
        %v4242 = vunpack.c.l.b16 %v2269
        %v4243 = vunpack.c.l.b16 %v2270
        %v4244 = vunpack.c.l.b16 %v2271
        %v4245 = vunpack.c.l.b16 %v2272
        %v4246 = vunpack.c.l.b16 %v2273
        %v4247 = vunpack.c.l.b16 %v2274
        %v4248 = vunpack.c.l.b16 %v2275
        %v4249 = vunpack.c.l.b16 %v2276
        %v4250 = vunpack.c.l.b16 %v2277
        %v4251 = vunpack.c.l.b16 %v2278
        %v4252 = vunpack.c.l.b16 %v2279
        %v4253 = vunpack.c.l.b16 %v2280
        %v4254 = vunpack.c.l.b16 %v2281
        %v4255 = vunpack.c.l.b16 %v2282
        %v4256 = vunpack.c.l.b16 %v2283
        %v4257 = vunpack.c.l.b16 %v2284
        %v4258 = vunpack.c.l.b16 %v2285
        %v4259 = vunpack.c.l.b16 %v2286
        %v4260 = vunpack.c.l.b16 %v2287
        %v4261 = vunpack.c.l.b16 %v2288
        %v4262 = vunpack.c.l.b16 %v2289
        %v4263 = vunpack.c.l.b16 %v2290
        %v4264 = vunpack.c.l.b16 %v2291
        %v4265 = vunpack.c.l.b16 %v2292
        %v4266 = vunpack.c.l.b16 %v2293
        %v4267 = vunpack.c.l.b16 %v2294
        %v4268 = vunpack.c.l.b16 %v2295
        %v4269 = vunpack.c.l.b16 %v2296
        %v4270 = vunpack.c.l.b16 %v2297
        %v4271 = vunpack.c.l.b16 %v2298
        %v4272 = vunpack.c.l.b16 %v2299
        %v4273 = vunpack.c.l.b16 %v2300
        %v4274 = vunpack.c.l.b16 %v2301
        %v4275 = vunpack.c.l.b16 %v2302
        %v4276 = vunpack.c.l.b16 %v2303
        %v4277 = vunpack.c.l.b16 %v2304
        %v4278 = vunpack.c.l.b16 %v2305
        %v4279 = vunpack.c.l.b16 %v2306
        %v4280 = vunpack.c.l.b16 %v2307
        %v4281 = vunpack.c.l.b16 %v2308
        %v4282 = vunpack.c.l.b16 %v2309
        %v4283 = vunpack.c.l.b16 %v2310
        %v4284 = vunpack.c.l.b16 %v2311
        %v4285 = vunpack.c.l.b16 %v2312
        %v4286 = vunpack.c.l.b16 %v2313
        %v4287 = vunpack.c.l.b16 %v2314
        %v4288 = vunpack.c.l.b16 %v2315
        %v4289 = vunpack.c.l.b16 %v2316
        %v4290 = vunpack.c.l.b16 %v2317
        %v4291 = vunpack.c.l.b16 %v2318
        %v4292 = vunpack.c.l.b16 %v2319
        %v4293 = vunpack.c.l.b16 %v2320
        %v4294 = vunpack.c.l.b16 %v2321
        %v4295 = vunpack.c.l.b16 %v2322
        %v4296 = vunpack.c.l.b16 %v2323
        %v4297 = vunpack.c.l.b16 %v2324
        %v4298 = vunpack.c.l.b16 %v2325
        %v4299 = vunpack.c.l.b16 %v2326
        %v4300 = vunpack.c.l.b16 %v2327
        %v4301 = vunpack.c.l.b16 %v2328
        %v4302 = vunpack.c.l.b16 %v2329
        %v4303 = vunpack.c.l.b16 %v2330
        %v4304 = vunpack.c.l.b16 %v2331
        %v4305 = vunpack.c.l.b16 %v2332
        %v4306 = vunpack.c.l.b16 %v2333
        %v4307 = vunpack.c.l.b16 %v2334
        %v4308 = vunpack.c.l.b16 %v2335
        %v4309 = vunpack.c.l.b16 %v2336
        %v4310 = vunpack.c.l.b16 %v2337
        %v4311 = vunpack.c.l.b16 %v2338
        %v4312 = vunpack.c.l.b16 %v2339
        %v4313 = vunpack.c.l.b16 %v2340
        %v4314 = vunpack.c.l.b16 %v2341
        %v4315 = vunpack.c.l.b16 %v2342
        %v4316 = vunpack.c.l.b16 %v2343
        %v4317 = vunpack.c.l.b16 %v2344
        %v4318 = vunpack.c.l.b16 %v2345
        %v4319 = vunpack.c.l.b16 %v2346
        %v4320 = vunpack.c.l.b16 %v2347
        %v4321 = vunpack.c.l.b16 %v2348
        %v4322 = vunpack.c.l.b16 %v2349
        %v4323 = vunpack.c.l.b16 %v2350
        %v4324 = vunpack.c.l.b16 %v2351
        %v4325 = vunpack.c.l.b16 %v2352
        %v4326 = vunpack.c.l.b16 %v2353
        %v4327 = vunpack.c.l.b16 %v2354
        %v4328 = vunpack.c.l.b16 %v2355
        %v4329 = vunpack.c.l.b16 %v2356
        %v4330 = vunpack.c.l.b16 %v2357
        %v4331 = vunpack.c.l.b16 %v2358
        %v4332 = vunpack.c.l.b16 %v2359
        %v4333 = vunpack.c.l.b16 %v2360
        %v4334 = vunpack.c.l.b16 %v2361
        %v4335 = vunpack.c.l.b16 %v2362
        %v4336 = vunpack.c.l.b16 %v2363
        %v4337 = vunpack.c.l.b16 %v2364
        %v4338 = vunpack.c.l.b16 %v2365
        %v4339 = vunpack.c.l.b16 %v2366
        %v4340 = vunpack.c.l.b16 %v2367
        %v4341 = vunpack.c.l.b16 %v2368
        %v4342 = vunpack.c.l.b16 %v2369
        %v4343 = vunpack.c.l.b16 %v2370
        %v4344 = vunpack.c.l.b16 %v2371
        %v4345 = vunpack.c.l.b16 %v2372
        %v4346 = vunpack.c.l.b16 %v2373
        %v4347 = vunpack.c.l.b16 %v2374
        %v4348 = vunpack.c.l.b16 %v2375
        %v4349 = vunpack.c.l.b16 %v2376
        %v4350 = vunpack.c.l.b16 %v2377
        %v4351 = vunpack.c.l.b16 %v2378
        %v4352 = vunpack.c.l.b16 %v2379
        %v4353 = vunpack.c.l.b16 %v2380
        %v4354 = vunpack.c.l.b16 %v2381
        %v4355 = vunpack.c.l.b16 %v2382
        %v4356 = vunpack.c.l.b16 %v2383
        %v4357 = vunpack.c.l.b16 %v2384
        %v4358 = vunpack.c.l.b16 %v2385
        %v4359 = vunpack.c.l.b16 %v2386
        %v4360 = vunpack.c.l.b16 %v2387
        %v4361 = vunpack.c.l.b16 %v2388
        %v4362 = vunpack.c.l.b16 %v2389
        %v4363 = vunpack.c.l.b16 %v2390
        %v4364 = vunpack.c.l.b16 %v2391
        %v4365 = vunpack.c.l.b16 %v2392
        %v4366 = vunpack.c.l.b16 %v2393
        %v4367 = vunpack.c.l.b16 %v2394
        %v4368 = vunpack.c.l.b16 %v2395
        %v4369 = vunpack.c.l.b16 %v2396
        %v4370 = vunpack.c.l.b16 %v2397
        %v4371 = vunpack.c.l.b16 %v2398
        %v4372 = vunpack.c.l.b16 %v2399
        %v4373 = vunpack.c.l.b16 %v2400
        %v4374 = vunpack.c.l.b16 %v2401
        %v4375 = vunpack.c.l.b16 %v2402
        %v4376 = vunpack.c.l.b16 %v2403
        %v4377 = vunpack.c.l.b16 %v2404
        %v4378 = vunpack.c.l.b16 %v2405
        %v4379 = vunpack.c.l.b16 %v2406
        %v4380 = vunpack.c.l.b16 %v2407
        %v4381 = vunpack.c.l.b16 %v2408
        %v4382 = vunpack.c.l.b16 %v2409
        %v4383 = vunpack.c.l.b16 %v2410
        %v4384 = vunpack.c.l.b16 %v2411
        %v4385 = vunpack.c.l.b16 %v2412
        %v4386 = vunpack.c.l.b16 %v2413
        %v4387 = vunpack.c.l.b16 %v2414
        %v4388 = vunpack.c.l.b16 %v2415
        %v4389 = vunpack.c.l.b16 %v2416
        %v4390 = vunpack.c.l.b16 %v2417
        %v4391 = vunpack.c.l.b16 %v2418
        %v4392 = vunpack.c.l.b16 %v2419
        %v4393 = vunpack.c.l.b16 %v2420
        %v4394 = vunpack.c.l.b16 %v2421
        %v4395 = vunpack.c.l.b16 %v2422
        %v4396 = vunpack.c.l.b16 %v2423
        %v4397 = vunpack.c.l.b16 %v2424
        %v4398 = vunpack.c.l.b16 %v2425
        %v4399 = vunpack.c.l.b16 %v2426
        %v4400 = vunpack.c.l.b16 %v2427
        %v4401 = vunpack.c.l.b16 %v2428
        %v4402 = vunpack.c.l.b16 %v2429
        %v4403 = vunpack.c.l.b16 %v2430
        %v4404 = vunpack.c.l.b16 %v2431
        %v4405 = vunpack.c.l.b16 %v2432
        %v4406 = vunpack.c.l.b16 %v2433
        %v4407 = vunpack.c.l.b16 %v2434
        %v4408 = vunpack.c.l.b16 %v2435
        %v4409 = vunpack.c.l.b16 %v2436
        %v4410 = vunpack.c.l.b16 %v2437
        %v4411 = vunpack.c.l.b16 %v2438
        %v4412 = vunpack.c.l.b16 %v2439
        %v4413 = vunpack.c.l.b16 %v2440
        %v4414 = vunpack.c.l.b16 %v2441
        %v4415 = vunpack.c.l.b16 %v2442
        %v4416 = vunpack.c.l.b16 %v2443
        %v4417 = vunpack.c.l.b16 %v2444
        %v4418 = vunpack.c.l.b16 %v2445
        %v4419 = vunpack.c.l.b16 %v2446
        %v4420 = vunpack.c.l.b16 %v2447
        %v4421 = vunpack.c.l.b16 %v2448
        %v4422 = vunpack.c.l.b16 %v2449
        %v4423 = vunpack.c.l.b16 %v2450
        %v4424 = vunpack.c.l.b16 %v2451
        %v4425 = vunpack.c.l.b16 %v2452
        %v4426 = vunpack.c.l.b16 %v2453
        %v4427 = vunpack.c.l.b16 %v2454
        %v4428 = vunpack.c.l.b16 %v2455
        %v4429 = vunpack.c.l.b16 %v2456
        %v4430 = vunpack.c.l.b16 %v2457
        %v4431 = vunpack.c.l.b16 %v2458
        %v4432 = vunpack.c.l.b16 %v2459
        %v4433 = vunpack.c.l.b16 %v2460
        %v4434 = vunpack.c.l.b16 %v2461
        %v4435 = vunpack.c.l.b16 %v2462
        %v4436 = vunpack.c.l.b16 %v2463
        %v4437 = vunpack.c.l.b16 %v2464
        %v4438 = vunpack.c.l.b16 %v2465
        %v4439 = vunpack.c.l.b16 %v2466
        %v4440 = vunpack.c.l.b16 %v2467
        %v4441 = vunpack.c.l.b16 %v2468
        %v4442 = vunpack.c.l.b16 %v2469
        %v4443 = vunpack.c.l.b16 %v2470
        %v4444 = vunpack.c.l.b16 %v2471
        %v4445 = vunpack.c.l.b16 %v2472
        %v4446 = vunpack.c.l.b16 %v2473
        %v4447 = vunpack.c.l.b16 %v2474
        %v4448 = vunpack.c.l.b16 %v2475
        %v4449 = vunpack.c.l.b16 %v2476
        %v4450 = vunpack.c.l.b16 %v2477
        %v4451 = vunpack.c.l.b16 %v2478
        %v4452 = vunpack.c.l.b16 %v2479
        %v4453 = vunpack.c.l.b16 %v2480
        %v4454 = vunpack.c.l.b16 %v2481
        %v4455 = vunpack.c.l.b16 %v2482
        %v4456 = vunpack.c.l.b16 %v2483
        %v4457 = vunpack.c.l.b16 %v2484
        %v4458 = vunpack.c.l.b16 %v2485
        %v4459 = vunpack.c.l.b16 %v2486
        %v4460 = vunpack.c.l.b16 %v2487
        %v4461 = vunpack.c.l.b16 %v2488
        %v4462 = vunpack.c.l.b16 %v2489
        %v4463 = vunpack.c.l.b16 %v2490
        %v4464 = vunpack.c.l.b16 %v2491
        %v4465 = vunpack.c.l.b16 %v2492
        %v4466 = vunpack.c.l.b16 %v2493
        %v4467 = vunpack.c.l.b16 %v2494
        %v4468 = vunpack.c.l.b16 %v2495
        %v4469 = vunpack.c.l.b16 %v2496
        %v4470 = vunpack.c.l.b16 %v2497
        %v4471 = vunpack.c.l.b16 %v2498
        %v4472 = vunpack.c.l.b16 %v2499
        %v4473 = vunpack.c.l.b16 %v2500
        %v4474 = vunpack.c.l.b16 %v2501
        %v4475 = vunpack.c.l.b16 %v2502
        %v4476 = vunpack.c.l.b16 %v2503
        %v4477 = vunpack.c.l.b16 %v2504
        %v4478 = vunpack.c.l.b16 %v2505
        %v4479 = vunpack.c.l.b16 %v2506
        %v4480 = vunpack.c.l.b16 %v2507
        %v4481 = vunpack.c.l.b16 %v2508
        %v4482 = vunpack.c.l.b16 %v2509
        %v4483 = vunpack.c.l.b16 %v2510
        %v4484 = vunpack.c.l.b16 %v2511
        %v4485 = vunpack.c.l.b16 %v2512
        %v4486 = vunpack.c.l.b16 %v2513
        %v4487 = vunpack.c.l.b16 %v2514
        %v4488 = vunpack.c.l.b16 %v2515
        %v4489 = vunpack.c.l.b16 %v2516
        %v4490 = vunpack.c.l.b16 %v2517
        %v4491 = vunpack.c.l.b16 %v2518
        %v4492 = vunpack.c.l.b16 %v2519
        %v4493 = vunpack.c.l.b16 %v2520
        %v4494 = vunpack.c.l.b16 %v2521
        %v4495 = vunpack.c.l.b16 %v2522
        %v4496 = vunpack.c.l.b16 %v2523
        %v4497 = vunpack.c.l.b16 %v2524
        %v4498 = vunpack.c.l.b16 %v2525
        %v4499 = vunpack.c.l.b16 %v2526
        %v4500 = vunpack.c.l.b16 %v2527
        %v4501 = vunpack.c.l.b16 %v2528
        %v4502 = vunpack.c.l.b16 %v2529
        %v4503 = vunpack.c.l.b16 %v2530
        %v4504 = vunpack.c.l.b16 %v2531
        %v4505 = vunpack.c.l.b16 %v2532
        %v4506 = vunpack.c.l.b16 %v2533
        %v4507 = vunpack.c.l.b16 %v2534
        %v4508 = vunpack.c.l.b16 %v2535
        %v4509 = vunpack.c.l.b16 %v2536
        %v4510 = vunpack.c.l.b16 %v2537
        %v4511 = vunpack.c.l.b16 %v2538
        %v4512 = vunpack.c.l.b16 %v2539
        %v4513 = vunpack.c.l.b16 %v2540
        %v4514 = vunpack.c.l.b16 %v2541
        %v4515 = vunpack.c.l.b16 %v2542
        %v4516 = vunpack.c.l.b16 %v2543
        %v4517 = vunpack.c.l.b16 %v2544
        %v4518 = vunpack.c.l.b16 %v2545
        %v4519 = vunpack.c.l.b16 %v2546
        %v4520 = vunpack.c.l.b16 %v2547
        %v4521 = vunpack.c.l.b16 %v2548
        %v4522 = vunpack.c.l.b16 %v2549
        %v4523 = vunpack.c.l.b16 %v2550
        %v4524 = vunpack.c.l.b16 %v2551
        %v4525 = vunpack.c.l.b16 %v2552
        %v4526 = vunpack.c.l.b16 %v2553
        %v4527 = vunpack.c.l.b16 %v2554
        %v4528 = vunpack.c.l.b16 %v2555
        %v4529 = vunpack.c.l.b16 %v2556
        %v4530 = vunpack.c.l.b16 %v2557
        %v4531 = vunpack.c.l.b16 %v2558
        %v4532 = vunpack.c.l.b16 %v2559
        %v4533 = vunpack.c.l.b16 %v2560
        %v4534 = vunpack.c.l.b16 %v2561
        %v4535 = vunpack.c.l.b16 %v2562
        %v4536 = vunpack.c.l.b16 %v2563
        %v4537 = vunpack.c.l.b16 %v2564
        %v4538 = vunpack.c.l.b16 %v2565
        %v4539 = vunpack.c.l.b16 %v2566
        %v4540 = vunpack.c.l.b16 %v2567
        %v4541 = vunpack.c.l.b16 %v2568
        %v4542 = vunpack.c.l.b16 %v2569
        %v4543 = vunpack.c.l.b16 %v2570
        %v4544 = vunpack.c.l.b16 %v2571
        %v4545 = vunpack.c.l.b16 %v2572
        %v4546 = vunpack.c.l.b16 %v2573
        %v4547 = vunpack.c.l.b16 %v2574
        %v4548 = vunpack.c.l.b16 %v2575
        %v4549 = vunpack.c.l.b16 %v2576
        %v4550 = vunpack.c.l.b16 %v2577
        %v4551 = vunpack.c.l.b16 %v2578
        %v4552 = vunpack.c.l.b16 %v2579
        %v4553 = vpack.c.b16 %v3754, %v3753
        %v4554 = vpack.c.b16 %v3756, %v3755
        %v4555 = vpack.c.b16 %v3758, %v3757
        %v4556 = vpack.c.b16 %v3760, %v3759
        %v4557 = vpack.c.b16 %v3762, %v3761
        %v4558 = vpack.c.b16 %v3764, %v3763
        %v4559 = vpack.c.b16 %v3766, %v3765
        %v4560 = vpack.c.b16 %v3768, %v3767
        %v4561 = vpack.c.b16 %v3770, %v3769
        %v4562 = vpack.c.b16 %v3772, %v3771
        %v4563 = vpack.c.b16 %v3774, %v3773
        %v4564 = vpack.c.b16 %v3776, %v3775
        %v4565 = vpack.c.b16 %v3778, %v3777
        %v4566 = vpack.c.b16 %v3780, %v3779
        %v4567 = vpack.c.b16 %v3782, %v3781
        %v4568 = vpack.c.b16 %v3784, %v3783
        %v4569 = vpack.c.b16 %v3786, %v3785
        %v4570 = vpack.c.b16 %v3788, %v3787
        %v4571 = vpack.c.b16 %v3790, %v3789
        %v4572 = vpack.c.b16 %v3792, %v3791
        %v4573 = vpack.c.b16 %v3794, %v3793
        %v4574 = vpack.c.b16 %v3796, %v3795
        %v4575 = vpack.c.b16 %v3798, %v3797
        %v4576 = vpack.c.b16 %v3800, %v3799
        %v4577 = vpack.c.b16 %v3802, %v3801
        %v4578 = vpack.c.b16 %v3804, %v3803
        %v4579 = vpack.c.b16 %v3806, %v3805
        %v4580 = vpack.c.b16 %v3808, %v3807
        %v4581 = vpack.c.b16 %v3810, %v3809
        %v4582 = vpack.c.b16 %v3812, %v3811
        %v4583 = vpack.c.b16 %v3814, %v3813
        %v4584 = vpack.c.b16 %v3816, %v3815
        %v4585 = vpack.c.b16 %v3818, %v3817
        %v4586 = vpack.c.b16 %v3820, %v3819
        %v4587 = vpack.c.b16 %v3822, %v3821
        %v4588 = vpack.c.b16 %v3824, %v3823
        %v4589 = vpack.c.b16 %v3826, %v3825
        %v4590 = vpack.c.b16 %v3828, %v3827
        %v4591 = vpack.c.b16 %v3830, %v3829
        %v4592 = vpack.c.b16 %v3832, %v3831
        %v4593 = vpack.c.b16 %v3834, %v3833
        %v4594 = vpack.c.b16 %v3836, %v3835
        %v4595 = vpack.c.b16 %v3838, %v3837
        %v4596 = vpack.c.b16 %v3840, %v3839
        %v4597 = vpack.c.b16 %v3842, %v3841
        %v4598 = vpack.c.b16 %v3844, %v3843
        %v4599 = vpack.c.b16 %v3846, %v3845
        %v4600 = vpack.c.b16 %v3848, %v3847
        %v4601 = vpack.c.b16 %v3850, %v3849
        %v4602 = vpack.c.b16 %v3852, %v3851
        %v4603 = vpack.c.b16 %v3854, %v3853
        %v4604 = vpack.c.b16 %v3856, %v3855
        %v4605 = vpack.c.b16 %v3858, %v3857
        %v4606 = vpack.c.b16 %v3860, %v3859
        %v4607 = vpack.c.b16 %v3862, %v3861
        %v4608 = vpack.c.b16 %v3864, %v3863
        %v4609 = vpack.c.b16 %v3866, %v3865
        %v4610 = vpack.c.b16 %v3868, %v3867
        %v4611 = vpack.c.b16 %v3870, %v3869
        %v4612 = vpack.c.b16 %v3872, %v3871
        %v4613 = vpack.c.b16 %v3874, %v3873
        %v4614 = vpack.c.b16 %v3876, %v3875
        %v4615 = vpack.c.b16 %v3878, %v3877
        %v4616 = vpack.c.b16 %v3880, %v3879
        %v4617 = vpack.c.b16 %v3882, %v3881
        %v4618 = vpack.c.b16 %v3884, %v3883
        %v4619 = vpack.c.b16 %v3886, %v3885
        %v4620 = vpack.c.b16 %v3888, %v3887
        %v4621 = vpack.c.b16 %v3890, %v3889
        %v4622 = vpack.c.b16 %v3892, %v3891
        %v4623 = vpack.c.b16 %v3894, %v3893
        %v4624 = vpack.c.b16 %v3896, %v3895
        %v4625 = vpack.c.b16 %v3898, %v3897
        %v4626 = vpack.c.b16 %v3900, %v3899
        %v4627 = vpack.c.b16 %v3902, %v3901
        %v4628 = vpack.c.b16 %v3904, %v3903
        %v4629 = vpack.c.b16 %v3906, %v3905
        %v4630 = vpack.c.b16 %v3908, %v3907
        %v4631 = vpack.c.b16 %v3910, %v3909
        %v4632 = vpack.c.b16 %v3912, %v3911
        %v4633 = vpack.c.b16 %v3914, %v3913
        %v4634 = vpack.c.b16 %v3916, %v3915
        %v4635 = vpack.c.b16 %v3918, %v3917
        %v4636 = vpack.c.b16 %v3920, %v3919
        %v4637 = vpack.c.b16 %v3922, %v3921
        %v4638 = vpack.c.b16 %v3924, %v3923
        %v4639 = vpack.c.b16 %v3926, %v3925
        %v4640 = vpack.c.b16 %v3928, %v3927
        %v4641 = vpack.c.b16 %v3930, %v3929
        %v4642 = vpack.c.b16 %v3932, %v3931
        %v4643 = vpack.c.b16 %v3934, %v3933
        %v4644 = vpack.c.b16 %v3936, %v3935
        %v4645 = vpack.c.b16 %v3938, %v3937
        %v4646 = vpack.c.b16 %v3940, %v3939
        %v4647 = vpack.c.b16 %v3942, %v3941
        %v4648 = vpack.c.b16 %v3944, %v3943
        %v4649 = vpack.c.b16 %v3946, %v3945
        %v4650 = vpack.c.b16 %v3948, %v3947
        %v4651 = vpack.c.b16 %v3950, %v3949
        %v4652 = vpack.c.b16 %v3952, %v3951
        %v4653 = vpack.c.b16 %v3954, %v3953
        %v4654 = vpack.c.b16 %v3956, %v3955
        %v4655 = vpack.c.b16 %v3958, %v3957
        %v4656 = vpack.c.b16 %v3960, %v3959
        %v4657 = vpack.c.b16 %v3962, %v3961
        %v4658 = vpack.c.b16 %v3964, %v3963
        %v4659 = vpack.c.b16 %v3966, %v3965
        %v4660 = vpack.c.b16 %v3968, %v3967
        %v4661 = vpack.c.b16 %v3970, %v3969
        %v4662 = vpack.c.b16 %v3972, %v3971
        %v4663 = vpack.c.b16 %v3974, %v3973
        %v4664 = vpack.c.b16 %v3976, %v3975
        %v4665 = vpack.c.b16 %v3978, %v3977
        %v4666 = vpack.c.b16 %v3980, %v3979
        %v4667 = vpack.c.b16 %v3982, %v3981
        %v4668 = vpack.c.b16 %v3984, %v3983
        %v4669 = vpack.c.b16 %v3986, %v3985
        %v4670 = vpack.c.b16 %v3988, %v3987
        %v4671 = vpack.c.b16 %v3990, %v3989
        %v4672 = vpack.c.b16 %v3992, %v3991
        %v4673 = vpack.c.b16 %v3994, %v3993
        %v4674 = vpack.c.b16 %v3996, %v3995
        %v4675 = vpack.c.b16 %v3998, %v3997
        %v4676 = vpack.c.b16 %v4000, %v3999
        %v4677 = vpack.c.b16 %v4002, %v4001
        %v4678 = vpack.c.b16 %v4004, %v4003
        %v4679 = vpack.c.b16 %v4006, %v4005
        %v4680 = vpack.c.b16 %v4008, %v4007
        %v4681 = vpack.c.b16 %v4010, %v4009
        %v4682 = vpack.c.b16 %v4012, %v4011
        %v4683 = vpack.c.b16 %v4014, %v4013
        %v4684 = vpack.c.b16 %v4016, %v4015
        %v4685 = vpack.c.b16 %v4018, %v4017
        %v4686 = vpack.c.b16 %v4020, %v4019
        %v4687 = vpack.c.b16 %v4022, %v4021
        %v4688 = vpack.c.b16 %v4024, %v4023
        %v4689 = vpack.c.b16 %v4026, %v4025
        %v4690 = vpack.c.b16 %v4028, %v4027
        %v4691 = vpack.c.b16 %v4030, %v4029
        %v4692 = vpack.c.b16 %v4032, %v4031
        %v4693 = vpack.c.b16 %v4034, %v4033
        %v4694 = vpack.c.b16 %v4036, %v4035
        %v4695 = vpack.c.b16 %v4038, %v4037
        %v4696 = vpack.c.b16 %v4040, %v4039
        %v4697 = vpack.c.b16 %v4042, %v4041
        %v4698 = vpack.c.b16 %v4044, %v4043
        %v4699 = vpack.c.b16 %v4046, %v4045
        %v4700 = vpack.c.b16 %v4048, %v4047
        %v4701 = vpack.c.b16 %v4050, %v4049
        %v4702 = vpack.c.b16 %v4052, %v4051
        %v4703 = vpack.c.b16 %v4054, %v4053
        %v4704 = vpack.c.b16 %v4056, %v4055
        %v4705 = vpack.c.b16 %v4058, %v4057
        %v4706 = vpack.c.b16 %v4060, %v4059
        %v4707 = vpack.c.b16 %v4062, %v4061
        %v4708 = vpack.c.b16 %v4064, %v4063
        %v4709 = vpack.c.b16 %v4066, %v4065
        %v4710 = vpack.c.b16 %v4068, %v4067
        %v4711 = vpack.c.b16 %v4070, %v4069
        %v4712 = vpack.c.b16 %v4072, %v4071
        %v4713 = vpack.c.b16 %v4074, %v4073
        %v4714 = vpack.c.b16 %v4076, %v4075
        %v4715 = vpack.c.b16 %v4078, %v4077
        %v4716 = vpack.c.b16 %v4080, %v4079
        %v4717 = vpack.c.b16 %v4082, %v4081
        %v4718 = vpack.c.b16 %v4084, %v4083
        %v4719 = vpack.c.b16 %v4086, %v4085
        %v4720 = vpack.c.b16 %v4088, %v4087
        %v4721 = vpack.c.b16 %v4090, %v4089
        %v4722 = vpack.c.b16 %v4092, %v4091
        %v4723 = vpack.c.b16 %v4094, %v4093
        %v4724 = vpack.c.b16 %v4096, %v4095
        %v4725 = vpack.c.b16 %v4098, %v4097
        %v4726 = vpack.c.b16 %v4100, %v4099
        %v4727 = vpack.c.b16 %v4102, %v4101
        %v4728 = vpack.c.b16 %v4104, %v4103
        %v4729 = vpack.c.b16 %v4106, %v4105
        %v4730 = vpack.c.b16 %v4108, %v4107
        %v4731 = vpack.c.b16 %v4110, %v4109
        %v4732 = vpack.c.b16 %v4112, %v4111
        %v4733 = vpack.c.b16 %v4114, %v4113
        %v4734 = vpack.c.b16 %v4116, %v4115
        %v4735 = vpack.c.b16 %v4118, %v4117
        %v4736 = vpack.c.b16 %v4120, %v4119
        %v4737 = vpack.c.b16 %v4122, %v4121
        %v4738 = vpack.c.b16 %v4124, %v4123
        %v4739 = vpack.c.b16 %v4126, %v4125
        %v4740 = vpack.c.b16 %v4128, %v4127
        %v4741 = vpack.c.b16 %v4130, %v4129
        %v4742 = vpack.c.b16 %v4132, %v4131
        %v4743 = vpack.c.b16 %v4134, %v4133
        %v4744 = vpack.c.b16 %v4136, %v4135
        %v4745 = vpack.c.b16 %v4138, %v4137
        %v4746 = vpack.c.b16 %v4140, %v4139
        %v4747 = vpack.c.b16 %v4142, %v4141
        %v4748 = vpack.c.b16 %v4144, %v4143
        %v4749 = vpack.c.b16 %v4146, %v4145
        %v4750 = vpack.c.b16 %v4148, %v4147
        %v4751 = vpack.c.b16 %v4150, %v4149
        %v4752 = vpack.c.b16 %v4152, %v4151
        %v4753 = vpack.c.b16 %v4154, %v4153
        %v4754 = vpack.c.b16 %v4156, %v4155
        %v4755 = vpack.c.b16 %v4158, %v4157
        %v4756 = vpack.c.b16 %v4160, %v4159
        %v4757 = vpack.c.b16 %v4162, %v4161
        %v4758 = vpack.c.b16 %v4164, %v4163
        %v4759 = vpack.c.b16 %v4166, %v4165
        %v4760 = vpack.c.b16 %v4168, %v4167
        %v4761 = vpack.c.b16 %v4170, %v4169
        %v4762 = vpack.c.b16 %v4172, %v4171
        %v4763 = vpack.c.b16 %v4174, %v4173
        %v4764 = vpack.c.b16 %v4176, %v4175
        %v4765 = vpack.c.b16 %v4178, %v4177
        %v4766 = vpack.c.b16 %v4180, %v4179
        %v4767 = vpack.c.b16 %v4182, %v4181
        %v4768 = vpack.c.b16 %v4184, %v4183
        %v4769 = vpack.c.b16 %v4186, %v4185
        %v4770 = vpack.c.b16 %v4188, %v4187
        %v4771 = vpack.c.b16 %v4190, %v4189
        %v4772 = vpack.c.b16 %v4192, %v4191
        %v4773 = vpack.c.b16 %v4194, %v4193
        %v4774 = vpack.c.b16 %v4196, %v4195
        %v4775 = vpack.c.b16 %v4198, %v4197
        %v4776 = vpack.c.b16 %v4200, %v4199
        %v4777 = vpack.c.b16 %v4202, %v4201
        %v4778 = vpack.c.b16 %v4204, %v4203
        %v4779 = vpack.c.b16 %v4206, %v4205
        %v4780 = vpack.c.b16 %v4208, %v4207
        %v4781 = vpack.c.b16 %v4210, %v4209
        %v4782 = vpack.c.b16 %v4212, %v4211
        %v4783 = vpack.c.b16 %v4214, %v4213
        %v4784 = vpack.c.b16 %v4216, %v4215
        %v4785 = vpack.c.b16 %v4218, %v4217
        %v4786 = vpack.c.b16 %v4220, %v4219
        %v4787 = vpack.c.b16 %v4222, %v4221
        %v4788 = vpack.c.b16 %v4224, %v4223
        %v4789 = vpack.c.b16 %v4226, %v4225
        %v4790 = vpack.c.b16 %v4228, %v4227
        %v4791 = vpack.c.b16 %v4230, %v4229
        %v4792 = vpack.c.b16 %v4232, %v4231
        %v4793 = vpack.c.b16 %v4234, %v4233
        %v4794 = vpack.c.b16 %v4236, %v4235
        %v4795 = vpack.c.b16 %v4238, %v4237
        %v4796 = vpack.c.b16 %v4240, %v4239
        %v4797 = vpack.c.b16 %v4242, %v4241
        %v4798 = vpack.c.b16 %v4244, %v4243
        %v4799 = vpack.c.b16 %v4246, %v4245
        %v4800 = vpack.c.b16 %v4248, %v4247
        %v4801 = vpack.c.b16 %v4250, %v4249
        %v4802 = vpack.c.b16 %v4252, %v4251
        %v4803 = vpack.c.b16 %v4254, %v4253
        %v4804 = vpack.c.b16 %v4256, %v4255
        %v4805 = vpack.c.b16 %v4258, %v4257
        %v4806 = vpack.c.b16 %v4260, %v4259
        %v4807 = vpack.c.b16 %v4262, %v4261
        %v4808 = vpack.c.b16 %v4264, %v4263
        %v4809 = vpack.c.b16 %v4266, %v4265
        %v4810 = vpack.c.b16 %v4268, %v4267
        %v4811 = vpack.c.b16 %v4270, %v4269
        %v4812 = vpack.c.b16 %v4272, %v4271
        %v4813 = vpack.c.b16 %v4274, %v4273
        %v4814 = vpack.c.b16 %v4276, %v4275
        %v4815 = vpack.c.b16 %v4278, %v4277
        %v4816 = vpack.c.b16 %v4280, %v4279
        %v4817 = vpack.c.b16 %v4282, %v4281
        %v4818 = vpack.c.b16 %v4284, %v4283
        %v4819 = vpack.c.b16 %v4286, %v4285
        %v4820 = vpack.c.b16 %v4288, %v4287
        %v4821 = vpack.c.b16 %v4290, %v4289
        %v4822 = vpack.c.b16 %v4292, %v4291
        %v4823 = vpack.c.b16 %v4294, %v4293
        %v4824 = vpack.c.b16 %v4296, %v4295
        %v4825 = vpack.c.b16 %v4298, %v4297
        %v4826 = vpack.c.b16 %v4300, %v4299
        %v4827 = vpack.c.b16 %v4302, %v4301
        %v4828 = vpack.c.b16 %v4304, %v4303
        %v4829 = vpack.c.b16 %v4306, %v4305
        %v4830 = vpack.c.b16 %v4308, %v4307
        %v4831 = vpack.c.b16 %v4310, %v4309
        %v4832 = vpack.c.b16 %v4312, %v4311
        %v4833 = vpack.c.b16 %v4314, %v4313
        %v4834 = vpack.c.b16 %v4316, %v4315
        %v4835 = vpack.c.b16 %v4318, %v4317
        %v4836 = vpack.c.b16 %v4320, %v4319
        %v4837 = vpack.c.b16 %v4322, %v4321
        %v4838 = vpack.c.b16 %v4324, %v4323
        %v4839 = vpack.c.b16 %v4326, %v4325
        %v4840 = vpack.c.b16 %v4328, %v4327
        %v4841 = vpack.c.b16 %v4330, %v4329
        %v4842 = vpack.c.b16 %v4332, %v4331
        %v4843 = vpack.c.b16 %v4334, %v4333
        %v4844 = vpack.c.b16 %v4336, %v4335
        %v4845 = vpack.c.b16 %v4338, %v4337
        %v4846 = vpack.c.b16 %v4340, %v4339
        %v4847 = vpack.c.b16 %v4342, %v4341
        %v4848 = vpack.c.b16 %v4344, %v4343
        %v4849 = vpack.c.b16 %v4346, %v4345
        %v4850 = vpack.c.b16 %v4348, %v4347
        %v4851 = vpack.c.b16 %v4350, %v4349
        %v4852 = vpack.c.b16 %v4352, %v4351
        %v4853 = vpack.c.b16 %v4354, %v4353
        %v4854 = vpack.c.b16 %v4356, %v4355
        %v4855 = vpack.c.b16 %v4358, %v4357
        %v4856 = vpack.c.b16 %v4360, %v4359
        %v4857 = vpack.c.b16 %v4362, %v4361
        %v4858 = vpack.c.b16 %v4364, %v4363
        %v4859 = vpack.c.b16 %v4366, %v4365
        %v4860 = vpack.c.b16 %v4368, %v4367
        %v4861 = vpack.c.b16 %v4370, %v4369
        %v4862 = vpack.c.b16 %v4372, %v4371
        %v4863 = vpack.c.b16 %v4374, %v4373
        %v4864 = vpack.c.b16 %v4376, %v4375
        %v4865 = vpack.c.b16 %v4378, %v4377
        %v4866 = vpack.c.b16 %v4380, %v4379
        %v4867 = vpack.c.b16 %v4382, %v4381
        %v4868 = vpack.c.b16 %v4384, %v4383
        %v4869 = vpack.c.b16 %v4386, %v4385
        %v4870 = vpack.c.b16 %v4388, %v4387
        %v4871 = vpack.c.b16 %v4390, %v4389
        %v4872 = vpack.c.b16 %v4392, %v4391
        %v4873 = vpack.c.b16 %v4394, %v4393
        %v4874 = vpack.c.b16 %v4396, %v4395
        %v4875 = vpack.c.b16 %v4398, %v4397
        %v4876 = vpack.c.b16 %v4400, %v4399
        %v4877 = vpack.c.b16 %v4402, %v4401
        %v4878 = vpack.c.b16 %v4404, %v4403
        %v4879 = vpack.c.b16 %v4406, %v4405
        %v4880 = vpack.c.b16 %v4408, %v4407
        %v4881 = vpack.c.b16 %v4410, %v4409
        %v4882 = vpack.c.b16 %v4412, %v4411
        %v4883 = vpack.c.b16 %v4414, %v4413
        %v4884 = vpack.c.b16 %v4416, %v4415
        %v4885 = vpack.c.b16 %v4418, %v4417
        %v4886 = vpack.c.b16 %v4420, %v4419
        %v4887 = vpack.c.b16 %v4422, %v4421
        %v4888 = vpack.c.b16 %v4424, %v4423
        %v4889 = vpack.c.b16 %v4426, %v4425
        %v4890 = vpack.c.b16 %v4428, %v4427
        %v4891 = vpack.c.b16 %v4430, %v4429
        %v4892 = vpack.c.b16 %v4432, %v4431
        %v4893 = vpack.c.b16 %v4434, %v4433
        %v4894 = vpack.c.b16 %v4436, %v4435
        %v4895 = vpack.c.b16 %v4438, %v4437
        %v4896 = vpack.c.b16 %v4440, %v4439
        %v4897 = vpack.c.b16 %v4442, %v4441
        %v4898 = vpack.c.b16 %v4444, %v4443
        %v4899 = vpack.c.b16 %v4446, %v4445
        %v4900 = vpack.c.b16 %v4448, %v4447
        %v4901 = vpack.c.b16 %v4450, %v4449
        %v4902 = vpack.c.b16 %v4452, %v4451
        %v4903 = vpack.c.b16 %v4454, %v4453
        %v4904 = vpack.c.b16 %v4456, %v4455
        %v4905 = vpack.c.b16 %v4458, %v4457
        %v4906 = vpack.c.b16 %v4460, %v4459
        %v4907 = vpack.c.b16 %v4462, %v4461
        %v4908 = vpack.c.b16 %v4464, %v4463
        %v4909 = vpack.c.b16 %v4466, %v4465
        %v4910 = vpack.c.b16 %v4468, %v4467
        %v4911 = vpack.c.b16 %v4470, %v4469
        %v4912 = vpack.c.b16 %v4472, %v4471
        %v4913 = vpack.c.b16 %v4474, %v4473
        %v4914 = vpack.c.b16 %v4476, %v4475
        %v4915 = vpack.c.b16 %v4478, %v4477
        %v4916 = vpack.c.b16 %v4480, %v4479
        %v4917 = vpack.c.b16 %v4482, %v4481
        %v4918 = vpack.c.b16 %v4484, %v4483
        %v4919 = vpack.c.b16 %v4486, %v4485
        %v4920 = vpack.c.b16 %v4488, %v4487
        %v4921 = vpack.c.b16 %v4490, %v4489
        %v4922 = vpack.c.b16 %v4492, %v4491
        %v4923 = vpack.c.b16 %v4494, %v4493
        %v4924 = vpack.c.b16 %v4496, %v4495
        %v4925 = vpack.c.b16 %v4498, %v4497
        %v4926 = vpack.c.b16 %v4500, %v4499
        %v4927 = vpack.c.b16 %v4502, %v4501
        %v4928 = vpack.c.b16 %v4504, %v4503
        %v4929 = vpack.c.b16 %v4506, %v4505
        %v4930 = vpack.c.b16 %v4508, %v4507
        %v4931 = vpack.c.b16 %v4510, %v4509
        %v4932 = vpack.c.b16 %v4512, %v4511
        %v4933 = vpack.c.b16 %v4514, %v4513
        %v4934 = vpack.c.b16 %v4516, %v4515
        %v4935 = vpack.c.b16 %v4518, %v4517
        %v4936 = vpack.c.b16 %v4520, %v4519
        %v4937 = vpack.c.b16 %v4522, %v4521
        %v4938 = vpack.c.b16 %v4524, %v4523
        %v4939 = vpack.c.b16 %v4526, %v4525
        %v4940 = vpack.c.b16 %v4528, %v4527
        %v4941 = vpack.c.b16 %v4530, %v4529
        %v4942 = vpack.c.b16 %v4532, %v4531
        %v4943 = vpack.c.b16 %v4534, %v4533
        %v4944 = vpack.c.b16 %v4536, %v4535
        %v4945 = vpack.c.b16 %v4538, %v4537
        %v4946 = vpack.c.b16 %v4540, %v4539
        %v4947 = vpack.c.b16 %v4542, %v4541
        %v4948 = vpack.c.b16 %v4544, %v4543
        %v4949 = vpack.c.b16 %v4546, %v4545
        %v4950 = vpack.c.b16 %v4548, %v4547
        %v4951 = vpack.c.b16 %v4550, %v4549
        %v4952 = vpack.c.b16 %v4552, %v4551
        %5353 = vmatprep.subr.bf16.mxu0 0
        %5354 = vmatpush1.bf16.msra.mxu0 %v4553
        %5355 = vmatprep.subr.bf16.mxu0 0
        %5356 = vmatpush1.bf16.msra.mxu0 %v4554
        %5357 = vmatprep.subr.bf16.mxu0 0
        %5358 = vmatpush1.bf16.msra.mxu0 %v4555
        %5359 = vmatprep.subr.bf16.mxu0 0
        %5360 = vmatpush1.bf16.msra.mxu0 %v4556
        %5361 = vmatprep.subr.bf16.mxu0 0
        %5362 = vmatpush1.bf16.msra.mxu0 %v4557
        %5363 = vmatprep.subr.bf16.mxu0 0
        %5364 = vmatpush1.bf16.msra.mxu0 %v4558
        %5365 = vmatprep.subr.bf16.mxu0 0
        %5366 = vmatpush1.bf16.msra.mxu0 %v4559
        %5367 = vmatprep.subr.bf16.mxu0 0
        %5368 = vmatpush1.bf16.msra.mxu0 %v4560
        %5369 = vmatprep.subr.bf16.mxu0 0
        %5370 = vmatpush1.bf16.msra.mxu0 %v4561
        %5371 = vmatprep.subr.bf16.mxu0 0
        %5372 = vmatpush1.bf16.msra.mxu0 %v4562
        %5373 = vmatprep.subr.bf16.mxu0 0
        %5374 = vmatpush1.bf16.msra.mxu0 %v4563
        %5375 = vmatprep.subr.bf16.mxu0 0
        %5376 = vmatpush1.bf16.msra.mxu0 %v4564
        %5377 = vmatprep.subr.bf16.mxu0 0
        %5378 = vmatpush1.bf16.msra.mxu0 %v4565
        %5379 = vmatprep.subr.bf16.mxu0 0
        %5380 = vmatpush1.bf16.msra.mxu0 %v4566
        %5381 = vmatprep.subr.bf16.mxu0 0
        %5382 = vmatpush1.bf16.msra.mxu0 %v4567
        %5383 = vmatprep.subr.bf16.mxu0 0
        %5384 = vmatpush1.bf16.msra.mxu0 %v4568
        %5385 = vmatprep.mubr.bf16.mxu0 %v2624
        %5386 = vmatmul.mubr.bf16.gmra.mrb[0].mxu0 %v2610
        %v5387 = vpop.f32.mrb[0].mxu0
        %v5388 = vadd.f32 0.0, %v5387
        %v5389 = vpop.f32.mrb[0].mxu0
        %v5390 = vpop.f32.mrb[0].mxu0
        %v5391 = vpop.f32.mrb[0].mxu0
        %5392 = vdwg.mxu0
        %5393 = vmatprep.subr.bf16.mxu0 0
        %5394 = vmatpush1.bf16.msra.mxu0 %v4569
        %5395 = vmatprep.subr.bf16.mxu0 0
        %5396 = vmatpush1.bf16.msra.mxu0 %v4570
        %5397 = vmatprep.subr.bf16.mxu0 0
        %5398 = vmatpush1.bf16.msra.mxu0 %v4571
        %5399 = vmatprep.subr.bf16.mxu0 0
        %5400 = vmatpush1.bf16.msra.mxu0 %v4572
        %5401 = vmatprep.subr.bf16.mxu0 0
        %5402 = vmatpush1.bf16.msra.mxu0 %v4573
        %5403 = vmatprep.subr.bf16.mxu0 0
        %5404 = vmatpush1.bf16.msra.mxu0 %v4574
        %5405 = vmatprep.subr.bf16.mxu0 0
        %5406 = vmatpush1.bf16.msra.mxu0 %v4575
        %5407 = vmatprep.subr.bf16.mxu0 0
        %5408 = vmatpush1.bf16.msra.mxu0 %v4576
        %5409 = vmatprep.subr.bf16.mxu0 0
        %5410 = vmatpush1.bf16.msra.mxu0 %v4577
        %5411 = vmatprep.subr.bf16.mxu0 0
        %5412 = vmatpush1.bf16.msra.mxu0 %v4578
        %5413 = vmatprep.subr.bf16.mxu0 0
        %5414 = vmatpush1.bf16.msra.mxu0 %v4579
        %5415 = vmatprep.subr.bf16.mxu0 0
        %5416 = vmatpush1.bf16.msra.mxu0 %v4580
        %5417 = vmatprep.subr.bf16.mxu0 0
        %5418 = vmatpush1.bf16.msra.mxu0 %v4581
        %5419 = vmatprep.subr.bf16.mxu0 0
        %5420 = vmatpush1.bf16.msra.mxu0 %v4582
        %5421 = vmatprep.subr.bf16.mxu0 0
        %5422 = vmatpush1.bf16.msra.mxu0 %v4583
        %5423 = vmatprep.subr.bf16.mxu0 0
        %5424 = vmatpush1.bf16.msra.mxu0 %v4584
        %5425 = vmatprep.mubr.bf16.mxu0 %v2634
        %5426 = vmatmul.mubr.bf16.gmra.mrb[0].mxu0 %v2632
        %v5427 = vpop.f32.mrb[0].mxu0
        %v5428 = vadd.f32 %v5388, %v5427
        %v5429 = vpop.f32.mrb[0].mxu0
        %v5430 = vpop.f32.mrb[0].mxu0
        %v5431 = vpop.f32.mrb[0].mxu0
        %5432 = vdwg.mxu0
        %5433 = vmatprep.subr.bf16.mxu0 0
        %5434 = vmatpush1.bf16.msra.mxu0 %v4585
        %5435 = vmatprep.subr.bf16.mxu0 0
        %5436 = vmatpush1.bf16.msra.mxu0 %v4586
        %5437 = vmatprep.subr.bf16.mxu0 0
        %5438 = vmatpush1.bf16.msra.mxu0 %v4587
        %5439 = vmatprep.subr.bf16.mxu0 0
        %5440 = vmatpush1.bf16.msra.mxu0 %v4588
        %5441 = vmatprep.subr.bf16.mxu0 0
        %5442 = vmatpush1.bf16.msra.mxu0 %v4589
        %5443 = vmatprep.subr.bf16.mxu0 0
        %5444 = vmatpush1.bf16.msra.mxu0 %v4590
        %5445 = vmatprep.subr.bf16.mxu0 0
        %5446 = vmatpush1.bf16.msra.mxu0 %v4591
        %5447 = vmatprep.subr.bf16.mxu0 0
        %5448 = vmatpush1.bf16.msra.mxu0 %v4592
        %5449 = vmatprep.subr.bf16.mxu0 0
        %5450 = vmatpush1.bf16.msra.mxu0 %v4593
        %5451 = vmatprep.subr.bf16.mxu0 0
        %5452 = vmatpush1.bf16.msra.mxu0 %v4594
        %5453 = vmatprep.subr.bf16.mxu0 0
        %5454 = vmatpush1.bf16.msra.mxu0 %v4595
        %5455 = vmatprep.subr.bf16.mxu0 0
        %5456 = vmatpush1.bf16.msra.mxu0 %v4596
        %5457 = vmatprep.subr.bf16.mxu0 0
        %5458 = vmatpush1.bf16.msra.mxu0 %v4597
        %5459 = vmatprep.subr.bf16.mxu0 0
        %5460 = vmatpush1.bf16.msra.mxu0 %v4598
        %5461 = vmatprep.subr.bf16.mxu0 0
        %5462 = vmatpush1.bf16.msra.mxu0 %v4599
        %5463 = vmatprep.subr.bf16.mxu0 0
        %5464 = vmatpush1.bf16.msra.mxu0 %v4600
        %5465 = vmatprep.mubr.bf16.mxu0 %v2631
        %5466 = vmatmul.mubr.bf16.gmra.mrb[0].mxu0 %v2617
        %v5467 = vpop.f32.mrb[0].mxu0
        %v5468 = vadd.f32 %v5428, %v5467
        %v5469 = vpop.f32.mrb[0].mxu0
        %v5470 = vpop.f32.mrb[0].mxu0
        %v5471 = vpop.f32.mrb[0].mxu0
        %5472 = vdwg.mxu0
        %5473 = vmatprep.subr.bf16.mxu0 0
        %5474 = vmatpush1.bf16.msra.mxu0 %v4601
        %5475 = vmatprep.subr.bf16.mxu0 0
        %5476 = vmatpush1.bf16.msra.mxu0 %v4602
        %5477 = vmatprep.subr.bf16.mxu0 0
        %5478 = vmatpush1.bf16.msra.mxu0 %v4603
        %5479 = vmatprep.subr.bf16.mxu0 0
        %5480 = vmatpush1.bf16.msra.mxu0 %v4604
        %5481 = vmatprep.subr.bf16.mxu0 0
        %5482 = vmatpush1.bf16.msra.mxu0 %v4605
        %5483 = vmatprep.subr.bf16.mxu0 0
        %5484 = vmatpush1.bf16.msra.mxu0 %v4606
        %5485 = vmatprep.subr.bf16.mxu0 0
        %5486 = vmatpush1.bf16.msra.mxu0 %v4607
        %5487 = vmatprep.subr.bf16.mxu0 0
        %5488 = vmatpush1.bf16.msra.mxu0 %v4608
        %5489 = vmatprep.subr.bf16.mxu0 0
        %5490 = vmatpush1.bf16.msra.mxu0 %v4609
        %5491 = vmatprep.subr.bf16.mxu0 0
        %5492 = vmatpush1.bf16.msra.mxu0 %v4610
        %5493 = vmatprep.subr.bf16.mxu0 0
        %5494 = vmatpush1.bf16.msra.mxu0 %v4611
        %5495 = vmatprep.subr.bf16.mxu0 0
        %5496 = vmatpush1.bf16.msra.mxu0 %v4612
        %5497 = vmatprep.subr.bf16.mxu0 0
        %5498 = vmatpush1.bf16.msra.mxu0 %v4613
        %5499 = vmatprep.subr.bf16.mxu0 0
        %5500 = vmatpush1.bf16.msra.mxu0 %v4614
        %5501 = vmatprep.subr.bf16.mxu0 0
        %5502 = vmatpush1.bf16.msra.mxu0 %v4615
        %5503 = vmatprep.subr.bf16.mxu0 0
        %5504 = vmatpush1.bf16.msra.mxu0 %v4616
        %5505 = vmatprep.mubr.bf16.mxu0 %v2635
        %5506 = vmatmul.mubr.bf16.gmra.mrb[0].mxu0 %v2633
        %v5507 = vpop.f32.mrb[0].mxu0
        %v5508 = vadd.f32 %v5468, %v5507
        %v5509 = vpop.f32.mrb[0].mxu0
        %v5510 = vpop.f32.mrb[0].mxu0
        %v5511 = vpop.f32.mrb[0].mxu0
        %5512 = vdwg.mxu0
        %5513 = vmatprep.subr.bf16.mxu0 0
        %5514 = vmatpush1.bf16.msra.mxu0 %v4617
        %5515 = vmatprep.subr.bf16.mxu0 0
        %5516 = vmatpush1.bf16.msra.mxu0 %v4618
        %5517 = vmatprep.subr.bf16.mxu0 0
        %5518 = vmatpush1.bf16.msra.mxu0 %v4619
        %5519 = vmatprep.subr.bf16.mxu0 0
        %5520 = vmatpush1.bf16.msra.mxu0 %v4620
        %5521 = vmatprep.subr.bf16.mxu0 0
        %5522 = vmatpush1.bf16.msra.mxu0 %v4621
        %5523 = vmatprep.subr.bf16.mxu0 0
        %5524 = vmatpush1.bf16.msra.mxu0 %v4622
        %5525 = vmatprep.subr.bf16.mxu0 0
        %5526 = vmatpush1.bf16.msra.mxu0 %v4623
        %5527 = vmatprep.subr.bf16.mxu0 0
        %5528 = vmatpush1.bf16.msra.mxu0 %v4624
        %5529 = vmatprep.subr.bf16.mxu0 0
        %5530 = vmatpush1.bf16.msra.mxu0 %v4625
        %5531 = vmatprep.subr.bf16.mxu0 0
        %5532 = vmatpush1.bf16.msra.mxu0 %v4626
        %5533 = vmatprep.subr.bf16.mxu0 0
        %5534 = vmatpush1.bf16.msra.mxu0 %v4627
        %5535 = vmatprep.subr.bf16.mxu0 0
        %5536 = vmatpush1.bf16.msra.mxu0 %v4628
        %5537 = vmatprep.subr.bf16.mxu0 0
        %5538 = vmatpush1.bf16.msra.mxu0 %v4629
        %5539 = vmatprep.subr.bf16.mxu0 0
        %5540 = vmatpush1.bf16.msra.mxu0 %v4630
        %5541 = vmatprep.subr.bf16.mxu0 0
        %5542 = vmatpush1.bf16.msra.mxu0 %v4631
        %5543 = vmatprep.subr.bf16.mxu0 0
        %5544 = vmatpush1.bf16.msra.mxu0 %v4632
        %5545 = vmatprep.mubr.bf16.mxu0 %v2673
        %5546 = vmatmul.mubr.bf16.gmra.mrb[0].mxu0 %v2659
        %v5547 = vpop.f32.mrb[0].mxu0
        %v5548 = vadd.f32 %v5508, %v5547
        %v5549 = vpop.f32.mrb[0].mxu0
        %v5550 = vpop.f32.mrb[0].mxu0
        %v5551 = vpop.f32.mrb[0].mxu0
        %5552 = vdwg.mxu0
        %5553 = vmatprep.subr.bf16.mxu0 0
        %5554 = vmatpush1.bf16.msra.mxu0 %v4633
        %5555 = vmatprep.subr.bf16.mxu0 0
        %5556 = vmatpush1.bf16.msra.mxu0 %v4634
        %5557 = vmatprep.subr.bf16.mxu0 0
        %5558 = vmatpush1.bf16.msra.mxu0 %v4635
        %5559 = vmatprep.subr.bf16.mxu0 0
        %5560 = vmatpush1.bf16.msra.mxu0 %v4636
        %5561 = vmatprep.subr.bf16.mxu0 0
        %5562 = vmatpush1.bf16.msra.mxu0 %v4637
        %5563 = vmatprep.subr.bf16.mxu0 0
        %5564 = vmatpush1.bf16.msra.mxu0 %v4638
        %5565 = vmatprep.subr.bf16.mxu0 0
        %5566 = vmatpush1.bf16.msra.mxu0 %v4639
        %5567 = vmatprep.subr.bf16.mxu0 0
        %5568 = vmatpush1.bf16.msra.mxu0 %v4640
        %5569 = vmatprep.subr.bf16.mxu0 0
        %5570 = vmatpush1.bf16.msra.mxu0 %v4641
        %5571 = vmatprep.subr.bf16.mxu0 0
        %5572 = vmatpush1.bf16.msra.mxu0 %v4642
        %5573 = vmatprep.subr.bf16.mxu0 0
        %5574 = vmatpush1.bf16.msra.mxu0 %v4643
        %5575 = vmatprep.subr.bf16.mxu0 0
        %5576 = vmatpush1.bf16.msra.mxu0 %v4644
        %5577 = vmatprep.subr.bf16.mxu0 0
        %5578 = vmatpush1.bf16.msra.mxu0 %v4645
        %5579 = vmatprep.subr.bf16.mxu0 0
        %5580 = vmatpush1.bf16.msra.mxu0 %v4646
        %5581 = vmatprep.subr.bf16.mxu0 0
        %5582 = vmatpush1.bf16.msra.mxu0 %v4647
        %5583 = vmatprep.subr.bf16.mxu0 0
        %5584 = vmatpush1.bf16.msra.mxu0 %v4648
        %5585 = vmatprep.mubr.bf16.mxu0 %v2683
        %5586 = vmatmul.mubr.bf16.gmra.mrb[0].mxu0 %v2681
        %v5587 = vpop.f32.mrb[0].mxu0
        %v5588 = vadd.f32 %v5548, %v5587
        %v5589 = vpop.f32.mrb[0].mxu0
        %v5590 = vpop.f32.mrb[0].mxu0
        %v5591 = vpop.f32.mrb[0].mxu0
        %5592 = vdwg.mxu0
        %5593 = vmatprep.subr.bf16.mxu0 0
        %5594 = vmatpush1.bf16.msra.mxu0 %v4649
        %5595 = vmatprep.subr.bf16.mxu0 0
        %5596 = vmatpush1.bf16.msra.mxu0 %v4650
        %5597 = vmatprep.subr.bf16.mxu0 0
        %5598 = vmatpush1.bf16.msra.mxu0 %v4651
        %5599 = vmatprep.subr.bf16.mxu0 0
        %5600 = vmatpush1.bf16.msra.mxu0 %v4652
        %5601 = vmatprep.subr.bf16.mxu0 0
        %5602 = vmatpush1.bf16.msra.mxu0 %v4653
        %5603 = vmatprep.subr.bf16.mxu0 0
        %5604 = vmatpush1.bf16.msra.mxu0 %v4654
        %5605 = vmatprep.subr.bf16.mxu0 0
        %5606 = vmatpush1.bf16.msra.mxu0 %v4655
        %5607 = vmatprep.subr.bf16.mxu0 0
        %5608 = vmatpush1.bf16.msra.mxu0 %v4656
        %5609 = vmatprep.subr.bf16.mxu0 0
        %5610 = vmatpush1.bf16.msra.mxu0 %v4657
        %5611 = vmatprep.subr.bf16.mxu0 0
        %5612 = vmatpush1.bf16.msra.mxu0 %v4658
        %5613 = vmatprep.subr.bf16.mxu0 0
        %5614 = vmatpush1.bf16.msra.mxu0 %v4659
        %5615 = vmatprep.subr.bf16.mxu0 0
        %5616 = vmatpush1.bf16.msra.mxu0 %v4660
        %5617 = vmatprep.subr.bf16.mxu0 0
        %5618 = vmatpush1.bf16.msra.mxu0 %v4661
        %5619 = vmatprep.subr.bf16.mxu0 0
        %5620 = vmatpush1.bf16.msra.mxu0 %v4662
        %5621 = vmatprep.subr.bf16.mxu0 0
        %5622 = vmatpush1.bf16.msra.mxu0 %v4663
        %5623 = vmatprep.subr.bf16.mxu0 0
        %5624 = vmatpush1.bf16.msra.mxu0 %v4664
        %5625 = vmatprep.mubr.bf16.mxu0 %v2680
        %5626 = vmatmul.mubr.bf16.gmra.mrb[0].mxu0 %v2666
        %v5627 = vpop.f32.mrb[0].mxu0
        %v5628 = vadd.f32 %v5588, %v5627
        %v5629 = vpop.f32.mrb[0].mxu0
        %v5630 = vpop.f32.mrb[0].mxu0
        %v5631 = vpop.f32.mrb[0].mxu0
        %5632 = vdwg.mxu0
        %5633 = vmatprep.subr.bf16.mxu0 0
        %5634 = vmatpush1.bf16.msra.mxu0 %v4665
        %5635 = vmatprep.subr.bf16.mxu0 0
        %5636 = vmatpush1.bf16.msra.mxu0 %v4666
        %5637 = vmatprep.subr.bf16.mxu0 0
        %5638 = vmatpush1.bf16.msra.mxu0 %v4667
        %5639 = vmatprep.subr.bf16.mxu0 0
        %5640 = vmatpush1.bf16.msra.mxu0 %v4668
        %5641 = vmatprep.subr.bf16.mxu0 0
        %5642 = vmatpush1.bf16.msra.mxu0 %v4669
        %5643 = vmatprep.subr.bf16.mxu0 0
        %5644 = vmatpush1.bf16.msra.mxu0 %v4670
        %5645 = vmatprep.subr.bf16.mxu0 0
        %5646 = vmatpush1.bf16.msra.mxu0 %v4671
        %5647 = vmatprep.subr.bf16.mxu0 0
        %5648 = vmatpush1.bf16.msra.mxu0 %v4672
        %5649 = vmatprep.subr.bf16.mxu0 0
        %5650 = vmatpush1.bf16.msra.mxu0 %v4673
        %5651 = vmatprep.subr.bf16.mxu0 0
        %5652 = vmatpush1.bf16.msra.mxu0 %v4674
        %5653 = vmatprep.subr.bf16.mxu0 0
        %5654 = vmatpush1.bf16.msra.mxu0 %v4675
        %5655 = vmatprep.subr.bf16.mxu0 0
        %5656 = vmatpush1.bf16.msra.mxu0 %v4676
        %5657 = vmatprep.subr.bf16.mxu0 0
        %5658 = vmatpush1.bf16.msra.mxu0 %v4677
        %5659 = vmatprep.subr.bf16.mxu0 0
        %5660 = vmatpush1.bf16.msra.mxu0 %v4678
        %5661 = vmatprep.subr.bf16.mxu0 0
        %5662 = vmatpush1.bf16.msra.mxu0 %v4679
        %5663 = vmatprep.subr.bf16.mxu0 0
        %5664 = vmatpush1.bf16.msra.mxu0 %v4680
        %5665 = vmatprep.mubr.bf16.mxu0 %v2684
        %5666 = vmatmul.mubr.bf16.gmra.mrb[0].mxu0 %v2682
        %v5667 = vpop.f32.mrb[0].mxu0
        %v5668 = vadd.f32 %v5628, %v5667
        %v5669 = vpop.f32.mrb[0].mxu0
        %v5670 = vpop.f32.mrb[0].mxu0
        %v5671 = vpop.f32.mrb[0].mxu0
        %5672 = vdwg.mxu0
        %5673 = vmatprep.subr.bf16.mxu0 0
        %5674 = vmatpush1.bf16.msra.mxu0 %v4681
        %5675 = vmatprep.subr.bf16.mxu0 0
        %5676 = vmatpush1.bf16.msra.mxu0 %v4682
        %5677 = vmatprep.subr.bf16.mxu0 0
        %5678 = vmatpush1.bf16.msra.mxu0 %v4683
        %5679 = vmatprep.subr.bf16.mxu0 0
        %5680 = vmatpush1.bf16.msra.mxu0 %v4684
        %5681 = vmatprep.subr.bf16.mxu0 0
        %5682 = vmatpush1.bf16.msra.mxu0 %v4685
        %5683 = vmatprep.subr.bf16.mxu0 0
        %5684 = vmatpush1.bf16.msra.mxu0 %v4686
        %5685 = vmatprep.subr.bf16.mxu0 0
        %5686 = vmatpush1.bf16.msra.mxu0 %v4687
        %5687 = vmatprep.subr.bf16.mxu0 0
        %5688 = vmatpush1.bf16.msra.mxu0 %v4688
        %5689 = vmatprep.subr.bf16.mxu0 0
        %5690 = vmatpush1.bf16.msra.mxu0 %v4689
        %5691 = vmatprep.subr.bf16.mxu0 0
        %5692 = vmatpush1.bf16.msra.mxu0 %v4690
        %5693 = vmatprep.subr.bf16.mxu0 0
        %5694 = vmatpush1.bf16.msra.mxu0 %v4691
        %5695 = vmatprep.subr.bf16.mxu0 0
        %5696 = vmatpush1.bf16.msra.mxu0 %v4692
        %5697 = vmatprep.subr.bf16.mxu0 0
        %5698 = vmatpush1.bf16.msra.mxu0 %v4693
        %5699 = vmatprep.subr.bf16.mxu0 0
        %5700 = vmatpush1.bf16.msra.mxu0 %v4694
        %5701 = vmatprep.subr.bf16.mxu0 0
        %5702 = vmatpush1.bf16.msra.mxu0 %v4695
        %5703 = vmatprep.subr.bf16.mxu0 0
        %5704 = vmatpush1.bf16.msra.mxu0 %v4696
        %5705 = vmatprep.mubr.bf16.mxu0 %v2722
        %5706 = vmatmul.mubr.bf16.gmra.mrb[0].mxu0 %v2708
        %v5707 = vpop.f32.mrb[0].mxu0
        %v5708 = vadd.f32 %v5668, %v5707
        %v5709 = vpop.f32.mrb[0].mxu0
        %v5710 = vpop.f32.mrb[0].mxu0
        %v5711 = vpop.f32.mrb[0].mxu0
        %5712 = vdwg.mxu0
        %5713 = vmatprep.subr.bf16.mxu0 0
        %5714 = vmatpush1.bf16.msra.mxu0 %v4697
        %5715 = vmatprep.subr.bf16.mxu0 0
        %5716 = vmatpush1.bf16.msra.mxu0 %v4698
        %5717 = vmatprep.subr.bf16.mxu0 0
        %5718 = vmatpush1.bf16.msra.mxu0 %v4699
        %5719 = vmatprep.subr.bf16.mxu0 0
        %5720 = vmatpush1.bf16.msra.mxu0 %v4700
        %5721 = vmatprep.subr.bf16.mxu0 0
        %5722 = vmatpush1.bf16.msra.mxu0 %v4701
        %5723 = vmatprep.subr.bf16.mxu0 0
        %5724 = vmatpush1.bf16.msra.mxu0 %v4702
        %5725 = vmatprep.subr.bf16.mxu0 0
        %5726 = vmatpush1.bf16.msra.mxu0 %v4703
        %5727 = vmatprep.subr.bf16.mxu0 0
        %5728 = vmatpush1.bf16.msra.mxu0 %v4704
        %5729 = vmatprep.subr.bf16.mxu0 0
        %5730 = vmatpush1.bf16.msra.mxu0 %v4705
        %5731 = vmatprep.subr.bf16.mxu0 0
        %5732 = vmatpush1.bf16.msra.mxu0 %v4706
        %5733 = vmatprep.subr.bf16.mxu0 0
        %5734 = vmatpush1.bf16.msra.mxu0 %v4707
        %5735 = vmatprep.subr.bf16.mxu0 0
        %5736 = vmatpush1.bf16.msra.mxu0 %v4708
        %5737 = vmatprep.subr.bf16.mxu0 0
        %5738 = vmatpush1.bf16.msra.mxu0 %v4709
        %5739 = vmatprep.subr.bf16.mxu0 0
        %5740 = vmatpush1.bf16.msra.mxu0 %v4710
        %5741 = vmatprep.subr.bf16.mxu0 0
        %5742 = vmatpush1.bf16.msra.mxu0 %v4711
        %5743 = vmatprep.subr.bf16.mxu0 0
        %5744 = vmatpush1.bf16.msra.mxu0 %v4712
        %5745 = vmatprep.mubr.bf16.mxu0 %v2732
        %5746 = vmatmul.mubr.bf16.gmra.mrb[0].mxu0 %v2730
        %v5747 = vpop.f32.mrb[0].mxu0
        %v5748 = vadd.f32 %v5708, %v5747
        %v5749 = vpop.f32.mrb[0].mxu0
        %v5750 = vpop.f32.mrb[0].mxu0
        %v5751 = vpop.f32.mrb[0].mxu0
        %5752 = vdwg.mxu0
        %5753 = vmatprep.subr.bf16.mxu0 0
        %5754 = vmatpush1.bf16.msra.mxu0 %v4713
        %5755 = vmatprep.subr.bf16.mxu0 0
        %5756 = vmatpush1.bf16.msra.mxu0 %v4714
        %5757 = vmatprep.subr.bf16.mxu0 0
        %5758 = vmatpush1.bf16.msra.mxu0 %v4715
        %5759 = vmatprep.subr.bf16.mxu0 0
        %5760 = vmatpush1.bf16.msra.mxu0 %v4716
        %5761 = vmatprep.subr.bf16.mxu0 0
        %5762 = vmatpush1.bf16.msra.mxu0 %v4717
        %5763 = vmatprep.subr.bf16.mxu0 0
        %5764 = vmatpush1.bf16.msra.mxu0 %v4718
        %5765 = vmatprep.subr.bf16.mxu0 0
        %5766 = vmatpush1.bf16.msra.mxu0 %v4719
        %5767 = vmatprep.subr.bf16.mxu0 0
        %5768 = vmatpush1.bf16.msra.mxu0 %v4720
        %5769 = vmatprep.subr.bf16.mxu0 0
        %5770 = vmatpush1.bf16.msra.mxu0 %v4721
        %5771 = vmatprep.subr.bf16.mxu0 0
        %5772 = vmatpush1.bf16.msra.mxu0 %v4722
        %5773 = vmatprep.subr.bf16.mxu0 0
        %5774 = vmatpush1.bf16.msra.mxu0 %v4723
        %5775 = vmatprep.subr.bf16.mxu0 0
        %5776 = vmatpush1.bf16.msra.mxu0 %v4724
        %5777 = vmatprep.subr.bf16.mxu0 0
        %5778 = vmatpush1.bf16.msra.mxu0 %v4725
        %5779 = vmatprep.subr.bf16.mxu0 0
        %5780 = vmatpush1.bf16.msra.mxu0 %v4726
        %5781 = vmatprep.subr.bf16.mxu0 0
        %5782 = vmatpush1.bf16.msra.mxu0 %v4727
        %5783 = vmatprep.subr.bf16.mxu0 0
        %5784 = vmatpush1.bf16.msra.mxu0 %v4728
        %5785 = vmatprep.mubr.bf16.mxu0 %v2729
        %5786 = vmatmul.mubr.bf16.gmra.mrb[0].mxu0 %v2715
        %v5787 = vpop.f32.mrb[0].mxu0
        %v5788 = vadd.f32 %v5748, %v5787
        %v5789 = vpop.f32.mrb[0].mxu0
        %v5790 = vpop.f32.mrb[0].mxu0
        %v5791 = vpop.f32.mrb[0].mxu0
        %5792 = vdwg.mxu0
        %5793 = vmatprep.subr.bf16.mxu0 0
        %5794 = vmatpush1.bf16.msra.mxu0 %v4729
        %5795 = vmatprep.subr.bf16.mxu0 0
        %5796 = vmatpush1.bf16.msra.mxu0 %v4730
        %5797 = vmatprep.subr.bf16.mxu0 0
        %5798 = vmatpush1.bf16.msra.mxu0 %v4731
        %5799 = vmatprep.subr.bf16.mxu0 0
        %5800 = vmatpush1.bf16.msra.mxu0 %v4732
        %5801 = vmatprep.subr.bf16.mxu0 0
        %5802 = vmatpush1.bf16.msra.mxu0 %v4733
        %5803 = vmatprep.subr.bf16.mxu0 0
        %5804 = vmatpush1.bf16.msra.mxu0 %v4734
        %5805 = vmatprep.subr.bf16.mxu0 0
        %5806 = vmatpush1.bf16.msra.mxu0 %v4735
        %5807 = vmatprep.subr.bf16.mxu0 0
        %5808 = vmatpush1.bf16.msra.mxu0 %v4736
        %5809 = vmatprep.subr.bf16.mxu0 0
        %5810 = vmatpush1.bf16.msra.mxu0 %v4737
        %5811 = vmatprep.subr.bf16.mxu0 0
        %5812 = vmatpush1.bf16.msra.mxu0 %v4738
        %5813 = vmatprep.subr.bf16.mxu0 0
        %5814 = vmatpush1.bf16.msra.mxu0 %v4739
        %5815 = vmatprep.subr.bf16.mxu0 0
        %5816 = vmatpush1.bf16.msra.mxu0 %v4740
        %5817 = vmatprep.subr.bf16.mxu0 0
        %5818 = vmatpush1.bf16.msra.mxu0 %v4741
        %5819 = vmatprep.subr.bf16.mxu0 0
        %5820 = vmatpush1.bf16.msra.mxu0 %v4742
        %5821 = vmatprep.subr.bf16.mxu0 0
        %5822 = vmatpush1.bf16.msra.mxu0 %v4743
        %5823 = vmatprep.subr.bf16.mxu0 0
        %5824 = vmatpush1.bf16.msra.mxu0 %v4744
        %5825 = vmatprep.mubr.bf16.mxu0 %v2733
        %5826 = vmatmul.mubr.bf16.gmra.mrb[0].mxu0 %v2731
        %v5827 = vpop.f32.mrb[0].mxu0
        %v5828 = vadd.f32 %v5788, %v5827
        %v5829 = vpop.f32.mrb[0].mxu0
        %v5830 = vpop.f32.mrb[0].mxu0
        %v5831 = vpop.f32.mrb[0].mxu0
        %5832 = vdwg.mxu0
        %5833 = vmatprep.subr.bf16.mxu0 0
        %5834 = vmatpush1.bf16.msra.mxu0 %v4745
        %5835 = vmatprep.subr.bf16.mxu0 0
        %5836 = vmatpush1.bf16.msra.mxu0 %v4746
        %5837 = vmatprep.subr.bf16.mxu0 0
        %5838 = vmatpush1.bf16.msra.mxu0 %v4747
        %5839 = vmatprep.subr.bf16.mxu0 0
        %5840 = vmatpush1.bf16.msra.mxu0 %v4748
        %5841 = vmatprep.subr.bf16.mxu0 0
        %5842 = vmatpush1.bf16.msra.mxu0 %v4749
        %5843 = vmatprep.subr.bf16.mxu0 0
        %5844 = vmatpush1.bf16.msra.mxu0 %v4750
        %5845 = vmatprep.subr.bf16.mxu0 0
        %5846 = vmatpush1.bf16.msra.mxu0 %v4751
        %5847 = vmatprep.subr.bf16.mxu0 0
        %5848 = vmatpush1.bf16.msra.mxu0 %v4752
        %5849 = vmatprep.subr.bf16.mxu0 0
        %5850 = vmatpush1.bf16.msra.mxu0 %v4753
        %5851 = vmatprep.subr.bf16.mxu0 0
        %5852 = vmatpush1.bf16.msra.mxu0 %v4754
        %5853 = vmatprep.subr.bf16.mxu0 0
        %5854 = vmatpush1.bf16.msra.mxu0 %v4755
        %5855 = vmatprep.subr.bf16.mxu0 0
        %5856 = vmatpush1.bf16.msra.mxu0 %v4756
        %5857 = vmatprep.subr.bf16.mxu0 0
        %5858 = vmatpush1.bf16.msra.mxu0 %v4757
        %5859 = vmatprep.subr.bf16.mxu0 0
        %5860 = vmatpush1.bf16.msra.mxu0 %v4758
        %5861 = vmatprep.subr.bf16.mxu0 0
        %5862 = vmatpush1.bf16.msra.mxu0 %v4759
        %5863 = vmatprep.subr.bf16.mxu0 0
        %5864 = vmatpush1.bf16.msra.mxu0 %v4760
        %5865 = vmatprep.mubr.bf16.mxu0 %v2771
        %5866 = vmatmul.mubr.bf16.gmra.mrb[0].mxu0 %v2757
        %v5867 = vpop.f32.mrb[0].mxu0
        %v5868 = vadd.f32 %v5828, %v5867
        %v5869 = vpop.f32.mrb[0].mxu0
        %v5870 = vpop.f32.mrb[0].mxu0
        %v5871 = vpop.f32.mrb[0].mxu0
        %5872 = vdwg.mxu0
        %5873 = vmatprep.subr.bf16.mxu0 0
        %5874 = vmatpush1.bf16.msra.mxu0 %v4761
        %5875 = vmatprep.subr.bf16.mxu0 0
        %5876 = vmatpush1.bf16.msra.mxu0 %v4762
        %5877 = vmatprep.subr.bf16.mxu0 0
        %5878 = vmatpush1.bf16.msra.mxu0 %v4763
        %5879 = vmatprep.subr.bf16.mxu0 0
        %5880 = vmatpush1.bf16.msra.mxu0 %v4764
        %5881 = vmatprep.subr.bf16.mxu0 0
        %5882 = vmatpush1.bf16.msra.mxu0 %v4765
        %5883 = vmatprep.subr.bf16.mxu0 0
        %5884 = vmatpush1.bf16.msra.mxu0 %v4766
        %5885 = vmatprep.subr.bf16.mxu0 0
        %5886 = vmatpush1.bf16.msra.mxu0 %v4767
        %5887 = vmatprep.subr.bf16.mxu0 0
        %5888 = vmatpush1.bf16.msra.mxu0 %v4768
        %5889 = vmatprep.subr.bf16.mxu0 0
        %5890 = vmatpush1.bf16.msra.mxu0 %v4769
        %5891 = vmatprep.subr.bf16.mxu0 0
        %5892 = vmatpush1.bf16.msra.mxu0 %v4770
        %5893 = vmatprep.subr.bf16.mxu0 0
        %5894 = vmatpush1.bf16.msra.mxu0 %v4771
        %5895 = vmatprep.subr.bf16.mxu0 0
        %5896 = vmatpush1.bf16.msra.mxu0 %v4772
        %5897 = vmatprep.subr.bf16.mxu0 0
        %5898 = vmatpush1.bf16.msra.mxu0 %v4773
        %5899 = vmatprep.subr.bf16.mxu0 0
        %5900 = vmatpush1.bf16.msra.mxu0 %v4774
        %5901 = vmatprep.subr.bf16.mxu0 0
        %5902 = vmatpush1.bf16.msra.mxu0 %v4775
        %5903 = vmatprep.subr.bf16.mxu0 0
        %5904 = vmatpush1.bf16.msra.mxu0 %v4776
        %5905 = vmatprep.mubr.bf16.mxu0 %v2781
        %5906 = vmatmul.mubr.bf16.gmra.mrb[0].mxu0 %v2779
        %v5907 = vpop.f32.mrb[0].mxu0
        %v5908 = vadd.f32 %v5868, %v5907
        %v5909 = vpop.f32.mrb[0].mxu0
        %v5910 = vpop.f32.mrb[0].mxu0
        %v5911 = vpop.f32.mrb[0].mxu0
        %5912 = vdwg.mxu0
        %5913 = vmatprep.subr.bf16.mxu0 0
        %5914 = vmatpush1.bf16.msra.mxu0 %v4777
        %5915 = vmatprep.subr.bf16.mxu0 0
        %5916 = vmatpush1.bf16.msra.mxu0 %v4778
        %5917 = vmatprep.subr.bf16.mxu0 0
        %5918 = vmatpush1.bf16.msra.mxu0 %v4779
        %5919 = vmatprep.subr.bf16.mxu0 0
        %5920 = vmatpush1.bf16.msra.mxu0 %v4780
        %5921 = vmatprep.subr.bf16.mxu0 0
        %5922 = vmatpush1.bf16.msra.mxu0 %v4781
        %5923 = vmatprep.subr.bf16.mxu0 0
        %5924 = vmatpush1.bf16.msra.mxu0 %v4782
        %5925 = vmatprep.subr.bf16.mxu0 0
        %5926 = vmatpush1.bf16.msra.mxu0 %v4783
        %5927 = vmatprep.subr.bf16.mxu0 0
        %5928 = vmatpush1.bf16.msra.mxu0 %v4784
        %5929 = vmatprep.subr.bf16.mxu0 0
        %5930 = vmatpush1.bf16.msra.mxu0 %v4785
        %5931 = vmatprep.subr.bf16.mxu0 0
        %5932 = vmatpush1.bf16.msra.mxu0 %v4786
        %5933 = vmatprep.subr.bf16.mxu0 0
        %5934 = vmatpush1.bf16.msra.mxu0 %v4787
        %5935 = vmatprep.subr.bf16.mxu0 0
        %5936 = vmatpush1.bf16.msra.mxu0 %v4788
        %5937 = vmatprep.subr.bf16.mxu0 0
        %5938 = vmatpush1.bf16.msra.mxu0 %v4789
        %5939 = vmatprep.subr.bf16.mxu0 0
        %5940 = vmatpush1.bf16.msra.mxu0 %v4790
        %5941 = vmatprep.subr.bf16.mxu0 0
        %5942 = vmatpush1.bf16.msra.mxu0 %v4791
        %5943 = vmatprep.subr.bf16.mxu0 0
        %5944 = vmatpush1.bf16.msra.mxu0 %v4792
        %5945 = vmatprep.mubr.bf16.mxu0 %v2778
        %5946 = vmatmul.mubr.bf16.gmra.mrb[0].mxu0 %v2764
        %v5947 = vpop.f32.mrb[0].mxu0
        %v5948 = vadd.f32 %v5908, %v5947
        %v5949 = vpop.f32.mrb[0].mxu0
        %v5950 = vpop.f32.mrb[0].mxu0
        %v5951 = vpop.f32.mrb[0].mxu0
        %5952 = vdwg.mxu0
        %5953 = vmatprep.subr.bf16.mxu0 0
        %5954 = vmatpush1.bf16.msra.mxu0 %v4793
        %5955 = vmatprep.subr.bf16.mxu0 0
        %5956 = vmatpush1.bf16.msra.mxu0 %v4794
        %5957 = vmatprep.subr.bf16.mxu0 0
        %5958 = vmatpush1.bf16.msra.mxu0 %v4795
        %5959 = vmatprep.subr.bf16.mxu0 0
        %5960 = vmatpush1.bf16.msra.mxu0 %v4796
        %5961 = vmatprep.subr.bf16.mxu0 0
        %5962 = vmatpush1.bf16.msra.mxu0 %v4797
        %5963 = vmatprep.subr.bf16.mxu0 0
        %5964 = vmatpush1.bf16.msra.mxu0 %v4798
        %5965 = vmatprep.subr.bf16.mxu0 0
        %5966 = vmatpush1.bf16.msra.mxu0 %v4799
        %5967 = vmatprep.subr.bf16.mxu0 0
        %5968 = vmatpush1.bf16.msra.mxu0 %v4800
        %5969 = vmatprep.subr.bf16.mxu0 0
        %5970 = vmatpush1.bf16.msra.mxu0 %v4801
        %5971 = vmatprep.subr.bf16.mxu0 0
        %5972 = vmatpush1.bf16.msra.mxu0 %v4802
        %5973 = vmatprep.subr.bf16.mxu0 0
        %5974 = vmatpush1.bf16.msra.mxu0 %v4803
        %5975 = vmatprep.subr.bf16.mxu0 0
        %5976 = vmatpush1.bf16.msra.mxu0 %v4804
        %5977 = vmatprep.subr.bf16.mxu0 0
        %5978 = vmatpush1.bf16.msra.mxu0 %v4805
        %5979 = vmatprep.subr.bf16.mxu0 0
        %5980 = vmatpush1.bf16.msra.mxu0 %v4806
        %5981 = vmatprep.subr.bf16.mxu0 0
        %5982 = vmatpush1.bf16.msra.mxu0 %v4807
        %5983 = vmatprep.subr.bf16.mxu0 0
        %5984 = vmatpush1.bf16.msra.mxu0 %v4808
        %5985 = vmatprep.mubr.bf16.mxu0 %v2782
        %5986 = vmatmul.mubr.bf16.gmra.mrb[0].mxu0 %v2780
        %v5987 = vpop.f32.mrb[0].mxu0
        %v5988 = vadd.f32 %v5948, %v5987
        %v5989 = vpop.f32.mrb[0].mxu0
        %v5990 = vpop.f32.mrb[0].mxu0
        %v5991 = vpop.f32.mrb[0].mxu0
        %5992 = vdwg.mxu0
        %5993 = vmatprep.subr.bf16.mxu0 0
        %5994 = vmatpush1.bf16.msra.mxu0 %v4809
        %5995 = vmatprep.subr.bf16.mxu0 0
        %5996 = vmatpush1.bf16.msra.mxu0 %v4810
        %5997 = vmatprep.subr.bf16.mxu0 0
        %5998 = vmatpush1.bf16.msra.mxu0 %v4811
        %5999 = vmatprep.subr.bf16.mxu0 0
        %6000 = vmatpush1.bf16.msra.mxu0 %v4812
        %6001 = vmatprep.subr.bf16.mxu0 0
        %6002 = vmatpush1.bf16.msra.mxu0 %v4813
        %6003 = vmatprep.subr.bf16.mxu0 0
        %6004 = vmatpush1.bf16.msra.mxu0 %v4814
        %6005 = vmatprep.subr.bf16.mxu0 0
        %6006 = vmatpush1.bf16.msra.mxu0 %v4815
        %6007 = vmatprep.subr.bf16.mxu0 0
        %6008 = vmatpush1.bf16.msra.mxu0 %v4816
        %6009 = vmatprep.subr.bf16.mxu0 0
        %6010 = vmatpush1.bf16.msra.mxu0 %v4817
        %6011 = vmatprep.subr.bf16.mxu0 0
        %6012 = vmatpush1.bf16.msra.mxu0 %v4818
        %6013 = vmatprep.subr.bf16.mxu0 0
        %6014 = vmatpush1.bf16.msra.mxu0 %v4819
        %6015 = vmatprep.subr.bf16.mxu0 0
        %6016 = vmatpush1.bf16.msra.mxu0 %v4820
        %6017 = vmatprep.subr.bf16.mxu0 0
        %6018 = vmatpush1.bf16.msra.mxu0 %v4821
        %6019 = vmatprep.subr.bf16.mxu0 0
        %6020 = vmatpush1.bf16.msra.mxu0 %v4822
        %6021 = vmatprep.subr.bf16.mxu0 0
        %6022 = vmatpush1.bf16.msra.mxu0 %v4823
        %6023 = vmatprep.subr.bf16.mxu0 0
        %6024 = vmatpush1.bf16.msra.mxu0 %v4824
        %6025 = vmatprep.mubr.bf16.mxu0 %v2820
        %6026 = vmatmul.mubr.bf16.gmra.mrb[0].mxu0 %v2806
        %v6027 = vpop.f32.mrb[0].mxu0
        %v6028 = vadd.f32 %v5988, %v6027
        %v6029 = vpop.f32.mrb[0].mxu0
        %v6030 = vpop.f32.mrb[0].mxu0
        %v6031 = vpop.f32.mrb[0].mxu0
        %6032 = vdwg.mxu0
        %6033 = vmatprep.subr.bf16.mxu0 0
        %6034 = vmatpush1.bf16.msra.mxu0 %v4825
        %6035 = vmatprep.subr.bf16.mxu0 0
        %6036 = vmatpush1.bf16.msra.mxu0 %v4826
        %6037 = vmatprep.subr.bf16.mxu0 0
        %6038 = vmatpush1.bf16.msra.mxu0 %v4827
        %6039 = vmatprep.subr.bf16.mxu0 0
        %6040 = vmatpush1.bf16.msra.mxu0 %v4828
        %6041 = vmatprep.subr.bf16.mxu0 0
        %6042 = vmatpush1.bf16.msra.mxu0 %v4829
        %6043 = vmatprep.subr.bf16.mxu0 0
        %6044 = vmatpush1.bf16.msra.mxu0 %v4830
        %6045 = vmatprep.subr.bf16.mxu0 0
        %6046 = vmatpush1.bf16.msra.mxu0 %v4831
        %6047 = vmatprep.subr.bf16.mxu0 0
        %6048 = vmatpush1.bf16.msra.mxu0 %v4832
        %6049 = vmatprep.subr.bf16.mxu0 0
        %6050 = vmatpush1.bf16.msra.mxu0 %v4833
        %6051 = vmatprep.subr.bf16.mxu0 0
        %6052 = vmatpush1.bf16.msra.mxu0 %v4834
        %6053 = vmatprep.subr.bf16.mxu0 0
        %6054 = vmatpush1.bf16.msra.mxu0 %v4835
        %6055 = vmatprep.subr.bf16.mxu0 0
        %6056 = vmatpush1.bf16.msra.mxu0 %v4836
        %6057 = vmatprep.subr.bf16.mxu0 0
        %6058 = vmatpush1.bf16.msra.mxu0 %v4837
        %6059 = vmatprep.subr.bf16.mxu0 0
        %6060 = vmatpush1.bf16.msra.mxu0 %v4838
        %6061 = vmatprep.subr.bf16.mxu0 0
        %6062 = vmatpush1.bf16.msra.mxu0 %v4839
        %6063 = vmatprep.subr.bf16.mxu0 0
        %6064 = vmatpush1.bf16.msra.mxu0 %v4840
        %6065 = vmatprep.mubr.bf16.mxu0 %v2830
        %6066 = vmatmul.mubr.bf16.gmra.mrb[0].mxu0 %v2828
        %v6067 = vpop.f32.mrb[0].mxu0
        %v6068 = vadd.f32 %v6028, %v6067
        %v6069 = vpop.f32.mrb[0].mxu0
        %v6070 = vpop.f32.mrb[0].mxu0
        %v6071 = vpop.f32.mrb[0].mxu0
        %6072 = vdwg.mxu0
        %6073 = vmatprep.subr.bf16.mxu0 0
        %6074 = vmatpush1.bf16.msra.mxu0 %v4841
        %6075 = vmatprep.subr.bf16.mxu0 0
        %6076 = vmatpush1.bf16.msra.mxu0 %v4842
        %6077 = vmatprep.subr.bf16.mxu0 0
        %6078 = vmatpush1.bf16.msra.mxu0 %v4843
        %6079 = vmatprep.subr.bf16.mxu0 0
        %6080 = vmatpush1.bf16.msra.mxu0 %v4844
        %6081 = vmatprep.subr.bf16.mxu0 0
        %6082 = vmatpush1.bf16.msra.mxu0 %v4845
        %6083 = vmatprep.subr.bf16.mxu0 0
        %6084 = vmatpush1.bf16.msra.mxu0 %v4846
        %6085 = vmatprep.subr.bf16.mxu0 0
        %6086 = vmatpush1.bf16.msra.mxu0 %v4847
        %6087 = vmatprep.subr.bf16.mxu0 0
        %6088 = vmatpush1.bf16.msra.mxu0 %v4848
        %6089 = vmatprep.subr.bf16.mxu0 0
        %6090 = vmatpush1.bf16.msra.mxu0 %v4849
        %6091 = vmatprep.subr.bf16.mxu0 0
        %6092 = vmatpush1.bf16.msra.mxu0 %v4850
        %6093 = vmatprep.subr.bf16.mxu0 0
        %6094 = vmatpush1.bf16.msra.mxu0 %v4851
        %6095 = vmatprep.subr.bf16.mxu0 0
        %6096 = vmatpush1.bf16.msra.mxu0 %v4852
        %6097 = vmatprep.subr.bf16.mxu0 0
        %6098 = vmatpush1.bf16.msra.mxu0 %v4853
        %6099 = vmatprep.subr.bf16.mxu0 0
        %6100 = vmatpush1.bf16.msra.mxu0 %v4854
        %6101 = vmatprep.subr.bf16.mxu0 0
        %6102 = vmatpush1.bf16.msra.mxu0 %v4855
        %6103 = vmatprep.subr.bf16.mxu0 0
        %6104 = vmatpush1.bf16.msra.mxu0 %v4856
        %6105 = vmatprep.mubr.bf16.mxu0 %v2827
        %6106 = vmatmul.mubr.bf16.gmra.mrb[0].mxu0 %v2813
        %v6107 = vpop.f32.mrb[0].mxu0
        %v6108 = vadd.f32 %v6068, %v6107
        %v6109 = vpop.f32.mrb[0].mxu0
        %v6110 = vpop.f32.mrb[0].mxu0
        %v6111 = vpop.f32.mrb[0].mxu0
        %6112 = vdwg.mxu0
        %6113 = vmatprep.subr.bf16.mxu0 0
        %6114 = vmatpush1.bf16.msra.mxu0 %v4857
        %6115 = vmatprep.subr.bf16.mxu0 0
        %6116 = vmatpush1.bf16.msra.mxu0 %v4858
        %6117 = vmatprep.subr.bf16.mxu0 0
        %6118 = vmatpush1.bf16.msra.mxu0 %v4859
        %6119 = vmatprep.subr.bf16.mxu0 0
        %6120 = vmatpush1.bf16.msra.mxu0 %v4860
        %6121 = vmatprep.subr.bf16.mxu0 0
        %6122 = vmatpush1.bf16.msra.mxu0 %v4861
        %6123 = vmatprep.subr.bf16.mxu0 0
        %6124 = vmatpush1.bf16.msra.mxu0 %v4862
        %6125 = vmatprep.subr.bf16.mxu0 0
        %6126 = vmatpush1.bf16.msra.mxu0 %v4863
        %6127 = vmatprep.subr.bf16.mxu0 0
        %6128 = vmatpush1.bf16.msra.mxu0 %v4864
        %6129 = vmatprep.subr.bf16.mxu0 0
        %6130 = vmatpush1.bf16.msra.mxu0 %v4865
        %6131 = vmatprep.subr.bf16.mxu0 0
        %6132 = vmatpush1.bf16.msra.mxu0 %v4866
        %6133 = vmatprep.subr.bf16.mxu0 0
        %6134 = vmatpush1.bf16.msra.mxu0 %v4867
        %6135 = vmatprep.subr.bf16.mxu0 0
        %6136 = vmatpush1.bf16.msra.mxu0 %v4868
        %6137 = vmatprep.subr.bf16.mxu0 0
        %6138 = vmatpush1.bf16.msra.mxu0 %v4869
        %6139 = vmatprep.subr.bf16.mxu0 0
        %6140 = vmatpush1.bf16.msra.mxu0 %v4870
        %6141 = vmatprep.subr.bf16.mxu0 0
        %6142 = vmatpush1.bf16.msra.mxu0 %v4871
        %6143 = vmatprep.subr.bf16.mxu0 0
        %6144 = vmatpush1.bf16.msra.mxu0 %v4872
        %6145 = vmatprep.mubr.bf16.mxu0 %v2831
        %6146 = vmatmul.mubr.bf16.gmra.mrb[0].mxu0 %v2829
        %v6147 = vpop.f32.mrb[0].mxu0
        %v6148 = vadd.f32 %v6108, %v6147
        %v6149 = vpop.f32.mrb[0].mxu0
        %v6150 = vpop.f32.mrb[0].mxu0
        %v6151 = vpop.f32.mrb[0].mxu0
        %6152 = vdwg.mxu0
        %6153 = vmatprep.subr.bf16.mxu0 0
        %6154 = vmatpush1.bf16.msra.mxu0 %v4873
        %6155 = vmatprep.subr.bf16.mxu0 0
        %6156 = vmatpush1.bf16.msra.mxu0 %v4874
        %6157 = vmatprep.subr.bf16.mxu0 0
        %6158 = vmatpush1.bf16.msra.mxu0 %v4875
        %6159 = vmatprep.subr.bf16.mxu0 0
        %6160 = vmatpush1.bf16.msra.mxu0 %v4876
        %6161 = vmatprep.subr.bf16.mxu0 0
        %6162 = vmatpush1.bf16.msra.mxu0 %v4877
        %6163 = vmatprep.subr.bf16.mxu0 0
        %6164 = vmatpush1.bf16.msra.mxu0 %v4878
        %6165 = vmatprep.subr.bf16.mxu0 0
        %6166 = vmatpush1.bf16.msra.mxu0 %v4879
        %6167 = vmatprep.subr.bf16.mxu0 0
        %6168 = vmatpush1.bf16.msra.mxu0 %v4880
        %6169 = vmatprep.subr.bf16.mxu0 0
        %6170 = vmatpush1.bf16.msra.mxu0 %v4881
        %6171 = vmatprep.subr.bf16.mxu0 0
        %6172 = vmatpush1.bf16.msra.mxu0 %v4882
        %6173 = vmatprep.subr.bf16.mxu0 0
        %6174 = vmatpush1.bf16.msra.mxu0 %v4883
        %6175 = vmatprep.subr.bf16.mxu0 0
        %6176 = vmatpush1.bf16.msra.mxu0 %v4884
        %6177 = vmatprep.subr.bf16.mxu0 0
        %6178 = vmatpush1.bf16.msra.mxu0 %v4885
        %6179 = vmatprep.subr.bf16.mxu0 0
        %6180 = vmatpush1.bf16.msra.mxu0 %v4886
        %6181 = vmatprep.subr.bf16.mxu0 0
        %6182 = vmatpush1.bf16.msra.mxu0 %v4887
        %6183 = vmatprep.subr.bf16.mxu0 0
        %6184 = vmatpush1.bf16.msra.mxu0 %v4888
        %6185 = vmatprep.mubr.bf16.mxu0 %v2869
        %6186 = vmatmul.mubr.bf16.gmra.mrb[0].mxu0 %v2855
        %v6187 = vpop.f32.mrb[0].mxu0
        %v6188 = vadd.f32 %v6148, %v6187
        %v6189 = vpop.f32.mrb[0].mxu0
        %v6190 = vpop.f32.mrb[0].mxu0
        %v6191 = vpop.f32.mrb[0].mxu0
        %6192 = vdwg.mxu0
        %6193 = vmatprep.subr.bf16.mxu0 0
        %6194 = vmatpush1.bf16.msra.mxu0 %v4889
        %6195 = vmatprep.subr.bf16.mxu0 0
        %6196 = vmatpush1.bf16.msra.mxu0 %v4890
        %6197 = vmatprep.subr.bf16.mxu0 0
        %6198 = vmatpush1.bf16.msra.mxu0 %v4891
        %6199 = vmatprep.subr.bf16.mxu0 0
        %6200 = vmatpush1.bf16.msra.mxu0 %v4892
        %6201 = vmatprep.subr.bf16.mxu0 0
        %6202 = vmatpush1.bf16.msra.mxu0 %v4893
        %6203 = vmatprep.subr.bf16.mxu0 0
        %6204 = vmatpush1.bf16.msra.mxu0 %v4894
        %6205 = vmatprep.subr.bf16.mxu0 0
        %6206 = vmatpush1.bf16.msra.mxu0 %v4895
        %6207 = vmatprep.subr.bf16.mxu0 0
        %6208 = vmatpush1.bf16.msra.mxu0 %v4896
        %6209 = vmatprep.subr.bf16.mxu0 0
        %6210 = vmatpush1.bf16.msra.mxu0 %v4897
        %6211 = vmatprep.subr.bf16.mxu0 0
        %6212 = vmatpush1.bf16.msra.mxu0 %v4898
        %6213 = vmatprep.subr.bf16.mxu0 0
        %6214 = vmatpush1.bf16.msra.mxu0 %v4899
        %6215 = vmatprep.subr.bf16.mxu0 0
        %6216 = vmatpush1.bf16.msra.mxu0 %v4900
        %6217 = vmatprep.subr.bf16.mxu0 0
        %6218 = vmatpush1.bf16.msra.mxu0 %v4901
        %6219 = vmatprep.subr.bf16.mxu0 0
        %6220 = vmatpush1.bf16.msra.mxu0 %v4902
        %6221 = vmatprep.subr.bf16.mxu0 0
        %6222 = vmatpush1.bf16.msra.mxu0 %v4903
        %6223 = vmatprep.subr.bf16.mxu0 0
        %6224 = vmatpush1.bf16.msra.mxu0 %v4904
        %6225 = vmatprep.mubr.bf16.mxu0 %v2879
        %6226 = vmatmul.mubr.bf16.gmra.mrb[0].mxu0 %v2877
        %v6227 = vpop.f32.mrb[0].mxu0
        %v6228 = vadd.f32 %v6188, %v6227
        %v6229 = vpop.f32.mrb[0].mxu0
        %v6230 = vpop.f32.mrb[0].mxu0
        %v6231 = vpop.f32.mrb[0].mxu0
        %6232 = vdwg.mxu0
        %6233 = vmatprep.subr.bf16.mxu0 0
        %6234 = vmatpush1.bf16.msra.mxu0 %v4905
        %6235 = vmatprep.subr.bf16.mxu0 0
        %6236 = vmatpush1.bf16.msra.mxu0 %v4906
        %6237 = vmatprep.subr.bf16.mxu0 0
        %6238 = vmatpush1.bf16.msra.mxu0 %v4907
        %6239 = vmatprep.subr.bf16.mxu0 0
        %6240 = vmatpush1.bf16.msra.mxu0 %v4908
        %6241 = vmatprep.subr.bf16.mxu0 0
        %6242 = vmatpush1.bf16.msra.mxu0 %v4909
        %6243 = vmatprep.subr.bf16.mxu0 0
        %6244 = vmatpush1.bf16.msra.mxu0 %v4910
        %6245 = vmatprep.subr.bf16.mxu0 0
        %6246 = vmatpush1.bf16.msra.mxu0 %v4911
        %6247 = vmatprep.subr.bf16.mxu0 0
        %6248 = vmatpush1.bf16.msra.mxu0 %v4912
        %6249 = vmatprep.subr.bf16.mxu0 0
        %6250 = vmatpush1.bf16.msra.mxu0 %v4913
        %6251 = vmatprep.subr.bf16.mxu0 0
        %6252 = vmatpush1.bf16.msra.mxu0 %v4914
        %6253 = vmatprep.subr.bf16.mxu0 0
        %6254 = vmatpush1.bf16.msra.mxu0 %v4915
        %6255 = vmatprep.subr.bf16.mxu0 0
        %6256 = vmatpush1.bf16.msra.mxu0 %v4916
        %6257 = vmatprep.subr.bf16.mxu0 0
        %6258 = vmatpush1.bf16.msra.mxu0 %v4917
        %6259 = vmatprep.subr.bf16.mxu0 0
        %6260 = vmatpush1.bf16.msra.mxu0 %v4918
        %6261 = vmatprep.subr.bf16.mxu0 0
        %6262 = vmatpush1.bf16.msra.mxu0 %v4919
        %6263 = vmatprep.subr.bf16.mxu0 0
        %6264 = vmatpush1.bf16.msra.mxu0 %v4920
        %6265 = vmatprep.mubr.bf16.mxu0 %v2876
        %6266 = vmatmul.mubr.bf16.gmra.mrb[0].mxu0 %v2862
        %v6267 = vpop.f32.mrb[0].mxu0
        %v6268 = vadd.f32 %v6228, %v6267
        %v6269 = vpop.f32.mrb[0].mxu0
        %v6270 = vpop.f32.mrb[0].mxu0
        %v6271 = vpop.f32.mrb[0].mxu0
        %6272 = vdwg.mxu0
        %6273 = vmatprep.subr.bf16.mxu0 0
        %6274 = vmatpush1.bf16.msra.mxu0 %v4921
        %6275 = vmatprep.subr.bf16.mxu0 0
        %6276 = vmatpush1.bf16.msra.mxu0 %v4922
        %6277 = vmatprep.subr.bf16.mxu0 0
        %6278 = vmatpush1.bf16.msra.mxu0 %v4923
        %6279 = vmatprep.subr.bf16.mxu0 0
        %6280 = vmatpush1.bf16.msra.mxu0 %v4924
        %6281 = vmatprep.subr.bf16.mxu0 0
        %6282 = vmatpush1.bf16.msra.mxu0 %v4925
        %6283 = vmatprep.subr.bf16.mxu0 0
        %6284 = vmatpush1.bf16.msra.mxu0 %v4926
        %6285 = vmatprep.subr.bf16.mxu0 0
        %6286 = vmatpush1.bf16.msra.mxu0 %v4927
        %6287 = vmatprep.subr.bf16.mxu0 0
        %6288 = vmatpush1.bf16.msra.mxu0 %v4928
        %6289 = vmatprep.subr.bf16.mxu0 0
        %6290 = vmatpush1.bf16.msra.mxu0 %v4929
        %6291 = vmatprep.subr.bf16.mxu0 0
        %6292 = vmatpush1.bf16.msra.mxu0 %v4930
        %6293 = vmatprep.subr.bf16.mxu0 0
        %6294 = vmatpush1.bf16.msra.mxu0 %v4931
        %6295 = vmatprep.subr.bf16.mxu0 0
        %6296 = vmatpush1.bf16.msra.mxu0 %v4932
        %6297 = vmatprep.subr.bf16.mxu0 0
        %6298 = vmatpush1.bf16.msra.mxu0 %v4933
        %6299 = vmatprep.subr.bf16.mxu0 0
        %6300 = vmatpush1.bf16.msra.mxu0 %v4934
        %6301 = vmatprep.subr.bf16.mxu0 0
        %6302 = vmatpush1.bf16.msra.mxu0 %v4935
        %6303 = vmatprep.subr.bf16.mxu0 0
        %6304 = vmatpush1.bf16.msra.mxu0 %v4936
        %6305 = vmatprep.mubr.bf16.mxu0 %v2880
        %6306 = vmatmul.mubr.bf16.gmra.mrb[0].mxu0 %v2878
        %v6307 = vpop.f32.mrb[0].mxu0
        %v6308 = vadd.f32 %v6268, %v6307
        %v6309 = vpop.f32.mrb[0].mxu0
        %v6310 = vpop.f32.mrb[0].mxu0
        %v6311 = vpop.f32.mrb[0].mxu0
        %6312 = vdwg.mxu0
        %6313 = vmatprep.subr.bf16.mxu0 0
        %6314 = vmatpush1.bf16.msra.mxu0 %v4937
        %6315 = vmatprep.subr.bf16.mxu0 0
        %6316 = vmatpush1.bf16.msra.mxu0 %v4938
        %6317 = vmatprep.subr.bf16.mxu0 0
        %6318 = vmatpush1.bf16.msra.mxu0 %v4939
        %6319 = vmatprep.subr.bf16.mxu0 0
        %6320 = vmatpush1.bf16.msra.mxu0 %v4940
        %6321 = vmatprep.subr.bf16.mxu0 0
        %6322 = vmatpush1.bf16.msra.mxu0 %v4941
        %6323 = vmatprep.subr.bf16.mxu0 0
        %6324 = vmatpush1.bf16.msra.mxu0 %v4942
        %6325 = vmatprep.subr.bf16.mxu0 0
        %6326 = vmatpush1.bf16.msra.mxu0 %v4943
        %6327 = vmatprep.subr.bf16.mxu0 0
        %6328 = vmatpush1.bf16.msra.mxu0 %v4944
        %6329 = vmatprep.subr.bf16.mxu0 0
        %6330 = vmatpush1.bf16.msra.mxu0 %v4945
        %6331 = vmatprep.subr.bf16.mxu0 0
        %6332 = vmatpush1.bf16.msra.mxu0 %v4946
        %6333 = vmatprep.subr.bf16.mxu0 0
        %6334 = vmatpush1.bf16.msra.mxu0 %v4947
        %6335 = vmatprep.subr.bf16.mxu0 0
        %6336 = vmatpush1.bf16.msra.mxu0 %v4948
        %6337 = vmatprep.subr.bf16.mxu0 0
        %6338 = vmatpush1.bf16.msra.mxu0 %v4949
        %6339 = vmatprep.subr.bf16.mxu0 0
        %6340 = vmatpush1.bf16.msra.mxu0 %v4950
        %6341 = vmatprep.subr.bf16.mxu0 0
        %6342 = vmatpush1.bf16.msra.mxu0 %v4951
        %6343 = vmatprep.subr.bf16.mxu0 0
        %6344 = vmatpush1.bf16.msra.mxu0 %v4952
        %6345 = vmatprep.mubr.bf16.mxu0 %v2902
        %6346 = vmatmul.mubr.bf16.gmra.mrb[0].mxu0 %v2895
        %v6347 = vpop.f32.mrb[0].mxu0
        %v6348 = vadd.f32 %v6308, %v6347
        %v6349 = vpop.f32.mrb[0].mxu0
        %v6350 = vpop.f32.mrb[0].mxu0
        %v6351 = vpop.f32.mrb[0].mxu0
        %6352 = vdwg.mxu0
        %v6353 = vadd.f32 %v1772, %v6348
        %6354 = vst [vmem:[#allocation3] sm:$0x3] %v6353
        %p6355 = scmp.eq.s32.totalorder %s42, 4
        // Predicated region
        $region149: #{tpu_custom_call.1} parent=87 // pred_check
          %p6356 = pneg %p6355
        $region150: #{tpu_custom_call.1} parent=87 // pred_check_branch
          %6358 = sbr.rel (%p6356) target = $region152
        $region151: #{tpu_custom_call.1} parent=87 // pred_region
          %v6359 = vld [vmem:[#allocation3] sm:$0x3]
          %v6360 = vld [vmem:[#allocation2] sm:$0x3]
          %v6361 = vld [vmem:[#allocation19] sm:$0xff]
          %v6362 = vld [vmem:[#allocation19 + $0x8] sm:$0xff]
          %v6363 = vld [vmem:[#allocation19 + $0x10] sm:$0xff]
          %v6364 = vld [vmem:[#allocation19 + $0x18] sm:$0xff]
          %v6365 = vld [vmem:[#allocation19 + $0x20] sm:$0xff]
          %v6366 = vld [vmem:[#allocation19 + $0x28] sm:$0xff]
          %v6367 = vld [vmem:[#allocation19 + $0x30] sm:$0xff]
          %v6368 = vld [vmem:[#allocation19 + $0x38] sm:$0xff]
          %v6369 = vld [vmem:[#allocation19 + $0x40] sm:$0xff]
          %v6370 = vld [vmem:[#allocation19 + $0x48] sm:$0xff]
          %v6371 = vld [vmem:[#allocation19 + $0x50] sm:$0xff]
          %v6372 = vld [vmem:[#allocation19 + $0x58] sm:$0xff]
          %v6373 = vld [vmem:[#allocation19 + $0x60] sm:$0xff]
          %v6374 = vld [vmem:[#allocation19 + $0x68] sm:$0xff]
          %v6375 = vld [vmem:[#allocation19 + $0x70] sm:$0xff]
          %v6376 = vld [vmem:[#allocation19 + $0x78] sm:$0xff]
          %v6377 = vld [vmem:[#allocation19 + $0x80] sm:$0xff]
          %v6378 = vld [vmem:[#allocation19 + $0x88] sm:$0xff]
          %v6379 = vld [vmem:[#allocation19 + $0x90] sm:$0xff]
          %v6380 = vld [vmem:[#allocation19 + $0x98] sm:$0xff]
          %v6381 = vld [vmem:[#allocation19 + $0xa0] sm:$0xff]
          %v6382 = vld [vmem:[#allocation19 + $0xa8] sm:$0xff]
          %v6383 = vld [vmem:[#allocation19 + $0xb0] sm:$0xff]
          %v6384 = vld [vmem:[#allocation19 + $0xb8] sm:$0xff]
          %v6385 = vld [vmem:[#allocation19 + $0xc0] sm:$0xff]
          %v6386 = vld [vmem:[#allocation19 + $0xc8] sm:$0xff]
          %v6387 = vld [vmem:[#allocation19 + $0xd0] sm:$0xff]
          %v6388 = vld [vmem:[#allocation19 + $0xd8] sm:$0xff]
          %v6389 = vld [vmem:[#allocation19 + $0xe0] sm:$0xff]
          %v6390 = vld [vmem:[#allocation19 + $0xe8] sm:$0xff]
          %v6391 = vld [vmem:[#allocation19 + $0xf0] sm:$0xff]
          %v6392 = vld [vmem:[#allocation19 + $0xf8] sm:$0xff]
          %v6393 = vld [vmem:[#allocation19 + $0x100] sm:$0xff]
          %v6394 = vld [vmem:[#allocation19 + $0x108] sm:$0xff]
          %v6395 = vld [vmem:[#allocation19 + $0x110] sm:$0xff]
          %v6396 = vld [vmem:[#allocation19 + $0x118] sm:$0xff]
          %v6397 = vld [vmem:[#allocation19 + $0x120] sm:$0xff]
          %v6398 = vld [vmem:[#allocation19 + $0x128] sm:$0xff]
          %v6399 = vld [vmem:[#allocation19 + $0x130] sm:$0xff]
          %v6400 = vld [vmem:[#allocation19 + $0x138] sm:$0xff]
          %v6401 = vld [vmem:[#allocation19 + $0x140] sm:$0xff]
          %v6402 = vld [vmem:[#allocation19 + $0x148] sm:$0xff]
          %v6403 = vld [vmem:[#allocation19 + $0x150] sm:$0xff]
          %v6404 = vld [vmem:[#allocation19 + $0x158] sm:$0xff]
          %v6405 = vld [vmem:[#allocation19 + $0x160] sm:$0xff]
          %v6406 = vld [vmem:[#allocation19 + $0x168] sm:$0xff]
          %v6407 = vld [vmem:[#allocation19 + $0x170] sm:$0xff]
          %v6408 = vld [vmem:[#allocation19 + $0x178] sm:$0xff]
          %v6409 = vld [vmem:[#allocation19 + $0x180] sm:$0xff]
          %v6410 = vld [vmem:[#allocation19 + $0x188] sm:$0xff]
          %v6411 = vld [vmem:[#allocation19 + $0x190] sm:$0xff]
          %v6412 = vld [vmem:[#allocation19 + $0x198] sm:$0xff]
          %v6413 = vld [vmem:[#allocation19 + $0x1a0] sm:$0xff]
          %v6414 = vld [vmem:[#allocation19 + $0x1a8] sm:$0xff]
          %v6415 = vld [vmem:[#allocation19 + $0x1b0] sm:$0xff]
          %v6416 = vld [vmem:[#allocation19 + $0x1b8] sm:$0xff]
          %v6417 = vld [vmem:[#allocation19 + $0x1c0] sm:$0xff]
          %v6418 = vld [vmem:[#allocation19 + $0x1c8] sm:$0xff]
          %v6419 = vld [vmem:[#allocation19 + $0x1d0] sm:$0xff]
          %v6420 = vld [vmem:[#allocation19 + $0x1d8] sm:$0xff]
          %v6421 = vld [vmem:[#allocation19 + $0x1e0] sm:$0xff]
          %v6422 = vld [vmem:[#allocation19 + $0x1e8] sm:$0xff]
          %v6423 = vld [vmem:[#allocation19 + $0x1f0] sm:$0xff]
          %v6424 = vld [vmem:[#allocation19 + $0x1f8] sm:$0xff]
          %v6425 = vld [vmem:[#allocation19 + $0x200] sm:$0xff]
          %v6426 = vld [vmem:[#allocation19 + $0x208] sm:$0xff]
          %v6427 = vld [vmem:[#allocation19 + $0x210] sm:$0xff]
          %v6428 = vld [vmem:[#allocation19 + $0x218] sm:$0xff]
          %v6429 = vld [vmem:[#allocation19 + $0x220] sm:$0xff]
          %v6430 = vld [vmem:[#allocation19 + $0x228] sm:$0xff]
          %v6431 = vld [vmem:[#allocation19 + $0x230] sm:$0xff]
          %v6432 = vld [vmem:[#allocation19 + $0x238] sm:$0xff]
          %v6433 = vld [vmem:[#allocation19 + $0x240] sm:$0xff]
          %v6434 = vld [vmem:[#allocation19 + $0x248] sm:$0xff]
          %v6435 = vld [vmem:[#allocation19 + $0x250] sm:$0xff]
          %v6436 = vld [vmem:[#allocation19 + $0x258] sm:$0xff]
          %v6437 = vld [vmem:[#allocation19 + $0x260] sm:$0xff]
          %v6438 = vld [vmem:[#allocation19 + $0x268] sm:$0xff]
          %v6439 = vld [vmem:[#allocation19 + $0x270] sm:$0xff]
          %v6440 = vld [vmem:[#allocation19 + $0x278] sm:$0xff]
          %v6441 = vld [vmem:[#allocation19 + $0x280] sm:$0xff]
          %v6442 = vld [vmem:[#allocation19 + $0x288] sm:$0xff]
          %v6443 = vld [vmem:[#allocation19 + $0x290] sm:$0xff]
          %v6444 = vld [vmem:[#allocation19 + $0x298] sm:$0xff]
          %v6445 = vld [vmem:[#allocation19 + $0x2a0] sm:$0xff]
          %v6446 = vld [vmem:[#allocation19 + $0x2a8] sm:$0xff]
          %v6447 = vld [vmem:[#allocation19 + $0x2b0] sm:$0xff]
          %v6448 = vld [vmem:[#allocation19 + $0x2b8] sm:$0xff]
          %v6449 = vld [vmem:[#allocation19 + $0x2c0] sm:$0xff]
          %v6450 = vld [vmem:[#allocation19 + $0x2c8] sm:$0xff]
          %v6451 = vld [vmem:[#allocation19 + $0x2d0] sm:$0xff]
          %v6452 = vld [vmem:[#allocation19 + $0x2d8] sm:$0xff]
          %v6453 = vld [vmem:[#allocation19 + $0x2e0] sm:$0xff]
          %v6454 = vld [vmem:[#allocation19 + $0x2e8] sm:$0xff]
          %v6455 = vld [vmem:[#allocation19 + $0x2f0] sm:$0xff]
          %v6456 = vld [vmem:[#allocation19 + $0x2f8] sm:$0xff]
          %v6457 = vld [vmem:[#allocation19 + $0x300] sm:$0xff]
          %v6458 = vld [vmem:[#allocation19 + $0x308] sm:$0xff]
          %v6459 = vld [vmem:[#allocation19 + $0x310] sm:$0xff]
          %v6460 = vld [vmem:[#allocation19 + $0x318] sm:$0xff]
          %v6461 = vld [vmem:[#allocation19 + $0x320] sm:$0xff]
          %v6462 = vld [vmem:[#allocation19 + $0x328] sm:$0xff]
          %v6463 = vld [vmem:[#allocation19 + $0x330] sm:$0xff]
          %v6464 = vld [vmem:[#allocation19 + $0x338] sm:$0xff]
          %v6465 = vld [vmem:[#allocation19 + $0x340] sm:$0xff]
          %v6466 = vld [vmem:[#allocation19 + $0x348] sm:$0xff]
          %v6467 = vld [vmem:[#allocation19 + $0x350] sm:$0xff]
          %v6468 = vld [vmem:[#allocation19 + $0x358] sm:$0xff]
          %v6469 = vld [vmem:[#allocation19 + $0x360] sm:$0xff]
          %v6470 = vld [vmem:[#allocation19 + $0x368] sm:$0xff]
          %v6471 = vld [vmem:[#allocation19 + $0x370] sm:$0xff]
          %v6472 = vld [vmem:[#allocation19 + $0x378] sm:$0xff]
          %v6473 = vld [vmem:[#allocation19 + $0x380] sm:$0xff]
          %v6474 = vld [vmem:[#allocation19 + $0x388] sm:$0xff]
          %v6475 = vld [vmem:[#allocation19 + $0x390] sm:$0xff]
          %v6476 = vld [vmem:[#allocation19 + $0x398] sm:$0xff]
          %v6477 = vld [vmem:[#allocation19 + $0x3a0] sm:$0xff]
          %v6478 = vld [vmem:[#allocation19 + $0x3a8] sm:$0xff]
          %v6479 = vld [vmem:[#allocation19 + $0x3b0] sm:$0xff]
          %v6480 = vld [vmem:[#allocation19 + $0x3b8] sm:$0xff]
          %v6481 = vld [vmem:[#allocation19 + $0x3c0] sm:$0xff]
          %v6482 = vld [vmem:[#allocation19 + $0x3c8] sm:$0xff]
          %v6483 = vld [vmem:[#allocation19 + $0x3d0] sm:$0xff]
          %v6484 = vld [vmem:[#allocation19 + $0x3d8] sm:$0xff]
          %v6485 = vld [vmem:[#allocation19 + $0x3e0] sm:$0xff]
          %v6486 = vld [vmem:[#allocation19 + $0x3e8] sm:$0xff]
          %v6487 = vld [vmem:[#allocation19 + $0x3f0] sm:$0xff]
          %v6488 = vld [vmem:[#allocation19 + $0x3f8] sm:$0xff]
          %v6489 = vld [vmem:[#allocation21] sm:$0xff]
          %v6490 = vld [vmem:[#allocation21 + $0x8] sm:$0xff]
          %v6491 = vld [vmem:[#allocation21 + $0x10] sm:$0xff]
          %v6492 = vld [vmem:[#allocation21 + $0x18] sm:$0xff]
          %v6493 = vld [vmem:[#allocation21 + $0x20] sm:$0xff]
          %v6494 = vld [vmem:[#allocation21 + $0x28] sm:$0xff]
          %v6495 = vld [vmem:[#allocation21 + $0x30] sm:$0xff]
          %v6496 = vld [vmem:[#allocation21 + $0x38] sm:$0xff]
          %v6497 = vld [vmem:[#allocation21 + $0x40] sm:$0xff]
          %v6498 = vld [vmem:[#allocation21 + $0x48] sm:$0xff]
          %v6499 = vld [vmem:[#allocation21 + $0x50] sm:$0xff]
          %v6500 = vld [vmem:[#allocation21 + $0x58] sm:$0xff]
          %v6501 = vld [vmem:[#allocation21 + $0x60] sm:$0xff]
          %v6502 = vld [vmem:[#allocation21 + $0x68] sm:$0xff]
          %v6503 = vld [vmem:[#allocation21 + $0x70] sm:$0xff]
          %v6504 = vld [vmem:[#allocation21 + $0x78] sm:$0xff]
          %v6505 = vld [vmem:[#allocation21 + $0x80] sm:$0xff]
          %v6506 = vld [vmem:[#allocation21 + $0x88] sm:$0xff]
          %v6507 = vld [vmem:[#allocation21 + $0x90] sm:$0xff]
          %v6508 = vld [vmem:[#allocation21 + $0x98] sm:$0xff]
          %v6509 = vld [vmem:[#allocation21 + $0xa0] sm:$0xff]
          %v6510 = vld [vmem:[#allocation21 + $0xa8] sm:$0xff]
          %v6511 = vld [vmem:[#allocation21 + $0xb0] sm:$0xff]
          %v6512 = vld [vmem:[#allocation21 + $0xb8] sm:$0xff]
          %v6513 = vld [vmem:[#allocation21 + $0xc0] sm:$0xff]
          %v6514 = vld [vmem:[#allocation21 + $0xc8] sm:$0xff]
          %v6515 = vld [vmem:[#allocation21 + $0xd0] sm:$0xff]
          %v6516 = vld [vmem:[#allocation21 + $0xd8] sm:$0xff]
          %v6517 = vld [vmem:[#allocation21 + $0xe0] sm:$0xff]
          %v6518 = vld [vmem:[#allocation21 + $0xe8] sm:$0xff]
          %v6519 = vld [vmem:[#allocation21 + $0xf0] sm:$0xff]
          %v6520 = vld [vmem:[#allocation21 + $0xf8] sm:$0xff]
          %v6521 = vld [vmem:[#allocation21 + $0x100] sm:$0xff]
          %v6522 = vld [vmem:[#allocation21 + $0x108] sm:$0xff]
          %v6523 = vld [vmem:[#allocation21 + $0x110] sm:$0xff]
          %v6524 = vld [vmem:[#allocation21 + $0x118] sm:$0xff]
          %v6525 = vld [vmem:[#allocation21 + $0x120] sm:$0xff]
          %v6526 = vld [vmem:[#allocation21 + $0x128] sm:$0xff]
          %v6527 = vld [vmem:[#allocation21 + $0x130] sm:$0xff]
          %v6528 = vld [vmem:[#allocation21 + $0x138] sm:$0xff]
          %v6529 = vld [vmem:[#allocation21 + $0x140] sm:$0xff]
          %v6530 = vld [vmem:[#allocation21 + $0x148] sm:$0xff]
          %v6531 = vld [vmem:[#allocation21 + $0x150] sm:$0xff]
          %v6532 = vld [vmem:[#allocation21 + $0x158] sm:$0xff]
          %v6533 = vld [vmem:[#allocation21 + $0x160] sm:$0xff]
          %v6534 = vld [vmem:[#allocation21 + $0x168] sm:$0xff]
          %v6535 = vld [vmem:[#allocation21 + $0x170] sm:$0xff]
          %v6536 = vld [vmem:[#allocation21 + $0x178] sm:$0xff]
          %v6537 = vld [vmem:[#allocation21 + $0x180] sm:$0xff]
          %v6538 = vld [vmem:[#allocation21 + $0x188] sm:$0xff]
          %v6539 = vld [vmem:[#allocation21 + $0x190] sm:$0xff]
          %v6540 = vld [vmem:[#allocation21 + $0x198] sm:$0xff]
          %v6541 = vld [vmem:[#allocation21 + $0x1a0] sm:$0xff]
          %v6542 = vld [vmem:[#allocation21 + $0x1a8] sm:$0xff]
          %v6543 = vld [vmem:[#allocation21 + $0x1b0] sm:$0xff]
          %v6544 = vld [vmem:[#allocation21 + $0x1b8] sm:$0xff]
          %v6545 = vld [vmem:[#allocation21 + $0x1c0] sm:$0xff]
          %v6546 = vld [vmem:[#allocation21 + $0x1c8] sm:$0xff]
          %v6547 = vld [vmem:[#allocation21 + $0x1d0] sm:$0xff]
          %v6548 = vld [vmem:[#allocation21 + $0x1d8] sm:$0xff]
          %v6549 = vld [vmem:[#allocation21 + $0x1e0] sm:$0xff]
          %v6550 = vld [vmem:[#allocation21 + $0x1e8] sm:$0xff]
          %v6551 = vld [vmem:[#allocation21 + $0x1f0] sm:$0xff]
          %v6552 = vld [vmem:[#allocation21 + $0x1f8] sm:$0xff]
          %v6553 = vld [vmem:[#allocation21 + $0x200] sm:$0xff]
          %v6554 = vld [vmem:[#allocation21 + $0x208] sm:$0xff]
          %v6555 = vld [vmem:[#allocation21 + $0x210] sm:$0xff]
          %v6556 = vld [vmem:[#allocation21 + $0x218] sm:$0xff]
          %v6557 = vld [vmem:[#allocation21 + $0x220] sm:$0xff]
          %v6558 = vld [vmem:[#allocation21 + $0x228] sm:$0xff]
          %v6559 = vld [vmem:[#allocation21 + $0x230] sm:$0xff]
          %v6560 = vld [vmem:[#allocation21 + $0x238] sm:$0xff]
          %v6561 = vld [vmem:[#allocation21 + $0x240] sm:$0xff]
          %v6562 = vld [vmem:[#allocation21 + $0x248] sm:$0xff]
          %v6563 = vld [vmem:[#allocation21 + $0x250] sm:$0xff]
          %v6564 = vld [vmem:[#allocation21 + $0x258] sm:$0xff]
          %v6565 = vld [vmem:[#allocation21 + $0x260] sm:$0xff]
          %v6566 = vld [vmem:[#allocation21 + $0x268] sm:$0xff]
          %v6567 = vld [vmem:[#allocation21 + $0x270] sm:$0xff]
          %v6568 = vld [vmem:[#allocation21 + $0x278] sm:$0xff]
          %v6569 = vld [vmem:[#allocation21 + $0x280] sm:$0xff]
          %v6570 = vld [vmem:[#allocation21 + $0x288] sm:$0xff]
          %v6571 = vld [vmem:[#allocation21 + $0x290] sm:$0xff]
          %v6572 = vld [vmem:[#allocation21 + $0x298] sm:$0xff]
          %v6573 = vld [vmem:[#allocation21 + $0x2a0] sm:$0xff]
          %v6574 = vld [vmem:[#allocation21 + $0x2a8] sm:$0xff]
          %v6575 = vld [vmem:[#allocation21 + $0x2b0] sm:$0xff]
          %v6576 = vld [vmem:[#allocation21 + $0x2b8] sm:$0xff]
          %v6577 = vld [vmem:[#allocation21 + $0x2c0] sm:$0xff]
          %v6578 = vld [vmem:[#allocation21 + $0x2c8] sm:$0xff]
          %v6579 = vld [vmem:[#allocation21 + $0x2d0] sm:$0xff]
          %v6580 = vld [vmem:[#allocation21 + $0x2d8] sm:$0xff]
          %v6581 = vld [vmem:[#allocation21 + $0x2e0] sm:$0xff]
          %v6582 = vld [vmem:[#allocation21 + $0x2e8] sm:$0xff]
          %v6583 = vld [vmem:[#allocation21 + $0x2f0] sm:$0xff]
          %v6584 = vld [vmem:[#allocation21 + $0x2f8] sm:$0xff]
          %v6585 = vld [vmem:[#allocation21 + $0x300] sm:$0xff]
          %v6586 = vld [vmem:[#allocation21 + $0x308] sm:$0xff]
          %v6587 = vld [vmem:[#allocation21 + $0x310] sm:$0xff]
          %v6588 = vld [vmem:[#allocation21 + $0x318] sm:$0xff]
          %v6589 = vld [vmem:[#allocation21 + $0x320] sm:$0xff]
          %v6590 = vld [vmem:[#allocation21 + $0x328] sm:$0xff]
          %v6591 = vld [vmem:[#allocation21 + $0x330] sm:$0xff]
          %v6592 = vld [vmem:[#allocation21 + $0x338] sm:$0xff]
          %v6593 = vld [vmem:[#allocation21 + $0x340] sm:$0xff]
          %v6594 = vld [vmem:[#allocation21 + $0x348] sm:$0xff]
          %v6595 = vld [vmem:[#allocation21 + $0x350] sm:$0xff]
          %v6596 = vld [vmem:[#allocation21 + $0x358] sm:$0xff]
          %v6597 = vld [vmem:[#allocation21 + $0x360] sm:$0xff]
          %v6598 = vld [vmem:[#allocation21 + $0x368] sm:$0xff]
          %v6599 = vld [vmem:[#allocation21 + $0x370] sm:$0xff]
          %v6600 = vld [vmem:[#allocation21 + $0x378] sm:$0xff]
          %v6601 = vld [vmem:[#allocation21 + $0x380] sm:$0xff]
          %v6602 = vld [vmem:[#allocation21 + $0x388] sm:$0xff]
          %v6603 = vld [vmem:[#allocation21 + $0x390] sm:$0xff]
          %v6604 = vld [vmem:[#allocation21 + $0x398] sm:$0xff]
          %v6605 = vld [vmem:[#allocation21 + $0x3a0] sm:$0xff]
          %v6606 = vld [vmem:[#allocation21 + $0x3a8] sm:$0xff]
          %v6607 = vld [vmem:[#allocation21 + $0x3b0] sm:$0xff]
          %v6608 = vld [vmem:[#allocation21 + $0x3b8] sm:$0xff]
          %v6609 = vld [vmem:[#allocation21 + $0x3c0] sm:$0xff]
          %v6610 = vld [vmem:[#allocation21 + $0x3c8] sm:$0xff]
          %v6611 = vld [vmem:[#allocation21 + $0x3d0] sm:$0xff]
          %v6612 = vld [vmem:[#allocation21 + $0x3d8] sm:$0xff]
          %v6613 = vld [vmem:[#allocation21 + $0x3e0] sm:$0xff]
          %v6614 = vld [vmem:[#allocation21 + $0x3e8] sm:$0xff]
          %v6615 = vld [vmem:[#allocation21 + $0x3f0] sm:$0xff]
          %v6616 = vld [vmem:[#allocation21 + $0x3f8] sm:$0xff]
          %6617 = vmatprep.subr.mxu0 %v6490
          %6618 = vmatpush1.msra.mxu0 %v6489
          %6619 = vmatprep.subr.mxu0 %v6498
          %6620 = vmatpush1.msra.mxu0 %v6497
          %6621 = vmatprep.subr.mxu0 %v6506
          %6622 = vmatpush1.msra.mxu0 %v6505
          %6623 = vmatprep.subr.mxu0 %v6514
          %6624 = vmatpush1.msra.mxu0 %v6513
          %6625 = vmatprep.subr.mxu0 %v6522
          %6626 = vmatpush1.msra.mxu0 %v6521
          %6627 = vmatprep.subr.mxu0 %v6530
          %6628 = vmatpush1.msra.mxu0 %v6529
          %6629 = vmatprep.subr.mxu0 %v6538
          %6630 = vmatpush1.msra.mxu0 %v6537
          %6631 = vmatprep.subr.mxu0 %v6546
          %6632 = vmatpush1.msra.mxu0 %v6545
          %6633 = vmatprep.subr.mxu0 %v6554
          %6634 = vmatpush1.msra.mxu0 %v6553
          %6635 = vmatprep.subr.mxu0 %v6562
          %6636 = vmatpush1.msra.mxu0 %v6561
          %6637 = vmatprep.subr.mxu0 %v6570
          %6638 = vmatpush1.msra.mxu0 %v6569
          %6639 = vmatprep.subr.mxu0 %v6578
          %6640 = vmatpush1.msra.mxu0 %v6577
          %6641 = vmatprep.subr.mxu0 %v6586
          %6642 = vmatpush1.msra.mxu0 %v6585
          %6643 = vmatprep.subr.mxu0 %v6594
          %6644 = vmatpush1.msra.mxu0 %v6593
          %6645 = vmatprep.subr.mxu0 %v6602
          %6646 = vmatpush1.msra.mxu0 %v6601
          %6647 = vmatprep.subr.mxu0 %v6610
          %6648 = vmatpush1.msra.mxu0 %v6609
          %6649 = vmatprep.subr.mxu0 0.0
          %6650 = vmatpush1.msra.mxu0 0.0
          %6651 = vmatprep.subr.mxu0 0.0
          %6652 = vmatpush1.msra.mxu0 0.0
          %6653 = vmatprep.subr.mxu0 0.0
          %6654 = vmatpush1.msra.mxu0 0.0
          %6655 = vmatprep.subr.mxu0 0.0
          %6656 = vmatpush1.msra.mxu0 0.0
          %6657 = vmatprep.subr.mxu0 0.0
          %6658 = vmatpush1.msra.mxu0 0.0
          %6659 = vmatprep.subr.mxu0 0.0
          %6660 = vmatpush1.msra.mxu0 0.0
          %6661 = vmatprep.subr.mxu0 0.0
          %6662 = vmatpush1.msra.mxu0 0.0
          %6663 = vmatprep.subr.mxu0 0.0
          %6664 = vmatpush1.msra.mxu0 0.0
          %6665 = vmatprep.subr.mxu0 0.0
          %6666 = vmatpush1.msra.mxu0 0.0
          %6667 = vmatprep.subr.mxu0 0.0
          %6668 = vmatpush1.msra.mxu0 0.0
          %6669 = vmatprep.subr.mxu0 0.0
          %6670 = vmatpush1.msra.mxu0 0.0
          %6671 = vmatprep.subr.mxu0 0.0
          %6672 = vmatpush1.msra.mxu0 0.0
          %6673 = vmatprep.subr.mxu0 0.0
          %6674 = vmatpush1.msra.mxu0 0.0
          %6675 = vmatprep.subr.mxu0 0.0
          %6676 = vmatpush1.msra.mxu0 0.0
          %6677 = vmatprep.subr.mxu0 0.0
          %6678 = vmatpush1.msra.mxu0 0.0
          %6679 = vmatprep.subr.mxu0 0.0
          %6680 = vmatpush1.msra.mxu0 0.0
          %6681 = vmatprep.mubr.f32.mxu0 0.0
          %6682 = vmatmul.mubr.f32.gmra.mrb[0].mxu0 %v6359
          %v6683 = vpop.f32.mrb[0].mxu0
          %v6684 = vadd.f32 0.0, %v6683
          %v6685 = vpop.f32.mrb[0].mxu0
          %v6686 = vadd.f32 0.0, %v6685
          %6687 = vdwg.mxu0
          %6688 = vmatprep.subr.mxu0 %v6492
          %6689 = vmatpush1.msra.mxu0 %v6491
          %6690 = vmatprep.subr.mxu0 %v6500
          %6691 = vmatpush1.msra.mxu0 %v6499
          %6692 = vmatprep.subr.mxu0 %v6508
          %6693 = vmatpush1.msra.mxu0 %v6507
          %6694 = vmatprep.subr.mxu0 %v6516
          %6695 = vmatpush1.msra.mxu0 %v6515
          %6696 = vmatprep.subr.mxu0 %v6524
          %6697 = vmatpush1.msra.mxu0 %v6523
          %6698 = vmatprep.subr.mxu0 %v6532
          %6699 = vmatpush1.msra.mxu0 %v6531
          %6700 = vmatprep.subr.mxu0 %v6540
          %6701 = vmatpush1.msra.mxu0 %v6539
          %6702 = vmatprep.subr.mxu0 %v6548
          %6703 = vmatpush1.msra.mxu0 %v6547
          %6704 = vmatprep.subr.mxu0 %v6556
          %6705 = vmatpush1.msra.mxu0 %v6555
          %6706 = vmatprep.subr.mxu0 %v6564
          %6707 = vmatpush1.msra.mxu0 %v6563
          %6708 = vmatprep.subr.mxu0 %v6572
          %6709 = vmatpush1.msra.mxu0 %v6571
          %6710 = vmatprep.subr.mxu0 %v6580
          %6711 = vmatpush1.msra.mxu0 %v6579
          %6712 = vmatprep.subr.mxu0 %v6588
          %6713 = vmatpush1.msra.mxu0 %v6587
          %6714 = vmatprep.subr.mxu0 %v6596
          %6715 = vmatpush1.msra.mxu0 %v6595
          %6716 = vmatprep.subr.mxu0 %v6604
          %6717 = vmatpush1.msra.mxu0 %v6603
          %6718 = vmatprep.subr.mxu0 %v6612
          %6719 = vmatpush1.msra.mxu0 %v6611
          %6720 = vmatprep.subr.mxu0 0.0
          %6721 = vmatpush1.msra.mxu0 0.0
          %6722 = vmatprep.subr.mxu0 0.0
          %6723 = vmatpush1.msra.mxu0 0.0
          %6724 = vmatprep.subr.mxu0 0.0
          %6725 = vmatpush1.msra.mxu0 0.0
          %6726 = vmatprep.subr.mxu0 0.0
          %6727 = vmatpush1.msra.mxu0 0.0
          %6728 = vmatprep.subr.mxu0 0.0
          %6729 = vmatpush1.msra.mxu0 0.0
          %6730 = vmatprep.subr.mxu0 0.0
          %6731 = vmatpush1.msra.mxu0 0.0
          %6732 = vmatprep.subr.mxu0 0.0
          %6733 = vmatpush1.msra.mxu0 0.0
          %6734 = vmatprep.subr.mxu0 0.0
          %6735 = vmatpush1.msra.mxu0 0.0
          %6736 = vmatprep.subr.mxu0 0.0
          %6737 = vmatpush1.msra.mxu0 0.0
          %6738 = vmatprep.subr.mxu0 0.0
          %6739 = vmatpush1.msra.mxu0 0.0
          %6740 = vmatprep.subr.mxu0 0.0
          %6741 = vmatpush1.msra.mxu0 0.0
          %6742 = vmatprep.subr.mxu0 0.0
          %6743 = vmatpush1.msra.mxu0 0.0
          %6744 = vmatprep.subr.mxu0 0.0
          %6745 = vmatpush1.msra.mxu0 0.0
          %6746 = vmatprep.subr.mxu0 0.0
          %6747 = vmatpush1.msra.mxu0 0.0
          %6748 = vmatprep.subr.mxu0 0.0
          %6749 = vmatpush1.msra.mxu0 0.0
          %6750 = vmatprep.subr.mxu0 0.0
          %6751 = vmatpush1.msra.mxu0 0.0
          %6752 = vmatprep.mubr.f32.mxu0 0.0
          %6753 = vmatmul.mubr.f32.gmra.mrb[0].mxu0 %v6359
          %v6754 = vpop.f32.mrb[0].mxu0
          %v6755 = vadd.f32 0.0, %v6754
          %v6756 = vpop.f32.mrb[0].mxu0
          %v6757 = vadd.f32 0.0, %v6756
          %6758 = vdwg.mxu0
          %6759 = vmatprep.subr.mxu0 %v6494
          %6760 = vmatpush1.msra.mxu0 %v6493
          %6761 = vmatprep.subr.mxu0 %v6502
          %6762 = vmatpush1.msra.mxu0 %v6501
          %6763 = vmatprep.subr.mxu0 %v6510
          %6764 = vmatpush1.msra.mxu0 %v6509
          %6765 = vmatprep.subr.mxu0 %v6518
          %6766 = vmatpush1.msra.mxu0 %v6517
          %6767 = vmatprep.subr.mxu0 %v6526
          %6768 = vmatpush1.msra.mxu0 %v6525
          %6769 = vmatprep.subr.mxu0 %v6534
          %6770 = vmatpush1.msra.mxu0 %v6533
          %6771 = vmatprep.subr.mxu0 %v6542
          %6772 = vmatpush1.msra.mxu0 %v6541
          %6773 = vmatprep.subr.mxu0 %v6550
          %6774 = vmatpush1.msra.mxu0 %v6549
          %6775 = vmatprep.subr.mxu0 %v6558
          %6776 = vmatpush1.msra.mxu0 %v6557
          %6777 = vmatprep.subr.mxu0 %v6566
          %6778 = vmatpush1.msra.mxu0 %v6565
          %6779 = vmatprep.subr.mxu0 %v6574
          %6780 = vmatpush1.msra.mxu0 %v6573
          %6781 = vmatprep.subr.mxu0 %v6582
          %6782 = vmatpush1.msra.mxu0 %v6581
          %6783 = vmatprep.subr.mxu0 %v6590
          %6784 = vmatpush1.msra.mxu0 %v6589
          %6785 = vmatprep.subr.mxu0 %v6598
          %6786 = vmatpush1.msra.mxu0 %v6597
          %6787 = vmatprep.subr.mxu0 %v6606
          %6788 = vmatpush1.msra.mxu0 %v6605
          %6789 = vmatprep.subr.mxu0 %v6614
          %6790 = vmatpush1.msra.mxu0 %v6613
          %6791 = vmatprep.subr.mxu0 0.0
          %6792 = vmatpush1.msra.mxu0 0.0
          %6793 = vmatprep.subr.mxu0 0.0
          %6794 = vmatpush1.msra.mxu0 0.0
          %6795 = vmatprep.subr.mxu0 0.0
          %6796 = vmatpush1.msra.mxu0 0.0
          %6797 = vmatprep.subr.mxu0 0.0
          %6798 = vmatpush1.msra.mxu0 0.0
          %6799 = vmatprep.subr.mxu0 0.0
          %6800 = vmatpush1.msra.mxu0 0.0
          %6801 = vmatprep.subr.mxu0 0.0
          %6802 = vmatpush1.msra.mxu0 0.0
          %6803 = vmatprep.subr.mxu0 0.0
          %6804 = vmatpush1.msra.mxu0 0.0
          %6805 = vmatprep.subr.mxu0 0.0
          %6806 = vmatpush1.msra.mxu0 0.0
          %6807 = vmatprep.subr.mxu0 0.0
          %6808 = vmatpush1.msra.mxu0 0.0
          %6809 = vmatprep.subr.mxu0 0.0
          %6810 = vmatpush1.msra.mxu0 0.0
          %6811 = vmatprep.subr.mxu0 0.0
          %6812 = vmatpush1.msra.mxu0 0.0
          %6813 = vmatprep.subr.mxu0 0.0
          %6814 = vmatpush1.msra.mxu0 0.0
          %6815 = vmatprep.subr.mxu0 0.0
          %6816 = vmatpush1.msra.mxu0 0.0
          %6817 = vmatprep.subr.mxu0 0.0
          %6818 = vmatpush1.msra.mxu0 0.0
          %6819 = vmatprep.subr.mxu0 0.0
          %6820 = vmatpush1.msra.mxu0 0.0
          %6821 = vmatprep.subr.mxu0 0.0
          %6822 = vmatpush1.msra.mxu0 0.0
          %6823 = vmatprep.mubr.f32.mxu0 0.0
          %6824 = vmatmul.mubr.f32.gmra.mrb[0].mxu0 %v6359
          %v6825 = vpop.f32.mrb[0].mxu0
          %v6826 = vadd.f32 0.0, %v6825
          %v6827 = vpop.f32.mrb[0].mxu0
          %v6828 = vadd.f32 0.0, %v6827
          %6829 = vdwg.mxu0
          %6830 = vmatprep.subr.mxu0 %v6496
          %6831 = vmatpush1.msra.mxu0 %v6495
          %6832 = vmatprep.subr.mxu0 %v6504
          %6833 = vmatpush1.msra.mxu0 %v6503
          %6834 = vmatprep.subr.mxu0 %v6512
          %6835 = vmatpush1.msra.mxu0 %v6511
          %6836 = vmatprep.subr.mxu0 %v6520
          %6837 = vmatpush1.msra.mxu0 %v6519
          %6838 = vmatprep.subr.mxu0 %v6528
          %6839 = vmatpush1.msra.mxu0 %v6527
          %6840 = vmatprep.subr.mxu0 %v6536
          %6841 = vmatpush1.msra.mxu0 %v6535
          %6842 = vmatprep.subr.mxu0 %v6544
          %6843 = vmatpush1.msra.mxu0 %v6543
          %6844 = vmatprep.subr.mxu0 %v6552
          %6845 = vmatpush1.msra.mxu0 %v6551
          %6846 = vmatprep.subr.mxu0 %v6560
          %6847 = vmatpush1.msra.mxu0 %v6559
          %6848 = vmatprep.subr.mxu0 %v6568
          %6849 = vmatpush1.msra.mxu0 %v6567
          %6850 = vmatprep.subr.mxu0 %v6576
          %6851 = vmatpush1.msra.mxu0 %v6575
          %6852 = vmatprep.subr.mxu0 %v6584
          %6853 = vmatpush1.msra.mxu0 %v6583
          %6854 = vmatprep.subr.mxu0 %v6592
          %6855 = vmatpush1.msra.mxu0 %v6591
          %6856 = vmatprep.subr.mxu0 %v6600
          %6857 = vmatpush1.msra.mxu0 %v6599
          %6858 = vmatprep.subr.mxu0 %v6608
          %6859 = vmatpush1.msra.mxu0 %v6607
          %6860 = vmatprep.subr.mxu0 %v6616
          %6861 = vmatpush1.msra.mxu0 %v6615
          %6862 = vmatprep.subr.mxu0 0.0
          %6863 = vmatpush1.msra.mxu0 0.0
          %6864 = vmatprep.subr.mxu0 0.0
          %6865 = vmatpush1.msra.mxu0 0.0
          %6866 = vmatprep.subr.mxu0 0.0
          %6867 = vmatpush1.msra.mxu0 0.0
          %6868 = vmatprep.subr.mxu0 0.0
          %6869 = vmatpush1.msra.mxu0 0.0
          %6870 = vmatprep.subr.mxu0 0.0
          %6871 = vmatpush1.msra.mxu0 0.0
          %6872 = vmatprep.subr.mxu0 0.0
          %6873 = vmatpush1.msra.mxu0 0.0
          %6874 = vmatprep.subr.mxu0 0.0
          %6875 = vmatpush1.msra.mxu0 0.0
          %6876 = vmatprep.subr.mxu0 0.0
          %6877 = vmatpush1.msra.mxu0 0.0
          %6878 = vmatprep.subr.mxu0 0.0
          %6879 = vmatpush1.msra.mxu0 0.0
          %6880 = vmatprep.subr.mxu0 0.0
          %6881 = vmatpush1.msra.mxu0 0.0
          %6882 = vmatprep.subr.mxu0 0.0
          %6883 = vmatpush1.msra.mxu0 0.0
          %6884 = vmatprep.subr.mxu0 0.0
          %6885 = vmatpush1.msra.mxu0 0.0
          %6886 = vmatprep.subr.mxu0 0.0
          %6887 = vmatpush1.msra.mxu0 0.0
          %6888 = vmatprep.subr.mxu0 0.0
          %6889 = vmatpush1.msra.mxu0 0.0
          %6890 = vmatprep.subr.mxu0 0.0
          %6891 = vmatpush1.msra.mxu0 0.0
          %6892 = vmatprep.subr.mxu0 0.0
          %6893 = vmatpush1.msra.mxu0 0.0
          %6894 = vmatprep.mubr.f32.mxu0 0.0
          %6895 = vmatmul.mubr.f32.gmra.mrb[0].mxu0 %v6359
          %v6896 = vpop.f32.mrb[0].mxu0
          %v6897 = vadd.f32 0.0, %v6896
          %v6898 = vpop.f32.mrb[0].mxu0
          %v6899 = vadd.f32 0.0, %v6898
          %6900 = vdwg.mxu0
          %6901 = vmatprep.subr.mxu0 %v6362
          %6902 = vmatpush1.msra.mxu0 %v6361
          %6903 = vmatprep.subr.mxu0 %v6370
          %6904 = vmatpush1.msra.mxu0 %v6369
          %6905 = vmatprep.subr.mxu0 %v6378
          %6906 = vmatpush1.msra.mxu0 %v6377
          %6907 = vmatprep.subr.mxu0 %v6386
          %6908 = vmatpush1.msra.mxu0 %v6385
          %6909 = vmatprep.subr.mxu0 %v6394
          %6910 = vmatpush1.msra.mxu0 %v6393
          %6911 = vmatprep.subr.mxu0 %v6402
          %6912 = vmatpush1.msra.mxu0 %v6401
          %6913 = vmatprep.subr.mxu0 %v6410
          %6914 = vmatpush1.msra.mxu0 %v6409
          %6915 = vmatprep.subr.mxu0 %v6418
          %6916 = vmatpush1.msra.mxu0 %v6417
          %6917 = vmatprep.subr.mxu0 %v6426
          %6918 = vmatpush1.msra.mxu0 %v6425
          %6919 = vmatprep.subr.mxu0 %v6434
          %6920 = vmatpush1.msra.mxu0 %v6433
          %6921 = vmatprep.subr.mxu0 %v6442
          %6922 = vmatpush1.msra.mxu0 %v6441
          %6923 = vmatprep.subr.mxu0 %v6450
          %6924 = vmatpush1.msra.mxu0 %v6449
          %6925 = vmatprep.subr.mxu0 %v6458
          %6926 = vmatpush1.msra.mxu0 %v6457
          %6927 = vmatprep.subr.mxu0 %v6466
          %6928 = vmatpush1.msra.mxu0 %v6465
          %6929 = vmatprep.subr.mxu0 %v6474
          %6930 = vmatpush1.msra.mxu0 %v6473
          %6931 = vmatprep.subr.mxu0 %v6482
          %6932 = vmatpush1.msra.mxu0 %v6481
          %6933 = vmatprep.subr.mxu0 0.0
          %6934 = vmatpush1.msra.mxu0 0.0
          %6935 = vmatprep.subr.mxu0 0.0
          %6936 = vmatpush1.msra.mxu0 0.0
          %6937 = vmatprep.subr.mxu0 0.0
          %6938 = vmatpush1.msra.mxu0 0.0
          %6939 = vmatprep.subr.mxu0 0.0
          %6940 = vmatpush1.msra.mxu0 0.0
          %6941 = vmatprep.subr.mxu0 0.0
          %6942 = vmatpush1.msra.mxu0 0.0
          %6943 = vmatprep.subr.mxu0 0.0
          %6944 = vmatpush1.msra.mxu0 0.0
          %6945 = vmatprep.subr.mxu0 0.0
          %6946 = vmatpush1.msra.mxu0 0.0
          %6947 = vmatprep.subr.mxu0 0.0
          %6948 = vmatpush1.msra.mxu0 0.0
          %6949 = vmatprep.subr.mxu0 0.0
          %6950 = vmatpush1.msra.mxu0 0.0
          %6951 = vmatprep.subr.mxu0 0.0
          %6952 = vmatpush1.msra.mxu0 0.0
          %6953 = vmatprep.subr.mxu0 0.0
          %6954 = vmatpush1.msra.mxu0 0.0
          %6955 = vmatprep.subr.mxu0 0.0
          %6956 = vmatpush1.msra.mxu0 0.0
          %6957 = vmatprep.subr.mxu0 0.0
          %6958 = vmatpush1.msra.mxu0 0.0
          %6959 = vmatprep.subr.mxu0 0.0
          %6960 = vmatpush1.msra.mxu0 0.0
          %6961 = vmatprep.subr.mxu0 0.0
          %6962 = vmatpush1.msra.mxu0 0.0
          %6963 = vmatprep.subr.mxu0 0.0
          %6964 = vmatpush1.msra.mxu0 0.0
          %6965 = vmatprep.mubr.f32.mxu0 0.0
          %6966 = vmatmul.mubr.f32.gmra.mrb[0].mxu0 %v6360
          %v6967 = vpop.f32.mrb[0].mxu0
          %v6968 = vadd.f32 %v6684, %v6967
          %v6969 = vpop.f32.mrb[0].mxu0
          %v6970 = vadd.f32 %v6686, %v6969
          %6971 = vdwg.mxu0
          %6972 = vmatprep.subr.mxu0 %v6364
          %6973 = vmatpush1.msra.mxu0 %v6363
          %6974 = vmatprep.subr.mxu0 %v6372
          %6975 = vmatpush1.msra.mxu0 %v6371
          %6976 = vmatprep.subr.mxu0 %v6380
          %6977 = vmatpush1.msra.mxu0 %v6379
          %6978 = vmatprep.subr.mxu0 %v6388
          %6979 = vmatpush1.msra.mxu0 %v6387
          %6980 = vmatprep.subr.mxu0 %v6396
          %6981 = vmatpush1.msra.mxu0 %v6395
          %6982 = vmatprep.subr.mxu0 %v6404
          %6983 = vmatpush1.msra.mxu0 %v6403
          %6984 = vmatprep.subr.mxu0 %v6412
          %6985 = vmatpush1.msra.mxu0 %v6411
          %6986 = vmatprep.subr.mxu0 %v6420
          %6987 = vmatpush1.msra.mxu0 %v6419
          %6988 = vmatprep.subr.mxu0 %v6428
          %6989 = vmatpush1.msra.mxu0 %v6427
          %6990 = vmatprep.subr.mxu0 %v6436
          %6991 = vmatpush1.msra.mxu0 %v6435
          %6992 = vmatprep.subr.mxu0 %v6444
          %6993 = vmatpush1.msra.mxu0 %v6443
          %6994 = vmatprep.subr.mxu0 %v6452
          %6995 = vmatpush1.msra.mxu0 %v6451
          %6996 = vmatprep.subr.mxu0 %v6460
          %6997 = vmatpush1.msra.mxu0 %v6459
          %6998 = vmatprep.subr.mxu0 %v6468
          %6999 = vmatpush1.msra.mxu0 %v6467
          %7000 = vmatprep.subr.mxu0 %v6476
          %7001 = vmatpush1.msra.mxu0 %v6475
          %7002 = vmatprep.subr.mxu0 %v6484
          %7003 = vmatpush1.msra.mxu0 %v6483
          %7004 = vmatprep.subr.mxu0 0.0
          %7005 = vmatpush1.msra.mxu0 0.0
          %7006 = vmatprep.subr.mxu0 0.0
          %7007 = vmatpush1.msra.mxu0 0.0
          %7008 = vmatprep.subr.mxu0 0.0
          %7009 = vmatpush1.msra.mxu0 0.0
          %7010 = vmatprep.subr.mxu0 0.0
          %7011 = vmatpush1.msra.mxu0 0.0
          %7012 = vmatprep.subr.mxu0 0.0
          %7013 = vmatpush1.msra.mxu0 0.0
          %7014 = vmatprep.subr.mxu0 0.0
          %7015 = vmatpush1.msra.mxu0 0.0
          %7016 = vmatprep.subr.mxu0 0.0
          %7017 = vmatpush1.msra.mxu0 0.0
          %7018 = vmatprep.subr.mxu0 0.0
          %7019 = vmatpush1.msra.mxu0 0.0
          %7020 = vmatprep.subr.mxu0 0.0
          %7021 = vmatpush1.msra.mxu0 0.0
          %7022 = vmatprep.subr.mxu0 0.0
          %7023 = vmatpush1.msra.mxu0 0.0
          %7024 = vmatprep.subr.mxu0 0.0
          %7025 = vmatpush1.msra.mxu0 0.0
          %7026 = vmatprep.subr.mxu0 0.0
          %7027 = vmatpush1.msra.mxu0 0.0
          %7028 = vmatprep.subr.mxu0 0.0
          %7029 = vmatpush1.msra.mxu0 0.0
          %7030 = vmatprep.subr.mxu0 0.0
          %7031 = vmatpush1.msra.mxu0 0.0
          %7032 = vmatprep.subr.mxu0 0.0
          %7033 = vmatpush1.msra.mxu0 0.0
          %7034 = vmatprep.subr.mxu0 0.0
          %7035 = vmatpush1.msra.mxu0 0.0
          %7036 = vmatprep.mubr.f32.mxu0 0.0
          %7037 = vmatmul.mubr.f32.gmra.mrb[0].mxu0 %v6360
          %v7038 = vpop.f32.mrb[0].mxu0
          %v7039 = vadd.f32 %v6755, %v7038
          %v7040 = vpop.f32.mrb[0].mxu0
          %v7041 = vadd.f32 %v6757, %v7040
          %7042 = vdwg.mxu0
          %7043 = vmatprep.subr.mxu0 %v6366
          %7044 = vmatpush1.msra.mxu0 %v6365
          %7045 = vmatprep.subr.mxu0 %v6374
          %7046 = vmatpush1.msra.mxu0 %v6373
          %7047 = vmatprep.subr.mxu0 %v6382
          %7048 = vmatpush1.msra.mxu0 %v6381
          %7049 = vmatprep.subr.mxu0 %v6390
          %7050 = vmatpush1.msra.mxu0 %v6389
          %7051 = vmatprep.subr.mxu0 %v6398
          %7052 = vmatpush1.msra.mxu0 %v6397
          %7053 = vmatprep.subr.mxu0 %v6406
          %7054 = vmatpush1.msra.mxu0 %v6405
          %7055 = vmatprep.subr.mxu0 %v6414
          %7056 = vmatpush1.msra.mxu0 %v6413
          %7057 = vmatprep.subr.mxu0 %v6422
          %7058 = vmatpush1.msra.mxu0 %v6421
          %7059 = vmatprep.subr.mxu0 %v6430
          %7060 = vmatpush1.msra.mxu0 %v6429
          %7061 = vmatprep.subr.mxu0 %v6438
          %7062 = vmatpush1.msra.mxu0 %v6437
          %7063 = vmatprep.subr.mxu0 %v6446
          %7064 = vmatpush1.msra.mxu0 %v6445
          %7065 = vmatprep.subr.mxu0 %v6454
          %7066 = vmatpush1.msra.mxu0 %v6453
          %7067 = vmatprep.subr.mxu0 %v6462
          %7068 = vmatpush1.msra.mxu0 %v6461
          %7069 = vmatprep.subr.mxu0 %v6470
          %7070 = vmatpush1.msra.mxu0 %v6469
          %7071 = vmatprep.subr.mxu0 %v6478
          %7072 = vmatpush1.msra.mxu0 %v6477
          %7073 = vmatprep.subr.mxu0 %v6486
          %7074 = vmatpush1.msra.mxu0 %v6485
          %7075 = vmatprep.subr.mxu0 0.0
          %7076 = vmatpush1.msra.mxu0 0.0
          %7077 = vmatprep.subr.mxu0 0.0
          %7078 = vmatpush1.msra.mxu0 0.0
          %7079 = vmatprep.subr.mxu0 0.0
          %7080 = vmatpush1.msra.mxu0 0.0
          %7081 = vmatprep.subr.mxu0 0.0
          %7082 = vmatpush1.msra.mxu0 0.0
          %7083 = vmatprep.subr.mxu0 0.0
          %7084 = vmatpush1.msra.mxu0 0.0
          %7085 = vmatprep.subr.mxu0 0.0
          %7086 = vmatpush1.msra.mxu0 0.0
          %7087 = vmatprep.subr.mxu0 0.0
          %7088 = vmatpush1.msra.mxu0 0.0
          %7089 = vmatprep.subr.mxu0 0.0
          %7090 = vmatpush1.msra.mxu0 0.0
          %7091 = vmatprep.subr.mxu0 0.0
          %7092 = vmatpush1.msra.mxu0 0.0
          %7093 = vmatprep.subr.mxu0 0.0
          %7094 = vmatpush1.msra.mxu0 0.0
          %7095 = vmatprep.subr.mxu0 0.0
          %7096 = vmatpush1.msra.mxu0 0.0
          %7097 = vmatprep.subr.mxu0 0.0
          %7098 = vmatpush1.msra.mxu0 0.0
          %7099 = vmatprep.subr.mxu0 0.0
          %7100 = vmatpush1.msra.mxu0 0.0
          %7101 = vmatprep.subr.mxu0 0.0
          %7102 = vmatpush1.msra.mxu0 0.0
          %7103 = vmatprep.subr.mxu0 0.0
          %7104 = vmatpush1.msra.mxu0 0.0
          %7105 = vmatprep.subr.mxu0 0.0
          %7106 = vmatpush1.msra.mxu0 0.0
          %7107 = vmatprep.mubr.f32.mxu0 0.0
          %7108 = vmatmul.mubr.f32.gmra.mrb[0].mxu0 %v6360
          %v7109 = vpop.f32.mrb[0].mxu0
          %v7110 = vadd.f32 %v6826, %v7109
          %v7111 = vpop.f32.mrb[0].mxu0
          %v7112 = vadd.f32 %v6828, %v7111
          %7113 = vdwg.mxu0
          %7114 = vmatprep.subr.mxu0 %v6368
          %7115 = vmatpush1.msra.mxu0 %v6367
          %7116 = vmatprep.subr.mxu0 %v6376
          %7117 = vmatpush1.msra.mxu0 %v6375
          %7118 = vmatprep.subr.mxu0 %v6384
          %7119 = vmatpush1.msra.mxu0 %v6383
          %7120 = vmatprep.subr.mxu0 %v6392
          %7121 = vmatpush1.msra.mxu0 %v6391
          %7122 = vmatprep.subr.mxu0 %v6400
          %7123 = vmatpush1.msra.mxu0 %v6399
          %7124 = vmatprep.subr.mxu0 %v6408
          %7125 = vmatpush1.msra.mxu0 %v6407
          %7126 = vmatprep.subr.mxu0 %v6416
          %7127 = vmatpush1.msra.mxu0 %v6415
          %7128 = vmatprep.subr.mxu0 %v6424
          %7129 = vmatpush1.msra.mxu0 %v6423
          %7130 = vmatprep.subr.mxu0 %v6432
          %7131 = vmatpush1.msra.mxu0 %v6431
          %7132 = vmatprep.subr.mxu0 %v6440
          %7133 = vmatpush1.msra.mxu0 %v6439
          %7134 = vmatprep.subr.mxu0 %v6448
          %7135 = vmatpush1.msra.mxu0 %v6447
          %7136 = vmatprep.subr.mxu0 %v6456
          %7137 = vmatpush1.msra.mxu0 %v6455
          %7138 = vmatprep.subr.mxu0 %v6464
          %7139 = vmatpush1.msra.mxu0 %v6463
          %7140 = vmatprep.subr.mxu0 %v6472
          %7141 = vmatpush1.msra.mxu0 %v6471
          %7142 = vmatprep.subr.mxu0 %v6480
          %7143 = vmatpush1.msra.mxu0 %v6479
          %7144 = vmatprep.subr.mxu0 %v6488
          %7145 = vmatpush1.msra.mxu0 %v6487
          %7146 = vmatprep.subr.mxu0 0.0
          %7147 = vmatpush1.msra.mxu0 0.0
          %7148 = vmatprep.subr.mxu0 0.0
          %7149 = vmatpush1.msra.mxu0 0.0
          %7150 = vmatprep.subr.mxu0 0.0
          %7151 = vmatpush1.msra.mxu0 0.0
          %7152 = vmatprep.subr.mxu0 0.0
          %7153 = vmatpush1.msra.mxu0 0.0
          %7154 = vmatprep.subr.mxu0 0.0
          %7155 = vmatpush1.msra.mxu0 0.0
          %7156 = vmatprep.subr.mxu0 0.0
          %7157 = vmatpush1.msra.mxu0 0.0
          %7158 = vmatprep.subr.mxu0 0.0
          %7159 = vmatpush1.msra.mxu0 0.0
          %7160 = vmatprep.subr.mxu0 0.0
          %7161 = vmatpush1.msra.mxu0 0.0
          %7162 = vmatprep.subr.mxu0 0.0
          %7163 = vmatpush1.msra.mxu0 0.0
          %7164 = vmatprep.subr.mxu0 0.0
          %7165 = vmatpush1.msra.mxu0 0.0
          %7166 = vmatprep.subr.mxu0 0.0
          %7167 = vmatpush1.msra.mxu0 0.0
          %7168 = vmatprep.subr.mxu0 0.0
          %7169 = vmatpush1.msra.mxu0 0.0
          %7170 = vmatprep.subr.mxu0 0.0
          %7171 = vmatpush1.msra.mxu0 0.0
          %7172 = vmatprep.subr.mxu0 0.0
          %7173 = vmatpush1.msra.mxu0 0.0
          %7174 = vmatprep.subr.mxu0 0.0
          %7175 = vmatpush1.msra.mxu0 0.0
          %7176 = vmatprep.subr.mxu0 0.0
          %7177 = vmatpush1.msra.mxu0 0.0
          %7178 = vmatprep.mubr.f32.mxu0 0.0
          %7179 = vmatmul.mubr.f32.gmra.mrb[0].mxu0 %v6360
          %v7180 = vpop.f32.mrb[0].mxu0
          %v7181 = vadd.f32 %v6897, %v7180
          %v7182 = vpop.f32.mrb[0].mxu0
          %v7183 = vadd.f32 %v6899, %v7182
          %7184 = vdwg.mxu0
          %v7185 = vld [vmem:[#allocation22] sm:$0xff]
          %v7187 = vlaneseq
          %v7188 = vshrl.u32 %v7187, 7
          %v7189 = vsub.s32 0, %v7188
          %v7190 = vrot.slane %v7185, %v7189
          %v7191 = vlaneseq
          %v7192 = vshrl.u32 %v7191, 7
          %v7193 = vsub.s32 1, %v7192
          %v7194 = vrot.slane %v7185, %v7193
          %v7195 = vlaneseq
          %v7196 = vshrl.u32 %v7195, 7
          %v7197 = vsub.s32 2, %v7196
          %v7198 = vrot.slane %v7185, %v7197
          %v7199 = vlaneseq
          %v7200 = vshrl.u32 %v7199, 7
          %v7201 = vsub.s32 3, %v7200
          %v7202 = vrot.slane %v7185, %v7201
          %v7203 = vlaneseq
          %v7204 = vshrl.u32 %v7203, 7
          %v7205 = vsub.s32 4, %v7204
          %v7206 = vrot.slane %v7185, %v7205
          %v7207 = vlaneseq
          %v7208 = vshrl.u32 %v7207, 7
          %v7209 = vsub.s32 5, %v7208
          %v7210 = vrot.slane %v7185, %v7209
          %v7211 = vlaneseq
          %v7212 = vshrl.u32 %v7211, 7
          %v7213 = vsub.s32 6, %v7212
          %v7214 = vrot.slane %v7185, %v7213
          %v7215 = vlaneseq
          %v7216 = vshrl.u32 %v7215, 7
          %v7217 = vsub.s32 7, %v7216
          %v7218 = vrot.slane %v7185, %v7217
          %v7227 = vadd.f32 %v6968, %v7190
          %v7228 = vadd.f32 %v6970, %v7194
          %v7229 = vadd.f32 %v7039, %v7198
          %v7230 = vadd.f32 %v7041, %v7202
          %v7231 = vadd.f32 %v7110, %v7206
          %v7232 = vadd.f32 %v7112, %v7210
          %v7233 = vadd.f32 %v7181, %v7214
          %v7234 = vadd.f32 %v7183, %v7218
          %v7235 = vmax.f32 %v7227, 0.0
          %v7236 = vmax.f32 %v7228, 0.0
          %v7237 = vmax.f32 %v7229, 0.0
          %v7238 = vmax.f32 %v7230, 0.0
          %v7239 = vmax.f32 %v7231, 0.0
          %v7240 = vmax.f32 %v7232, 0.0
          %v7241 = vmax.f32 %v7233, 0.0
          %v7242 = vmax.f32 %v7234, 0.0
          %v7243 = vld [vmem:[#allocation24] sm:$0xff]
          %v7244 = vld [vmem:[#allocation24 + $0x8] sm:$0xff]
          %v7245 = vld [vmem:[#allocation24 + $0x10] sm:$0xff]
          %v7246 = vld [vmem:[#allocation24 + $0x18] sm:$0xff]
          %v7247 = vld [vmem:[#allocation24 + $0x20] sm:$0xff]
          %v7248 = vld [vmem:[#allocation24 + $0x28] sm:$0xff]
          %v7249 = vld [vmem:[#allocation24 + $0x30] sm:$0xff]
          %v7250 = vld [vmem:[#allocation24 + $0x38] sm:$0xff]
          %v7251 = vld [vmem:[#allocation24 + $0x40] sm:$0xff]
          %v7252 = vld [vmem:[#allocation24 + $0x48] sm:$0xff]
          %v7253 = vld [vmem:[#allocation24 + $0x50] sm:$0xff]
          %v7254 = vld [vmem:[#allocation24 + $0x58] sm:$0xff]
          %v7255 = vld [vmem:[#allocation24 + $0x60] sm:$0xff]
          %v7256 = vld [vmem:[#allocation24 + $0x68] sm:$0xff]
          %v7257 = vld [vmem:[#allocation24 + $0x70] sm:$0xff]
          %v7258 = vld [vmem:[#allocation24 + $0x78] sm:$0xff]
          %v7259 = vld [vmem:[#allocation24 + $0x80] sm:$0xff]
          %v7260 = vld [vmem:[#allocation24 + $0x88] sm:$0xff]
          %v7261 = vld [vmem:[#allocation24 + $0x90] sm:$0xff]
          %v7262 = vld [vmem:[#allocation24 + $0x98] sm:$0xff]
          %v7263 = vld [vmem:[#allocation24 + $0xa0] sm:$0xff]
          %v7264 = vld [vmem:[#allocation24 + $0xa8] sm:$0xff]
          %v7265 = vld [vmem:[#allocation24 + $0xb0] sm:$0xff]
          %v7266 = vld [vmem:[#allocation24 + $0xb8] sm:$0xff]
          %v7267 = vld [vmem:[#allocation24 + $0xc0] sm:$0xff]
          %v7268 = vld [vmem:[#allocation24 + $0xc8] sm:$0xff]
          %v7269 = vld [vmem:[#allocation24 + $0xd0] sm:$0xff]
          %v7270 = vld [vmem:[#allocation24 + $0xd8] sm:$0xff]
          %v7271 = vld [vmem:[#allocation24 + $0xe0] sm:$0xff]
          %v7272 = vld [vmem:[#allocation24 + $0xe8] sm:$0xff]
          %v7273 = vld [vmem:[#allocation24 + $0xf0] sm:$0xff]
          %v7274 = vld [vmem:[#allocation24 + $0xf8] sm:$0xff]
          %v7275 = vld [vmem:[#allocation24 + $0x100] sm:$0xff]
          %v7276 = vld [vmem:[#allocation24 + $0x108] sm:$0xff]
          %v7277 = vld [vmem:[#allocation24 + $0x110] sm:$0xff]
          %v7278 = vld [vmem:[#allocation24 + $0x118] sm:$0xff]
          %v7279 = vld [vmem:[#allocation24 + $0x120] sm:$0xff]
          %v7280 = vld [vmem:[#allocation24 + $0x128] sm:$0xff]
          %v7281 = vld [vmem:[#allocation24 + $0x130] sm:$0xff]
          %v7282 = vld [vmem:[#allocation24 + $0x138] sm:$0xff]
          %v7283 = vld [vmem:[#allocation24 + $0x140] sm:$0xff]
          %v7284 = vld [vmem:[#allocation24 + $0x148] sm:$0xff]
          %v7285 = vld [vmem:[#allocation24 + $0x150] sm:$0xff]
          %v7286 = vld [vmem:[#allocation24 + $0x158] sm:$0xff]
          %v7287 = vld [vmem:[#allocation24 + $0x160] sm:$0xff]
          %v7288 = vld [vmem:[#allocation24 + $0x168] sm:$0xff]
          %v7289 = vld [vmem:[#allocation24 + $0x170] sm:$0xff]
          %v7290 = vld [vmem:[#allocation24 + $0x178] sm:$0xff]
          %v7291 = vld [vmem:[#allocation24 + $0x180] sm:$0xff]
          %v7292 = vld [vmem:[#allocation24 + $0x188] sm:$0xff]
          %v7293 = vld [vmem:[#allocation24 + $0x190] sm:$0xff]
          %v7294 = vld [vmem:[#allocation24 + $0x198] sm:$0xff]
          %v7295 = vld [vmem:[#allocation24 + $0x1a0] sm:$0xff]
          %v7296 = vld [vmem:[#allocation24 + $0x1a8] sm:$0xff]
          %v7297 = vld [vmem:[#allocation24 + $0x1b0] sm:$0xff]
          %v7298 = vld [vmem:[#allocation24 + $0x1b8] sm:$0xff]
          %v7299 = vld [vmem:[#allocation24 + $0x1c0] sm:$0xff]
          %v7300 = vld [vmem:[#allocation24 + $0x1c8] sm:$0xff]
          %v7301 = vld [vmem:[#allocation24 + $0x1d0] sm:$0xff]
          %v7302 = vld [vmem:[#allocation24 + $0x1d8] sm:$0xff]
          %v7303 = vld [vmem:[#allocation24 + $0x1e0] sm:$0xff]
          %v7304 = vld [vmem:[#allocation24 + $0x1e8] sm:$0xff]
          %v7305 = vld [vmem:[#allocation24 + $0x1f0] sm:$0xff]
          %v7306 = vld [vmem:[#allocation24 + $0x1f8] sm:$0xff]
          %v7307 = vld [vmem:[#allocation24 + $0x200] sm:$0xff]
          %v7308 = vld [vmem:[#allocation24 + $0x208] sm:$0xff]
          %v7309 = vld [vmem:[#allocation24 + $0x210] sm:$0xff]
          %v7310 = vld [vmem:[#allocation24 + $0x218] sm:$0xff]
          %v7311 = vld [vmem:[#allocation24 + $0x220] sm:$0xff]
          %v7312 = vld [vmem:[#allocation24 + $0x228] sm:$0xff]
          %v7313 = vld [vmem:[#allocation24 + $0x230] sm:$0xff]
          %v7314 = vld [vmem:[#allocation24 + $0x238] sm:$0xff]
          %v7315 = vld [vmem:[#allocation24 + $0x240] sm:$0xff]
          %v7316 = vld [vmem:[#allocation24 + $0x248] sm:$0xff]
          %v7317 = vld [vmem:[#allocation24 + $0x250] sm:$0xff]
          %v7318 = vld [vmem:[#allocation24 + $0x258] sm:$0xff]
          %v7319 = vld [vmem:[#allocation24 + $0x260] sm:$0xff]
          %v7320 = vld [vmem:[#allocation24 + $0x268] sm:$0xff]
          %v7321 = vld [vmem:[#allocation24 + $0x270] sm:$0xff]
          %v7322 = vld [vmem:[#allocation24 + $0x278] sm:$0xff]
          %v7323 = vld [vmem:[#allocation24 + $0x280] sm:$0xff]
          %v7324 = vld [vmem:[#allocation24 + $0x288] sm:$0xff]
          %v7325 = vld [vmem:[#allocation24 + $0x290] sm:$0xff]
          %v7326 = vld [vmem:[#allocation24 + $0x298] sm:$0xff]
          %v7327 = vld [vmem:[#allocation24 + $0x2a0] sm:$0xff]
          %v7328 = vld [vmem:[#allocation24 + $0x2a8] sm:$0xff]
          %v7329 = vld [vmem:[#allocation24 + $0x2b0] sm:$0xff]
          %v7330 = vld [vmem:[#allocation24 + $0x2b8] sm:$0xff]
          %v7331 = vld [vmem:[#allocation24 + $0x2c0] sm:$0xff]
          %v7332 = vld [vmem:[#allocation24 + $0x2c8] sm:$0xff]
          %v7333 = vld [vmem:[#allocation24 + $0x2d0] sm:$0xff]
          %v7334 = vld [vmem:[#allocation24 + $0x2d8] sm:$0xff]
          %v7335 = vld [vmem:[#allocation24 + $0x2e0] sm:$0xff]
          %v7336 = vld [vmem:[#allocation24 + $0x2e8] sm:$0xff]
          %v7337 = vld [vmem:[#allocation24 + $0x2f0] sm:$0xff]
          %v7338 = vld [vmem:[#allocation24 + $0x2f8] sm:$0xff]
          %v7339 = vld [vmem:[#allocation24 + $0x300] sm:$0xff]
          %v7340 = vld [vmem:[#allocation24 + $0x308] sm:$0xff]
          %v7341 = vld [vmem:[#allocation24 + $0x310] sm:$0xff]
          %v7342 = vld [vmem:[#allocation24 + $0x318] sm:$0xff]
          %v7343 = vld [vmem:[#allocation24 + $0x320] sm:$0xff]
          %v7344 = vld [vmem:[#allocation24 + $0x328] sm:$0xff]
          %v7345 = vld [vmem:[#allocation24 + $0x330] sm:$0xff]
          %v7346 = vld [vmem:[#allocation24 + $0x338] sm:$0xff]
          %v7347 = vld [vmem:[#allocation24 + $0x340] sm:$0xff]
          %v7348 = vld [vmem:[#allocation24 + $0x348] sm:$0xff]
          %v7349 = vld [vmem:[#allocation24 + $0x350] sm:$0xff]
          %v7350 = vld [vmem:[#allocation24 + $0x358] sm:$0xff]
          %v7351 = vld [vmem:[#allocation24 + $0x360] sm:$0xff]
          %v7352 = vld [vmem:[#allocation24 + $0x368] sm:$0xff]
          %v7353 = vld [vmem:[#allocation24 + $0x370] sm:$0xff]
          %v7354 = vld [vmem:[#allocation24 + $0x378] sm:$0xff]
          %v7355 = vld [vmem:[#allocation24 + $0x380] sm:$0xff]
          %v7356 = vld [vmem:[#allocation24 + $0x388] sm:$0xff]
          %v7357 = vld [vmem:[#allocation24 + $0x390] sm:$0xff]
          %v7358 = vld [vmem:[#allocation24 + $0x398] sm:$0xff]
          %v7359 = vld [vmem:[#allocation24 + $0x3a0] sm:$0xff]
          %v7360 = vld [vmem:[#allocation24 + $0x3a8] sm:$0xff]
          %v7361 = vld [vmem:[#allocation24 + $0x3b0] sm:$0xff]
          %v7362 = vld [vmem:[#allocation24 + $0x3b8] sm:$0xff]
          %v7363 = vld [vmem:[#allocation24 + $0x3c0] sm:$0xff]
          %v7364 = vld [vmem:[#allocation24 + $0x3c8] sm:$0xff]
          %v7365 = vld [vmem:[#allocation24 + $0x3d0] sm:$0xff]
          %v7366 = vld [vmem:[#allocation24 + $0x3d8] sm:$0xff]
          %v7367 = vld [vmem:[#allocation24 + $0x3e0] sm:$0xff]
          %v7368 = vld [vmem:[#allocation24 + $0x3e8] sm:$0xff]
          %v7369 = vld [vmem:[#allocation24 + $0x3f0] sm:$0xff]
          %v7370 = vld [vmem:[#allocation24 + $0x3f8] sm:$0xff]
          %v7371 = vld [vmem:[#allocation24 + $0x400] sm:$0xff]
          %v7372 = vld [vmem:[#allocation24 + $0x408] sm:$0xff]
          %v7373 = vld [vmem:[#allocation24 + $0x410] sm:$0xff]
          %v7374 = vld [vmem:[#allocation24 + $0x418] sm:$0xff]
          %v7375 = vld [vmem:[#allocation24 + $0x420] sm:$0xff]
          %v7376 = vld [vmem:[#allocation24 + $0x428] sm:$0xff]
          %v7377 = vld [vmem:[#allocation24 + $0x430] sm:$0xff]
          %v7378 = vld [vmem:[#allocation24 + $0x438] sm:$0xff]
          %v7379 = vld [vmem:[#allocation24 + $0x440] sm:$0xff]
          %v7380 = vld [vmem:[#allocation24 + $0x448] sm:$0xff]
          %v7381 = vld [vmem:[#allocation24 + $0x450] sm:$0xff]
          %v7382 = vld [vmem:[#allocation24 + $0x458] sm:$0xff]
          %v7383 = vld [vmem:[#allocation24 + $0x460] sm:$0xff]
          %v7384 = vld [vmem:[#allocation24 + $0x468] sm:$0xff]
          %v7385 = vld [vmem:[#allocation24 + $0x470] sm:$0xff]
          %v7386 = vld [vmem:[#allocation24 + $0x478] sm:$0xff]
          %v7387 = vld [vmem:[#allocation24 + $0x480] sm:$0xff]
          %v7388 = vld [vmem:[#allocation24 + $0x488] sm:$0xff]
          %v7389 = vld [vmem:[#allocation24 + $0x490] sm:$0xff]
          %v7390 = vld [vmem:[#allocation24 + $0x498] sm:$0xff]
          %v7391 = vld [vmem:[#allocation24 + $0x4a0] sm:$0xff]
          %v7392 = vld [vmem:[#allocation24 + $0x4a8] sm:$0xff]
          %v7393 = vld [vmem:[#allocation24 + $0x4b0] sm:$0xff]
          %v7394 = vld [vmem:[#allocation24 + $0x4b8] sm:$0xff]
          %v7395 = vld [vmem:[#allocation24 + $0x4c0] sm:$0xff]
          %v7396 = vld [vmem:[#allocation24 + $0x4c8] sm:$0xff]
          %v7397 = vld [vmem:[#allocation24 + $0x4d0] sm:$0xff]
          %v7398 = vld [vmem:[#allocation24 + $0x4d8] sm:$0xff]
          %v7399 = vld [vmem:[#allocation24 + $0x4e0] sm:$0xff]
          %v7400 = vld [vmem:[#allocation24 + $0x4e8] sm:$0xff]
          %v7401 = vld [vmem:[#allocation24 + $0x4f0] sm:$0xff]
          %v7402 = vld [vmem:[#allocation24 + $0x4f8] sm:$0xff]
          %v7403 = vld [vmem:[#allocation24 + $0x500] sm:$0xff]
          %v7404 = vld [vmem:[#allocation24 + $0x508] sm:$0xff]
          %v7405 = vld [vmem:[#allocation24 + $0x510] sm:$0xff]
          %v7406 = vld [vmem:[#allocation24 + $0x518] sm:$0xff]
          %v7407 = vld [vmem:[#allocation24 + $0x520] sm:$0xff]
          %v7408 = vld [vmem:[#allocation24 + $0x528] sm:$0xff]
          %v7409 = vld [vmem:[#allocation24 + $0x530] sm:$0xff]
          %v7410 = vld [vmem:[#allocation24 + $0x538] sm:$0xff]
          %v7411 = vld [vmem:[#allocation24 + $0x540] sm:$0xff]
          %v7412 = vld [vmem:[#allocation24 + $0x548] sm:$0xff]
          %v7413 = vld [vmem:[#allocation24 + $0x550] sm:$0xff]
          %v7414 = vld [vmem:[#allocation24 + $0x558] sm:$0xff]
          %v7415 = vld [vmem:[#allocation24 + $0x560] sm:$0xff]
          %v7416 = vld [vmem:[#allocation24 + $0x568] sm:$0xff]
          %v7417 = vld [vmem:[#allocation24 + $0x570] sm:$0xff]
          %v7418 = vld [vmem:[#allocation24 + $0x578] sm:$0xff]
          %v7419 = vld [vmem:[#allocation24 + $0x580] sm:$0xff]
          %v7420 = vld [vmem:[#allocation24 + $0x588] sm:$0xff]
          %v7421 = vld [vmem:[#allocation24 + $0x590] sm:$0xff]
          %v7422 = vld [vmem:[#allocation24 + $0x598] sm:$0xff]
          %v7423 = vld [vmem:[#allocation24 + $0x5a0] sm:$0xff]
          %v7424 = vld [vmem:[#allocation24 + $0x5a8] sm:$0xff]
          %v7425 = vld [vmem:[#allocation24 + $0x5b0] sm:$0xff]
          %v7426 = vld [vmem:[#allocation24 + $0x5b8] sm:$0xff]
          %v7427 = vld [vmem:[#allocation24 + $0x5c0] sm:$0xff]
          %v7428 = vld [vmem:[#allocation24 + $0x5c8] sm:$0xff]
          %v7429 = vld [vmem:[#allocation24 + $0x5d0] sm:$0xff]
          %v7430 = vld [vmem:[#allocation24 + $0x5d8] sm:$0xff]
          %v7431 = vld [vmem:[#allocation24 + $0x5e0] sm:$0xff]
          %v7432 = vld [vmem:[#allocation24 + $0x5e8] sm:$0xff]
          %v7433 = vld [vmem:[#allocation24 + $0x5f0] sm:$0xff]
          %v7434 = vld [vmem:[#allocation24 + $0x5f8] sm:$0xff]
          %v7435 = vld [vmem:[#allocation24 + $0x600] sm:$0xff]
          %v7436 = vld [vmem:[#allocation24 + $0x608] sm:$0xff]
          %v7437 = vld [vmem:[#allocation24 + $0x610] sm:$0xff]
          %v7438 = vld [vmem:[#allocation24 + $0x618] sm:$0xff]
          %v7439 = vld [vmem:[#allocation24 + $0x620] sm:$0xff]
          %v7440 = vld [vmem:[#allocation24 + $0x628] sm:$0xff]
          %v7441 = vld [vmem:[#allocation24 + $0x630] sm:$0xff]
          %v7442 = vld [vmem:[#allocation24 + $0x638] sm:$0xff]
          %v7443 = vld [vmem:[#allocation24 + $0x640] sm:$0xff]
          %v7444 = vld [vmem:[#allocation24 + $0x648] sm:$0xff]
          %v7445 = vld [vmem:[#allocation24 + $0x650] sm:$0xff]
          %v7446 = vld [vmem:[#allocation24 + $0x658] sm:$0xff]
          %v7447 = vld [vmem:[#allocation24 + $0x660] sm:$0xff]
          %v7448 = vld [vmem:[#allocation24 + $0x668] sm:$0xff]
          %v7449 = vld [vmem:[#allocation24 + $0x670] sm:$0xff]
          %v7450 = vld [vmem:[#allocation24 + $0x678] sm:$0xff]
          %v7451 = vld [vmem:[#allocation24 + $0x680] sm:$0xff]
          %v7452 = vld [vmem:[#allocation24 + $0x688] sm:$0xff]
          %v7453 = vld [vmem:[#allocation24 + $0x690] sm:$0xff]
          %v7454 = vld [vmem:[#allocation24 + $0x698] sm:$0xff]
          %v7455 = vld [vmem:[#allocation24 + $0x6a0] sm:$0xff]
          %v7456 = vld [vmem:[#allocation24 + $0x6a8] sm:$0xff]
          %v7457 = vld [vmem:[#allocation24 + $0x6b0] sm:$0xff]
          %v7458 = vld [vmem:[#allocation24 + $0x6b8] sm:$0xff]
          %v7459 = vld [vmem:[#allocation24 + $0x6c0] sm:$0xff]
          %v7460 = vld [vmem:[#allocation24 + $0x6c8] sm:$0xff]
          %v7461 = vld [vmem:[#allocation24 + $0x6d0] sm:$0xff]
          %v7462 = vld [vmem:[#allocation24 + $0x6d8] sm:$0xff]
          %v7463 = vld [vmem:[#allocation24 + $0x6e0] sm:$0xff]
          %v7464 = vld [vmem:[#allocation24 + $0x6e8] sm:$0xff]
          %v7465 = vld [vmem:[#allocation24 + $0x6f0] sm:$0xff]
          %v7466 = vld [vmem:[#allocation24 + $0x6f8] sm:$0xff]
          %v7467 = vld [vmem:[#allocation24 + $0x700] sm:$0xff]
          %v7468 = vld [vmem:[#allocation24 + $0x708] sm:$0xff]
          %v7469 = vld [vmem:[#allocation24 + $0x710] sm:$0xff]
          %v7470 = vld [vmem:[#allocation24 + $0x718] sm:$0xff]
          %v7471 = vld [vmem:[#allocation24 + $0x720] sm:$0xff]
          %v7472 = vld [vmem:[#allocation24 + $0x728] sm:$0xff]
          %v7473 = vld [vmem:[#allocation24 + $0x730] sm:$0xff]
          %v7474 = vld [vmem:[#allocation24 + $0x738] sm:$0xff]
          %v7475 = vld [vmem:[#allocation24 + $0x740] sm:$0xff]
          %v7476 = vld [vmem:[#allocation24 + $0x748] sm:$0xff]
          %v7477 = vld [vmem:[#allocation24 + $0x750] sm:$0xff]
          %v7478 = vld [vmem:[#allocation24 + $0x758] sm:$0xff]
          %v7479 = vld [vmem:[#allocation24 + $0x760] sm:$0xff]
          %v7480 = vld [vmem:[#allocation24 + $0x768] sm:$0xff]
          %v7481 = vld [vmem:[#allocation24 + $0x770] sm:$0xff]
          %v7482 = vld [vmem:[#allocation24 + $0x778] sm:$0xff]
          %v7483 = vld [vmem:[#allocation24 + $0x780] sm:$0xff]
          %v7484 = vld [vmem:[#allocation24 + $0x788] sm:$0xff]
          %v7485 = vld [vmem:[#allocation24 + $0x790] sm:$0xff]
          %v7486 = vld [vmem:[#allocation24 + $0x798] sm:$0xff]
          %v7487 = vld [vmem:[#allocation24 + $0x7a0] sm:$0xff]
          %v7488 = vld [vmem:[#allocation24 + $0x7a8] sm:$0xff]
          %v7489 = vld [vmem:[#allocation24 + $0x7b0] sm:$0xff]
          %v7490 = vld [vmem:[#allocation24 + $0x7b8] sm:$0xff]
          %v7491 = vld [vmem:[#allocation24 + $0x7c0] sm:$0xff]
          %v7492 = vld [vmem:[#allocation24 + $0x7c8] sm:$0xff]
          %v7493 = vld [vmem:[#allocation24 + $0x7d0] sm:$0xff]
          %v7494 = vld [vmem:[#allocation24 + $0x7d8] sm:$0xff]
          %v7495 = vld [vmem:[#allocation24 + $0x7e0] sm:$0xff]
          %v7496 = vld [vmem:[#allocation24 + $0x7e8] sm:$0xff]
          %v7497 = vld [vmem:[#allocation24 + $0x7f0] sm:$0xff]
          %v7498 = vld [vmem:[#allocation24 + $0x7f8] sm:$0xff]
          %v7499 = vld [vmem:[#allocation25] sm:$0x3]
          %v7501 = vlaneseq
          %v7502 = vshrl.u32 %v7501, 7
          %v7503 = vsub.s32 0, %v7502
          %v7504 = vrot.slane %v7499, %v7503
          %v7505 = vlaneseq
          %v7506 = vshrl.u32 %v7505, 7
          %v7507 = vsub.s32 1, %v7506
          %v7508 = vrot.slane %v7499, %v7507
          %7511 = vmatprep.subr.mxu0 %v7244
          %7512 = vmatpush1.msra.mxu0 %v7243
          %7513 = vmatprep.subr.mxu0 %v7246
          %7514 = vmatpush1.msra.mxu0 %v7245
          %7515 = vmatprep.subr.mxu0 %v7248
          %7516 = vmatpush1.msra.mxu0 %v7247
          %7517 = vmatprep.subr.mxu0 %v7250
          %7518 = vmatpush1.msra.mxu0 %v7249
          %7519 = vmatprep.subr.mxu0 %v7252
          %7520 = vmatpush1.msra.mxu0 %v7251
          %7521 = vmatprep.subr.mxu0 %v7254
          %7522 = vmatpush1.msra.mxu0 %v7253
          %7523 = vmatprep.subr.mxu0 %v7256
          %7524 = vmatpush1.msra.mxu0 %v7255
          %7525 = vmatprep.subr.mxu0 %v7258
          %7526 = vmatpush1.msra.mxu0 %v7257
          %7527 = vmatprep.subr.mxu0 %v7260
          %7528 = vmatpush1.msra.mxu0 %v7259
          %7529 = vmatprep.subr.mxu0 %v7262
          %7530 = vmatpush1.msra.mxu0 %v7261
          %7531 = vmatprep.subr.mxu0 %v7264
          %7532 = vmatpush1.msra.mxu0 %v7263
          %7533 = vmatprep.subr.mxu0 %v7266
          %7534 = vmatpush1.msra.mxu0 %v7265
          %7535 = vmatprep.subr.mxu0 %v7268
          %7536 = vmatpush1.msra.mxu0 %v7267
          %7537 = vmatprep.subr.mxu0 %v7270
          %7538 = vmatpush1.msra.mxu0 %v7269
          %7539 = vmatprep.subr.mxu0 %v7272
          %7540 = vmatpush1.msra.mxu0 %v7271
          %7541 = vmatprep.subr.mxu0 %v7274
          %7542 = vmatpush1.msra.mxu0 %v7273
          %7543 = vmatprep.subr.mxu0 %v7276
          %7544 = vmatpush1.msra.mxu0 %v7275
          %7545 = vmatprep.subr.mxu0 %v7278
          %7546 = vmatpush1.msra.mxu0 %v7277
          %7547 = vmatprep.subr.mxu0 %v7280
          %7548 = vmatpush1.msra.mxu0 %v7279
          %7549 = vmatprep.subr.mxu0 %v7282
          %7550 = vmatpush1.msra.mxu0 %v7281
          %7551 = vmatprep.subr.mxu0 %v7284
          %7552 = vmatpush1.msra.mxu0 %v7283
          %7553 = vmatprep.subr.mxu0 %v7286
          %7554 = vmatpush1.msra.mxu0 %v7285
          %7555 = vmatprep.subr.mxu0 %v7288
          %7556 = vmatpush1.msra.mxu0 %v7287
          %7557 = vmatprep.subr.mxu0 %v7290
          %7558 = vmatpush1.msra.mxu0 %v7289
          %7559 = vmatprep.subr.mxu0 %v7292
          %7560 = vmatpush1.msra.mxu0 %v7291
          %7561 = vmatprep.subr.mxu0 %v7294
          %7562 = vmatpush1.msra.mxu0 %v7293
          %7563 = vmatprep.subr.mxu0 %v7296
          %7564 = vmatpush1.msra.mxu0 %v7295
          %7565 = vmatprep.subr.mxu0 %v7298
          %7566 = vmatpush1.msra.mxu0 %v7297
          %7567 = vmatprep.subr.mxu0 %v7300
          %7568 = vmatpush1.msra.mxu0 %v7299
          %7569 = vmatprep.subr.mxu0 %v7302
          %7570 = vmatpush1.msra.mxu0 %v7301
          %7571 = vmatprep.subr.mxu0 %v7304
          %7572 = vmatpush1.msra.mxu0 %v7303
          %7573 = vmatprep.subr.mxu0 %v7306
          %7574 = vmatpush1.msra.mxu0 %v7305
          %7575 = vmatprep.mubr.f32.mxu0 %v7236
          %7576 = vmatmul.mubr.f32.gmra.mrb[0].mxu0 %v7235
          %v7577 = vpop.f32.mrb[0].mxu0
          %v7578 = vadd.f32 %v7504, %v7577
          %v7579 = vpop.f32.mrb[0].mxu0
          %v7580 = vadd.f32 %v7508, %v7579
          %7581 = vdwg.mxu0
          %7582 = vmatprep.subr.mxu0 %v7308
          %7583 = vmatpush1.msra.mxu0 %v7307
          %7584 = vmatprep.subr.mxu0 %v7310
          %7585 = vmatpush1.msra.mxu0 %v7309
          %7586 = vmatprep.subr.mxu0 %v7312
          %7587 = vmatpush1.msra.mxu0 %v7311
          %7588 = vmatprep.subr.mxu0 %v7314
          %7589 = vmatpush1.msra.mxu0 %v7313
          %7590 = vmatprep.subr.mxu0 %v7316
          %7591 = vmatpush1.msra.mxu0 %v7315
          %7592 = vmatprep.subr.mxu0 %v7318
          %7593 = vmatpush1.msra.mxu0 %v7317
          %7594 = vmatprep.subr.mxu0 %v7320
          %7595 = vmatpush1.msra.mxu0 %v7319
          %7596 = vmatprep.subr.mxu0 %v7322
          %7597 = vmatpush1.msra.mxu0 %v7321
          %7598 = vmatprep.subr.mxu0 %v7324
          %7599 = vmatpush1.msra.mxu0 %v7323
          %7600 = vmatprep.subr.mxu0 %v7326
          %7601 = vmatpush1.msra.mxu0 %v7325
          %7602 = vmatprep.subr.mxu0 %v7328
          %7603 = vmatpush1.msra.mxu0 %v7327
          %7604 = vmatprep.subr.mxu0 %v7330
          %7605 = vmatpush1.msra.mxu0 %v7329
          %7606 = vmatprep.subr.mxu0 %v7332
          %7607 = vmatpush1.msra.mxu0 %v7331
          %7608 = vmatprep.subr.mxu0 %v7334
          %7609 = vmatpush1.msra.mxu0 %v7333
          %7610 = vmatprep.subr.mxu0 %v7336
          %7611 = vmatpush1.msra.mxu0 %v7335
          %7612 = vmatprep.subr.mxu0 %v7338
          %7613 = vmatpush1.msra.mxu0 %v7337
          %7614 = vmatprep.subr.mxu0 %v7340
          %7615 = vmatpush1.msra.mxu0 %v7339
          %7616 = vmatprep.subr.mxu0 %v7342
          %7617 = vmatpush1.msra.mxu0 %v7341
          %7618 = vmatprep.subr.mxu0 %v7344
          %7619 = vmatpush1.msra.mxu0 %v7343
          %7620 = vmatprep.subr.mxu0 %v7346
          %7621 = vmatpush1.msra.mxu0 %v7345
          %7622 = vmatprep.subr.mxu0 %v7348
          %7623 = vmatpush1.msra.mxu0 %v7347
          %7624 = vmatprep.subr.mxu0 %v7350
          %7625 = vmatpush1.msra.mxu0 %v7349
          %7626 = vmatprep.subr.mxu0 %v7352
          %7627 = vmatpush1.msra.mxu0 %v7351
          %7628 = vmatprep.subr.mxu0 %v7354
          %7629 = vmatpush1.msra.mxu0 %v7353
          %7630 = vmatprep.subr.mxu0 %v7356
          %7631 = vmatpush1.msra.mxu0 %v7355
          %7632 = vmatprep.subr.mxu0 %v7358
          %7633 = vmatpush1.msra.mxu0 %v7357
          %7634 = vmatprep.subr.mxu0 %v7360
          %7635 = vmatpush1.msra.mxu0 %v7359
          %7636 = vmatprep.subr.mxu0 %v7362
          %7637 = vmatpush1.msra.mxu0 %v7361
          %7638 = vmatprep.subr.mxu0 %v7364
          %7639 = vmatpush1.msra.mxu0 %v7363
          %7640 = vmatprep.subr.mxu0 %v7366
          %7641 = vmatpush1.msra.mxu0 %v7365
          %7642 = vmatprep.subr.mxu0 %v7368
          %7643 = vmatpush1.msra.mxu0 %v7367
          %7644 = vmatprep.subr.mxu0 %v7370
          %7645 = vmatpush1.msra.mxu0 %v7369
          %7646 = vmatprep.mubr.f32.mxu0 %v7238
          %7647 = vmatmul.mubr.f32.gmra.mrb[0].mxu0 %v7237
          %v7648 = vpop.f32.mrb[0].mxu0
          %v7649 = vadd.f32 %v7578, %v7648
          %v7650 = vpop.f32.mrb[0].mxu0
          %v7651 = vadd.f32 %v7580, %v7650
          %7652 = vdwg.mxu0
          %7653 = vmatprep.subr.mxu0 %v7372
          %7654 = vmatpush1.msra.mxu0 %v7371
          %7655 = vmatprep.subr.mxu0 %v7374
          %7656 = vmatpush1.msra.mxu0 %v7373
          %7657 = vmatprep.subr.mxu0 %v7376
          %7658 = vmatpush1.msra.mxu0 %v7375
          %7659 = vmatprep.subr.mxu0 %v7378
          %7660 = vmatpush1.msra.mxu0 %v7377
          %7661 = vmatprep.subr.mxu0 %v7380
          %7662 = vmatpush1.msra.mxu0 %v7379
          %7663 = vmatprep.subr.mxu0 %v7382
          %7664 = vmatpush1.msra.mxu0 %v7381
          %7665 = vmatprep.subr.mxu0 %v7384
          %7666 = vmatpush1.msra.mxu0 %v7383
          %7667 = vmatprep.subr.mxu0 %v7386
          %7668 = vmatpush1.msra.mxu0 %v7385
          %7669 = vmatprep.subr.mxu0 %v7388
          %7670 = vmatpush1.msra.mxu0 %v7387
          %7671 = vmatprep.subr.mxu0 %v7390
          %7672 = vmatpush1.msra.mxu0 %v7389
          %7673 = vmatprep.subr.mxu0 %v7392
          %7674 = vmatpush1.msra.mxu0 %v7391
          %7675 = vmatprep.subr.mxu0 %v7394
          %7676 = vmatpush1.msra.mxu0 %v7393
          %7677 = vmatprep.subr.mxu0 %v7396
          %7678 = vmatpush1.msra.mxu0 %v7395
          %7679 = vmatprep.subr.mxu0 %v7398
          %7680 = vmatpush1.msra.mxu0 %v7397
          %7681 = vmatprep.subr.mxu0 %v7400
          %7682 = vmatpush1.msra.mxu0 %v7399
          %7683 = vmatprep.subr.mxu0 %v7402
          %7684 = vmatpush1.msra.mxu0 %v7401
          %7685 = vmatprep.subr.mxu0 %v7404
          %7686 = vmatpush1.msra.mxu0 %v7403
          %7687 = vmatprep.subr.mxu0 %v7406
          %7688 = vmatpush1.msra.mxu0 %v7405
          %7689 = vmatprep.subr.mxu0 %v7408
          %7690 = vmatpush1.msra.mxu0 %v7407
          %7691 = vmatprep.subr.mxu0 %v7410
          %7692 = vmatpush1.msra.mxu0 %v7409
          %7693 = vmatprep.subr.mxu0 %v7412
          %7694 = vmatpush1.msra.mxu0 %v7411
          %7695 = vmatprep.subr.mxu0 %v7414
          %7696 = vmatpush1.msra.mxu0 %v7413
          %7697 = vmatprep.subr.mxu0 %v7416
          %7698 = vmatpush1.msra.mxu0 %v7415
          %7699 = vmatprep.subr.mxu0 %v7418
          %7700 = vmatpush1.msra.mxu0 %v7417
          %7701 = vmatprep.subr.mxu0 %v7420
          %7702 = vmatpush1.msra.mxu0 %v7419
          %7703 = vmatprep.subr.mxu0 %v7422
          %7704 = vmatpush1.msra.mxu0 %v7421
          %7705 = vmatprep.subr.mxu0 %v7424
          %7706 = vmatpush1.msra.mxu0 %v7423
          %7707 = vmatprep.subr.mxu0 %v7426
          %7708 = vmatpush1.msra.mxu0 %v7425
          %7709 = vmatprep.subr.mxu0 %v7428
          %7710 = vmatpush1.msra.mxu0 %v7427
          %7711 = vmatprep.subr.mxu0 %v7430
          %7712 = vmatpush1.msra.mxu0 %v7429
          %7713 = vmatprep.subr.mxu0 %v7432
          %7714 = vmatpush1.msra.mxu0 %v7431
          %7715 = vmatprep.subr.mxu0 %v7434
          %7716 = vmatpush1.msra.mxu0 %v7433
          %7717 = vmatprep.mubr.f32.mxu0 %v7240
          %7718 = vmatmul.mubr.f32.gmra.mrb[0].mxu0 %v7239
          %v7719 = vpop.f32.mrb[0].mxu0
          %v7720 = vadd.f32 %v7649, %v7719
          %v7721 = vpop.f32.mrb[0].mxu0
          %v7722 = vadd.f32 %v7651, %v7721
          %7723 = vdwg.mxu0
          %7724 = vmatprep.subr.mxu0 %v7436
          %7725 = vmatpush1.msra.mxu0 %v7435
          %7726 = vmatprep.subr.mxu0 %v7438
          %7727 = vmatpush1.msra.mxu0 %v7437
          %7728 = vmatprep.subr.mxu0 %v7440
          %7729 = vmatpush1.msra.mxu0 %v7439
          %7730 = vmatprep.subr.mxu0 %v7442
          %7731 = vmatpush1.msra.mxu0 %v7441
          %7732 = vmatprep.subr.mxu0 %v7444
          %7733 = vmatpush1.msra.mxu0 %v7443
          %7734 = vmatprep.subr.mxu0 %v7446
          %7735 = vmatpush1.msra.mxu0 %v7445
          %7736 = vmatprep.subr.mxu0 %v7448
          %7737 = vmatpush1.msra.mxu0 %v7447
          %7738 = vmatprep.subr.mxu0 %v7450
          %7739 = vmatpush1.msra.mxu0 %v7449
          %7740 = vmatprep.subr.mxu0 %v7452
          %7741 = vmatpush1.msra.mxu0 %v7451
          %7742 = vmatprep.subr.mxu0 %v7454
          %7743 = vmatpush1.msra.mxu0 %v7453
          %7744 = vmatprep.subr.mxu0 %v7456
          %7745 = vmatpush1.msra.mxu0 %v7455
          %7746 = vmatprep.subr.mxu0 %v7458
          %7747 = vmatpush1.msra.mxu0 %v7457
          %7748 = vmatprep.subr.mxu0 %v7460
          %7749 = vmatpush1.msra.mxu0 %v7459
          %7750 = vmatprep.subr.mxu0 %v7462
          %7751 = vmatpush1.msra.mxu0 %v7461
          %7752 = vmatprep.subr.mxu0 %v7464
          %7753 = vmatpush1.msra.mxu0 %v7463
          %7754 = vmatprep.subr.mxu0 %v7466
          %7755 = vmatpush1.msra.mxu0 %v7465
          %7756 = vmatprep.subr.mxu0 %v7468
          %7757 = vmatpush1.msra.mxu0 %v7467
          %7758 = vmatprep.subr.mxu0 %v7470
          %7759 = vmatpush1.msra.mxu0 %v7469
          %7760 = vmatprep.subr.mxu0 %v7472
          %7761 = vmatpush1.msra.mxu0 %v7471
          %7762 = vmatprep.subr.mxu0 %v7474
          %7763 = vmatpush1.msra.mxu0 %v7473
          %7764 = vmatprep.subr.mxu0 %v7476
          %7765 = vmatpush1.msra.mxu0 %v7475
          %7766 = vmatprep.subr.mxu0 %v7478
          %7767 = vmatpush1.msra.mxu0 %v7477
          %7768 = vmatprep.subr.mxu0 %v7480
          %7769 = vmatpush1.msra.mxu0 %v7479
          %7770 = vmatprep.subr.mxu0 %v7482
          %7771 = vmatpush1.msra.mxu0 %v7481
          %7772 = vmatprep.subr.mxu0 %v7484
          %7773 = vmatpush1.msra.mxu0 %v7483
          %7774 = vmatprep.subr.mxu0 %v7486
          %7775 = vmatpush1.msra.mxu0 %v7485
          %7776 = vmatprep.subr.mxu0 %v7488
          %7777 = vmatpush1.msra.mxu0 %v7487
          %7778 = vmatprep.subr.mxu0 %v7490
          %7779 = vmatpush1.msra.mxu0 %v7489
          %7780 = vmatprep.subr.mxu0 %v7492
          %7781 = vmatpush1.msra.mxu0 %v7491
          %7782 = vmatprep.subr.mxu0 %v7494
          %7783 = vmatpush1.msra.mxu0 %v7493
          %7784 = vmatprep.subr.mxu0 %v7496
          %7785 = vmatpush1.msra.mxu0 %v7495
          %7786 = vmatprep.subr.mxu0 %v7498
          %7787 = vmatpush1.msra.mxu0 %v7497
          %7788 = vmatprep.mubr.f32.mxu0 %v7242
          %7789 = vmatmul.mubr.f32.gmra.mrb[0].mxu0 %v7241
          %v7790 = vpop.f32.mrb[0].mxu0
          %v7791 = vadd.f32 %v7720, %v7790
          %v7792 = vpop.f32.mrb[0].mxu0
          %v7793 = vadd.f32 %v7722, %v7792
          %7794 = vdwg.mxu0
          %v7795 = vmax.f32 %v7791, 0.0
          %v7796 = vmax.f32 %v7793, 0.0
          %v7797 = vld [vmem:[%s15] sm:$0xff]
          %v7798 = vld [vmem:[%s15 + $0x8] sm:$0xff]
          %v7799 = vld [vmem:[%s15 + $0x10] sm:$0xff]
          %v7800 = vld [vmem:[%s15 + $0x18] sm:$0xff]
          %v7801 = vld [vmem:[%s15 + $0x20] sm:$0xff]
          %v7802 = vld [vmem:[%s15 + $0x28] sm:$0xff]
          %v7803 = vld [vmem:[%s15 + $0x30] sm:$0xff]
          %v7804 = vld [vmem:[%s15 + $0x38] sm:$0xff]
          %v7805 = vld [vmem:[%s15 + $0x40] sm:$0xff]
          %v7806 = vld [vmem:[%s15 + $0x48] sm:$0xff]
          %v7807 = vld [vmem:[%s15 + $0x50] sm:$0xff]
          %v7808 = vld [vmem:[%s15 + $0x58] sm:$0xff]
          %v7809 = vld [vmem:[%s15 + $0x60] sm:$0xff]
          %v7810 = vld [vmem:[%s15 + $0x68] sm:$0xff]
          %v7811 = vld [vmem:[%s15 + $0x70] sm:$0xff]
          %v7812 = vld [vmem:[%s15 + $0x78] sm:$0xff]
          %v7813 = vld [vmem:[%s15 + $0x80] sm:$0xff]
          %v7814 = vld [vmem:[%s15 + $0x88] sm:$0xff]
          %v7815 = vld [vmem:[%s15 + $0x90] sm:$0xff]
          %v7816 = vld [vmem:[%s15 + $0x98] sm:$0xff]
          %v7817 = vld [vmem:[%s15 + $0xa0] sm:$0xff]
          %v7818 = vld [vmem:[%s15 + $0xa8] sm:$0xff]
          %v7819 = vld [vmem:[%s15 + $0xb0] sm:$0xff]
          %v7820 = vld [vmem:[%s15 + $0xb8] sm:$0xff]
          %v7821 = vld [vmem:[%s15 + $0xc0] sm:$0xff]
          %v7822 = vld [vmem:[%s15 + $0xc8] sm:$0xff]
          %v7823 = vld [vmem:[%s15 + $0xd0] sm:$0xff]
          %v7824 = vld [vmem:[%s15 + $0xd8] sm:$0xff]
          %v7825 = vld [vmem:[%s15 + $0xe0] sm:$0xff]
          %v7826 = vld [vmem:[%s15 + $0xe8] sm:$0xff]
          %v7827 = vld [vmem:[%s15 + $0xf0] sm:$0xff]
          %v7828 = vld [vmem:[%s15 + $0xf8] sm:$0xff]
          %v7829 = vld [vmem:[#allocation4] sm:$0x1]
          %v7831 = vlaneseq
          %v7832 = vshrl.u32 %v7831, 7
          %v7833 = vsub.s32 0, %v7832
          %v7834 = vrot.slane %v7829, %v7833
          %7836 = vmatprep.subr.mxu0 0.0
          %7837 = vmatpush1.msra.mxu0 %v7797
          %7838 = vmatprep.subr.mxu0 0.0
          %7839 = vmatpush1.msra.mxu0 %v7798
          %7840 = vmatprep.subr.mxu0 0.0
          %7841 = vmatpush1.msra.mxu0 %v7799
          %7842 = vmatprep.subr.mxu0 0.0
          %7843 = vmatpush1.msra.mxu0 %v7800
          %7844 = vmatprep.subr.mxu0 0.0
          %7845 = vmatpush1.msra.mxu0 %v7801
          %7846 = vmatprep.subr.mxu0 0.0
          %7847 = vmatpush1.msra.mxu0 %v7802
          %7848 = vmatprep.subr.mxu0 0.0
          %7849 = vmatpush1.msra.mxu0 %v7803
          %7850 = vmatprep.subr.mxu0 0.0
          %7851 = vmatpush1.msra.mxu0 %v7804
          %7852 = vmatprep.subr.mxu0 0.0
          %7853 = vmatpush1.msra.mxu0 %v7805
          %7854 = vmatprep.subr.mxu0 0.0
          %7855 = vmatpush1.msra.mxu0 %v7806
          %7856 = vmatprep.subr.mxu0 0.0
          %7857 = vmatpush1.msra.mxu0 %v7807
          %7858 = vmatprep.subr.mxu0 0.0
          %7859 = vmatpush1.msra.mxu0 %v7808
          %7860 = vmatprep.subr.mxu0 0.0
          %7861 = vmatpush1.msra.mxu0 %v7809
          %7862 = vmatprep.subr.mxu0 0.0
          %7863 = vmatpush1.msra.mxu0 %v7810
          %7864 = vmatprep.subr.mxu0 0.0
          %7865 = vmatpush1.msra.mxu0 %v7811
          %7866 = vmatprep.subr.mxu0 0.0
          %7867 = vmatpush1.msra.mxu0 %v7812
          %7868 = vmatprep.subr.mxu0 0.0
          %7869 = vmatpush1.msra.mxu0 %v7813
          %7870 = vmatprep.subr.mxu0 0.0
          %7871 = vmatpush1.msra.mxu0 %v7814
          %7872 = vmatprep.subr.mxu0 0.0
          %7873 = vmatpush1.msra.mxu0 %v7815
          %7874 = vmatprep.subr.mxu0 0.0
          %7875 = vmatpush1.msra.mxu0 %v7816
          %7876 = vmatprep.subr.mxu0 0.0
          %7877 = vmatpush1.msra.mxu0 %v7817
          %7878 = vmatprep.subr.mxu0 0.0
          %7879 = vmatpush1.msra.mxu0 %v7818
          %7880 = vmatprep.subr.mxu0 0.0
          %7881 = vmatpush1.msra.mxu0 %v7819
          %7882 = vmatprep.subr.mxu0 0.0
          %7883 = vmatpush1.msra.mxu0 %v7820
          %7884 = vmatprep.subr.mxu0 0.0
          %7885 = vmatpush1.msra.mxu0 %v7821
          %7886 = vmatprep.subr.mxu0 0.0
          %7887 = vmatpush1.msra.mxu0 %v7822
          %7888 = vmatprep.subr.mxu0 0.0
          %7889 = vmatpush1.msra.mxu0 %v7823
          %7890 = vmatprep.subr.mxu0 0.0
          %7891 = vmatpush1.msra.mxu0 %v7824
          %7892 = vmatprep.subr.mxu0 0.0
          %7893 = vmatpush1.msra.mxu0 %v7825
          %7894 = vmatprep.subr.mxu0 0.0
          %7895 = vmatpush1.msra.mxu0 %v7826
          %7896 = vmatprep.subr.mxu0 0.0
          %7897 = vmatpush1.msra.mxu0 %v7827
          %7898 = vmatprep.subr.mxu0 0.0
          %7899 = vmatpush1.msra.mxu0 %v7828
          %7900 = vmatprep.mubr.f32.mxu0 %v7796
          %7901 = vmatmul.mubr.f32.gmra.mrb[0].mxu0 %v7795
          %v7902 = vpop.f32.mrb[0].mxu0
          %v7903 = vadd.f32 %v7834, %v7902
          %v7904 = vpop.f32.mrb[0].mxu0
          %7905 = vdwg.mxu0
          %vm7906 = vcmask 1024
          %7907 = vst.msk [vmem:[%s17] sm:$0x3] %vm7906, %v7903
        $region152: #{tpu_custom_call.1} parent=87 // pred_fallthru
          _
        // Predicated region
        $region153: #{tpu_custom_call.1} parent=87 // pred_check
          %p7908 = pneg %p422
        $region154: #{tpu_custom_call.1} parent=87 // pred_check_branch
          %7910 = sbr.rel (%p7908) target = $region156
        $region155: #{tpu_custom_call.1} parent=87 // pred_region
          _
        $region156: #{tpu_custom_call.1} parent=87 // pred_fallthru
          _
        // Predicated region
        $region157: #{tpu_custom_call.1} parent=87 // pred_check
          %p7911 = pneg %p422
        $region158: #{tpu_custom_call.1} parent=87 // pred_check_branch
          %7913 = sbr.rel (%p7911) target = $region160
        $region159: #{tpu_custom_call.1} parent=87 // pred_region
          _
        $region160: #{tpu_custom_call.1} parent=87 // pred_fallthru
          _
      $region88: #{tpu_custom_call.1} parent=5 // pred_fallthru
        _
      %p7914 = scmp.le.s32.totalorder 2, %s37
      // Predicated region
      $region161: #{tpu_custom_call.1} parent=5 // pred_check
        %p7915 = pneg %p7914
      $region162: #{tpu_custom_call.1} parent=5 // pred_check_branch
        %7917 = sbr.rel (%p7915) target = $region164
      $region163: #{tpu_custom_call.1} parent=5 // pred_region
        %s7918 = ssub.s32 %s37, 2
      $region164: #{tpu_custom_call.1} parent=5 // pred_fallthru
        _
    $region6: #{tpu_custom_call.1} parent=1 // loop_footer
      %s41 = sadd.s32 1, %s37
    $region7: #{tpu_custom_call.1} parent=1 // loop_footer_branch
      %36 = sbr.rel target = $region3
    $region8: #{tpu_custom_call.1} parent=1 // loop_exit
      _
    %7919 = vsyncpa [#allocation6], 1
    %s7920 = scalar_lea.sflag [#allocation6], 1
    %7921 = vsyncpa %s7920, 1
    %7922 = vsyncpa [#allocation8], 1
    %s7923 = scalar_lea.sflag [#allocation8], 1
    %7924 = vsyncpa %s7923, 1
    %7925 = vsyncpa [#allocation11], 1
    %7926 = vsyncpa [#allocation14], 1
    %7927 = vsyncpa [#allocation17], 1
    %7928 = vsyncpa [#allocation20], 1
    %7929 = vsyncpa [#allocation23], 1
    %7930 = vsyncpa [#allocation26], 1

</llo_original>
